<compile_context>
chip_gen: v7x
topology: tpu7x:2x2x1
jax: 0.10.0
libtpu: 0.0.40
codegen_flags: <defaults>
</compile_context>

<pallas_src>
import functools

import jax
import jax.numpy as jnp
from jax.experimental import pallas as pl
from jax.experimental.pallas import tpu as pltpu

EPS = 1e-5


# ----------------------------- Pallas kernels ------------------------------ #

def _conv_bn_pool_kernel(p_ref, w_ref, b_ref, g_ref, be_ref, o_ref,
                         s_ref, ss_ref, *, inv_m):
    """One pool-window position of fused conv-GEMM + train-mode BN + 2x2 maxpool.

    Grid axis 0 walks the 4 pool-window positions (reduction axis): o_ref and
    the stats scratches are resident accumulators (constant out index_map).

    p_ref  : (1, K, mp) bf16 transposed im2col patches for this pool position,
             columns ordered (n, i, j)
    w_ref  : (Cout, K) bf16 transposed conv weight
    b_ref / g_ref / be_ref : (Cout, 1) f32 bias / gamma / beta
    o_ref  : (Cout, mp) f32 lane-dense pooled output (resident accumulator)
    s_ref / ss_ref : (Cout, 1) f32 running per-channel sum / sum-of-squares of
             the PRE-pool activation (BN runs before the pool in the reference)
    """
    p = pl.program_id(0)

    # conv GEMM for this pool-window position: bf16 in, f32 accumulate.
    y = jnp.dot(w_ref[...], p_ref[0],
                preferred_element_type=jnp.float32) + b_ref[...]

    # one-pass batch statistics over all N*H*W pre-pool rows (biased variance)
    cs = jnp.sum(y, axis=1, keepdims=True)
    css = jnp.sum(y * y, axis=1, keepdims=True)

    @pl.when(p == 0)
    def _():
        s_ref[...] = cs
        ss_ref[...] = css
        o_ref[...] = y                       # running 2x2 max pool (init)

    @pl.when(p > 0)
    def _():
        s_ref[...] += cs
        ss_ref[...] += css
        o_ref[...] = jnp.maximum(o_ref[...], y)

    # Last pool position: fold the BN affine into the pooled output.
    # max(scale*y + shift) == scale*max(y) + shift because
    # scale = rsqrt(var + eps) * gamma > 0 for the fresh-module gamma == 1.
    @pl.when(p == pl.num_programs(0) - 1)
    def _():
        mean = s_ref[...] * inv_m
        var = ss_ref[...] * inv_m - mean * mean
        scale = jax.lax.rsqrt(var + EPS) * g_ref[...]
        shift = be_ref[...] - mean * scale
        o_ref[...] = o_ref[...] * scale + shift


def conv_bn_pool(patches_t, w_t, b, gamma, beta):
    """patches_t: (4, K, mp) bf16, w_t: (Cout, K) bf16 -> (Cout, mp) f32."""
    npos, K, mp = patches_t.shape
    cout = w_t.shape[0]
    kernel = functools.partial(_conv_bn_pool_kernel, inv_m=1.0 / (npos * mp))
    return pl.pallas_call(
        kernel,
        out_shape=jax.ShapeDtypeStruct((cout, mp), jnp.float32),
        grid=(npos,),
        in_specs=[
            # one contiguous pool-position slab per grid step (double-buffered)
            pl.BlockSpec((1, K, mp), lambda p: (p, 0, 0)),
            pl.BlockSpec((cout, K), lambda p: (0, 0)),
            pl.BlockSpec((cout, 1), lambda p: (0, 0)),
            pl.BlockSpec((cout, 1), lambda p: (0, 0)),
            pl.BlockSpec((cout, 1), lambda p: (0, 0)),
        ],
        out_specs=pl.BlockSpec((cout, mp), lambda p: (0, 0)),   # resident
        scratch_shapes=[pltpu.VMEM((cout, 1), jnp.float32),
                        pltpu.VMEM((cout, 1), jnp.float32)],
        compiler_params=pltpu.CompilerParams(
            dimension_semantics=("arbitrary",)),
    )(patches_t, w_t, b.reshape(cout, 1), gamma.reshape(cout, 1),
      beta.reshape(cout, 1))


def _fc_bn_relu_out_softmax_kernel(x_ref, w_ref, bf_ref, g_ref, be_ref,
                                   wo_ref, bo_ref, o_ref, acc_ref, *, tk):
    """K-tiled fc1 GEMM (bf16 in, f32 accum) + fused bn3 + ReLU + out + softmax.

    x_ref is the full (M, K) activation (constant index_map: DMA'd once);
    w_ref streams (tk, H) bf16 weight tiles.
    """
    k = pl.program_id(0)

    @pl.when(k == 0)
    def _():
        acc_ref[...] = jnp.zeros_like(acc_ref)

    off = pl.multiple_of(k * tk, tk)
    acc_ref[...] += jnp.dot(x_ref[:, pl.ds(off, tk)], w_ref[...],
                            preferred_element_type=jnp.float32)

    @pl.when(k == pl.num_programs(0) - 1)
    def _():
        h = acc_ref[...] + bf_ref[...]
        m = h.shape[0]
        mean = jnp.sum(h, axis=0, keepdims=True) * (1.0 / m)
        var = jnp.sum(h * h, axis=0, keepdims=True) * (1.0 / m) - mean * mean
        scale = jax.lax.rsqrt(var + EPS) * g_ref[...]
        hr = jnp.maximum(h * scale + (be_ref[...] - mean * scale), 0.0)
        logits = jnp.dot(hr, wo_ref[...],
                         preferred_element_type=jnp.float32) + bo_ref[...]
        mx = jnp.max(logits, axis=-1, keepdims=True)
        e = jnp.exp(logits - mx)
        o_ref[...] = e / jnp.sum(e, axis=-1, keepdims=True)


def fc_bn_relu_out_softmax(x, wf, bf, g3, be3, wo, bo, tk=4096):
    M, K = x.shape
    H = wf.shape[1]
    N = wo.shape[1]
    assert K % tk == 0, "fc1 K must be divisible by the K-tile"
    return pl.pallas_call(
        functools.partial(_fc_bn_relu_out_softmax_kernel, tk=tk),
        out_shape=jax.ShapeDtypeStruct((M, N), jnp.float32),
        grid=(K // tk,),
        in_specs=[
            # full activation, loaded once (constant block index), sliced in-kernel
            pl.BlockSpec((M, K), lambda k: (0, 0)),
            # fc1 weight streaming is the only HBM-heavy path
            pl.BlockSpec((tk, H), lambda k: (k, 0)),
            pl.BlockSpec((1, H), lambda k: (0, 0)),
            pl.BlockSpec((1, H), lambda k: (0, 0)),
            pl.BlockSpec((1, H), lambda k: (0, 0)),
            pl.BlockSpec((H, N), lambda k: (0, 0)),
            pl.BlockSpec((1, N), lambda k: (0, 0)),
        ],
        out_specs=pl.BlockSpec((M, N), lambda k: (0, 0)),
        scratch_shapes=[pltpu.VMEM((M, H), jnp.float32)],
        compiler_params=pltpu.CompilerParams(
            dimension_semantics=("arbitrary",),
            # 2 x 4 MiB double-buffered weight tiles: raise v5e's 16 MiB default.
            vmem_limit_bytes=32 * 1024 * 1024),
    )(x, wf, bf.reshape(1, H), g3.reshape(1, H), be3.reshape(1, H),
      wo, bo.reshape(1, N))


# ------------------------------- JAX glue ---------------------------------- #

def _im2col_pooled_T(xp, kh, kw, k_pad=0):
    """Transposed, pool-position-major im2col for stride-1 conv + 2x2/2 maxpool.

    xp: padded NHWC input (N, Hp, Wp, C), already bf16.
    Returns (4, K, mp): one (K, mp) slab per pool-window position, rows ordered
    (a, b, c) to match w.reshape(kh*kw*C, Cout), columns ordered (n, i, j).
    Optionally zero-pads the K axis by k_pad for sublane alignment.
    """
    N, Hp, Wp, C = xp.shape
    Ho2 = (Hp - kh + 1) // 2
    Wo2 = (Wp - kw + 1) // 2
    mp = N * Ho2 * Wo2
    blocks = []
    for di in range(2):
        for dj in range(2):
            taps = [
                jnp.transpose(
                    xp[:, di + a: di + a + 2 * Ho2: 2,
                       dj + b: dj + b + 2 * Wo2: 2, :],
                    (3, 0, 1, 2)).reshape(C, mp)
                for a in range(kh) for b in range(kw)
            ]
            blk = jnp.concatenate(taps, axis=0)             # (kh*kw*C, mp)
            if k_pad:
                blk = jnp.concatenate(
                    [blk, jnp.zeros((k_pad, mp), blk.dtype)], axis=0)
            blocks.append(blk)
    return jnp.stack(blocks, axis=0), Ho2, Wo2              # (4, K, mp)


def init_params(key, num_classes=2):
    ks = jax.random.split(key, 4)
    p = {}
    # conv1: Conv2d(3, 16, k=3, pad=2)   (weights stored KH, KW, Cin, Cout)
    p["w1"] = jax.random.normal(ks[0], (3, 3, 3, 16), jnp.float32) * 0.1
    p["b1"] = jnp.zeros((16,), jnp.float32)
    p["g1"] = jnp.ones((16,), jnp.float32)
    p["be1"] = jnp.zeros((16,), jnp.float32)
    # conv2: Conv2d(16, 32, k=5, pad=2)
    p["w2"] = jax.random.normal(ks[1], (5, 5, 16, 32), jnp.float32) * 0.05
    p["b2"] = jnp.zeros((32,), jnp.float32)
    p["g2"] = jnp.ones((32,), jnp.float32)
    p["be2"] = jnp.zeros((32,), jnp.float32)
    # fc1: Linear(32*16*16, 512), stored (in, out) in bf16 so the kernel
    # streams half the HBM bytes; accumulation stays f32 in VMEM scratch.
    p["wf"] = (jax.random.normal(ks[2], (32 * 16 * 16, 512), jnp.float32)
               * 0.01).astype(jnp.bfloat16)
    p["bf"] = jnp.zeros((512,), jnp.float32)
    p["g3"] = jnp.ones((512,), jnp.float32)
    p["be3"] = jnp.zeros((512,), jnp.float32)
    # out: Linear(512, num_classes)
    p["wo"] = jax.random.normal(ks[3], (512, num_classes), jnp.float32) * 0.05
    p["bo"] = jnp.zeros((num_classes,), jnp.float32)
    return p


@jax.jit
def conv_classify_forward(x_nchw, params):
    N = x_nchw.shape[0]
    x = jnp.transpose(x_nchw, (0, 2, 3, 1)).astype(jnp.float32)   # NCHW -> NHWC

    # --- stage 1: conv1(k=3, pad=2) + bias + bn1 + maxpool2x2 (one kernel) ---
    xp = jnp.pad(x, ((0, 0), (2, 2), (2, 2), (0, 0))).astype(jnp.bfloat16)
    patches1, Ho2, Wo2 = _im2col_pooled_T(xp, 3, 3, k_pad=5)   # (4, 32, N*32*32)
    w1 = params["w1"].reshape(27, 16)
    w1 = jnp.concatenate([w1, jnp.zeros((5, 16), w1.dtype)], axis=0)
    w1t = w1.T.astype(jnp.bfloat16)                            # (16, 32)
    y1 = conv_bn_pool(patches1, w1t, params["b1"], params["g1"],
                      params["be1"])                           # (16, N*32*32) f32

    # --- stage 2: conv2(k=5, pad=2) + bias + bn2 + maxpool2x2 (one kernel) ---
    y1_nhwc = jnp.transpose(y1.reshape(16, N, Ho2, Wo2), (1, 2, 3, 0))
    yp = jnp.pad(y1_nhwc, ((0, 0), (2, 2), (2, 2), (0, 0))).astype(jnp.bfloat16)
    patches2, Ho2b, Wo2b = _im2col_pooled_T(yp, 5, 5)          # (4, 400, N*16*16)
    w2t = params["w2"].reshape(400, 32).T.astype(jnp.bfloat16)  # (32, 400)
    y2 = conv_bn_pool(patches2, w2t, params["b2"], params["g2"],
                      params["be2"])                           # (32, N*16*16) f32

    # flatten in NCHW (c, h, w) order to match torch's x.view(N, -1)
    flat = jnp.transpose(y2.reshape(32, N, Ho2b * Wo2b),
                         (1, 0, 2)).reshape(N, -1)             # (N, 8192)

    # --- stage 3: fc1 + bn3 + relu + out + softmax (one kernel) --------------
    # TODO(synk): nn.BatchNorm2d(512) applied to a 2-D (N, 512) tensor would
    # raise in PyTorch; implemented with BatchNorm1d (per-feature) semantics.
    return fc_bn_relu_out_softmax(flat.astype(jnp.bfloat16), params["wf"],
                                  params["bf"], params["g3"], params["be3"],
                                  params["wo"], params["bo"], tk=4096)


if __name__ == "__main__":
    key = jax.random.PRNGKey(0)
    pkey, xkey = jax.random.split(key)
    params = init_params(pkey, num_classes=2)
    # Input spatial size 62 is implied by fc1 in_features = 32*16*16
    # (62 --conv pad2 k3--> 64 --pool--> 32 --conv pad2 k5--> 32 --pool--> 16).
    x = jax.random.normal(xkey, (2, 3, 62, 62), jnp.float32)
    out = conv_classify_forward(x, params)
    jax.block_until_ready(out)
    assert out.shape == (2, 2)
    assert bool(jnp.all(jnp.isfinite(out)))
    assert bool(jnp.allclose(jnp.sum(out, axis=-1), 1.0, atol=1e-3))
    print("KERNEL_OK")
</pallas_src>

<mosaic_0001>
module attributes {stable_mosaic.version = 11 : i64} {
  func.func @_conv_bn_pool_kernel(%arg0: i32, %arg1: memref<1x32x2048xbf16, #tpu.memory_space<vmem>>, %arg2: memref<16x32xbf16, #tpu.memory_space<vmem>>, %arg3: memref<16x1xf32, #tpu.memory_space<vmem>>, %arg4: memref<16x1xf32, #tpu.memory_space<vmem>>, %arg5: memref<16x1xf32, #tpu.memory_space<vmem>>, %arg6: memref<16x2048xf32, #tpu.memory_space<vmem>>, %arg7: memref<16x1xf32, #tpu.memory_space<vmem>>, %arg8: memref<16x1xf32, #tpu.memory_space<vmem>>) attributes {dimension_semantics = [#tpu.dimension_semantics<arbitrary>], iteration_bounds = array<i64: 4>, scalar_prefetch = 0 : i64, scratch_operands = 2 : i64, tpu.core_type = #tpu.core_type<tc>, window_params = [{transform_indices = @transform_0, window_bounds = array<i64: 1, 32, 2048>}, {pipeline_mode = #tpu.pipeline_mode<synchronous>, transform_indices = @transform_1, window_bounds = array<i64: 16, 32>}, {pipeline_mode = #tpu.pipeline_mode<synchronous>, transform_indices = @transform_2, window_bounds = array<i64: 16, 1>}, {pipeline_mode = #tpu.pipeline_mode<synchronous>, transform_indices = @transform_3, window_bounds = array<i64: 16, 1>}, {pipeline_mode = #tpu.pipeline_mode<synchronous>, transform_indices = @transform_4, window_bounds = array<i64: 16, 1>}, {pipeline_mode = #tpu.pipeline_mode<synchronous>, transform_indices = @transform_5, window_bounds = array<i64: 16, 2048>}]} {
    %c0 = arith.constant 0 : index
    %c0_0 = arith.constant 0 : index
    %0 = vector.load %arg2[%c0, %c0_0] : memref<16x32xbf16, #tpu.memory_space<vmem>>, vector<16x32xbf16>
    %c0_1 = arith.constant 0 : index
    %c0_2 = arith.constant 0 : index
    %c0_3 = arith.constant 0 : index
    %1 = vector.load %arg1[%c0_1, %c0_2, %c0_3] : memref<1x32x2048xbf16, #tpu.memory_space<vmem>>, vector<1x32x2048xbf16>
    %2 = vector.shape_cast %1 : vector<1x32x2048xbf16> to vector<32x2048xbf16>
    %cst = arith.constant dense<0.000000e+00> : vector<16x2048xf32>
    %3 = tpu.matmul %0, %2, %cst {dimension_numbers = #tpu.dot_dimension_numbers<[1], [0], [0], [1], [0, 0, 1, 1], [], []>} : vector<16x32xbf16>, vector<32x2048xbf16>, vector<16x2048xf32> -> vector<16x2048xf32>
    %c0_4 = arith.constant 0 : index
    %c0_5 = arith.constant 0 : index
    %4 = vector.load %arg3[%c0_4, %c0_5] : memref<16x1xf32, #tpu.memory_space<vmem>>, vector<16x1xf32>
    %5 = vector.broadcast %4 : vector<16x1xf32> to vector<16x2048xf32>
    %6 = arith.addf %3, %5 : vector<16x2048xf32>
    %cst_6 = arith.constant dense<0.000000e+00> : vector<16xf32>
    %7 = vector.multi_reduction <add>, %6, %cst_6 [1] : vector<16x2048xf32> to vector<16xf32>
    %8 = vector.shape_cast %7 : vector<16xf32> to vector<16x1xf32>
    %9 = arith.mulf %6, %6 : vector<16x2048xf32>
    %cst_7 = arith.constant dense<0.000000e+00> : vector<16xf32>
    %10 = vector.multi_reduction <add>, %9, %cst_7 [1] : vector<16x2048xf32> to vector<16xf32>
    %11 = vector.shape_cast %10 : vector<16xf32> to vector<16x1xf32>
    %c0_i32 = arith.constant 0 : i32
    %12 = arith.cmpi eq, %arg0, %c0_i32 : i32
    %13 = arith.extui %12 : i1 to i32
    %c0_i32_8 = arith.constant 0 : i32
    %14 = arith.cmpi ne, %13, %c0_i32_8 : i32
    scf.if %14 {
      %c0_12 = arith.constant 0 : index
      %c0_13 = arith.constant 0 : index
      %21 = vector.load %arg7[%c0_12, %c0_13] : memref<16x1xf32, #tpu.memory_space<vmem>>, vector<16x1xf32>
      tpu.vector_store %arg7[%c0_12, %c0_13], %8 {strides = array<i32>} : memref<16x1xf32, #tpu.memory_space<vmem>>, vector<16x1xf32>,
      %c0_14 = arith.constant 0 : index
      %c0_15 = arith.constant 0 : index
      %22 = vector.load %arg8[%c0_14, %c0_15] : memref<16x1xf32, #tpu.memory_space<vmem>>, vector<16x1xf32>
      tpu.vector_store %arg8[%c0_14, %c0_15], %11 {strides = array<i32>} : memref<16x1xf32, #tpu.memory_space<vmem>>, vector<16x1xf32>,
      %c0_16 = arith.constant 0 : index
      %c0_17 = arith.constant 0 : index
      %23 = vector.load %arg6[%c0_16, %c0_17] : memref<16x2048xf32, #tpu.memory_space<vmem>>, vector<16x2048xf32>
      tpu.vector_store %arg6[%c0_16, %c0_17], %6 {strides = array<i32>} : memref<16x2048xf32, #tpu.memory_space<vmem>>, vector<16x2048xf32>,
    } else {
    }
    %c0_i32_9 = arith.constant 0 : i32
    %15 = arith.cmpi sgt, %arg0, %c0_i32_9 : i32
    %16 = arith.extui %15 : i1 to i32
    %c0_i32_10 = arith.constant 0 : i32
    %17 = arith.cmpi ne, %16, %c0_i32_10 : i32
    scf.if %17 {
      %c0_12 = arith.constant 0 : index
      %c0_13 = arith.constant 0 : index
      %21 = vector.load %arg7[%c0_12, %c0_13] : memref<16x1xf32, #tpu.memory_space<vmem>>, vector<16x1xf32>
      %22 = arith.addf %21, %8 : vector<16x1xf32>
      %c0_14 = arith.constant 0 : index
      %c0_15 = arith.constant 0 : index
      %23 = vector.load %arg7[%c0_14, %c0_15] : memref<16x1xf32, #tpu.memory_space<vmem>>, vector<16x1xf32>
      tpu.vector_store %arg7[%c0_14, %c0_15], %22 {strides = array<i32>} : memref<16x1xf32, #tpu.memory_space<vmem>>, vector<16x1xf32>,
      %c0_16 = arith.constant 0 : index
      %c0_17 = arith.constant 0 : index
      %24 = vector.load %arg8[%c0_16, %c0_17] : memref<16x1xf32, #tpu.memory_space<vmem>>, vector<16x1xf32>
      %25 = arith.addf %24, %11 : vector<16x1xf32>
      %c0_18 = arith.constant 0 : index
      %c0_19 = arith.constant 0 : index
      %26 = vector.load %arg8[%c0_18, %c0_19] : memref<16x1xf32, #tpu.memory_space<vmem>>, vector<16x1xf32>
      tpu.vector_store %arg8[%c0_18, %c0_19], %25 {strides = array<i32>} : memref<16x1xf32, #tpu.memory_space<vmem>>, vector<16x1xf32>,
      %c0_20 = arith.constant 0 : index
      %c0_21 = arith.constant 0 : index
      %27 = vector.load %arg6[%c0_20, %c0_21] : memref<16x2048xf32, #tpu.memory_space<vmem>>, vector<16x2048xf32>
      %28 = arith.maximumf %27, %6 : vector<16x2048xf32>
      %c0_22 = arith.constant 0 : index
      %c0_23 = arith.constant 0 : index
      %29 = vector.load %arg6[%c0_22, %c0_23] : memref<16x2048xf32, #tpu.memory_space<vmem>>, vector<16x2048xf32>
      tpu.vector_store %arg6[%c0_22, %c0_23], %28 {strides = array<i32>} : memref<16x2048xf32, #tpu.memory_space<vmem>>, vector<16x2048xf32>,
    } else {
    }
    %c3_i32 = arith.constant 3 : i32
    %18 = arith.cmpi eq, %arg0, %c3_i32 : i32
    %19 = arith.extui %18 : i1 to i32
    %c0_i32_11 = arith.constant 0 : i32
    %20 = arith.cmpi ne, %19, %c0_i32_11 : i32
    scf.if %20 {
      %c0_12 = arith.constant 0 : index
      %c0_13 = arith.constant 0 : index
      %21 = vector.load %arg7[%c0_12, %c0_13] : memref<16x1xf32, #tpu.memory_space<vmem>>, vector<16x1xf32>
      %cst_14 = arith.constant 1.22070313E-4 : f32
      %22 = vector.broadcast %cst_14 : f32 to vector<16x1xf32>
      %23 = arith.mulf %21, %22 : vector<16x1xf32>
      %c0_15 = arith.constant 0 : index
      %c0_16 = arith.constant 0 : index
      %24 = vector.load %arg8[%c0_15, %c0_16] : memref<16x1xf32, #tpu.memory_space<vmem>>, vector<16x1xf32>
      %cst_17 = arith.constant 1.22070313E-4 : f32
      %25 = vector.broadcast %cst_17 : f32 to vector<16x1xf32>
      %26 = arith.mulf %24, %25 : vector<16x1xf32>
      %27 = arith.mulf %23, %23 : vector<16x1xf32>
      %28 = arith.subf %26, %27 : vector<16x1xf32>
      %cst_18 = arith.constant 9.99999974E-6 : f32
      %29 = vector.broadcast %cst_18 : f32 to vector<16x1xf32>
      %30 = arith.addf %28, %29 : vector<16x1xf32>
      %31 = math.rsqrt %30 : vector<16x1xf32>
      %c0_19 = arith.constant 0 : index
      %c0_20 = arith.constant 0 : index
      %32 = vector.load %arg4[%c0_19, %c0_20] : memref<16x1xf32, #tpu.memory_space<vmem>>, vector<16x1xf32>
      %33 = arith.mulf %31, %32 : vector<16x1xf32>
      %c0_21 = arith.constant 0 : index
      %c0_22 = arith.constant 0 : index
      %34 = vector.load %arg5[%c0_21, %c0_22] : memref<16x1xf32, #tpu.memory_space<vmem>>, vector<16x1xf32>
      %35 = arith.mulf %23, %33 : vector<16x1xf32>
      %36 = arith.subf %34, %35 : vector<16x1xf32>
      %c0_23 = arith.constant 0 : index
      %c0_24 = arith.constant 0 : index
      %37 = vector.load %arg6[%c0_23, %c0_24] : memref<16x2048xf32, #tpu.memory_space<vmem>>, vector<16x2048xf32>
      %38 = vector.broadcast %33 : vector<16x1xf32> to vector<16x2048xf32>
      %39 = arith.mulf %37, %38 : vector<16x2048xf32>
      %40 = vector.broadcast %36 : vector<16x1xf32> to vector<16x2048xf32>
      %41 = arith.addf %39, %40 : vector<16x2048xf32>
      %c0_25 = arith.constant 0 : index
      %c0_26 = arith.constant 0 : index
      %42 = vector.load %arg6[%c0_25, %c0_26] : memref<16x2048xf32, #tpu.memory_space<vmem>>, vector<16x2048xf32>
      tpu.vector_store %arg6[%c0_25, %c0_26], %41 {strides = array<i32>} : memref<16x2048xf32, #tpu.memory_space<vmem>>, vector<16x2048xf32>,
    } else {
    }
    return
  }
  func.func @transform_0(%arg0: i32) -> (i32, i32, i32) {
    %c0_i32 = arith.constant 0 : i32
    %c0_i32_0 = arith.constant 0 : i32
    %c0_i32_1 = arith.constant 0 : i32
    return %arg0, %c0_i32, %c0_i32_0 : i32, i32, i32
  }
  func.func @transform_1(%arg0: i32) -> (i32, i32) {
    %c0_i32 = arith.constant 0 : i32
    %c0_i32_0 = arith.constant 0 : i32
    %c0_i32_1 = arith.constant 0 : i32
    return %c0_i32, %c0_i32_0 : i32, i32
  }
  func.func @transform_2(%arg0: i32) -> (i32, i32) {
    %c0_i32 = arith.constant 0 : i32
    %c0_i32_0 = arith.constant 0 : i32
    %c0_i32_1 = arith.constant 0 : i32
    return %c0_i32, %c0_i32_0 : i32, i32
  }
  func.func @transform_3(%arg0: i32) -> (i32, i32) {
    %c0_i32 = arith.constant 0 : i32
    %c0_i32_0 = arith.constant 0 : i32
    %c0_i32_1 = arith.constant 0 : i32
    return %c0_i32, %c0_i32_0 : i32, i32
  }
  func.func @transform_4(%arg0: i32) -> (i32, i32) {
    %c0_i32 = arith.constant 0 : i32
    %c0_i32_0 = arith.constant 0 : i32
    %c0_i32_1 = arith.constant 0 : i32
    return %c0_i32, %c0_i32_0 : i32, i32
  }
  func.func @transform_5(%arg0: i32) -> (i32, i32) {
    %c0_i32 = arith.constant 0 : i32
    %c0_i32_0 = arith.constant 0 : i32
    %c0_i32_1 = arith.constant 0 : i32
    return %c0_i32, %c0_i32_0 : i32, i32
  }
}

module attributes {stable_mosaic.version = 11 : i64} {
  func.func @_conv_bn_pool_kernel(%arg0: i32, %arg1: memref<1x400x512xbf16, #tpu.memory_space<vmem>>, %arg2: memref<32x400xbf16, #tpu.memory_space<vmem>>, %arg3: memref<32x1xf32, #tpu.memory_space<vmem>>, %arg4: memref<32x1xf32, #tpu.memory_space<vmem>>, %arg5: memref<32x1xf32, #tpu.memory_space<vmem>>, %arg6: memref<32x512xf32, #tpu.memory_space<vmem>>, %arg7: memref<32x1xf32, #tpu.memory_space<vmem>>, %arg8: memref<32x1xf32, #tpu.memory_space<vmem>>) attributes {dimension_semantics = [#tpu.dimension_semantics<arbitrary>], iteration_bounds = array<i64: 4>, scalar_prefetch = 0 : i64, scratch_operands = 2 : i64, tpu.core_type = #tpu.core_type<tc>, window_params = [{transform_indices = @transform_0, window_bounds = array<i64: 1, 400, 512>}, {pipeline_mode = #tpu.pipeline_mode<synchronous>, transform_indices = @transform_1, window_bounds = array<i64: 32, 400>}, {pipeline_mode = #tpu.pipeline_mode<synchronous>, transform_indices = @transform_2, window_bounds = array<i64: 32, 1>}, {pipeline_mode = #tpu.pipeline_mode<synchronous>, transform_indices = @transform_3, window_bounds = array<i64: 32, 1>}, {pipeline_mode = #tpu.pipeline_mode<synchronous>, transform_indices = @transform_4, window_bounds = array<i64: 32, 1>}, {pipeline_mode = #tpu.pipeline_mode<synchronous>, transform_indices = @transform_5, window_bounds = array<i64: 32, 512>}]} {
    %c0 = arith.constant 0 : index
    %c0_0 = arith.constant 0 : index
    %0 = vector.load %arg2[%c0, %c0_0] : memref<32x400xbf16, #tpu.memory_space<vmem>>, vector<32x400xbf16>
    %c0_1 = arith.constant 0 : index
    %c0_2 = arith.constant 0 : index
    %c0_3 = arith.constant 0 : index
    %1 = vector.load %arg1[%c0_1, %c0_2, %c0_3] : memref<1x400x512xbf16, #tpu.memory_space<vmem>>, vector<1x400x512xbf16>
    %2 = vector.shape_cast %1 : vector<1x400x512xbf16> to vector<400x512xbf16>
    %cst = arith.constant dense<0.000000e+00> : vector<32x512xf32>
    %3 = tpu.matmul %0, %2, %cst {dimension_numbers = #tpu.dot_dimension_numbers<[1], [0], [0], [1], [0, 0, 1, 1], [], []>} : vector<32x400xbf16>, vector<400x512xbf16>, vector<32x512xf32> -> vector<32x512xf32>
    %c0_4 = arith.constant 0 : index
    %c0_5 = arith.constant 0 : index
    %4 = vector.load %arg3[%c0_4, %c0_5] : memref<32x1xf32, #tpu.memory_space<vmem>>, vector<32x1xf32>
    %5 = vector.broadcast %4 : vector<32x1xf32> to vector<32x512xf32>
    %6 = arith.addf %3, %5 : vector<32x512xf32>
    %cst_6 = arith.constant dense<0.000000e+00> : vector<32xf32>
    %7 = vector.multi_reduction <add>, %6, %cst_6 [1] : vector<32x512xf32> to vector<32xf32>
    %8 = vector.shape_cast %7 : vector<32xf32> to vector<32x1xf32>
    %9 = arith.mulf %6, %6 : vector<32x512xf32>
    %cst_7 = arith.constant dense<0.000000e+00> : vector<32xf32>
    %10 = vector.multi_reduction <add>, %9, %cst_7 [1] : vector<32x512xf32> to vector<32xf32>
    %11 = vector.shape_cast %10 : vector<32xf32> to vector<32x1xf32>
    %c0_i32 = arith.constant 0 : i32
    %12 = arith.cmpi eq, %arg0, %c0_i32 : i32
    %13 = arith.extui %12 : i1 to i32
    %c0_i32_8 = arith.constant 0 : i32
    %14 = arith.cmpi ne, %13, %c0_i32_8 : i32
    scf.if %14 {
      %c0_12 = arith.constant 0 : index
      %c0_13 = arith.constant 0 : index
      %21 = vector.load %arg7[%c0_12, %c0_13] : memref<32x1xf32, #tpu.memory_space<vmem>>, vector<32x1xf32>
      tpu.vector_store %arg7[%c0_12, %c0_13], %8 {strides = array<i32>} : memref<32x1xf32, #tpu.memory_space<vmem>>, vector<32x1xf32>,
      %c0_14 = arith.constant 0 : index
      %c0_15 = arith.constant 0 : index
      %22 = vector.load %arg8[%c0_14, %c0_15] : memref<32x1xf32, #tpu.memory_space<vmem>>, vector<32x1xf32>
      tpu.vector_store %arg8[%c0_14, %c0_15], %11 {strides = array<i32>} : memref<32x1xf32, #tpu.memory_space<vmem>>, vector<32x1xf32>,
      %c0_16 = arith.constant 0 : index
      %c0_17 = arith.constant 0 : index
      %23 = vector.load %arg6[%c0_16, %c0_17] : memref<32x512xf32, #tpu.memory_space<vmem>>, vector<32x512xf32>
      tpu.vector_store %arg6[%c0_16, %c0_17], %6 {strides = array<i32>} : memref<32x512xf32, #tpu.memory_space<vmem>>, vector<32x512xf32>,
    } else {
    }
    %c0_i32_9 = arith.constant 0 : i32
    %15 = arith.cmpi sgt, %arg0, %c0_i32_9 : i32
    %16 = arith.extui %15 : i1 to i32
    %c0_i32_10 = arith.constant 0 : i32
    %17 = arith.cmpi ne, %16, %c0_i32_10 : i32
    scf.if %17 {
      %c0_12 = arith.constant 0 : index
      %c0_13 = arith.constant 0 : index
      %21 = vector.load %arg7[%c0_12, %c0_13] : memref<32x1xf32, #tpu.memory_space<vmem>>, vector<32x1xf32>
      %22 = arith.addf %21, %8 : vector<32x1xf32>
      %c0_14 = arith.constant 0 : index
      %c0_15 = arith.constant 0 : index
      %23 = vector.load %arg7[%c0_14, %c0_15] : memref<32x1xf32, #tpu.memory_space<vmem>>, vector<32x1xf32>
      tpu.vector_store %arg7[%c0_14, %c0_15], %22 {strides = array<i32>} : memref<32x1xf32, #tpu.memory_space<vmem>>, vector<32x1xf32>,
      %c0_16 = arith.constant 0 : index
      %c0_17 = arith.constant 0 : index
      %24 = vector.load %arg8[%c0_16, %c0_17] : memref<32x1xf32, #tpu.memory_space<vmem>>, vector<32x1xf32>
      %25 = arith.addf %24, %11 : vector<32x1xf32>
      %c0_18 = arith.constant 0 : index
      %c0_19 = arith.constant 0 : index
      %26 = vector.load %arg8[%c0_18, %c0_19] : memref<32x1xf32, #tpu.memory_space<vmem>>, vector<32x1xf32>
      tpu.vector_store %arg8[%c0_18, %c0_19], %25 {strides = array<i32>} : memref<32x1xf32, #tpu.memory_space<vmem>>, vector<32x1xf32>,
      %c0_20 = arith.constant 0 : index
      %c0_21 = arith.constant 0 : index
      %27 = vector.load %arg6[%c0_20, %c0_21] : memref<32x512xf32, #tpu.memory_space<vmem>>, vector<32x512xf32>
      %28 = arith.maximumf %27, %6 : vector<32x512xf32>
      %c0_22 = arith.constant 0 : index
      %c0_23 = arith.constant 0 : index
      %29 = vector.load %arg6[%c0_22, %c0_23] : memref<32x512xf32, #tpu.memory_space<vmem>>, vector<32x512xf32>
      tpu.vector_store %arg6[%c0_22, %c0_23], %28 {strides = array<i32>} : memref<32x512xf32, #tpu.memory_space<vmem>>, vector<32x512xf32>,
    } else {
    }
    %c3_i32 = arith.constant 3 : i32
    %18 = arith.cmpi eq, %arg0, %c3_i32 : i32
    %19 = arith.extui %18 : i1 to i32
    %c0_i32_11 = arith.constant 0 : i32
    %20 = arith.cmpi ne, %19, %c0_i32_11 : i32
    scf.if %20 {
      %c0_12 = arith.constant 0 : index
      %c0_13 = arith.constant 0 : index
      %21 = vector.load %arg7[%c0_12, %c0_13] : memref<32x1xf32, #tpu.memory_space<vmem>>, vector<32x1xf32>
      %cst_14 = arith.constant 4.8828125E-4 : f32
      %22 = vector.broadcast %cst_14 : f32 to vector<32x1xf32>
      %23 = arith.mulf %21, %22 : vector<32x1xf32>
      %c0_15 = arith.constant 0 : index
      %c0_16 = arith.constant 0 : index
      %24 = vector.load %arg8[%c0_15, %c0_16] : memref<32x1xf32, #tpu.memory_space<vmem>>, vector<32x1xf32>
      %cst_17 = arith.constant 4.8828125E-4 : f32
      %25 = vector.broadcast %cst_17 : f32 to vector<32x1xf32>
      %26 = arith.mulf %24, %25 : vector<32x1xf32>
      %27 = arith.mulf %23, %23 : vector<32x1xf32>
      %28 = arith.subf %26, %27 : vector<32x1xf32>
      %cst_18 = arith.constant 9.99999974E-6 : f32
      %29 = vector.broadcast %cst_18 : f32 to vector<32x1xf32>
      %30 = arith.addf %28, %29 : vector<32x1xf32>
      %31 = math.rsqrt %30 : vector<32x1xf32>
      %c0_19 = arith.constant 0 : index
      %c0_20 = arith.constant 0 : index
      %32 = vector.load %arg4[%c0_19, %c0_20] : memref<32x1xf32, #tpu.memory_space<vmem>>, vector<32x1xf32>
      %33 = arith.mulf %31, %32 : vector<32x1xf32>
      %c0_21 = arith.constant 0 : index
      %c0_22 = arith.constant 0 : index
      %34 = vector.load %arg5[%c0_21, %c0_22] : memref<32x1xf32, #tpu.memory_space<vmem>>, vector<32x1xf32>
      %35 = arith.mulf %23, %33 : vector<32x1xf32>
      %36 = arith.subf %34, %35 : vector<32x1xf32>
      %c0_23 = arith.constant 0 : index
      %c0_24 = arith.constant 0 : index
      %37 = vector.load %arg6[%c0_23, %c0_24] : memref<32x512xf32, #tpu.memory_space<vmem>>, vector<32x512xf32>
      %38 = vector.broadcast %33 : vector<32x1xf32> to vector<32x512xf32>
      %39 = arith.mulf %37, %38 : vector<32x512xf32>
      %40 = vector.broadcast %36 : vector<32x1xf32> to vector<32x512xf32>
      %41 = arith.addf %39, %40 : vector<32x512xf32>
      %c0_25 = arith.constant 0 : index
      %c0_26 = arith.constant 0 : index
      %42 = vector.load %arg6[%c0_25, %c0_26] : memref<32x512xf32, #tpu.memory_space<vmem>>, vector<32x512xf32>
      tpu.vector_store %arg6[%c0_25, %c0_26], %41 {strides = array<i32>} : memref<32x512xf32, #tpu.memory_space<vmem>>, vector<32x512xf32>,
    } else {
    }
    return
  }
  func.func @transform_0(%arg0: i32) -> (i32, i32, i32) {
    %c0_i32 = arith.constant 0 : i32
    %c0_i32_0 = arith.constant 0 : i32
    %c0_i32_1 = arith.constant 0 : i32
    return %arg0, %c0_i32, %c0_i32_0 : i32, i32, i32
  }
  func.func @transform_1(%arg0: i32) -> (i32, i32) {
    %c0_i32 = arith.constant 0 : i32
    %c0_i32_0 = arith.constant 0 : i32
    %c0_i32_1 = arith.constant 0 : i32
    return %c0_i32, %c0_i32_0 : i32, i32
  }
  func.func @transform_2(%arg0: i32) -> (i32, i32) {
    %c0_i32 = arith.constant 0 : i32
    %c0_i32_0 = arith.constant 0 : i32
    %c0_i32_1 = arith.constant 0 : i32
    return %c0_i32, %c0_i32_0 : i32, i32
  }
  func.func @transform_3(%arg0: i32) -> (i32, i32) {
    %c0_i32 = arith.constant 0 : i32
    %c0_i32_0 = arith.constant 0 : i32
    %c0_i32_1 = arith.constant 0 : i32
    return %c0_i32, %c0_i32_0 : i32, i32
  }
  func.func @transform_4(%arg0: i32) -> (i32, i32) {
    %c0_i32 = arith.constant 0 : i32
    %c0_i32_0 = arith.constant 0 : i32
    %c0_i32_1 = arith.constant 0 : i32
    return %c0_i32, %c0_i32_0 : i32, i32
  }
  func.func @transform_5(%arg0: i32) -> (i32, i32) {
    %c0_i32 = arith.constant 0 : i32
    %c0_i32_0 = arith.constant 0 : i32
    %c0_i32_1 = arith.constant 0 : i32
    return %c0_i32, %c0_i32_0 : i32, i32
  }
}

module attributes {stable_mosaic.version = 11 : i64} {
  func.func @_fc_bn_relu_out_softmax_kernel(%arg0: i32, %arg1: memref<2x8192xbf16, #tpu.memory_space<vmem>>, %arg2: memref<4096x512xbf16, #tpu.memory_space<vmem>>, %arg3: memref<1x512xf32, #tpu.memory_space<vmem>>, %arg4: memref<1x512xf32, #tpu.memory_space<vmem>>, %arg5: memref<1x512xf32, #tpu.memory_space<vmem>>, %arg6: memref<512x2xf32, #tpu.memory_space<vmem>>, %arg7: memref<1x2xf32, #tpu.memory_space<vmem>>, %arg8: memref<2x2xf32, #tpu.memory_space<vmem>>, %arg9: memref<2x512xf32, #tpu.memory_space<vmem>>) attributes {dimension_semantics = [#tpu.dimension_semantics<arbitrary>], iteration_bounds = array<i64: 2>, scalar_prefetch = 0 : i64, scratch_operands = 1 : i64, tpu.core_type = #tpu.core_type<tc>, window_params = [{pipeline_mode = #tpu.pipeline_mode<synchronous>, transform_indices = @transform_0, window_bounds = array<i64: 2, 8192>}, {transform_indices = @transform_1, window_bounds = array<i64: 4096, 512>}, {pipeline_mode = #tpu.pipeline_mode<synchronous>, transform_indices = @transform_2, window_bounds = array<i64: 1, 512>}, {pipeline_mode = #tpu.pipeline_mode<synchronous>, transform_indices = @transform_3, window_bounds = array<i64: 1, 512>}, {pipeline_mode = #tpu.pipeline_mode<synchronous>, transform_indices = @transform_4, window_bounds = array<i64: 1, 512>}, {pipeline_mode = #tpu.pipeline_mode<synchronous>, transform_indices = @transform_5, window_bounds = array<i64: 512, 2>}, {pipeline_mode = #tpu.pipeline_mode<synchronous>, transform_indices = @transform_6, window_bounds = array<i64: 1, 2>}, {pipeline_mode = #tpu.pipeline_mode<synchronous>, transform_indices = @transform_7, window_bounds = array<i64: 2, 2>}]} {
    %c0_i32 = arith.constant 0 : i32
    %0 = arith.cmpi eq, %arg0, %c0_i32 : i32
    %1 = arith.extui %0 : i1 to i32
    %c0_i32_0 = arith.constant 0 : i32
    %2 = arith.cmpi ne, %1, %c0_i32_0 : i32
    scf.if %2 {
      %cst_8 = arith.constant 0.000000e+00 : f32
      %15 = vector.broadcast %cst_8 : f32 to vector<2x512xf32>
      %c0_9 = arith.constant 0 : index
      %c0_10 = arith.constant 0 : index
      %16 = vector.load %arg9[%c0_9, %c0_10] : memref<2x512xf32, #tpu.memory_space<vmem>>, vector<2x512xf32>
      tpu.vector_store %arg9[%c0_9, %c0_10], %15 {strides = array<i32>} : memref<2x512xf32, #tpu.memory_space<vmem>>, vector<2x512xf32>,
    } else {
    }
    %c4096_i32 = arith.constant 4096 : i32
    %3 = arith.muli %arg0, %c4096_i32 : i32
    %4 = tpu.assume_multiple %3, 4096 : i32
    %c0 = arith.constant 0 : index
    %c0_1 = arith.constant 0 : index
    %5 = vector.load %arg9[%c0, %c0_1] : memref<2x512xf32, #tpu.memory_space<vmem>>, vector<2x512xf32>
    %c0_2 = arith.constant 0 : index
    %6 = arith.index_cast %4 : i32 to index
    %7 = vector.load %arg1[%c0_2, %6] : memref<2x8192xbf16, #tpu.memory_space<vmem>>, vector<2x4096xbf16>
    %c0_3 = arith.constant 0 : index
    %c0_4 = arith.constant 0 : index
    %8 = vector.load %arg2[%c0_3, %c0_4] : memref<4096x512xbf16, #tpu.memory_space<vmem>>, vector<4096x512xbf16>
    %cst = arith.constant dense<0.000000e+00> : vector<2x512xf32>
    %9 = tpu.matmul %7, %8, %cst {dimension_numbers = #tpu.dot_dimension_numbers<[1], [0], [0], [1], [0, 0, 1, 1], [], []>} : vector<2x4096xbf16>, vector<4096x512xbf16>, vector<2x512xf32> -> vector<2x512xf32>
    %10 = arith.addf %5, %9 : vector<2x512xf32>
    %c0_5 = arith.constant 0 : index
    %c0_6 = arith.constant 0 : index
    %11 = vector.load %arg9[%c0_5, %c0_6] : memref<2x512xf32, #tpu.memory_space<vmem>>, vector<2x512xf32>
    tpu.vector_store %arg9[%c0_5, %c0_6], %10 {strides = array<i32>} : memref<2x512xf32, #tpu.memory_space<vmem>>, vector<2x512xf32>,
    %c1_i32 = arith.constant 1 : i32
    %12 = arith.cmpi eq, %arg0, %c1_i32 : i32
    %13 = arith.extui %12 : i1 to i32
    %c0_i32_7 = arith.constant 0 : i32
    %14 = arith.cmpi ne, %13, %c0_i32_7 : i32
    scf.if %14 {
      %c0_8 = arith.constant 0 : index
      %c0_9 = arith.constant 0 : index
      %15 = vector.load %arg9[%c0_8, %c0_9] : memref<2x512xf32, #tpu.memory_space<vmem>>, vector<2x512xf32>
      %c0_10 = arith.constant 0 : index
      %c0_11 = arith.constant 0 : index
      %16 = vector.load %arg3[%c0_10, %c0_11] : memref<1x512xf32, #tpu.memory_space<vmem>>, vector<1x512xf32>
      %17 = vector.broadcast %16 : vector<1x512xf32> to vector<2x512xf32>
      %18 = arith.addf %15, %17 : vector<2x512xf32>
      %cst_12 = arith.constant dense<0.000000e+00> : vector<512xf32>
      %19 = vector.multi_reduction <add>, %18, %cst_12 [0] : vector<2x512xf32> to vector<512xf32>
      %20 = vector.shape_cast %19 : vector<512xf32> to vector<1x512xf32>
      %cst_13 = arith.constant 5.000000e-01 : f32
      %21 = vector.broadcast %cst_13 : f32 to vector<1x512xf32>
      %22 = arith.mulf %20, %21 : vector<1x512xf32>
      %23 = arith.mulf %18, %18 : vector<2x512xf32>
      %cst_14 = arith.constant dense<0.000000e+00> : vector<512xf32>
      %24 = vector.multi_reduction <add>, %23, %cst_14 [0] : vector<2x512xf32> to vector<512xf32>
      %25 = vector.shape_cast %24 : vector<512xf32> to vector<1x512xf32>
      %cst_15 = arith.constant 5.000000e-01 : f32
      %26 = vector.broadcast %cst_15 : f32 to vector<1x512xf32>
      %27 = arith.mulf %25, %26 : vector<1x512xf32>
      %28 = arith.mulf %22, %22 : vector<1x512xf32>
      %29 = arith.subf %27, %28 : vector<1x512xf32>
      %cst_16 = arith.constant 9.99999974E-6 : f32
      %30 = vector.broadcast %cst_16 : f32 to vector<1x512xf32>
      %31 = arith.addf %29, %30 : vector<1x512xf32>
      %32 = math.rsqrt %31 : vector<1x512xf32>
      %c0_17 = arith.constant 0 : index
      %c0_18 = arith.constant 0 : index
      %33 = vector.load %arg4[%c0_17, %c0_18] : memref<1x512xf32, #tpu.memory_space<vmem>>, vector<1x512xf32>
      %34 = arith.mulf %32, %33 : vector<1x512xf32>
      %35 = vector.broadcast %34 : vector<1x512xf32> to vector<2x512xf32>
      %36 = arith.mulf %18, %35 : vector<2x512xf32>
      %c0_19 = arith.constant 0 : index
      %c0_20 = arith.constant 0 : index
      %37 = vector.load %arg5[%c0_19, %c0_20] : memref<1x512xf32, #tpu.memory_space<vmem>>, vector<1x512xf32>
      %38 = arith.mulf %22, %34 : vector<1x512xf32>
      %39 = arith.subf %37, %38 : vector<1x512xf32>
      %40 = vector.broadcast %39 : vector<1x512xf32> to vector<2x512xf32>
      %41 = arith.addf %36, %40 : vector<2x512xf32>
      %cst_21 = arith.constant 0.000000e+00 : f32
      %42 = vector.broadcast %cst_21 : f32 to vector<2x512xf32>
      %43 = arith.maximumf %41, %42 : vector<2x512xf32>
      %c0_22 = arith.constant 0 : index
      %c0_23 = arith.constant 0 : index
      %44 = vector.load %arg6[%c0_22, %c0_23] : memref<512x2xf32, #tpu.memory_space<vmem>>, vector<512x2xf32>
      %cst_24 = arith.constant dense<0.000000e+00> : vector<2x2xf32>
      %45 = tpu.matmul %43, %44, %cst_24 {dimension_numbers = #tpu.dot_dimension_numbers<[1], [0], [0], [1], [0, 0, 1, 1], [], []>} : vector<2x512xf32>, vector<512x2xf32>, vector<2x2xf32> -> vector<2x2xf32>
      %c0_25 = arith.constant 0 : index
      %c0_26 = arith.constant 0 : index
      %46 = vector.load %arg7[%c0_25, %c0_26] : memref<1x2xf32, #tpu.memory_space<vmem>>, vector<1x2xf32>
      %47 = vector.broadcast %46 : vector<1x2xf32> to vector<2x2xf32>
      %48 = arith.addf %45, %47 : vector<2x2xf32>
      %cst_27 = arith.constant dense<0xFF800000> : vector<2xf32>
      %49 = vector.multi_reduction <maximumf>, %48, %cst_27 [1] : vector<2x2xf32> to vector<2xf32>
      %50 = vector.shape_cast %49 : vector<2xf32> to vector<2x1xf32>
      %51 = vector.broadcast %50 : vector<2x1xf32> to vector<2x2xf32>
      %52 = arith.subf %48, %51 : vector<2x2xf32>
      %53 = math.exp %52 : vector<2x2xf32>
      %cst_28 = arith.constant dense<0.000000e+00> : vector<2xf32>
      %54 = vector.multi_reduction <add>, %53, %cst_28 [1] : vector<2x2xf32> to vector<2xf32>
      %55 = vector.shape_cast %54 : vector<2xf32> to vector<2x1xf32>
      %56 = vector.broadcast %55 : vector<2x1xf32> to vector<2x2xf32>
      %57 = arith.divf %53, %56 : vector<2x2xf32>
      %c0_29 = arith.constant 0 : index
      %c0_30 = arith.constant 0 : index
      %58 = vector.load %arg8[%c0_29, %c0_30] : memref<2x2xf32, #tpu.memory_space<vmem>>, vector<2x2xf32>
      tpu.vector_store %arg8[%c0_29, %c0_30], %57 {strides = array<i32>} : memref<2x2xf32, #tpu.memory_space<vmem>>, vector<2x2xf32>,
    } else {
    }
    return
  }
  func.func @transform_0(%arg0: i32) -> (i32, i32) {
    %c0_i32 = arith.constant 0 : i32
    %c0_i32_0 = arith.constant 0 : i32
    %c0_i32_1 = arith.constant 0 : i32
    return %c0_i32, %c0_i32_0 : i32, i32
  }
  func.func @transform_1(%arg0: i32) -> (i32, i32) {
    %c0_i32 = arith.constant 0 : i32
    %c0_i32_0 = arith.constant 0 : i32
    return %arg0, %c0_i32 : i32, i32
  }
  func.func @transform_2(%arg0: i32) -> (i32, i32) {
    %c0_i32 = arith.constant 0 : i32
    %c0_i32_0 = arith.constant 0 : i32
    %c0_i32_1 = arith.constant 0 : i32
    return %c0_i32, %c0_i32_0 : i32, i32
  }
  func.func @transform_3(%arg0: i32) -> (i32, i32) {
    %c0_i32 = arith.constant 0 : i32
    %c0_i32_0 = arith.constant 0 : i32
    %c0_i32_1 = arith.constant 0 : i32
    return %c0_i32, %c0_i32_0 : i32, i32
  }
  func.func @transform_4(%arg0: i32) -> (i32, i32) {
    %c0_i32 = arith.constant 0 : i32
    %c0_i32_0 = arith.constant 0 : i32
    %c0_i32_1 = arith.constant 0 : i32
    return %c0_i32, %c0_i32_0 : i32, i32
  }
  func.func @transform_5(%arg0: i32) -> (i32, i32) {
    %c0_i32 = arith.constant 0 : i32
    %c0_i32_0 = arith.constant 0 : i32
    %c0_i32_1 = arith.constant 0 : i32
    return %c0_i32, %c0_i32_0 : i32, i32
  }
  func.func @transform_6(%arg0: i32) -> (i32, i32) {
    %c0_i32 = arith.constant 0 : i32
    %c0_i32_0 = arith.constant 0 : i32
    %c0_i32_1 = arith.constant 0 : i32
    return %c0_i32, %c0_i32_0 : i32, i32
  }
  func.func @transform_7(%arg0: i32) -> (i32, i32) {
    %c0_i32 = arith.constant 0 : i32
    %c0_i32_0 = arith.constant 0 : i32
    %c0_i32_1 = arith.constant 0 : i32
    return %c0_i32, %c0_i32_0 : i32, i32
  }
}

</mosaic_0001>

<llo_original>
// kernel: conv_classify_forward.3
$region0: #{conv_classify_forward.3}
  #allocation0 [shape = 'u32[]', space=smem, size = 0x4, offset = 0x4, fixed_abs, tag = 'smem constant byte address 0x4 - core index']
  #allocation1 [shape = 'u32[144,128]{1,0:T(1,128)}', space=vmem, size = 0x12000, scoped, tag = 'internal scratch']
  #allocation2 [shape = 'f32[16,1]{1,0:T(8,128)}', space=vmem, size = 0x2000, scoped, tag = 'scratch operand']
  #allocation3 [shape = 'f32[16,1]{1,0:T(8,128)}', space=vmem, size = 0x2000, scoped, tag = 'scratch operand']
  %s0 = inlined_call_operand.vmem [shape: bf16[4,32,2048], index: 0, kind: input, shape index: {}]
  %s1 = inlined_call_operand.vmem [shape: bf16[16,32], index: 1, kind: input, shape index: {}]
  %s2 = inlined_call_operand.vmem [shape: f32[16,1], index: 2, kind: input, shape index: {}]
  %s3 = inlined_call_operand.vmem [shape: f32[16,1], index: 3, kind: input, shape index: {}]
  %s4 = inlined_call_operand.vmem [shape: f32[16,1], index: 4, kind: input, shape index: {}]
  %s5 = inlined_call_operand.vmem [shape: f32[16,2048], index: 5, kind: output, shape index: {}]
  %s6 = sld [smem:[#allocation0]]
  $region65: #{conv_classify_forward.3} parent=0
    _
  %s8 = ssub.s32 1, %s6
  %s9 = scalar_select 0, %s8, %s6
  loop: start=0, step=1, limit=6
  $region2: #{conv_classify_forward.3} parent=0 // loop_pre_header
    _
  $region3: #{conv_classify_forward.3} parent=0 // loop_header
    %s11 = sphi 0, %s15
    %p12 = scmp.ge.s32.totalorder %s11, 6
    %s21 = sphi 0, %s23
    %s24 = sphi 0, %s21
    %s25 = sphi 0, %s24
    %s41 = sphi 0, %s25
    %s45 = sphi 0, %s45
    %s47 = sphi 0, %s45
    %s48 = sphi 0, %s47
    %s62 = sphi 0, %s48
    %s66 = sphi 0, %s66
    %s68 = sphi 0, %s66
    %s69 = sphi 0, %s68
    %s83 = sphi 0, %s69
    %s87 = sphi 0, %s87
    %s89 = sphi 0, %s87
    %s90 = sphi 0, %s89
    %s104 = sphi 0, %s90
    %s108 = sphi 0, %s108
    %s110 = sphi 0, %s108
    %s111 = sphi 0, %s110
    %s125 = sphi 0, %s111
    %s129 = sphi 0, %s129
    %s131 = sphi 0, %s129
    %s132 = sphi 0, %s131
    %s146 = sphi 0, %s132
  $region4: #{conv_classify_forward.3} parent=0 // loop_header_branch
    %14 = sbr.rel (%p12) target = $region8
  $region5: #{conv_classify_forward.3} parent=0 // loop_body
    %s16 = ssub.s32 %s11, 1
    %s17 = ssub.s32 %s11, 2
    %s18 = sadd.s32 %s11, 1
    %s19 = ssub.s32 %s11, %s18
    %p20 = scmp.eq.s32.totalorder %s19, 0
    %s22 = sadd.s32 %s21, 1
    %s23 = scalar_select %p20, %s21, %s22
    %p26 = pneg %p20
    %p27 = scmp.eq.s32.totalorder %s11, 3
    %p28 = por %p26, %p27
    %p29 = scmp.ne.s32.totalorder %s21, %s24
    %p30 = scmp.eq.s32.totalorder %s11, 0
    %p31 = por %p29, %p30
    %p32 = scmp.ne.s32.totalorder %s21, %s24
    %p33 = scmp.eq.s32.totalorder %s16, 3
    %p34 = por %p32, %p33
    %p35 = scmp.ne.s32.totalorder %s24, %s25
    %p36 = scmp.eq.s32.totalorder %s16, 0
    %p37 = por %p35, %p36
    %p38 = scmp.ne.s32.totalorder %s24, %s25
    %p39 = scmp.eq.s32.totalorder %s17, 3
    %p40 = por %p38, %p39
    %p42 = scmp.ne.s32.totalorder %s25, %s41
    %p43 = scmp.eq.s32.totalorder %s17, 0
    %p44 = por %p42, %p43
    %s46 = sadd.s32 %s45, 1
    %p49 = scmp.eq.s32.totalorder %s11, 3
    %p50 = scmp.ne.s32.totalorder %s45, %s47
    %p51 = scmp.eq.s32.totalorder %s11, 0
    %p52 = por %p50, %p51
    %p53 = scmp.ne.s32.totalorder %s45, %s47
    %p54 = scmp.eq.s32.totalorder %s16, 3
    %p55 = por %p53, %p54
    %p56 = scmp.ne.s32.totalorder %s47, %s48
    %p57 = scmp.eq.s32.totalorder %s16, 0
    %p58 = por %p56, %p57
    %p59 = scmp.ne.s32.totalorder %s47, %s48
    %p60 = scmp.eq.s32.totalorder %s17, 3
    %p61 = por %p59, %p60
    %p63 = scmp.ne.s32.totalorder %s48, %s62
    %p64 = scmp.eq.s32.totalorder %s17, 0
    %p65 = por %p63, %p64
    %s67 = sadd.s32 %s66, 1
    %p70 = scmp.eq.s32.totalorder %s11, 3
    %p71 = scmp.ne.s32.totalorder %s66, %s68
    %p72 = scmp.eq.s32.totalorder %s11, 0
    %p73 = por %p71, %p72
    %p74 = scmp.ne.s32.totalorder %s66, %s68
    %p75 = scmp.eq.s32.totalorder %s16, 3
    %p76 = por %p74, %p75
    %p77 = scmp.ne.s32.totalorder %s68, %s69
    %p78 = scmp.eq.s32.totalorder %s16, 0
    %p79 = por %p77, %p78
    %p80 = scmp.ne.s32.totalorder %s68, %s69
    %p81 = scmp.eq.s32.totalorder %s17, 3
    %p82 = por %p80, %p81
    %p84 = scmp.ne.s32.totalorder %s69, %s83
    %p85 = scmp.eq.s32.totalorder %s17, 0
    %p86 = por %p84, %p85
    %s88 = sadd.s32 %s87, 1
    %p91 = scmp.eq.s32.totalorder %s11, 3
    %p92 = scmp.ne.s32.totalorder %s87, %s89
    %p93 = scmp.eq.s32.totalorder %s11, 0
    %p94 = por %p92, %p93
    %p95 = scmp.ne.s32.totalorder %s87, %s89
    %p96 = scmp.eq.s32.totalorder %s16, 3
    %p97 = por %p95, %p96
    %p98 = scmp.ne.s32.totalorder %s89, %s90
    %p99 = scmp.eq.s32.totalorder %s16, 0
    %p100 = por %p98, %p99
    %p101 = scmp.ne.s32.totalorder %s89, %s90
    %p102 = scmp.eq.s32.totalorder %s17, 3
    %p103 = por %p101, %p102
    %p105 = scmp.ne.s32.totalorder %s90, %s104
    %p106 = scmp.eq.s32.totalorder %s17, 0
    %p107 = por %p105, %p106
    %s109 = sadd.s32 %s108, 1
    %p112 = scmp.eq.s32.totalorder %s11, 3
    %p113 = scmp.ne.s32.totalorder %s108, %s110
    %p114 = scmp.eq.s32.totalorder %s11, 0
    %p115 = por %p113, %p114
    %p116 = scmp.ne.s32.totalorder %s108, %s110
    %p117 = scmp.eq.s32.totalorder %s16, 3
    %p118 = por %p116, %p117
    %p119 = scmp.ne.s32.totalorder %s110, %s111
    %p120 = scmp.eq.s32.totalorder %s16, 0
    %p121 = por %p119, %p120
    %p122 = scmp.ne.s32.totalorder %s110, %s111
    %p123 = scmp.eq.s32.totalorder %s17, 3
    %p124 = por %p122, %p123
    %p126 = scmp.ne.s32.totalorder %s111, %s125
    %p127 = scmp.eq.s32.totalorder %s17, 0
    %p128 = por %p126, %p127
    %s130 = sadd.s32 %s129, 1
    %p133 = scmp.eq.s32.totalorder %s11, 3
    %p134 = scmp.ne.s32.totalorder %s129, %s131
    %p135 = scmp.eq.s32.totalorder %s11, 0
    %p136 = por %p134, %p135
    %p137 = scmp.ne.s32.totalorder %s129, %s131
    %p138 = scmp.eq.s32.totalorder %s16, 3
    %p139 = por %p137, %p138
    %p140 = scmp.ne.s32.totalorder %s131, %s132
    %p141 = scmp.eq.s32.totalorder %s16, 0
    %p142 = por %p140, %p141
    %p143 = scmp.ne.s32.totalorder %s131, %s132
    %p144 = scmp.eq.s32.totalorder %s17, 3
    %p145 = por %p143, %p144
    %p147 = scmp.ne.s32.totalorder %s132, %s146
    %p148 = scmp.eq.s32.totalorder %s17, 0
    %p149 = por %p147, %p148
    %p150 = scmp.le.s32.totalorder 1, %s11
    %p151 = scmp.lt.s32.totalorder %s11, 5
    %p152 = pnand %p150, %p151
    %p153 = pneg %p152
    // Predicated region
    $region9: #{conv_classify_forward.3} parent=5 // pred_check
      _
    $region10: #{conv_classify_forward.3} parent=5 // pred_check_branch
      %155 = sbr.rel (%p152) target = $region12
    $region11: #{conv_classify_forward.3} parent=5 // pred_region
      %s156 = ssub.s32 %s11, 1
      // Predicated region
      $region13: #{conv_classify_forward.3} parent=11 // pred_check
        %p157 = pneg %p58
      $region14: #{conv_classify_forward.3} parent=11 // pred_check_branch
        %159 = sbr.rel (%p157) target = $region16
      $region15: #{conv_classify_forward.3} parent=11 // pred_region
        _
      $region16: #{conv_classify_forward.3} parent=11 // pred_fallthru
        _
      // Predicated region
      $region17: #{conv_classify_forward.3} parent=11 // pred_check
        %p160 = pneg %p79
      $region18: #{conv_classify_forward.3} parent=11 // pred_check_branch
        %162 = sbr.rel (%p160) target = $region20
      $region19: #{conv_classify_forward.3} parent=11 // pred_region
        _
      $region20: #{conv_classify_forward.3} parent=11 // pred_fallthru
        _
      // Predicated region
      $region21: #{conv_classify_forward.3} parent=11 // pred_check
        %p163 = pneg %p100
      $region22: #{conv_classify_forward.3} parent=11 // pred_check_branch
        %165 = sbr.rel (%p163) target = $region24
      $region23: #{conv_classify_forward.3} parent=11 // pred_region
        _
      $region24: #{conv_classify_forward.3} parent=11 // pred_fallthru
        _
      // Predicated region
      $region25: #{conv_classify_forward.3} parent=11 // pred_check
        %p166 = pneg %p121
      $region26: #{conv_classify_forward.3} parent=11 // pred_check_branch
        %168 = sbr.rel (%p166) target = $region28
      $region27: #{conv_classify_forward.3} parent=11 // pred_region
        _
      $region28: #{conv_classify_forward.3} parent=11 // pred_fallthru
        _
    $region12: #{conv_classify_forward.3} parent=5 // pred_fallthru
      _
    %p169 = scmp.lt.s32.totalorder %s11, 4
    // Predicated region
    $region29: #{conv_classify_forward.3} parent=5 // pred_check
      %p170 = pneg %p169
    $region30: #{conv_classify_forward.3} parent=5 // pred_check_branch
      %172 = sbr.rel (%p170) target = $region32
    $region31: #{conv_classify_forward.3} parent=5 // pred_region
      // Predicated region
      $region33: #{conv_classify_forward.3} parent=31 // pred_check
        %p173 = pneg %p31
      $region34: #{conv_classify_forward.3} parent=31 // pred_check_branch
        %175 = sbr.rel (%p173) target = $region36
      $region35: #{conv_classify_forward.3} parent=31 // pred_region
        %p176 = scmp.lt.s32.totalorder %s11, 3
        %s177 = scalar_select %p176, %s11, 3
        %s178 = smul.addr %s177, 64
        %s179 = smul.addr %s178, 4
        %s180 = scalar_lea.vmem %s0, %s179
      $region36: #{conv_classify_forward.3} parent=31 // pred_fallthru
        _
    $region32: #{conv_classify_forward.3} parent=5 // pred_fallthru
      _
    %p181 = scmp.le.s32.totalorder 1, %s11
    %p182 = scmp.lt.s32.totalorder %s11, 5
    %p183 = pnand %p181, %p182
    %p184 = pneg %p183
    // Predicated region
    $region37: #{conv_classify_forward.3} parent=5 // pred_check
      _
    $region38: #{conv_classify_forward.3} parent=5 // pred_check_branch
      %186 = sbr.rel (%p183) target = $region40
    $region39: #{conv_classify_forward.3} parent=5 // pred_region
      %s187 = ssub.s32 %s11, 1
      %p188 = scmp.lt.s32.totalorder %s16, 3
      %s189 = scalar_select %p188, %s16, 3
      %s190 = smul.addr %s189, 64
      %s191 = smul.addr %s190, 4
      %s192 = scalar_lea.vmem %s0, %s191
      %p193 = pneg %p37
      %p194 = pneg %p34
      %p195 = pneg %p58
      %p196 = pneg %p55
      %p197 = pneg %p79
      %p198 = pneg %p76
      %p199 = pneg %p100
      %p200 = pneg %p97
      %p201 = pneg %p121
      %p202 = pneg %p118
      %p203 = pneg %p142
      %p204 = pneg %p139
      %p205 = scmp.lt.s32.totalorder %s16, 3
      %s206 = scalar_select %p205, %s16, 3
      %s207 = smul.addr %s206, 64
      %s208 = smul.addr %s207, 4
      %s209 = scalar_lea.vmem %s0, %s208
      %v211 = vld [vmem:[%s1] sm:$0xf]
      %v212 = vld [vmem:[%s1 + $0x4] sm:$0xf]
      %v213 = vld [vmem:[%s209] sm:$0xff]
      %v214 = vld [vmem:[%s209 + $0x8] sm:$0xff]
      %v215 = vld [vmem:[%s209 + $0x10] sm:$0xff]
      %v216 = vld [vmem:[%s209 + $0x18] sm:$0xff]
      %v217 = vld [vmem:[%s209 + $0x20] sm:$0xff]
      %v218 = vld [vmem:[%s209 + $0x28] sm:$0xff]
      %v219 = vld [vmem:[%s209 + $0x30] sm:$0xff]
      %v220 = vld [vmem:[%s209 + $0x38] sm:$0xff]
      %v221 = vld [vmem:[%s209 + $0x40] sm:$0xff]
      %v222 = vld [vmem:[%s209 + $0x48] sm:$0xff]
      %v223 = vld [vmem:[%s209 + $0x50] sm:$0xff]
      %v224 = vld [vmem:[%s209 + $0x58] sm:$0xff]
      %v225 = vld [vmem:[%s209 + $0x60] sm:$0xff]
      %v226 = vld [vmem:[%s209 + $0x68] sm:$0xff]
      %v227 = vld [vmem:[%s209 + $0x70] sm:$0xff]
      %v228 = vld [vmem:[%s209 + $0x78] sm:$0xff]
      %v229 = vld [vmem:[%s209 + $0x80] sm:$0xff]
      %v230 = vld [vmem:[%s209 + $0x88] sm:$0xff]
      %v231 = vld [vmem:[%s209 + $0x90] sm:$0xff]
      %v232 = vld [vmem:[%s209 + $0x98] sm:$0xff]
      %v233 = vld [vmem:[%s209 + $0xa0] sm:$0xff]
      %v234 = vld [vmem:[%s209 + $0xa8] sm:$0xff]
      %v235 = vld [vmem:[%s209 + $0xb0] sm:$0xff]
      %v236 = vld [vmem:[%s209 + $0xb8] sm:$0xff]
      %v237 = vld [vmem:[%s209 + $0xc0] sm:$0xff]
      %v238 = vld [vmem:[%s209 + $0xc8] sm:$0xff]
      %v239 = vld [vmem:[%s209 + $0xd0] sm:$0xff]
      %v240 = vld [vmem:[%s209 + $0xd8] sm:$0xff]
      %v241 = vld [vmem:[%s209 + $0xe0] sm:$0xff]
      %v242 = vld [vmem:[%s209 + $0xe8] sm:$0xff]
      %v243 = vld [vmem:[%s209 + $0xf0] sm:$0xff]
      %v244 = vld [vmem:[%s209 + $0xf8] sm:$0xff]
      %v245 = vld [vmem:[%s2] sm:$0xff]
      %v246 = vld [vmem:[%s2 + $0x8] sm:$0xff]
      %248 = vset.pattern.permute.xlu0 0
      %249 = vperm.xlu0 %248, %v245
      %v250 = vpop.permute.xlu0 %249
      %253 = vset.pattern.permute.xlu0 0
      %254 = vperm.xlu0 %253, %v246
      %v255 = vpop.permute.xlu0 %254
      %v259 = vunpack.c.l.b16 %v211
      %v260 = vunpack.c.l.b16 %v212
      %v261 = vpack.c.b16 %v260, %v259
      %v294 = vunpack.c.l.b16 %v213
      %v295 = vunpack.c.h.b16 %v213
      %v296 = vunpack.c.l.b16 %v214
      %v297 = vunpack.c.h.b16 %v214
      %v298 = vunpack.c.l.b16 %v215
      %v299 = vunpack.c.h.b16 %v215
      %v300 = vunpack.c.l.b16 %v216
      %v301 = vunpack.c.h.b16 %v216
      %v302 = vunpack.c.l.b16 %v217
      %v303 = vunpack.c.h.b16 %v217
      %v304 = vunpack.c.l.b16 %v218
      %v305 = vunpack.c.h.b16 %v218
      %v306 = vunpack.c.l.b16 %v219
      %v307 = vunpack.c.h.b16 %v219
      %v308 = vunpack.c.l.b16 %v220
      %v309 = vunpack.c.h.b16 %v220
      %v310 = vunpack.c.l.b16 %v221
      %v311 = vunpack.c.h.b16 %v221
      %v312 = vunpack.c.l.b16 %v222
      %v313 = vunpack.c.h.b16 %v222
      %v314 = vunpack.c.l.b16 %v223
      %v315 = vunpack.c.h.b16 %v223
      %v316 = vunpack.c.l.b16 %v224
      %v317 = vunpack.c.h.b16 %v224
      %v318 = vunpack.c.l.b16 %v225
      %v319 = vunpack.c.h.b16 %v225
      %v320 = vunpack.c.l.b16 %v226
      %v321 = vunpack.c.h.b16 %v226
      %v322 = vunpack.c.l.b16 %v227
      %v323 = vunpack.c.h.b16 %v227
      %v324 = vunpack.c.l.b16 %v228
      %v325 = vunpack.c.h.b16 %v228
      %v326 = vunpack.c.l.b16 %v229
      %v327 = vunpack.c.h.b16 %v229
      %v328 = vunpack.c.l.b16 %v230
      %v329 = vunpack.c.h.b16 %v230
      %v330 = vunpack.c.l.b16 %v231
      %v331 = vunpack.c.h.b16 %v231
      %v332 = vunpack.c.l.b16 %v232
      %v333 = vunpack.c.h.b16 %v232
      %v334 = vunpack.c.l.b16 %v233
      %v335 = vunpack.c.h.b16 %v233
      %v336 = vunpack.c.l.b16 %v234
      %v337 = vunpack.c.h.b16 %v234
      %v338 = vunpack.c.l.b16 %v235
      %v339 = vunpack.c.h.b16 %v235
      %v340 = vunpack.c.l.b16 %v236
      %v341 = vunpack.c.h.b16 %v236
      %v342 = vunpack.c.l.b16 %v237
      %v343 = vunpack.c.h.b16 %v237
      %v344 = vunpack.c.l.b16 %v238
      %v345 = vunpack.c.h.b16 %v238
      %v346 = vunpack.c.l.b16 %v239
      %v347 = vunpack.c.h.b16 %v239
      %v348 = vunpack.c.l.b16 %v240
      %v349 = vunpack.c.h.b16 %v240
      %v350 = vunpack.c.l.b16 %v241
      %v351 = vunpack.c.h.b16 %v241
      %v352 = vunpack.c.l.b16 %v242
      %v353 = vunpack.c.h.b16 %v242
      %v354 = vunpack.c.l.b16 %v243
      %v355 = vunpack.c.h.b16 %v243
      %v356 = vunpack.c.l.b16 %v244
      %v357 = vunpack.c.h.b16 %v244
      %v358 = vpack.c.b16 %v310, %v294
      %v359 = vpack.c.b16 %v311, %v295
      %v360 = vpack.c.b16 %v312, %v296
      %v361 = vpack.c.b16 %v313, %v297
      %v362 = vpack.c.b16 %v314, %v298
      %v363 = vpack.c.b16 %v315, %v299
      %v364 = vpack.c.b16 %v316, %v300
      %v365 = vpack.c.b16 %v317, %v301
      %v366 = vpack.c.b16 %v318, %v302
      %v367 = vpack.c.b16 %v319, %v303
      %v368 = vpack.c.b16 %v320, %v304
      %v369 = vpack.c.b16 %v321, %v305
      %v370 = vpack.c.b16 %v322, %v306
      %v371 = vpack.c.b16 %v323, %v307
      %v372 = vpack.c.b16 %v324, %v308
      %v373 = vpack.c.b16 %v325, %v309
      %v374 = vpack.c.b16 %v342, %v326
      %v375 = vpack.c.b16 %v343, %v327
      %v376 = vpack.c.b16 %v344, %v328
      %v377 = vpack.c.b16 %v345, %v329
      %v378 = vpack.c.b16 %v346, %v330
      %v379 = vpack.c.b16 %v347, %v331
      %v380 = vpack.c.b16 %v348, %v332
      %v381 = vpack.c.b16 %v349, %v333
      %v382 = vpack.c.b16 %v350, %v334
      %v383 = vpack.c.b16 %v351, %v335
      %v384 = vpack.c.b16 %v352, %v336
      %v385 = vpack.c.b16 %v353, %v337
      %v386 = vpack.c.b16 %v354, %v338
      %v387 = vpack.c.b16 %v355, %v339
      %v388 = vpack.c.b16 %v356, %v340
      %v389 = vpack.c.b16 %v357, %v341
      %vm422 = vcmask 261120
      %v424 = vsel %vm422, %v261, 0
      %426 = vmatprep.subr.bf16.mxu0 %v359
      %427 = vmatpush1.bf16.msra.mxu0 %v358
      %428 = vmatprep.subr.bf16.mxu0 %v375
      %429 = vmatpush1.bf16.msra.mxu0 %v374
      %430 = vmatprep.subr.bf16.mxu0 0
      %431 = vmatpush1.bf16.msra.mxu0 0
      %432 = vmatprep.subr.bf16.mxu0 0
      %433 = vmatpush1.bf16.msra.mxu0 0
      %434 = vmatprep.subr.bf16.mxu0 0
      %435 = vmatpush1.bf16.msra.mxu0 0
      %436 = vmatprep.subr.bf16.mxu0 0
      %437 = vmatpush1.bf16.msra.mxu0 0
      %438 = vmatprep.subr.bf16.mxu0 0
      %439 = vmatpush1.bf16.msra.mxu0 0
      %440 = vmatprep.subr.bf16.mxu0 0
      %441 = vmatpush1.bf16.msra.mxu0 0
      %442 = vmatprep.subr.bf16.mxu0 0
      %443 = vmatpush1.bf16.msra.mxu0 0
      %444 = vmatprep.subr.bf16.mxu0 0
      %445 = vmatpush1.bf16.msra.mxu0 0
      %446 = vmatprep.subr.bf16.mxu0 0
      %447 = vmatpush1.bf16.msra.mxu0 0
      %448 = vmatprep.subr.bf16.mxu0 0
      %449 = vmatpush1.bf16.msra.mxu0 0
      %450 = vmatprep.subr.bf16.mxu0 0
      %451 = vmatpush1.bf16.msra.mxu0 0
      %452 = vmatprep.subr.bf16.mxu0 0
      %453 = vmatpush1.bf16.msra.mxu0 0
      %454 = vmatprep.subr.bf16.mxu0 0
      %455 = vmatpush1.bf16.msra.mxu0 0
      %456 = vmatprep.subr.bf16.mxu0 0
      %457 = vmatpush1.bf16.msra.mxu0 0
      %458 = vmatprep.mubr.bf16.mxu0 0
      %459 = vmatmul.mubr.bf16.gmra.mrb[0].mxu0 %v424
      %v460 = vpop.f32.mrb[0].mxu0
      %v461 = vadd.f32 %v250, %v460
      %v462 = vpop.f32.mrb[0].mxu0
      %v463 = vadd.f32 %v250, %v462
      %v464 = vpop.f32.mrb[0].mxu0
      %v465 = vadd.f32 %v255, %v464
      %v466 = vpop.f32.mrb[0].mxu0
      %v467 = vadd.f32 %v255, %v466
      %468 = vdwg.mxu0
      %469 = vmatprep.subr.bf16.mxu0 %v361
      %470 = vmatpush1.bf16.msra.mxu0 %v360
      %471 = vmatprep.subr.bf16.mxu0 %v377
      %472 = vmatpush1.bf16.msra.mxu0 %v376
      %473 = vmatprep.subr.bf16.mxu0 0
      %474 = vmatpush1.bf16.msra.mxu0 0
      %475 = vmatprep.subr.bf16.mxu0 0
      %476 = vmatpush1.bf16.msra.mxu0 0
      %477 = vmatprep.subr.bf16.mxu0 0
      %478 = vmatpush1.bf16.msra.mxu0 0
      %479 = vmatprep.subr.bf16.mxu0 0
      %480 = vmatpush1.bf16.msra.mxu0 0
      %481 = vmatprep.subr.bf16.mxu0 0
      %482 = vmatpush1.bf16.msra.mxu0 0
      %483 = vmatprep.subr.bf16.mxu0 0
      %484 = vmatpush1.bf16.msra.mxu0 0
      %485 = vmatprep.subr.bf16.mxu0 0
      %486 = vmatpush1.bf16.msra.mxu0 0
      %487 = vmatprep.subr.bf16.mxu0 0
      %488 = vmatpush1.bf16.msra.mxu0 0
      %489 = vmatprep.subr.bf16.mxu0 0
      %490 = vmatpush1.bf16.msra.mxu0 0
      %491 = vmatprep.subr.bf16.mxu0 0
      %492 = vmatpush1.bf16.msra.mxu0 0
      %493 = vmatprep.subr.bf16.mxu0 0
      %494 = vmatpush1.bf16.msra.mxu0 0
      %495 = vmatprep.subr.bf16.mxu0 0
      %496 = vmatpush1.bf16.msra.mxu0 0
      %497 = vmatprep.subr.bf16.mxu0 0
      %498 = vmatpush1.bf16.msra.mxu0 0
      %499 = vmatprep.subr.bf16.mxu0 0
      %500 = vmatpush1.bf16.msra.mxu0 0
      %501 = vmatprep.mubr.bf16.mxu0 0
      %502 = vmatmul.mubr.bf16.gmra.mrb[0].mxu0 %v424
      %v503 = vpop.f32.mrb[0].mxu0
      %v504 = vadd.f32 %v250, %v503
      %v505 = vpop.f32.mrb[0].mxu0
      %v506 = vadd.f32 %v250, %v505
      %v507 = vpop.f32.mrb[0].mxu0
      %v508 = vadd.f32 %v255, %v507
      %v509 = vpop.f32.mrb[0].mxu0
      %v510 = vadd.f32 %v255, %v509
      %511 = vdwg.mxu0
      %512 = vmatprep.subr.bf16.mxu0 %v363
      %513 = vmatpush1.bf16.msra.mxu0 %v362
      %514 = vmatprep.subr.bf16.mxu0 %v379
      %515 = vmatpush1.bf16.msra.mxu0 %v378
      %516 = vmatprep.subr.bf16.mxu0 0
      %517 = vmatpush1.bf16.msra.mxu0 0
      %518 = vmatprep.subr.bf16.mxu0 0
      %519 = vmatpush1.bf16.msra.mxu0 0
      %520 = vmatprep.subr.bf16.mxu0 0
      %521 = vmatpush1.bf16.msra.mxu0 0
      %522 = vmatprep.subr.bf16.mxu0 0
      %523 = vmatpush1.bf16.msra.mxu0 0
      %524 = vmatprep.subr.bf16.mxu0 0
      %525 = vmatpush1.bf16.msra.mxu0 0
      %526 = vmatprep.subr.bf16.mxu0 0
      %527 = vmatpush1.bf16.msra.mxu0 0
      %528 = vmatprep.subr.bf16.mxu0 0
      %529 = vmatpush1.bf16.msra.mxu0 0
      %530 = vmatprep.subr.bf16.mxu0 0
      %531 = vmatpush1.bf16.msra.mxu0 0
      %532 = vmatprep.subr.bf16.mxu0 0
      %533 = vmatpush1.bf16.msra.mxu0 0
      %534 = vmatprep.subr.bf16.mxu0 0
      %535 = vmatpush1.bf16.msra.mxu0 0
      %536 = vmatprep.subr.bf16.mxu0 0
      %537 = vmatpush1.bf16.msra.mxu0 0
      %538 = vmatprep.subr.bf16.mxu0 0
      %539 = vmatpush1.bf16.msra.mxu0 0
      %540 = vmatprep.subr.bf16.mxu0 0
      %541 = vmatpush1.bf16.msra.mxu0 0
      %542 = vmatprep.subr.bf16.mxu0 0
      %543 = vmatpush1.bf16.msra.mxu0 0
      %544 = vmatprep.mubr.bf16.mxu0 0
      %545 = vmatmul.mubr.bf16.gmra.mrb[0].mxu0 %v424
      %v546 = vpop.f32.mrb[0].mxu0
      %v547 = vadd.f32 %v250, %v546
      %v548 = vpop.f32.mrb[0].mxu0
      %v549 = vadd.f32 %v250, %v548
      %v550 = vpop.f32.mrb[0].mxu0
      %v551 = vadd.f32 %v255, %v550
      %v552 = vpop.f32.mrb[0].mxu0
      %v553 = vadd.f32 %v255, %v552
      %554 = vdwg.mxu0
      %555 = vmatprep.subr.bf16.mxu0 %v365
      %556 = vmatpush1.bf16.msra.mxu0 %v364
      %557 = vmatprep.subr.bf16.mxu0 %v381
      %558 = vmatpush1.bf16.msra.mxu0 %v380
      %559 = vmatprep.subr.bf16.mxu0 0
      %560 = vmatpush1.bf16.msra.mxu0 0
      %561 = vmatprep.subr.bf16.mxu0 0
      %562 = vmatpush1.bf16.msra.mxu0 0
      %563 = vmatprep.subr.bf16.mxu0 0
      %564 = vmatpush1.bf16.msra.mxu0 0
      %565 = vmatprep.subr.bf16.mxu0 0
      %566 = vmatpush1.bf16.msra.mxu0 0
      %567 = vmatprep.subr.bf16.mxu0 0
      %568 = vmatpush1.bf16.msra.mxu0 0
      %569 = vmatprep.subr.bf16.mxu0 0
      %570 = vmatpush1.bf16.msra.mxu0 0
      %571 = vmatprep.subr.bf16.mxu0 0
      %572 = vmatpush1.bf16.msra.mxu0 0
      %573 = vmatprep.subr.bf16.mxu0 0
      %574 = vmatpush1.bf16.msra.mxu0 0
      %575 = vmatprep.subr.bf16.mxu0 0
      %576 = vmatpush1.bf16.msra.mxu0 0
      %577 = vmatprep.subr.bf16.mxu0 0
      %578 = vmatpush1.bf16.msra.mxu0 0
      %579 = vmatprep.subr.bf16.mxu0 0
      %580 = vmatpush1.bf16.msra.mxu0 0
      %581 = vmatprep.subr.bf16.mxu0 0
      %582 = vmatpush1.bf16.msra.mxu0 0
      %583 = vmatprep.subr.bf16.mxu0 0
      %584 = vmatpush1.bf16.msra.mxu0 0
      %585 = vmatprep.subr.bf16.mxu0 0
      %586 = vmatpush1.bf16.msra.mxu0 0
      %587 = vmatprep.mubr.bf16.mxu0 0
      %588 = vmatmul.mubr.bf16.gmra.mrb[0].mxu0 %v424
      %v589 = vpop.f32.mrb[0].mxu0
      %v590 = vadd.f32 %v250, %v589
      %v591 = vpop.f32.mrb[0].mxu0
      %v592 = vadd.f32 %v250, %v591
      %v593 = vpop.f32.mrb[0].mxu0
      %v594 = vadd.f32 %v255, %v593
      %v595 = vpop.f32.mrb[0].mxu0
      %v596 = vadd.f32 %v255, %v595
      %597 = vdwg.mxu0
      %598 = vmatprep.subr.bf16.mxu0 %v367
      %599 = vmatpush1.bf16.msra.mxu0 %v366
      %600 = vmatprep.subr.bf16.mxu0 %v383
      %601 = vmatpush1.bf16.msra.mxu0 %v382
      %602 = vmatprep.subr.bf16.mxu0 0
      %603 = vmatpush1.bf16.msra.mxu0 0
      %604 = vmatprep.subr.bf16.mxu0 0
      %605 = vmatpush1.bf16.msra.mxu0 0
      %606 = vmatprep.subr.bf16.mxu0 0
      %607 = vmatpush1.bf16.msra.mxu0 0
      %608 = vmatprep.subr.bf16.mxu0 0
      %609 = vmatpush1.bf16.msra.mxu0 0
      %610 = vmatprep.subr.bf16.mxu0 0
      %611 = vmatpush1.bf16.msra.mxu0 0
      %612 = vmatprep.subr.bf16.mxu0 0
      %613 = vmatpush1.bf16.msra.mxu0 0
      %614 = vmatprep.subr.bf16.mxu0 0
      %615 = vmatpush1.bf16.msra.mxu0 0
      %616 = vmatprep.subr.bf16.mxu0 0
      %617 = vmatpush1.bf16.msra.mxu0 0
      %618 = vmatprep.subr.bf16.mxu0 0
      %619 = vmatpush1.bf16.msra.mxu0 0
      %620 = vmatprep.subr.bf16.mxu0 0
      %621 = vmatpush1.bf16.msra.mxu0 0
      %622 = vmatprep.subr.bf16.mxu0 0
      %623 = vmatpush1.bf16.msra.mxu0 0
      %624 = vmatprep.subr.bf16.mxu0 0
      %625 = vmatpush1.bf16.msra.mxu0 0
      %626 = vmatprep.subr.bf16.mxu0 0
      %627 = vmatpush1.bf16.msra.mxu0 0
      %628 = vmatprep.subr.bf16.mxu0 0
      %629 = vmatpush1.bf16.msra.mxu0 0
      %630 = vmatprep.mubr.bf16.mxu0 0
      %631 = vmatmul.mubr.bf16.gmra.mrb[0].mxu0 %v424
      %v632 = vpop.f32.mrb[0].mxu0
      %v633 = vadd.f32 %v250, %v632
      %v634 = vpop.f32.mrb[0].mxu0
      %v635 = vadd.f32 %v250, %v634
      %v636 = vpop.f32.mrb[0].mxu0
      %v637 = vadd.f32 %v255, %v636
      %v638 = vpop.f32.mrb[0].mxu0
      %v639 = vadd.f32 %v255, %v638
      %640 = vdwg.mxu0
      %641 = vmatprep.subr.bf16.mxu0 %v369
      %642 = vmatpush1.bf16.msra.mxu0 %v368
      %643 = vmatprep.subr.bf16.mxu0 %v385
      %644 = vmatpush1.bf16.msra.mxu0 %v384
      %645 = vmatprep.subr.bf16.mxu0 0
      %646 = vmatpush1.bf16.msra.mxu0 0
      %647 = vmatprep.subr.bf16.mxu0 0
      %648 = vmatpush1.bf16.msra.mxu0 0
      %649 = vmatprep.subr.bf16.mxu0 0
      %650 = vmatpush1.bf16.msra.mxu0 0
      %651 = vmatprep.subr.bf16.mxu0 0
      %652 = vmatpush1.bf16.msra.mxu0 0
      %653 = vmatprep.subr.bf16.mxu0 0
      %654 = vmatpush1.bf16.msra.mxu0 0
      %655 = vmatprep.subr.bf16.mxu0 0
      %656 = vmatpush1.bf16.msra.mxu0 0
      %657 = vmatprep.subr.bf16.mxu0 0
      %658 = vmatpush1.bf16.msra.mxu0 0
      %659 = vmatprep.subr.bf16.mxu0 0
      %660 = vmatpush1.bf16.msra.mxu0 0
      %661 = vmatprep.subr.bf16.mxu0 0
      %662 = vmatpush1.bf16.msra.mxu0 0
      %663 = vmatprep.subr.bf16.mxu0 0
      %664 = vmatpush1.bf16.msra.mxu0 0
      %665 = vmatprep.subr.bf16.mxu0 0
      %666 = vmatpush1.bf16.msra.mxu0 0
      %667 = vmatprep.subr.bf16.mxu0 0
      %668 = vmatpush1.bf16.msra.mxu0 0
      %669 = vmatprep.subr.bf16.mxu0 0
      %670 = vmatpush1.bf16.msra.mxu0 0
      %671 = vmatprep.subr.bf16.mxu0 0
      %672 = vmatpush1.bf16.msra.mxu0 0
      %673 = vmatprep.mubr.bf16.mxu0 0
      %674 = vmatmul.mubr.bf16.gmra.mrb[0].mxu0 %v424
      %v675 = vpop.f32.mrb[0].mxu0
      %v676 = vadd.f32 %v250, %v675
      %v677 = vpop.f32.mrb[0].mxu0
      %v678 = vadd.f32 %v250, %v677
      %v679 = vpop.f32.mrb[0].mxu0
      %v680 = vadd.f32 %v255, %v679
      %v681 = vpop.f32.mrb[0].mxu0
      %v682 = vadd.f32 %v255, %v681
      %683 = vdwg.mxu0
      %684 = vmatprep.subr.bf16.mxu0 %v371
      %685 = vmatpush1.bf16.msra.mxu0 %v370
      %686 = vmatprep.subr.bf16.mxu0 %v387
      %687 = vmatpush1.bf16.msra.mxu0 %v386
      %688 = vmatprep.subr.bf16.mxu0 0
      %689 = vmatpush1.bf16.msra.mxu0 0
      %690 = vmatprep.subr.bf16.mxu0 0
      %691 = vmatpush1.bf16.msra.mxu0 0
      %692 = vmatprep.subr.bf16.mxu0 0
      %693 = vmatpush1.bf16.msra.mxu0 0
      %694 = vmatprep.subr.bf16.mxu0 0
      %695 = vmatpush1.bf16.msra.mxu0 0
      %696 = vmatprep.subr.bf16.mxu0 0
      %697 = vmatpush1.bf16.msra.mxu0 0
      %698 = vmatprep.subr.bf16.mxu0 0
      %699 = vmatpush1.bf16.msra.mxu0 0
      %700 = vmatprep.subr.bf16.mxu0 0
      %701 = vmatpush1.bf16.msra.mxu0 0
      %702 = vmatprep.subr.bf16.mxu0 0
      %703 = vmatpush1.bf16.msra.mxu0 0
      %704 = vmatprep.subr.bf16.mxu0 0
      %705 = vmatpush1.bf16.msra.mxu0 0
      %706 = vmatprep.subr.bf16.mxu0 0
      %707 = vmatpush1.bf16.msra.mxu0 0
      %708 = vmatprep.subr.bf16.mxu0 0
      %709 = vmatpush1.bf16.msra.mxu0 0
      %710 = vmatprep.subr.bf16.mxu0 0
      %711 = vmatpush1.bf16.msra.mxu0 0
      %712 = vmatprep.subr.bf16.mxu0 0
      %713 = vmatpush1.bf16.msra.mxu0 0
      %714 = vmatprep.subr.bf16.mxu0 0
      %715 = vmatpush1.bf16.msra.mxu0 0
      %716 = vmatprep.mubr.bf16.mxu0 0
      %717 = vmatmul.mubr.bf16.gmra.mrb[0].mxu0 %v424
      %v718 = vpop.f32.mrb[0].mxu0
      %v719 = vadd.f32 %v250, %v718
      %v720 = vpop.f32.mrb[0].mxu0
      %v721 = vadd.f32 %v250, %v720
      %v722 = vpop.f32.mrb[0].mxu0
      %v723 = vadd.f32 %v255, %v722
      %v724 = vpop.f32.mrb[0].mxu0
      %v725 = vadd.f32 %v255, %v724
      %726 = vdwg.mxu0
      %727 = vmatprep.subr.bf16.mxu0 %v373
      %728 = vmatpush1.bf16.msra.mxu0 %v372
      %729 = vmatprep.subr.bf16.mxu0 %v389
      %730 = vmatpush1.bf16.msra.mxu0 %v388
      %731 = vmatprep.subr.bf16.mxu0 0
      %732 = vmatpush1.bf16.msra.mxu0 0
      %733 = vmatprep.subr.bf16.mxu0 0
      %734 = vmatpush1.bf16.msra.mxu0 0
      %735 = vmatprep.subr.bf16.mxu0 0
      %736 = vmatpush1.bf16.msra.mxu0 0
      %737 = vmatprep.subr.bf16.mxu0 0
      %738 = vmatpush1.bf16.msra.mxu0 0
      %739 = vmatprep.subr.bf16.mxu0 0
      %740 = vmatpush1.bf16.msra.mxu0 0
      %741 = vmatprep.subr.bf16.mxu0 0
      %742 = vmatpush1.bf16.msra.mxu0 0
      %743 = vmatprep.subr.bf16.mxu0 0
      %744 = vmatpush1.bf16.msra.mxu0 0
      %745 = vmatprep.subr.bf16.mxu0 0
      %746 = vmatpush1.bf16.msra.mxu0 0
      %747 = vmatprep.subr.bf16.mxu0 0
      %748 = vmatpush1.bf16.msra.mxu0 0
      %749 = vmatprep.subr.bf16.mxu0 0
      %750 = vmatpush1.bf16.msra.mxu0 0
      %751 = vmatprep.subr.bf16.mxu0 0
      %752 = vmatpush1.bf16.msra.mxu0 0
      %753 = vmatprep.subr.bf16.mxu0 0
      %754 = vmatpush1.bf16.msra.mxu0 0
      %755 = vmatprep.subr.bf16.mxu0 0
      %756 = vmatpush1.bf16.msra.mxu0 0
      %757 = vmatprep.subr.bf16.mxu0 0
      %758 = vmatpush1.bf16.msra.mxu0 0
      %759 = vmatprep.mubr.bf16.mxu0 0
      %760 = vmatmul.mubr.bf16.gmra.mrb[0].mxu0 %v424
      %v761 = vpop.f32.mrb[0].mxu0
      %v762 = vadd.f32 %v250, %v761
      %v763 = vpop.f32.mrb[0].mxu0
      %v764 = vadd.f32 %v250, %v763
      %v765 = vpop.f32.mrb[0].mxu0
      %v766 = vadd.f32 %v255, %v765
      %v767 = vpop.f32.mrb[0].mxu0
      %v768 = vadd.f32 %v255, %v767
      %769 = vdwg.mxu0
      %v770 = vadd.f32 %v461, %v463
      %v771 = vadd.f32 %v770, %v504
      %v772 = vadd.f32 %v771, %v506
      %v773 = vadd.f32 %v772, %v547
      %v774 = vadd.f32 %v773, %v549
      %v775 = vadd.f32 %v774, %v590
      %v776 = vadd.f32 %v775, %v592
      %v777 = vadd.f32 %v776, %v633
      %v778 = vadd.f32 %v777, %v635
      %v779 = vadd.f32 %v778, %v676
      %v780 = vadd.f32 %v779, %v678
      %v781 = vadd.f32 %v780, %v719
      %v782 = vadd.f32 %v781, %v721
      %v783 = vadd.f32 %v782, %v762
      %v784 = vadd.f32 %v783, %v764
      %785 = vadd.xlane.f32.xlu0 %v784
      %v786 = vpop.xlane.xlu0 %785
      %v787 = vadd.f32 %v465, %v467
      %v788 = vadd.f32 %v787, %v508
      %v789 = vadd.f32 %v788, %v510
      %v790 = vadd.f32 %v789, %v551
      %v791 = vadd.f32 %v790, %v553
      %v792 = vadd.f32 %v791, %v594
      %v793 = vadd.f32 %v792, %v596
      %v794 = vadd.f32 %v793, %v637
      %v795 = vadd.f32 %v794, %v639
      %v796 = vadd.f32 %v795, %v680
      %v797 = vadd.f32 %v796, %v682
      %v798 = vadd.f32 %v797, %v723
      %v799 = vadd.f32 %v798, %v725
      %v800 = vadd.f32 %v799, %v766
      %v801 = vadd.f32 %v800, %v768
      %802 = vadd.xlane.f32.xlu0 %v801
      %v803 = vpop.xlane.xlu0 %802
      %v804 = vmul.f32 %v461, %v461
      %v805 = vmul.f32 %v463, %v463
      %v806 = vmul.f32 %v504, %v504
      %v807 = vmul.f32 %v506, %v506
      %v808 = vmul.f32 %v547, %v547
      %v809 = vmul.f32 %v549, %v549
      %v810 = vmul.f32 %v590, %v590
      %v811 = vmul.f32 %v592, %v592
      %v812 = vmul.f32 %v633, %v633
      %v813 = vmul.f32 %v635, %v635
      %v814 = vmul.f32 %v676, %v676
      %v815 = vmul.f32 %v678, %v678
      %v816 = vmul.f32 %v719, %v719
      %v817 = vmul.f32 %v721, %v721
      %v818 = vmul.f32 %v762, %v762
      %v819 = vmul.f32 %v764, %v764
      %v820 = vmul.f32 %v465, %v465
      %v821 = vmul.f32 %v467, %v467
      %v822 = vmul.f32 %v508, %v508
      %v823 = vmul.f32 %v510, %v510
      %v824 = vmul.f32 %v551, %v551
      %v825 = vmul.f32 %v553, %v553
      %v826 = vmul.f32 %v594, %v594
      %v827 = vmul.f32 %v596, %v596
      %v828 = vmul.f32 %v637, %v637
      %v829 = vmul.f32 %v639, %v639
      %v830 = vmul.f32 %v680, %v680
      %v831 = vmul.f32 %v682, %v682
      %v832 = vmul.f32 %v723, %v723
      %v833 = vmul.f32 %v725, %v725
      %v834 = vmul.f32 %v766, %v766
      %v835 = vmul.f32 %v768, %v768
      %v836 = vadd.f32 %v804, %v805
      %v837 = vadd.f32 %v836, %v806
      %v838 = vadd.f32 %v837, %v807
      %v839 = vadd.f32 %v838, %v808
      %v840 = vadd.f32 %v839, %v809
      %v841 = vadd.f32 %v840, %v810
      %v842 = vadd.f32 %v841, %v811
      %v843 = vadd.f32 %v842, %v812
      %v844 = vadd.f32 %v843, %v813
      %v845 = vadd.f32 %v844, %v814
      %v846 = vadd.f32 %v845, %v815
      %v847 = vadd.f32 %v846, %v816
      %v848 = vadd.f32 %v847, %v817
      %v849 = vadd.f32 %v848, %v818
      %v850 = vadd.f32 %v849, %v819
      %851 = vadd.xlane.f32.xlu0 %v850
      %v852 = vpop.xlane.xlu0 %851
      %v853 = vadd.f32 %v820, %v821
      %v854 = vadd.f32 %v853, %v822
      %v855 = vadd.f32 %v854, %v823
      %v856 = vadd.f32 %v855, %v824
      %v857 = vadd.f32 %v856, %v825
      %v858 = vadd.f32 %v857, %v826
      %v859 = vadd.f32 %v858, %v827
      %v860 = vadd.f32 %v859, %v828
      %v861 = vadd.f32 %v860, %v829
      %v862 = vadd.f32 %v861, %v830
      %v863 = vadd.f32 %v862, %v831
      %v864 = vadd.f32 %v863, %v832
      %v865 = vadd.f32 %v864, %v833
      %v866 = vadd.f32 %v865, %v834
      %v867 = vadd.f32 %v866, %v835
      %868 = vadd.xlane.f32.xlu0 %v867
      %v869 = vpop.xlane.xlu0 %868
      %p870 = scmp.eq.s32.totalorder %s16, 0
      // Predicated region
      $region41: #{conv_classify_forward.3} parent=39 // pred_check
        %p871 = pneg %p870
      $region42: #{conv_classify_forward.3} parent=39 // pred_check_branch
        %873 = sbr.rel (%p871) target = $region44
      $region43: #{conv_classify_forward.3} parent=39 // pred_region
        %vm874 = vcmask 7168
        %875 = vst.msk [vmem:[#allocation2] sm:$0xff] %vm874, %v786
        %876 = vst.msk [vmem:[#allocation2 + $0x8] sm:$0xff] %vm874, %v803
        %877 = vst.msk [vmem:[#allocation3] sm:$0xff] %vm874, %v852
        %878 = vst.msk [vmem:[#allocation3 + $0x8] sm:$0xff] %vm874, %v869
        %879 = vst [vmem:[%s5] sm:$0xff] %v461
        %880 = vst [vmem:[%s5 + $0x8] sm:$0xff] %v463
        %881 = vst [vmem:[%s5 + $0x10] sm:$0xff] %v504
        %882 = vst [vmem:[%s5 + $0x18] sm:$0xff] %v506
        %883 = vst [vmem:[%s5 + $0x20] sm:$0xff] %v547
        %884 = vst [vmem:[%s5 + $0x28] sm:$0xff] %v549
        %885 = vst [vmem:[%s5 + $0x30] sm:$0xff] %v590
        %886 = vst [vmem:[%s5 + $0x38] sm:$0xff] %v592
        %887 = vst [vmem:[%s5 + $0x40] sm:$0xff] %v633
        %888 = vst [vmem:[%s5 + $0x48] sm:$0xff] %v635
        %889 = vst [vmem:[%s5 + $0x50] sm:$0xff] %v676
        %890 = vst [vmem:[%s5 + $0x58] sm:$0xff] %v678
        %891 = vst [vmem:[%s5 + $0x60] sm:$0xff] %v719
        %892 = vst [vmem:[%s5 + $0x68] sm:$0xff] %v721
        %893 = vst [vmem:[%s5 + $0x70] sm:$0xff] %v762
        %894 = vst [vmem:[%s5 + $0x78] sm:$0xff] %v764
        %895 = vst [vmem:[%s5 + $0x80] sm:$0xff] %v465
        %896 = vst [vmem:[%s5 + $0x88] sm:$0xff] %v467
        %897 = vst [vmem:[%s5 + $0x90] sm:$0xff] %v508
        %898 = vst [vmem:[%s5 + $0x98] sm:$0xff] %v510
        %899 = vst [vmem:[%s5 + $0xa0] sm:$0xff] %v551
        %900 = vst [vmem:[%s5 + $0xa8] sm:$0xff] %v553
        %901 = vst [vmem:[%s5 + $0xb0] sm:$0xff] %v594
        %902 = vst [vmem:[%s5 + $0xb8] sm:$0xff] %v596
        %903 = vst [vmem:[%s5 + $0xc0] sm:$0xff] %v637
        %904 = vst [vmem:[%s5 + $0xc8] sm:$0xff] %v639
        %905 = vst [vmem:[%s5 + $0xd0] sm:$0xff] %v680
        %906 = vst [vmem:[%s5 + $0xd8] sm:$0xff] %v682
        %907 = vst [vmem:[%s5 + $0xe0] sm:$0xff] %v723
        %908 = vst [vmem:[%s5 + $0xe8] sm:$0xff] %v725
        %909 = vst [vmem:[%s5 + $0xf0] sm:$0xff] %v766
        %910 = vst [vmem:[%s5 + $0xf8] sm:$0xff] %v768
      $region44: #{conv_classify_forward.3} parent=39 // pred_fallthru
        _
      %p911 = scmp.gt.s32.totalorder %s16, 0
      // Predicated region
      $region45: #{conv_classify_forward.3} parent=39 // pred_check
        %p912 = pneg %p911
      $region46: #{conv_classify_forward.3} parent=39 // pred_check_branch
        %914 = sbr.rel (%p912) target = $region48
      $region47: #{conv_classify_forward.3} parent=39 // pred_region
        %v915 = vld [vmem:[#allocation2] sm:$0xff]
        %v916 = vld [vmem:[#allocation2 + $0x8] sm:$0xff]
        %v917 = vadd.f32 %v915, %v786
        %v918 = vadd.f32 %v916, %v803
        %vm919 = vcmask 7168
        %920 = vst.msk [vmem:[#allocation2] sm:$0xff] %vm919, %v917
        %921 = vst.msk [vmem:[#allocation2 + $0x8] sm:$0xff] %vm919, %v918
        %v922 = vld [vmem:[#allocation3] sm:$0xff]
        %v923 = vld [vmem:[#allocation3 + $0x8] sm:$0xff]
        %v924 = vadd.f32 %v922, %v852
        %v925 = vadd.f32 %v923, %v869
        %926 = vst.msk [vmem:[#allocation3] sm:$0xff] %vm919, %v924
        %927 = vst.msk [vmem:[#allocation3 + $0x8] sm:$0xff] %vm919, %v925
        %v928 = vld [vmem:[%s5] sm:$0xff]
        %v929 = vld [vmem:[%s5 + $0x8] sm:$0xff]
        %v930 = vld [vmem:[%s5 + $0x10] sm:$0xff]
        %v931 = vld [vmem:[%s5 + $0x18] sm:$0xff]
        %v932 = vld [vmem:[%s5 + $0x20] sm:$0xff]
        %v933 = vld [vmem:[%s5 + $0x28] sm:$0xff]
        %v934 = vld [vmem:[%s5 + $0x30] sm:$0xff]
        %v935 = vld [vmem:[%s5 + $0x38] sm:$0xff]
        %v936 = vld [vmem:[%s5 + $0x40] sm:$0xff]
        %v937 = vld [vmem:[%s5 + $0x48] sm:$0xff]
        %v938 = vld [vmem:[%s5 + $0x50] sm:$0xff]
        %v939 = vld [vmem:[%s5 + $0x58] sm:$0xff]
        %v940 = vld [vmem:[%s5 + $0x60] sm:$0xff]
        %v941 = vld [vmem:[%s5 + $0x68] sm:$0xff]
        %v942 = vld [vmem:[%s5 + $0x70] sm:$0xff]
        %v943 = vld [vmem:[%s5 + $0x78] sm:$0xff]
        %v944 = vld [vmem:[%s5 + $0x80] sm:$0xff]
        %v945 = vld [vmem:[%s5 + $0x88] sm:$0xff]
        %v946 = vld [vmem:[%s5 + $0x90] sm:$0xff]
        %v947 = vld [vmem:[%s5 + $0x98] sm:$0xff]
        %v948 = vld [vmem:[%s5 + $0xa0] sm:$0xff]
        %v949 = vld [vmem:[%s5 + $0xa8] sm:$0xff]
        %v950 = vld [vmem:[%s5 + $0xb0] sm:$0xff]
        %v951 = vld [vmem:[%s5 + $0xb8] sm:$0xff]
        %v952 = vld [vmem:[%s5 + $0xc0] sm:$0xff]
        %v953 = vld [vmem:[%s5 + $0xc8] sm:$0xff]
        %v954 = vld [vmem:[%s5 + $0xd0] sm:$0xff]
        %v955 = vld [vmem:[%s5 + $0xd8] sm:$0xff]
        %v956 = vld [vmem:[%s5 + $0xe0] sm:$0xff]
        %v957 = vld [vmem:[%s5 + $0xe8] sm:$0xff]
        %v958 = vld [vmem:[%s5 + $0xf0] sm:$0xff]
        %v959 = vld [vmem:[%s5 + $0xf8] sm:$0xff]
        %v960 = vmax.f32 %v928, %v461
        %v961 = vmax.f32 %v929, %v463
        %v962 = vmax.f32 %v930, %v504
        %v963 = vmax.f32 %v931, %v506
        %v964 = vmax.f32 %v932, %v547
        %v965 = vmax.f32 %v933, %v549
        %v966 = vmax.f32 %v934, %v590
        %v967 = vmax.f32 %v935, %v592
        %v968 = vmax.f32 %v936, %v633
        %v969 = vmax.f32 %v937, %v635
        %v970 = vmax.f32 %v938, %v676
        %v971 = vmax.f32 %v939, %v678
        %v972 = vmax.f32 %v940, %v719
        %v973 = vmax.f32 %v941, %v721
        %v974 = vmax.f32 %v942, %v762
        %v975 = vmax.f32 %v943, %v764
        %v976 = vmax.f32 %v944, %v465
        %v977 = vmax.f32 %v945, %v467
        %v978 = vmax.f32 %v946, %v508
        %v979 = vmax.f32 %v947, %v510
        %v980 = vmax.f32 %v948, %v551
        %v981 = vmax.f32 %v949, %v553
        %v982 = vmax.f32 %v950, %v594
        %v983 = vmax.f32 %v951, %v596
        %v984 = vmax.f32 %v952, %v637
        %v985 = vmax.f32 %v953, %v639
        %v986 = vmax.f32 %v954, %v680
        %v987 = vmax.f32 %v955, %v682
        %v988 = vmax.f32 %v956, %v723
        %v989 = vmax.f32 %v957, %v725
        %v990 = vmax.f32 %v958, %v766
        %v991 = vmax.f32 %v959, %v768
        %992 = vst [vmem:[%s5] sm:$0xff] %v960
        %993 = vst [vmem:[%s5 + $0x8] sm:$0xff] %v961
        %994 = vst [vmem:[%s5 + $0x10] sm:$0xff] %v962
        %995 = vst [vmem:[%s5 + $0x18] sm:$0xff] %v963
        %996 = vst [vmem:[%s5 + $0x20] sm:$0xff] %v964
        %997 = vst [vmem:[%s5 + $0x28] sm:$0xff] %v965
        %998 = vst [vmem:[%s5 + $0x30] sm:$0xff] %v966
        %999 = vst [vmem:[%s5 + $0x38] sm:$0xff] %v967
        %1000 = vst [vmem:[%s5 + $0x40] sm:$0xff] %v968
        %1001 = vst [vmem:[%s5 + $0x48] sm:$0xff] %v969
        %1002 = vst [vmem:[%s5 + $0x50] sm:$0xff] %v970
        %1003 = vst [vmem:[%s5 + $0x58] sm:$0xff] %v971
        %1004 = vst [vmem:[%s5 + $0x60] sm:$0xff] %v972
        %1005 = vst [vmem:[%s5 + $0x68] sm:$0xff] %v973
        %1006 = vst [vmem:[%s5 + $0x70] sm:$0xff] %v974
        %1007 = vst [vmem:[%s5 + $0x78] sm:$0xff] %v975
        %1008 = vst [vmem:[%s5 + $0x80] sm:$0xff] %v976
        %1009 = vst [vmem:[%s5 + $0x88] sm:$0xff] %v977
        %1010 = vst [vmem:[%s5 + $0x90] sm:$0xff] %v978
        %1011 = vst [vmem:[%s5 + $0x98] sm:$0xff] %v979
        %1012 = vst [vmem:[%s5 + $0xa0] sm:$0xff] %v980
        %1013 = vst [vmem:[%s5 + $0xa8] sm:$0xff] %v981
        %1014 = vst [vmem:[%s5 + $0xb0] sm:$0xff] %v982
        %1015 = vst [vmem:[%s5 + $0xb8] sm:$0xff] %v983
        %1016 = vst [vmem:[%s5 + $0xc0] sm:$0xff] %v984
        %1017 = vst [vmem:[%s5 + $0xc8] sm:$0xff] %v985
        %1018 = vst [vmem:[%s5 + $0xd0] sm:$0xff] %v986
        %1019 = vst [vmem:[%s5 + $0xd8] sm:$0xff] %v987
        %1020 = vst [vmem:[%s5 + $0xe0] sm:$0xff] %v988
        %1021 = vst [vmem:[%s5 + $0xe8] sm:$0xff] %v989
        %1022 = vst [vmem:[%s5 + $0xf0] sm:$0xff] %v990
        %1023 = vst [vmem:[%s5 + $0xf8] sm:$0xff] %v991
      $region48: #{conv_classify_forward.3} parent=39 // pred_fallthru
        _
      %p1024 = scmp.eq.s32.totalorder %s16, 3
      // Predicated region
      $region49: #{conv_classify_forward.3} parent=39 // pred_check
        %p1025 = pneg %p1024
      $region50: #{conv_classify_forward.3} parent=39 // pred_check_branch
        %1027 = sbr.rel (%p1025) target = $region52
      $region51: #{conv_classify_forward.3} parent=39 // pred_region
        %v1028 = vld [vmem:[#allocation2] sm:$0xff]
        %v1029 = vld [vmem:[#allocation2 + $0x8] sm:$0xff]
        %v1030 = vmul.f32 %v1028, 0.00012207031
        %v1031 = vmul.f32 %v1029, 0.00012207031
        %v1032 = vld [vmem:[#allocation3] sm:$0xff]
        %v1033 = vld [vmem:[#allocation3 + $0x8] sm:$0xff]
        %v1034 = vmul.f32 %v1032, 0.00012207031
        %v1035 = vmul.f32 %v1033, 0.00012207031
        %v1036 = vmul.f32 %v1030, %v1030
        %v1037 = vmul.f32 %v1031, %v1031
        %v1038 = vsub.f32 %v1034, %v1036
        %v1039 = vsub.f32 %v1035, %v1037
        %v1040 = vadd.f32 %v1038, 1e-05
        %v1041 = vadd.f32 %v1039, 1e-05
        %v1042 = vrsqrt.pop %v1040
        %v1043 = vrsqrt.pop %v1041
        %v1044 = vld [vmem:[%s3] sm:$0xff]
        %v1045 = vld [vmem:[%s3 + $0x8] sm:$0xff]
        %v1046 = vmul.f32 %v1042, %v1044
        %v1047 = vmul.f32 %v1043, %v1045
        %v1048 = vld [vmem:[%s4] sm:$0xff]
        %v1049 = vld [vmem:[%s4 + $0x8] sm:$0xff]
        %v1050 = vmul.f32 %v1030, %v1046
        %v1051 = vmul.f32 %v1031, %v1047
        %v1052 = vsub.f32 %v1048, %v1050
        %v1053 = vsub.f32 %v1049, %v1051
        %v1054 = vld [vmem:[%s5] sm:$0xff]
        %v1055 = vld [vmem:[%s5 + $0x8] sm:$0xff]
        %v1056 = vld [vmem:[%s5 + $0x10] sm:$0xff]
        %v1057 = vld [vmem:[%s5 + $0x18] sm:$0xff]
        %v1058 = vld [vmem:[%s5 + $0x20] sm:$0xff]
        %v1059 = vld [vmem:[%s5 + $0x28] sm:$0xff]
        %v1060 = vld [vmem:[%s5 + $0x30] sm:$0xff]
        %v1061 = vld [vmem:[%s5 + $0x38] sm:$0xff]
        %v1062 = vld [vmem:[%s5 + $0x40] sm:$0xff]
        %v1063 = vld [vmem:[%s5 + $0x48] sm:$0xff]
        %v1064 = vld [vmem:[%s5 + $0x50] sm:$0xff]
        %v1065 = vld [vmem:[%s5 + $0x58] sm:$0xff]
        %v1066 = vld [vmem:[%s5 + $0x60] sm:$0xff]
        %v1067 = vld [vmem:[%s5 + $0x68] sm:$0xff]
        %v1068 = vld [vmem:[%s5 + $0x70] sm:$0xff]
        %v1069 = vld [vmem:[%s5 + $0x78] sm:$0xff]
        %v1070 = vld [vmem:[%s5 + $0x80] sm:$0xff]
        %v1071 = vld [vmem:[%s5 + $0x88] sm:$0xff]
        %v1072 = vld [vmem:[%s5 + $0x90] sm:$0xff]
        %v1073 = vld [vmem:[%s5 + $0x98] sm:$0xff]
        %v1074 = vld [vmem:[%s5 + $0xa0] sm:$0xff]
        %v1075 = vld [vmem:[%s5 + $0xa8] sm:$0xff]
        %v1076 = vld [vmem:[%s5 + $0xb0] sm:$0xff]
        %v1077 = vld [vmem:[%s5 + $0xb8] sm:$0xff]
        %v1078 = vld [vmem:[%s5 + $0xc0] sm:$0xff]
        %v1079 = vld [vmem:[%s5 + $0xc8] sm:$0xff]
        %v1080 = vld [vmem:[%s5 + $0xd0] sm:$0xff]
        %v1081 = vld [vmem:[%s5 + $0xd8] sm:$0xff]
        %v1082 = vld [vmem:[%s5 + $0xe0] sm:$0xff]
        %v1083 = vld [vmem:[%s5 + $0xe8] sm:$0xff]
        %v1084 = vld [vmem:[%s5 + $0xf0] sm:$0xff]
        %v1085 = vld [vmem:[%s5 + $0xf8] sm:$0xff]
        %1087 = vset.pattern.permute.xlu0 0
        %1088 = vperm.xlu0 %1087, %v1046
        %v1089 = vpop.permute.xlu0 %1088
        %1092 = vset.pattern.permute.xlu0 0
        %1093 = vperm.xlu0 %1092, %v1047
        %v1094 = vpop.permute.xlu0 %1093
        %v1096 = vmul.f32 %v1054, %v1089
        %v1097 = vmul.f32 %v1055, %v1089
        %v1098 = vmul.f32 %v1056, %v1089
        %v1099 = vmul.f32 %v1057, %v1089
        %v1100 = vmul.f32 %v1058, %v1089
        %v1101 = vmul.f32 %v1059, %v1089
        %v1102 = vmul.f32 %v1060, %v1089
        %v1103 = vmul.f32 %v1061, %v1089
        %v1104 = vmul.f32 %v1062, %v1089
        %v1105 = vmul.f32 %v1063, %v1089
        %v1106 = vmul.f32 %v1064, %v1089
        %v1107 = vmul.f32 %v1065, %v1089
        %v1108 = vmul.f32 %v1066, %v1089
        %v1109 = vmul.f32 %v1067, %v1089
        %v1110 = vmul.f32 %v1068, %v1089
        %v1111 = vmul.f32 %v1069, %v1089
        %v1112 = vmul.f32 %v1070, %v1094
        %v1113 = vmul.f32 %v1071, %v1094
        %v1114 = vmul.f32 %v1072, %v1094
        %v1115 = vmul.f32 %v1073, %v1094
        %v1116 = vmul.f32 %v1074, %v1094
        %v1117 = vmul.f32 %v1075, %v1094
        %v1118 = vmul.f32 %v1076, %v1094
        %v1119 = vmul.f32 %v1077, %v1094
        %v1120 = vmul.f32 %v1078, %v1094
        %v1121 = vmul.f32 %v1079, %v1094
        %v1122 = vmul.f32 %v1080, %v1094
        %v1123 = vmul.f32 %v1081, %v1094
        %v1124 = vmul.f32 %v1082, %v1094
        %v1125 = vmul.f32 %v1083, %v1094
        %v1126 = vmul.f32 %v1084, %v1094
        %v1127 = vmul.f32 %v1085, %v1094
        %1129 = vset.pattern.permute.xlu0 0
        %1130 = vperm.xlu0 %1129, %v1052
        %v1131 = vpop.permute.xlu0 %1130
        %1134 = vset.pattern.permute.xlu0 0
        %1135 = vperm.xlu0 %1134, %v1053
        %v1136 = vpop.permute.xlu0 %1135
        %v1138 = vadd.f32 %v1096, %v1131
        %v1139 = vadd.f32 %v1097, %v1131
        %v1140 = vadd.f32 %v1098, %v1131
        %v1141 = vadd.f32 %v1099, %v1131
        %v1142 = vadd.f32 %v1100, %v1131
        %v1143 = vadd.f32 %v1101, %v1131
        %v1144 = vadd.f32 %v1102, %v1131
        %v1145 = vadd.f32 %v1103, %v1131
        %v1146 = vadd.f32 %v1104, %v1131
        %v1147 = vadd.f32 %v1105, %v1131
        %v1148 = vadd.f32 %v1106, %v1131
        %v1149 = vadd.f32 %v1107, %v1131
        %v1150 = vadd.f32 %v1108, %v1131
        %v1151 = vadd.f32 %v1109, %v1131
        %v1152 = vadd.f32 %v1110, %v1131
        %v1153 = vadd.f32 %v1111, %v1131
        %v1154 = vadd.f32 %v1112, %v1136
        %v1155 = vadd.f32 %v1113, %v1136
        %v1156 = vadd.f32 %v1114, %v1136
        %v1157 = vadd.f32 %v1115, %v1136
        %v1158 = vadd.f32 %v1116, %v1136
        %v1159 = vadd.f32 %v1117, %v1136
        %v1160 = vadd.f32 %v1118, %v1136
        %v1161 = vadd.f32 %v1119, %v1136
        %v1162 = vadd.f32 %v1120, %v1136
        %v1163 = vadd.f32 %v1121, %v1136
        %v1164 = vadd.f32 %v1122, %v1136
        %v1165 = vadd.f32 %v1123, %v1136
        %v1166 = vadd.f32 %v1124, %v1136
        %v1167 = vadd.f32 %v1125, %v1136
        %v1168 = vadd.f32 %v1126, %v1136
        %v1169 = vadd.f32 %v1127, %v1136
        %1170 = vst [vmem:[%s5] sm:$0xff] %v1138
        %1171 = vst [vmem:[%s5 + $0x8] sm:$0xff] %v1139
        %1172 = vst [vmem:[%s5 + $0x10] sm:$0xff] %v1140
        %1173 = vst [vmem:[%s5 + $0x18] sm:$0xff] %v1141
        %1174 = vst [vmem:[%s5 + $0x20] sm:$0xff] %v1142
        %1175 = vst [vmem:[%s5 + $0x28] sm:$0xff] %v1143
        %1176 = vst [vmem:[%s5 + $0x30] sm:$0xff] %v1144
        %1177 = vst [vmem:[%s5 + $0x38] sm:$0xff] %v1145
        %1178 = vst [vmem:[%s5 + $0x40] sm:$0xff] %v1146
        %1179 = vst [vmem:[%s5 + $0x48] sm:$0xff] %v1147
        %1180 = vst [vmem:[%s5 + $0x50] sm:$0xff] %v1148
        %1181 = vst [vmem:[%s5 + $0x58] sm:$0xff] %v1149
        %1182 = vst [vmem:[%s5 + $0x60] sm:$0xff] %v1150
        %1183 = vst [vmem:[%s5 + $0x68] sm:$0xff] %v1151
        %1184 = vst [vmem:[%s5 + $0x70] sm:$0xff] %v1152
        %1185 = vst [vmem:[%s5 + $0x78] sm:$0xff] %v1153
        %1186 = vst [vmem:[%s5 + $0x80] sm:$0xff] %v1154
        %1187 = vst [vmem:[%s5 + $0x88] sm:$0xff] %v1155
        %1188 = vst [vmem:[%s5 + $0x90] sm:$0xff] %v1156
        %1189 = vst [vmem:[%s5 + $0x98] sm:$0xff] %v1157
        %1190 = vst [vmem:[%s5 + $0xa0] sm:$0xff] %v1158
        %1191 = vst [vmem:[%s5 + $0xa8] sm:$0xff] %v1159
        %1192 = vst [vmem:[%s5 + $0xb0] sm:$0xff] %v1160
        %1193 = vst [vmem:[%s5 + $0xb8] sm:$0xff] %v1161
        %1194 = vst [vmem:[%s5 + $0xc0] sm:$0xff] %v1162
        %1195 = vst [vmem:[%s5 + $0xc8] sm:$0xff] %v1163
        %1196 = vst [vmem:[%s5 + $0xd0] sm:$0xff] %v1164
        %1197 = vst [vmem:[%s5 + $0xd8] sm:$0xff] %v1165
        %1198 = vst [vmem:[%s5 + $0xe0] sm:$0xff] %v1166
        %1199 = vst [vmem:[%s5 + $0xe8] sm:$0xff] %v1167
        %1200 = vst [vmem:[%s5 + $0xf0] sm:$0xff] %v1168
        %1201 = vst [vmem:[%s5 + $0xf8] sm:$0xff] %v1169
      $region52: #{conv_classify_forward.3} parent=39 // pred_fallthru
        _
      // Predicated region
      $region53: #{conv_classify_forward.3} parent=39 // pred_check
        %p1202 = pneg %p139
      $region54: #{conv_classify_forward.3} parent=39 // pred_check_branch
        %1204 = sbr.rel (%p1202) target = $region56
      $region55: #{conv_classify_forward.3} parent=39 // pred_region
        _
      $region56: #{conv_classify_forward.3} parent=39 // pred_fallthru
        _
      // Predicated region
      $region57: #{conv_classify_forward.3} parent=39 // pred_check
        %p1205 = pneg %p139
      $region58: #{conv_classify_forward.3} parent=39 // pred_check_branch
        %1207 = sbr.rel (%p1205) target = $region60
      $region59: #{conv_classify_forward.3} parent=39 // pred_region
        _
      $region60: #{conv_classify_forward.3} parent=39 // pred_fallthru
        _
    $region40: #{conv_classify_forward.3} parent=5 // pred_fallthru
      _
    %p1208 = scmp.le.s32.totalorder 2, %s11
    // Predicated region
    $region61: #{conv_classify_forward.3} parent=5 // pred_check
      %p1209 = pneg %p1208
    $region62: #{conv_classify_forward.3} parent=5 // pred_check_branch
      %1211 = sbr.rel (%p1209) target = $region64
    $region63: #{conv_classify_forward.3} parent=5 // pred_region
      %s1212 = ssub.s32 %s11, 2
    $region64: #{conv_classify_forward.3} parent=5 // pred_fallthru
      _
  $region6: #{conv_classify_forward.3} parent=0 // loop_footer
    %s15 = sadd.s32 1, %s11
  $region7: #{conv_classify_forward.3} parent=0 // loop_footer_branch
    %10 = sbr.rel target = $region3
  $region8: #{conv_classify_forward.3} parent=0 // loop_exit
    _

// kernel: conv_classify_forward.4
$region0: #{conv_classify_forward.4}
  #allocation0 [shape = 'u32[]', space=smem, size = 0x4, offset = 0x4, fixed_abs, tag = 'smem constant byte address 0x4 - core index']
  #allocation1 [shape = 'u32[144,128]{1,0:T(1,128)}', space=vmem, size = 0x12000, scoped, tag = 'internal scratch']
  #allocation2 [shape = 'f32[32,1]{1,0:T(8,128)}', space=vmem, size = 0x4000, scoped, tag = 'scratch operand']
  #allocation3 [shape = 'f32[32,1]{1,0:T(8,128)}', space=vmem, size = 0x4000, scoped, tag = 'scratch operand']
  %s0 = inlined_call_operand.vmem [shape: bf16[4,400,512], index: 0, kind: input, shape index: {}]
  %s1 = inlined_call_operand.vmem [shape: bf16[32,400], index: 1, kind: input, shape index: {}]
  %s2 = inlined_call_operand.vmem [shape: f32[32,1], index: 2, kind: input, shape index: {}]
  %s3 = inlined_call_operand.vmem [shape: f32[32,1], index: 3, kind: input, shape index: {}]
  %s4 = inlined_call_operand.vmem [shape: f32[32,1], index: 4, kind: input, shape index: {}]
  %s5 = inlined_call_operand.vmem [shape: f32[32,512], index: 5, kind: output, shape index: {}]
  %s6 = sld [smem:[#allocation0]]
  $region65: #{conv_classify_forward.4} parent=0
    _
  %s8 = ssub.s32 1, %s6
  %s9 = scalar_select 0, %s8, %s6
  loop: start=0, step=1, limit=6
  $region2: #{conv_classify_forward.4} parent=0 // loop_pre_header
    _
  $region3: #{conv_classify_forward.4} parent=0 // loop_header
    %s11 = sphi 0, %s15
    %p12 = scmp.ge.s32.totalorder %s11, 6
    %s21 = sphi 0, %s23
    %s24 = sphi 0, %s21
    %s25 = sphi 0, %s24
    %s41 = sphi 0, %s25
    %s45 = sphi 0, %s45
    %s47 = sphi 0, %s45
    %s48 = sphi 0, %s47
    %s62 = sphi 0, %s48
    %s66 = sphi 0, %s66
    %s68 = sphi 0, %s66
    %s69 = sphi 0, %s68
    %s83 = sphi 0, %s69
    %s87 = sphi 0, %s87
    %s89 = sphi 0, %s87
    %s90 = sphi 0, %s89
    %s104 = sphi 0, %s90
    %s108 = sphi 0, %s108
    %s110 = sphi 0, %s108
    %s111 = sphi 0, %s110
    %s125 = sphi 0, %s111
    %s129 = sphi 0, %s129
    %s131 = sphi 0, %s129
    %s132 = sphi 0, %s131
    %s146 = sphi 0, %s132
  $region4: #{conv_classify_forward.4} parent=0 // loop_header_branch
    %14 = sbr.rel (%p12) target = $region8
  $region5: #{conv_classify_forward.4} parent=0 // loop_body
    %s16 = ssub.s32 %s11, 1
    %s17 = ssub.s32 %s11, 2
    %s18 = sadd.s32 %s11, 1
    %s19 = ssub.s32 %s11, %s18
    %p20 = scmp.eq.s32.totalorder %s19, 0
    %s22 = sadd.s32 %s21, 1
    %s23 = scalar_select %p20, %s21, %s22
    %p26 = pneg %p20
    %p27 = scmp.eq.s32.totalorder %s11, 3
    %p28 = por %p26, %p27
    %p29 = scmp.ne.s32.totalorder %s21, %s24
    %p30 = scmp.eq.s32.totalorder %s11, 0
    %p31 = por %p29, %p30
    %p32 = scmp.ne.s32.totalorder %s21, %s24
    %p33 = scmp.eq.s32.totalorder %s16, 3
    %p34 = por %p32, %p33
    %p35 = scmp.ne.s32.totalorder %s24, %s25
    %p36 = scmp.eq.s32.totalorder %s16, 0
    %p37 = por %p35, %p36
    %p38 = scmp.ne.s32.totalorder %s24, %s25
    %p39 = scmp.eq.s32.totalorder %s17, 3
    %p40 = por %p38, %p39
    %p42 = scmp.ne.s32.totalorder %s25, %s41
    %p43 = scmp.eq.s32.totalorder %s17, 0
    %p44 = por %p42, %p43
    %s46 = sadd.s32 %s45, 1
    %p49 = scmp.eq.s32.totalorder %s11, 3
    %p50 = scmp.ne.s32.totalorder %s45, %s47
    %p51 = scmp.eq.s32.totalorder %s11, 0
    %p52 = por %p50, %p51
    %p53 = scmp.ne.s32.totalorder %s45, %s47
    %p54 = scmp.eq.s32.totalorder %s16, 3
    %p55 = por %p53, %p54
    %p56 = scmp.ne.s32.totalorder %s47, %s48
    %p57 = scmp.eq.s32.totalorder %s16, 0
    %p58 = por %p56, %p57
    %p59 = scmp.ne.s32.totalorder %s47, %s48
    %p60 = scmp.eq.s32.totalorder %s17, 3
    %p61 = por %p59, %p60
    %p63 = scmp.ne.s32.totalorder %s48, %s62
    %p64 = scmp.eq.s32.totalorder %s17, 0
    %p65 = por %p63, %p64
    %s67 = sadd.s32 %s66, 1
    %p70 = scmp.eq.s32.totalorder %s11, 3
    %p71 = scmp.ne.s32.totalorder %s66, %s68
    %p72 = scmp.eq.s32.totalorder %s11, 0
    %p73 = por %p71, %p72
    %p74 = scmp.ne.s32.totalorder %s66, %s68
    %p75 = scmp.eq.s32.totalorder %s16, 3
    %p76 = por %p74, %p75
    %p77 = scmp.ne.s32.totalorder %s68, %s69
    %p78 = scmp.eq.s32.totalorder %s16, 0
    %p79 = por %p77, %p78
    %p80 = scmp.ne.s32.totalorder %s68, %s69
    %p81 = scmp.eq.s32.totalorder %s17, 3
    %p82 = por %p80, %p81
    %p84 = scmp.ne.s32.totalorder %s69, %s83
    %p85 = scmp.eq.s32.totalorder %s17, 0
    %p86 = por %p84, %p85
    %s88 = sadd.s32 %s87, 1
    %p91 = scmp.eq.s32.totalorder %s11, 3
    %p92 = scmp.ne.s32.totalorder %s87, %s89
    %p93 = scmp.eq.s32.totalorder %s11, 0
    %p94 = por %p92, %p93
    %p95 = scmp.ne.s32.totalorder %s87, %s89
    %p96 = scmp.eq.s32.totalorder %s16, 3
    %p97 = por %p95, %p96
    %p98 = scmp.ne.s32.totalorder %s89, %s90
    %p99 = scmp.eq.s32.totalorder %s16, 0
    %p100 = por %p98, %p99
    %p101 = scmp.ne.s32.totalorder %s89, %s90
    %p102 = scmp.eq.s32.totalorder %s17, 3
    %p103 = por %p101, %p102
    %p105 = scmp.ne.s32.totalorder %s90, %s104
    %p106 = scmp.eq.s32.totalorder %s17, 0
    %p107 = por %p105, %p106
    %s109 = sadd.s32 %s108, 1
    %p112 = scmp.eq.s32.totalorder %s11, 3
    %p113 = scmp.ne.s32.totalorder %s108, %s110
    %p114 = scmp.eq.s32.totalorder %s11, 0
    %p115 = por %p113, %p114
    %p116 = scmp.ne.s32.totalorder %s108, %s110
    %p117 = scmp.eq.s32.totalorder %s16, 3
    %p118 = por %p116, %p117
    %p119 = scmp.ne.s32.totalorder %s110, %s111
    %p120 = scmp.eq.s32.totalorder %s16, 0
    %p121 = por %p119, %p120
    %p122 = scmp.ne.s32.totalorder %s110, %s111
    %p123 = scmp.eq.s32.totalorder %s17, 3
    %p124 = por %p122, %p123
    %p126 = scmp.ne.s32.totalorder %s111, %s125
    %p127 = scmp.eq.s32.totalorder %s17, 0
    %p128 = por %p126, %p127
    %s130 = sadd.s32 %s129, 1
    %p133 = scmp.eq.s32.totalorder %s11, 3
    %p134 = scmp.ne.s32.totalorder %s129, %s131
    %p135 = scmp.eq.s32.totalorder %s11, 0
    %p136 = por %p134, %p135
    %p137 = scmp.ne.s32.totalorder %s129, %s131
    %p138 = scmp.eq.s32.totalorder %s16, 3
    %p139 = por %p137, %p138
    %p140 = scmp.ne.s32.totalorder %s131, %s132
    %p141 = scmp.eq.s32.totalorder %s16, 0
    %p142 = por %p140, %p141
    %p143 = scmp.ne.s32.totalorder %s131, %s132
    %p144 = scmp.eq.s32.totalorder %s17, 3
    %p145 = por %p143, %p144
    %p147 = scmp.ne.s32.totalorder %s132, %s146
    %p148 = scmp.eq.s32.totalorder %s17, 0
    %p149 = por %p147, %p148
    %p150 = scmp.le.s32.totalorder 1, %s11
    %p151 = scmp.lt.s32.totalorder %s11, 5
    %p152 = pnand %p150, %p151
    %p153 = pneg %p152
    // Predicated region
    $region9: #{conv_classify_forward.4} parent=5 // pred_check
      _
    $region10: #{conv_classify_forward.4} parent=5 // pred_check_branch
      %155 = sbr.rel (%p152) target = $region12
    $region11: #{conv_classify_forward.4} parent=5 // pred_region
      %s156 = ssub.s32 %s11, 1
      // Predicated region
      $region13: #{conv_classify_forward.4} parent=11 // pred_check
        %p157 = pneg %p58
      $region14: #{conv_classify_forward.4} parent=11 // pred_check_branch
        %159 = sbr.rel (%p157) target = $region16
      $region15: #{conv_classify_forward.4} parent=11 // pred_region
        _
      $region16: #{conv_classify_forward.4} parent=11 // pred_fallthru
        _
      // Predicated region
      $region17: #{conv_classify_forward.4} parent=11 // pred_check
        %p160 = pneg %p79
      $region18: #{conv_classify_forward.4} parent=11 // pred_check_branch
        %162 = sbr.rel (%p160) target = $region20
      $region19: #{conv_classify_forward.4} parent=11 // pred_region
        _
      $region20: #{conv_classify_forward.4} parent=11 // pred_fallthru
        _
      // Predicated region
      $region21: #{conv_classify_forward.4} parent=11 // pred_check
        %p163 = pneg %p100
      $region22: #{conv_classify_forward.4} parent=11 // pred_check_branch
        %165 = sbr.rel (%p163) target = $region24
      $region23: #{conv_classify_forward.4} parent=11 // pred_region
        _
      $region24: #{conv_classify_forward.4} parent=11 // pred_fallthru
        _
      // Predicated region
      $region25: #{conv_classify_forward.4} parent=11 // pred_check
        %p166 = pneg %p121
      $region26: #{conv_classify_forward.4} parent=11 // pred_check_branch
        %168 = sbr.rel (%p166) target = $region28
      $region27: #{conv_classify_forward.4} parent=11 // pred_region
        _
      $region28: #{conv_classify_forward.4} parent=11 // pred_fallthru
        _
    $region12: #{conv_classify_forward.4} parent=5 // pred_fallthru
      _
    %p169 = scmp.lt.s32.totalorder %s11, 4
    // Predicated region
    $region29: #{conv_classify_forward.4} parent=5 // pred_check
      %p170 = pneg %p169
    $region30: #{conv_classify_forward.4} parent=5 // pred_check_branch
      %172 = sbr.rel (%p170) target = $region32
    $region31: #{conv_classify_forward.4} parent=5 // pred_region
      // Predicated region
      $region33: #{conv_classify_forward.4} parent=31 // pred_check
        %p173 = pneg %p31
      $region34: #{conv_classify_forward.4} parent=31 // pred_check_branch
        %175 = sbr.rel (%p173) target = $region36
      $region35: #{conv_classify_forward.4} parent=31 // pred_region
        %p176 = scmp.lt.s32.totalorder %s11, 3
        %s177 = scalar_select %p176, %s11, 3
        %s178 = smul.addr %s177, 200
        %s179 = smul.addr %s178, 4
        %s180 = scalar_lea.vmem %s0, %s179
      $region36: #{conv_classify_forward.4} parent=31 // pred_fallthru
        _
    $region32: #{conv_classify_forward.4} parent=5 // pred_fallthru
      _
    %p181 = scmp.le.s32.totalorder 1, %s11
    %p182 = scmp.lt.s32.totalorder %s11, 5
    %p183 = pnand %p181, %p182
    %p184 = pneg %p183
    // Predicated region
    $region37: #{conv_classify_forward.4} parent=5 // pred_check
      _
    $region38: #{conv_classify_forward.4} parent=5 // pred_check_branch
      %186 = sbr.rel (%p183) target = $region40
    $region39: #{conv_classify_forward.4} parent=5 // pred_region
      %s187 = ssub.s32 %s11, 1
      %p188 = scmp.lt.s32.totalorder %s16, 3
      %s189 = scalar_select %p188, %s16, 3
      %s190 = smul.addr %s189, 200
      %s191 = smul.addr %s190, 4
      %s192 = scalar_lea.vmem %s0, %s191
      %p193 = pneg %p37
      %p194 = pneg %p34
      %p195 = pneg %p58
      %p196 = pneg %p55
      %p197 = pneg %p79
      %p198 = pneg %p76
      %p199 = pneg %p100
      %p200 = pneg %p97
      %p201 = pneg %p121
      %p202 = pneg %p118
      %p203 = pneg %p142
      %p204 = pneg %p139
      %p205 = scmp.lt.s32.totalorder %s16, 3
      %s206 = scalar_select %p205, %s16, 3
      %s207 = smul.addr %s206, 200
      %s208 = smul.addr %s207, 4
      %s209 = scalar_lea.vmem %s0, %s208
      %v211 = vld [vmem:[%s1] sm:$0xff]
      %v212 = vld [vmem:[%s1 + $0x8] sm:$0xff]
      %v213 = vld [vmem:[%s1 + $0x10] sm:$0xff]
      %v214 = vld [vmem:[%s1 + $0x18] sm:$0xff]
      %v215 = vld [vmem:[%s1 + $0x20] sm:$0xff]
      %v216 = vld [vmem:[%s1 + $0x28] sm:$0xff]
      %v217 = vld [vmem:[%s1 + $0x30] sm:$0xff]
      %v218 = vld [vmem:[%s1 + $0x38] sm:$0xff]
      %v219 = vld [vmem:[%s209] sm:$0xff]
      %v220 = vld [vmem:[%s209 + $0x8] sm:$0xff]
      %v221 = vld [vmem:[%s209 + $0x10] sm:$0xff]
      %v222 = vld [vmem:[%s209 + $0x18] sm:$0xff]
      %v223 = vld [vmem:[%s209 + $0x20] sm:$0xff]
      %v224 = vld [vmem:[%s209 + $0x28] sm:$0xff]
      %v225 = vld [vmem:[%s209 + $0x30] sm:$0xff]
      %v226 = vld [vmem:[%s209 + $0x38] sm:$0xff]
      %v227 = vld [vmem:[%s209 + $0x40] sm:$0xff]
      %v228 = vld [vmem:[%s209 + $0x48] sm:$0xff]
      %v229 = vld [vmem:[%s209 + $0x50] sm:$0xff]
      %v230 = vld [vmem:[%s209 + $0x58] sm:$0xff]
      %v231 = vld [vmem:[%s209 + $0x60] sm:$0xff]
      %v232 = vld [vmem:[%s209 + $0x68] sm:$0xff]
      %v233 = vld [vmem:[%s209 + $0x70] sm:$0xff]
      %v234 = vld [vmem:[%s209 + $0x78] sm:$0xff]
      %v235 = vld [vmem:[%s209 + $0x80] sm:$0xff]
      %v236 = vld [vmem:[%s209 + $0x88] sm:$0xff]
      %v237 = vld [vmem:[%s209 + $0x90] sm:$0xff]
      %v238 = vld [vmem:[%s209 + $0x98] sm:$0xff]
      %v239 = vld [vmem:[%s209 + $0xa0] sm:$0xff]
      %v240 = vld [vmem:[%s209 + $0xa8] sm:$0xff]
      %v241 = vld [vmem:[%s209 + $0xb0] sm:$0xff]
      %v242 = vld [vmem:[%s209 + $0xb8] sm:$0xff]
      %v243 = vld [vmem:[%s209 + $0xc0] sm:$0xff]
      %v244 = vld [vmem:[%s209 + $0xc8] sm:$0xff]
      %v245 = vld [vmem:[%s209 + $0xd0] sm:$0xff]
      %v246 = vld [vmem:[%s209 + $0xd8] sm:$0xff]
      %v247 = vld [vmem:[%s209 + $0xe0] sm:$0xff]
      %v248 = vld [vmem:[%s209 + $0xe8] sm:$0xff]
      %v249 = vld [vmem:[%s209 + $0xf0] sm:$0xff]
      %v250 = vld [vmem:[%s209 + $0xf8] sm:$0xff]
      %v251 = vld [vmem:[%s209 + $0x100] sm:$0xff]
      %v252 = vld [vmem:[%s209 + $0x108] sm:$0xff]
      %v253 = vld [vmem:[%s209 + $0x110] sm:$0xff]
      %v254 = vld [vmem:[%s209 + $0x118] sm:$0xff]
      %v255 = vld [vmem:[%s209 + $0x120] sm:$0xff]
      %v256 = vld [vmem:[%s209 + $0x128] sm:$0xff]
      %v257 = vld [vmem:[%s209 + $0x130] sm:$0xff]
      %v258 = vld [vmem:[%s209 + $0x138] sm:$0xff]
      %v259 = vld [vmem:[%s209 + $0x140] sm:$0xff]
      %v260 = vld [vmem:[%s209 + $0x148] sm:$0xff]
      %v261 = vld [vmem:[%s209 + $0x150] sm:$0xff]
      %v262 = vld [vmem:[%s209 + $0x158] sm:$0xff]
      %v263 = vld [vmem:[%s209 + $0x160] sm:$0xff]
      %v264 = vld [vmem:[%s209 + $0x168] sm:$0xff]
      %v265 = vld [vmem:[%s209 + $0x170] sm:$0xff]
      %v266 = vld [vmem:[%s209 + $0x178] sm:$0xff]
      %v267 = vld [vmem:[%s209 + $0x180] sm:$0xff]
      %v268 = vld [vmem:[%s209 + $0x188] sm:$0xff]
      %v269 = vld [vmem:[%s209 + $0x190] sm:$0xff]
      %v270 = vld [vmem:[%s209 + $0x198] sm:$0xff]
      %v271 = vld [vmem:[%s209 + $0x1a0] sm:$0xff]
      %v272 = vld [vmem:[%s209 + $0x1a8] sm:$0xff]
      %v273 = vld [vmem:[%s209 + $0x1b0] sm:$0xff]
      %v274 = vld [vmem:[%s209 + $0x1b8] sm:$0xff]
      %v275 = vld [vmem:[%s209 + $0x1c0] sm:$0xff]
      %v276 = vld [vmem:[%s209 + $0x1c8] sm:$0xff]
      %v277 = vld [vmem:[%s209 + $0x1d0] sm:$0xff]
      %v278 = vld [vmem:[%s209 + $0x1d8] sm:$0xff]
      %v279 = vld [vmem:[%s209 + $0x1e0] sm:$0xff]
      %v280 = vld [vmem:[%s209 + $0x1e8] sm:$0xff]
      %v281 = vld [vmem:[%s209 + $0x1f0] sm:$0xff]
      %v282 = vld [vmem:[%s209 + $0x1f8] sm:$0xff]
      %v283 = vld [vmem:[%s209 + $0x200] sm:$0xff]
      %v284 = vld [vmem:[%s209 + $0x208] sm:$0xff]
      %v285 = vld [vmem:[%s209 + $0x210] sm:$0xff]
      %v286 = vld [vmem:[%s209 + $0x218] sm:$0xff]
      %v287 = vld [vmem:[%s209 + $0x220] sm:$0xff]
      %v288 = vld [vmem:[%s209 + $0x228] sm:$0xff]
      %v289 = vld [vmem:[%s209 + $0x230] sm:$0xff]
      %v290 = vld [vmem:[%s209 + $0x238] sm:$0xff]
      %v291 = vld [vmem:[%s209 + $0x240] sm:$0xff]
      %v292 = vld [vmem:[%s209 + $0x248] sm:$0xff]
      %v293 = vld [vmem:[%s209 + $0x250] sm:$0xff]
      %v294 = vld [vmem:[%s209 + $0x258] sm:$0xff]
      %v295 = vld [vmem:[%s209 + $0x260] sm:$0xff]
      %v296 = vld [vmem:[%s209 + $0x268] sm:$0xff]
      %v297 = vld [vmem:[%s209 + $0x270] sm:$0xff]
      %v298 = vld [vmem:[%s209 + $0x278] sm:$0xff]
      %v299 = vld [vmem:[%s209 + $0x280] sm:$0xff]
      %v300 = vld [vmem:[%s209 + $0x288] sm:$0xff]
      %v301 = vld [vmem:[%s209 + $0x290] sm:$0xff]
      %v302 = vld [vmem:[%s209 + $0x298] sm:$0xff]
      %v303 = vld [vmem:[%s209 + $0x2a0] sm:$0xff]
      %v304 = vld [vmem:[%s209 + $0x2a8] sm:$0xff]
      %v305 = vld [vmem:[%s209 + $0x2b0] sm:$0xff]
      %v306 = vld [vmem:[%s209 + $0x2b8] sm:$0xff]
      %v307 = vld [vmem:[%s209 + $0x2c0] sm:$0xff]
      %v308 = vld [vmem:[%s209 + $0x2c8] sm:$0xff]
      %v309 = vld [vmem:[%s209 + $0x2d0] sm:$0xff]
      %v310 = vld [vmem:[%s209 + $0x2d8] sm:$0xff]
      %v311 = vld [vmem:[%s209 + $0x2e0] sm:$0xff]
      %v312 = vld [vmem:[%s209 + $0x2e8] sm:$0xff]
      %v313 = vld [vmem:[%s209 + $0x2f0] sm:$0xff]
      %v314 = vld [vmem:[%s209 + $0x2f8] sm:$0xff]
      %v315 = vld [vmem:[%s209 + $0x300] sm:$0xff]
      %v316 = vld [vmem:[%s209 + $0x308] sm:$0xff]
      %v317 = vld [vmem:[%s209 + $0x310] sm:$0xff]
      %v318 = vld [vmem:[%s209 + $0x318] sm:$0xff]
      %v319 = vld [vmem:[%s2] sm:$0xff]
      %v320 = vld [vmem:[%s2 + $0x8] sm:$0xff]
      %v321 = vld [vmem:[%s2 + $0x10] sm:$0xff]
      %v322 = vld [vmem:[%s2 + $0x18] sm:$0xff]
      %324 = vset.pattern.permute.xlu0 0
      %325 = vperm.xlu0 %324, %v319
      %v326 = vpop.permute.xlu0 %325
      %329 = vset.pattern.permute.xlu0 0
      %330 = vperm.xlu0 %329, %v320
      %v331 = vpop.permute.xlu0 %330
      %334 = vset.pattern.permute.xlu0 0
      %335 = vperm.xlu0 %334, %v321
      %v336 = vpop.permute.xlu0 %335
      %339 = vset.pattern.permute.xlu0 0
      %340 = vperm.xlu0 %339, %v322
      %v341 = vpop.permute.xlu0 %340
      %v351 = vunpack.c.l.b16 %v211
      %v352 = vunpack.c.h.b16 %v211
      %v353 = vunpack.c.l.b16 %v212
      %v354 = vunpack.c.h.b16 %v212
      %v355 = vunpack.c.l.b16 %v213
      %v356 = vunpack.c.h.b16 %v213
      %v357 = vunpack.c.l.b16 %v214
      %v358 = vunpack.c.h.b16 %v214
      %v359 = vunpack.c.l.b16 %v215
      %v360 = vunpack.c.h.b16 %v215
      %v361 = vunpack.c.l.b16 %v216
      %v362 = vunpack.c.h.b16 %v216
      %v363 = vunpack.c.l.b16 %v217
      %v364 = vunpack.c.h.b16 %v217
      %v365 = vunpack.c.l.b16 %v218
      %v366 = vunpack.c.h.b16 %v218
      %v367 = vpack.c.b16 %v355, %v351
      %v368 = vpack.c.b16 %v356, %v352
      %v369 = vpack.c.b16 %v357, %v353
      %v370 = vpack.c.b16 %v358, %v354
      %v371 = vpack.c.b16 %v363, %v359
      %v372 = vpack.c.b16 %v364, %v360
      %v373 = vpack.c.b16 %v365, %v361
      %v374 = vpack.c.b16 %v366, %v362
      %v481 = vunpack.c.l.b16 %v219
      %v482 = vunpack.c.h.b16 %v219
      %v483 = vunpack.c.l.b16 %v220
      %v484 = vunpack.c.h.b16 %v220
      %v485 = vunpack.c.l.b16 %v221
      %v486 = vunpack.c.h.b16 %v221
      %v487 = vunpack.c.l.b16 %v222
      %v488 = vunpack.c.h.b16 %v222
      %v489 = vunpack.c.l.b16 %v223
      %v490 = vunpack.c.h.b16 %v223
      %v491 = vunpack.c.l.b16 %v224
      %v492 = vunpack.c.h.b16 %v224
      %v493 = vunpack.c.l.b16 %v225
      %v494 = vunpack.c.h.b16 %v225
      %v495 = vunpack.c.l.b16 %v226
      %v496 = vunpack.c.h.b16 %v226
      %v497 = vunpack.c.l.b16 %v227
      %v498 = vunpack.c.h.b16 %v227
      %v499 = vunpack.c.l.b16 %v228
      %v500 = vunpack.c.h.b16 %v228
      %v501 = vunpack.c.l.b16 %v229
      %v502 = vunpack.c.h.b16 %v229
      %v503 = vunpack.c.l.b16 %v230
      %v504 = vunpack.c.h.b16 %v230
      %v505 = vunpack.c.l.b16 %v231
      %v506 = vunpack.c.h.b16 %v231
      %v507 = vunpack.c.l.b16 %v232
      %v508 = vunpack.c.h.b16 %v232
      %v509 = vunpack.c.l.b16 %v233
      %v510 = vunpack.c.h.b16 %v233
      %v511 = vunpack.c.l.b16 %v234
      %v512 = vunpack.c.h.b16 %v234
      %v513 = vunpack.c.l.b16 %v235
      %v514 = vunpack.c.h.b16 %v235
      %v515 = vunpack.c.l.b16 %v236
      %v516 = vunpack.c.h.b16 %v236
      %v517 = vunpack.c.l.b16 %v237
      %v518 = vunpack.c.h.b16 %v237
      %v519 = vunpack.c.l.b16 %v238
      %v520 = vunpack.c.h.b16 %v238
      %v521 = vunpack.c.l.b16 %v239
      %v522 = vunpack.c.h.b16 %v239
      %v523 = vunpack.c.l.b16 %v240
      %v524 = vunpack.c.h.b16 %v240
      %v525 = vunpack.c.l.b16 %v241
      %v526 = vunpack.c.h.b16 %v241
      %v527 = vunpack.c.l.b16 %v242
      %v528 = vunpack.c.h.b16 %v242
      %v529 = vunpack.c.l.b16 %v243
      %v530 = vunpack.c.h.b16 %v243
      %v531 = vunpack.c.l.b16 %v244
      %v532 = vunpack.c.h.b16 %v244
      %v533 = vunpack.c.l.b16 %v245
      %v534 = vunpack.c.h.b16 %v245
      %v535 = vunpack.c.l.b16 %v246
      %v536 = vunpack.c.h.b16 %v246
      %v537 = vunpack.c.l.b16 %v247
      %v538 = vunpack.c.h.b16 %v247
      %v539 = vunpack.c.l.b16 %v248
      %v540 = vunpack.c.h.b16 %v248
      %v541 = vunpack.c.l.b16 %v249
      %v542 = vunpack.c.h.b16 %v249
      %v543 = vunpack.c.l.b16 %v250
      %v544 = vunpack.c.h.b16 %v250
      %v545 = vunpack.c.l.b16 %v251
      %v546 = vunpack.c.h.b16 %v251
      %v547 = vunpack.c.l.b16 %v252
      %v548 = vunpack.c.h.b16 %v252
      %v549 = vunpack.c.l.b16 %v253
      %v550 = vunpack.c.h.b16 %v253
      %v551 = vunpack.c.l.b16 %v254
      %v552 = vunpack.c.h.b16 %v254
      %v553 = vunpack.c.l.b16 %v255
      %v554 = vunpack.c.h.b16 %v255
      %v555 = vunpack.c.l.b16 %v256
      %v556 = vunpack.c.h.b16 %v256
      %v557 = vunpack.c.l.b16 %v257
      %v558 = vunpack.c.h.b16 %v257
      %v559 = vunpack.c.l.b16 %v258
      %v560 = vunpack.c.h.b16 %v258
      %v561 = vunpack.c.l.b16 %v259
      %v562 = vunpack.c.h.b16 %v259
      %v563 = vunpack.c.l.b16 %v260
      %v564 = vunpack.c.h.b16 %v260
      %v565 = vunpack.c.l.b16 %v261
      %v566 = vunpack.c.h.b16 %v261
      %v567 = vunpack.c.l.b16 %v262
      %v568 = vunpack.c.h.b16 %v262
      %v569 = vunpack.c.l.b16 %v263
      %v570 = vunpack.c.h.b16 %v263
      %v571 = vunpack.c.l.b16 %v264
      %v572 = vunpack.c.h.b16 %v264
      %v573 = vunpack.c.l.b16 %v265
      %v574 = vunpack.c.h.b16 %v265
      %v575 = vunpack.c.l.b16 %v266
      %v576 = vunpack.c.h.b16 %v266
      %v577 = vunpack.c.l.b16 %v267
      %v578 = vunpack.c.h.b16 %v267
      %v579 = vunpack.c.l.b16 %v268
      %v580 = vunpack.c.h.b16 %v268
      %v581 = vunpack.c.l.b16 %v269
      %v582 = vunpack.c.h.b16 %v269
      %v583 = vunpack.c.l.b16 %v270
      %v584 = vunpack.c.h.b16 %v270
      %v585 = vunpack.c.l.b16 %v271
      %v586 = vunpack.c.h.b16 %v271
      %v587 = vunpack.c.l.b16 %v272
      %v588 = vunpack.c.h.b16 %v272
      %v589 = vunpack.c.l.b16 %v273
      %v590 = vunpack.c.h.b16 %v273
      %v591 = vunpack.c.l.b16 %v274
      %v592 = vunpack.c.h.b16 %v274
      %v593 = vunpack.c.l.b16 %v275
      %v594 = vunpack.c.h.b16 %v275
      %v595 = vunpack.c.l.b16 %v276
      %v596 = vunpack.c.h.b16 %v276
      %v597 = vunpack.c.l.b16 %v277
      %v598 = vunpack.c.h.b16 %v277
      %v599 = vunpack.c.l.b16 %v278
      %v600 = vunpack.c.h.b16 %v278
      %v601 = vunpack.c.l.b16 %v279
      %v602 = vunpack.c.h.b16 %v279
      %v603 = vunpack.c.l.b16 %v280
      %v604 = vunpack.c.h.b16 %v280
      %v605 = vunpack.c.l.b16 %v281
      %v606 = vunpack.c.h.b16 %v281
      %v607 = vunpack.c.l.b16 %v282
      %v608 = vunpack.c.h.b16 %v282
      %v609 = vunpack.c.l.b16 %v283
      %v610 = vunpack.c.h.b16 %v283
      %v611 = vunpack.c.l.b16 %v284
      %v612 = vunpack.c.h.b16 %v284
      %v613 = vunpack.c.l.b16 %v285
      %v614 = vunpack.c.h.b16 %v285
      %v615 = vunpack.c.l.b16 %v286
      %v616 = vunpack.c.h.b16 %v286
      %v617 = vunpack.c.l.b16 %v287
      %v618 = vunpack.c.h.b16 %v287
      %v619 = vunpack.c.l.b16 %v288
      %v620 = vunpack.c.h.b16 %v288
      %v621 = vunpack.c.l.b16 %v289
      %v622 = vunpack.c.h.b16 %v289
      %v623 = vunpack.c.l.b16 %v290
      %v624 = vunpack.c.h.b16 %v290
      %v625 = vunpack.c.l.b16 %v291
      %v626 = vunpack.c.h.b16 %v291
      %v627 = vunpack.c.l.b16 %v292
      %v628 = vunpack.c.h.b16 %v292
      %v629 = vunpack.c.l.b16 %v293
      %v630 = vunpack.c.h.b16 %v293
      %v631 = vunpack.c.l.b16 %v294
      %v632 = vunpack.c.h.b16 %v294
      %v633 = vunpack.c.l.b16 %v295
      %v634 = vunpack.c.h.b16 %v295
      %v635 = vunpack.c.l.b16 %v296
      %v636 = vunpack.c.h.b16 %v296
      %v637 = vunpack.c.l.b16 %v297
      %v638 = vunpack.c.h.b16 %v297
      %v639 = vunpack.c.l.b16 %v298
      %v640 = vunpack.c.h.b16 %v298
      %v641 = vunpack.c.l.b16 %v299
      %v642 = vunpack.c.h.b16 %v299
      %v643 = vunpack.c.l.b16 %v300
      %v644 = vunpack.c.h.b16 %v300
      %v645 = vunpack.c.l.b16 %v301
      %v646 = vunpack.c.h.b16 %v301
      %v647 = vunpack.c.l.b16 %v302
      %v648 = vunpack.c.h.b16 %v302
      %v649 = vunpack.c.l.b16 %v303
      %v650 = vunpack.c.h.b16 %v303
      %v651 = vunpack.c.l.b16 %v304
      %v652 = vunpack.c.h.b16 %v304
      %v653 = vunpack.c.l.b16 %v305
      %v654 = vunpack.c.h.b16 %v305
      %v655 = vunpack.c.l.b16 %v306
      %v656 = vunpack.c.h.b16 %v306
      %v657 = vunpack.c.l.b16 %v307
      %v658 = vunpack.c.h.b16 %v307
      %v659 = vunpack.c.l.b16 %v308
      %v660 = vunpack.c.h.b16 %v308
      %v661 = vunpack.c.l.b16 %v309
      %v662 = vunpack.c.h.b16 %v309
      %v663 = vunpack.c.l.b16 %v310
      %v664 = vunpack.c.h.b16 %v310
      %v665 = vunpack.c.l.b16 %v311
      %v666 = vunpack.c.h.b16 %v311
      %v667 = vunpack.c.l.b16 %v312
      %v668 = vunpack.c.h.b16 %v312
      %v669 = vunpack.c.l.b16 %v313
      %v670 = vunpack.c.h.b16 %v313
      %v671 = vunpack.c.l.b16 %v314
      %v672 = vunpack.c.h.b16 %v314
      %v673 = vunpack.c.l.b16 %v315
      %v674 = vunpack.c.h.b16 %v315
      %v675 = vunpack.c.l.b16 %v316
      %v676 = vunpack.c.h.b16 %v316
      %v677 = vunpack.c.l.b16 %v317
      %v678 = vunpack.c.h.b16 %v317
      %v679 = vunpack.c.l.b16 %v318
      %v680 = vunpack.c.h.b16 %v318
      %v681 = vpack.c.b16 %v485, %v481
      %v682 = vpack.c.b16 %v486, %v482
      %v683 = vpack.c.b16 %v487, %v483
      %v684 = vpack.c.b16 %v488, %v484
      %v685 = vpack.c.b16 %v493, %v489
      %v686 = vpack.c.b16 %v494, %v490
      %v687 = vpack.c.b16 %v495, %v491
      %v688 = vpack.c.b16 %v496, %v492
      %v689 = vpack.c.b16 %v501, %v497
      %v690 = vpack.c.b16 %v502, %v498
      %v691 = vpack.c.b16 %v503, %v499
      %v692 = vpack.c.b16 %v504, %v500
      %v693 = vpack.c.b16 %v509, %v505
      %v694 = vpack.c.b16 %v510, %v506
      %v695 = vpack.c.b16 %v511, %v507
      %v696 = vpack.c.b16 %v512, %v508
      %v697 = vpack.c.b16 %v517, %v513
      %v698 = vpack.c.b16 %v518, %v514
      %v699 = vpack.c.b16 %v519, %v515
      %v700 = vpack.c.b16 %v520, %v516
      %v701 = vpack.c.b16 %v525, %v521
      %v702 = vpack.c.b16 %v526, %v522
      %v703 = vpack.c.b16 %v527, %v523
      %v704 = vpack.c.b16 %v528, %v524
      %v705 = vpack.c.b16 %v533, %v529
      %v706 = vpack.c.b16 %v534, %v530
      %v707 = vpack.c.b16 %v535, %v531
      %v708 = vpack.c.b16 %v536, %v532
      %v709 = vpack.c.b16 %v541, %v537
      %v710 = vpack.c.b16 %v542, %v538
      %v711 = vpack.c.b16 %v543, %v539
      %v712 = vpack.c.b16 %v544, %v540
      %v713 = vpack.c.b16 %v549, %v545
      %v714 = vpack.c.b16 %v550, %v546
      %v715 = vpack.c.b16 %v551, %v547
      %v716 = vpack.c.b16 %v552, %v548
      %v717 = vpack.c.b16 %v557, %v553
      %v718 = vpack.c.b16 %v558, %v554
      %v719 = vpack.c.b16 %v559, %v555
      %v720 = vpack.c.b16 %v560, %v556
      %v721 = vpack.c.b16 %v565, %v561
      %v722 = vpack.c.b16 %v566, %v562
      %v723 = vpack.c.b16 %v567, %v563
      %v724 = vpack.c.b16 %v568, %v564
      %v725 = vpack.c.b16 %v573, %v569
      %v726 = vpack.c.b16 %v574, %v570
      %v727 = vpack.c.b16 %v575, %v571
      %v728 = vpack.c.b16 %v576, %v572
      %v729 = vpack.c.b16 %v581, %v577
      %v730 = vpack.c.b16 %v582, %v578
      %v731 = vpack.c.b16 %v583, %v579
      %v732 = vpack.c.b16 %v584, %v580
      %v733 = vpack.c.b16 %v589, %v585
      %v734 = vpack.c.b16 %v590, %v586
      %v735 = vpack.c.b16 %v591, %v587
      %v736 = vpack.c.b16 %v592, %v588
      %v737 = vpack.c.b16 %v597, %v593
      %v738 = vpack.c.b16 %v598, %v594
      %v739 = vpack.c.b16 %v599, %v595
      %v740 = vpack.c.b16 %v600, %v596
      %v741 = vpack.c.b16 %v605, %v601
      %v742 = vpack.c.b16 %v606, %v602
      %v743 = vpack.c.b16 %v607, %v603
      %v744 = vpack.c.b16 %v608, %v604
      %v745 = vpack.c.b16 %v613, %v609
      %v746 = vpack.c.b16 %v614, %v610
      %v747 = vpack.c.b16 %v615, %v611
      %v748 = vpack.c.b16 %v616, %v612
      %v749 = vpack.c.b16 %v621, %v617
      %v750 = vpack.c.b16 %v622, %v618
      %v751 = vpack.c.b16 %v623, %v619
      %v752 = vpack.c.b16 %v624, %v620
      %v753 = vpack.c.b16 %v629, %v625
      %v754 = vpack.c.b16 %v630, %v626
      %v755 = vpack.c.b16 %v631, %v627
      %v756 = vpack.c.b16 %v632, %v628
      %v757 = vpack.c.b16 %v637, %v633
      %v758 = vpack.c.b16 %v638, %v634
      %v759 = vpack.c.b16 %v639, %v635
      %v760 = vpack.c.b16 %v640, %v636
      %v761 = vpack.c.b16 %v645, %v641
      %v762 = vpack.c.b16 %v646, %v642
      %v763 = vpack.c.b16 %v647, %v643
      %v764 = vpack.c.b16 %v648, %v644
      %v765 = vpack.c.b16 %v653, %v649
      %v766 = vpack.c.b16 %v654, %v650
      %v767 = vpack.c.b16 %v655, %v651
      %v768 = vpack.c.b16 %v656, %v652
      %v769 = vpack.c.b16 %v661, %v657
      %v770 = vpack.c.b16 %v662, %v658
      %v771 = vpack.c.b16 %v663, %v659
      %v772 = vpack.c.b16 %v664, %v660
      %v773 = vpack.c.b16 %v669, %v665
      %v774 = vpack.c.b16 %v670, %v666
      %v775 = vpack.c.b16 %v671, %v667
      %v776 = vpack.c.b16 %v672, %v668
      %v777 = vpack.c.b16 %v677, %v673
      %v778 = vpack.c.b16 %v678, %v674
      %v779 = vpack.c.b16 %v679, %v675
      %v780 = vpack.c.b16 %v680, %v676
      %vm881 = vcmask 130048
      %v883 = vsel %vm881, %v370, 0
      %v886 = vsel %vm881, %v374, 0
      %888 = vmatprep.subr.bf16.mxu0 %v682
      %889 = vmatpush1.bf16.msra.mxu0 %v681
      %890 = vmatprep.subr.bf16.mxu0 %v686
      %891 = vmatpush1.bf16.msra.mxu0 %v685
      %892 = vmatprep.subr.bf16.mxu0 %v690
      %893 = vmatpush1.bf16.msra.mxu0 %v689
      %894 = vmatprep.subr.bf16.mxu0 %v694
      %895 = vmatpush1.bf16.msra.mxu0 %v693
      %896 = vmatprep.subr.bf16.mxu0 %v698
      %897 = vmatpush1.bf16.msra.mxu0 %v697
      %898 = vmatprep.subr.bf16.mxu0 %v702
      %899 = vmatpush1.bf16.msra.mxu0 %v701
      %900 = vmatprep.subr.bf16.mxu0 %v706
      %901 = vmatpush1.bf16.msra.mxu0 %v705
      %902 = vmatprep.subr.bf16.mxu0 %v710
      %903 = vmatpush1.bf16.msra.mxu0 %v709
      %904 = vmatprep.subr.bf16.mxu0 %v714
      %905 = vmatpush1.bf16.msra.mxu0 %v713
      %906 = vmatprep.subr.bf16.mxu0 %v718
      %907 = vmatpush1.bf16.msra.mxu0 %v717
      %908 = vmatprep.subr.bf16.mxu0 %v722
      %909 = vmatpush1.bf16.msra.mxu0 %v721
      %910 = vmatprep.subr.bf16.mxu0 %v726
      %911 = vmatpush1.bf16.msra.mxu0 %v725
      %912 = vmatprep.subr.bf16.mxu0 %v730
      %913 = vmatpush1.bf16.msra.mxu0 %v729
      %914 = vmatprep.subr.bf16.mxu0 %v734
      %915 = vmatpush1.bf16.msra.mxu0 %v733
      %916 = vmatprep.subr.bf16.mxu0 %v738
      %917 = vmatpush1.bf16.msra.mxu0 %v737
      %918 = vmatprep.subr.bf16.mxu0 %v742
      %919 = vmatpush1.bf16.msra.mxu0 %v741
      %920 = vmatprep.mubr.bf16.mxu0 %v368
      %921 = vmatmul.mubr.bf16.gmra.mrb[0].mxu0 %v367
      %v922 = vpop.f32.mrb[0].mxu0
      %v923 = vadd.f32 %v326, %v922
      %v924 = vpop.f32.mrb[0].mxu0
      %v925 = vadd.f32 %v326, %v924
      %v926 = vpop.f32.mrb[0].mxu0
      %v927 = vadd.f32 %v331, %v926
      %v928 = vpop.f32.mrb[0].mxu0
      %v929 = vadd.f32 %v331, %v928
      %930 = vmatprep.mubr.bf16.mxu0 %v372
      %931 = vmatmul.mubr.bf16.gmra.mrb[0].mxu0 %v371
      %v932 = vpop.f32.mrb[0].mxu0
      %v933 = vadd.f32 %v336, %v932
      %v934 = vpop.f32.mrb[0].mxu0
      %v935 = vadd.f32 %v336, %v934
      %v936 = vpop.f32.mrb[0].mxu0
      %v937 = vadd.f32 %v341, %v936
      %v938 = vpop.f32.mrb[0].mxu0
      %v939 = vadd.f32 %v341, %v938
      %940 = vdwg.mxu0
      %941 = vmatprep.subr.bf16.mxu0 %v746
      %942 = vmatpush1.bf16.msra.mxu0 %v745
      %943 = vmatprep.subr.bf16.mxu0 %v750
      %944 = vmatpush1.bf16.msra.mxu0 %v749
      %945 = vmatprep.subr.bf16.mxu0 %v754
      %946 = vmatpush1.bf16.msra.mxu0 %v753
      %947 = vmatprep.subr.bf16.mxu0 %v758
      %948 = vmatpush1.bf16.msra.mxu0 %v757
      %949 = vmatprep.subr.bf16.mxu0 %v762
      %950 = vmatpush1.bf16.msra.mxu0 %v761
      %951 = vmatprep.subr.bf16.mxu0 %v766
      %952 = vmatpush1.bf16.msra.mxu0 %v765
      %953 = vmatprep.subr.bf16.mxu0 %v770
      %954 = vmatpush1.bf16.msra.mxu0 %v769
      %955 = vmatprep.subr.bf16.mxu0 %v774
      %956 = vmatpush1.bf16.msra.mxu0 %v773
      %957 = vmatprep.subr.bf16.mxu0 %v778
      %958 = vmatpush1.bf16.msra.mxu0 %v777
      %959 = vmatprep.subr.bf16.mxu0 0
      %960 = vmatpush1.bf16.msra.mxu0 0
      %961 = vmatprep.subr.bf16.mxu0 0
      %962 = vmatpush1.bf16.msra.mxu0 0
      %963 = vmatprep.subr.bf16.mxu0 0
      %964 = vmatpush1.bf16.msra.mxu0 0
      %965 = vmatprep.subr.bf16.mxu0 0
      %966 = vmatpush1.bf16.msra.mxu0 0
      %967 = vmatprep.subr.bf16.mxu0 0
      %968 = vmatpush1.bf16.msra.mxu0 0
      %969 = vmatprep.subr.bf16.mxu0 0
      %970 = vmatpush1.bf16.msra.mxu0 0
      %971 = vmatprep.subr.bf16.mxu0 0
      %972 = vmatpush1.bf16.msra.mxu0 0
      %973 = vmatprep.mubr.bf16.mxu0 %v883
      %974 = vmatmul.mubr.bf16.gmra.mrb[0].mxu0 %v369
      %v975 = vpop.f32.mrb[0].mxu0
      %v976 = vadd.f32 %v923, %v975
      %v977 = vpop.f32.mrb[0].mxu0
      %v978 = vadd.f32 %v925, %v977
      %v979 = vpop.f32.mrb[0].mxu0
      %v980 = vadd.f32 %v927, %v979
      %v981 = vpop.f32.mrb[0].mxu0
      %v982 = vadd.f32 %v929, %v981
      %983 = vmatprep.mubr.bf16.mxu0 %v886
      %984 = vmatmul.mubr.bf16.gmra.mrb[0].mxu0 %v373
      %v985 = vpop.f32.mrb[0].mxu0
      %v986 = vadd.f32 %v933, %v985
      %v987 = vpop.f32.mrb[0].mxu0
      %v988 = vadd.f32 %v935, %v987
      %v989 = vpop.f32.mrb[0].mxu0
      %v990 = vadd.f32 %v937, %v989
      %v991 = vpop.f32.mrb[0].mxu0
      %v992 = vadd.f32 %v939, %v991
      %993 = vdwg.mxu0
      %994 = vmatprep.subr.bf16.mxu0 %v684
      %995 = vmatpush1.bf16.msra.mxu0 %v683
      %996 = vmatprep.subr.bf16.mxu0 %v688
      %997 = vmatpush1.bf16.msra.mxu0 %v687
      %998 = vmatprep.subr.bf16.mxu0 %v692
      %999 = vmatpush1.bf16.msra.mxu0 %v691
      %1000 = vmatprep.subr.bf16.mxu0 %v696
      %1001 = vmatpush1.bf16.msra.mxu0 %v695
      %1002 = vmatprep.subr.bf16.mxu0 %v700
      %1003 = vmatpush1.bf16.msra.mxu0 %v699
      %1004 = vmatprep.subr.bf16.mxu0 %v704
      %1005 = vmatpush1.bf16.msra.mxu0 %v703
      %1006 = vmatprep.subr.bf16.mxu0 %v708
      %1007 = vmatpush1.bf16.msra.mxu0 %v707
      %1008 = vmatprep.subr.bf16.mxu0 %v712
      %1009 = vmatpush1.bf16.msra.mxu0 %v711
      %1010 = vmatprep.subr.bf16.mxu0 %v716
      %1011 = vmatpush1.bf16.msra.mxu0 %v715
      %1012 = vmatprep.subr.bf16.mxu0 %v720
      %1013 = vmatpush1.bf16.msra.mxu0 %v719
      %1014 = vmatprep.subr.bf16.mxu0 %v724
      %1015 = vmatpush1.bf16.msra.mxu0 %v723
      %1016 = vmatprep.subr.bf16.mxu0 %v728
      %1017 = vmatpush1.bf16.msra.mxu0 %v727
      %1018 = vmatprep.subr.bf16.mxu0 %v732
      %1019 = vmatpush1.bf16.msra.mxu0 %v731
      %1020 = vmatprep.subr.bf16.mxu0 %v736
      %1021 = vmatpush1.bf16.msra.mxu0 %v735
      %1022 = vmatprep.subr.bf16.mxu0 %v740
      %1023 = vmatpush1.bf16.msra.mxu0 %v739
      %1024 = vmatprep.subr.bf16.mxu0 %v744
      %1025 = vmatpush1.bf16.msra.mxu0 %v743
      %1026 = vmatprep.mubr.bf16.mxu0 %v368
      %1027 = vmatmul.mubr.bf16.gmra.mrb[0].mxu0 %v367
      %v1028 = vpop.f32.mrb[0].mxu0
      %v1029 = vadd.f32 %v326, %v1028
      %v1030 = vpop.f32.mrb[0].mxu0
      %v1031 = vadd.f32 %v326, %v1030
      %v1032 = vpop.f32.mrb[0].mxu0
      %v1033 = vadd.f32 %v331, %v1032
      %v1034 = vpop.f32.mrb[0].mxu0
      %v1035 = vadd.f32 %v331, %v1034
      %1036 = vmatprep.mubr.bf16.mxu0 %v372
      %1037 = vmatmul.mubr.bf16.gmra.mrb[0].mxu0 %v371
      %v1038 = vpop.f32.mrb[0].mxu0
      %v1039 = vadd.f32 %v336, %v1038
      %v1040 = vpop.f32.mrb[0].mxu0
      %v1041 = vadd.f32 %v336, %v1040
      %v1042 = vpop.f32.mrb[0].mxu0
      %v1043 = vadd.f32 %v341, %v1042
      %v1044 = vpop.f32.mrb[0].mxu0
      %v1045 = vadd.f32 %v341, %v1044
      %1046 = vdwg.mxu0
      %1047 = vmatprep.subr.bf16.mxu0 %v748
      %1048 = vmatpush1.bf16.msra.mxu0 %v747
      %1049 = vmatprep.subr.bf16.mxu0 %v752
      %1050 = vmatpush1.bf16.msra.mxu0 %v751
      %1051 = vmatprep.subr.bf16.mxu0 %v756
      %1052 = vmatpush1.bf16.msra.mxu0 %v755
      %1053 = vmatprep.subr.bf16.mxu0 %v760
      %1054 = vmatpush1.bf16.msra.mxu0 %v759
      %1055 = vmatprep.subr.bf16.mxu0 %v764
      %1056 = vmatpush1.bf16.msra.mxu0 %v763
      %1057 = vmatprep.subr.bf16.mxu0 %v768
      %1058 = vmatpush1.bf16.msra.mxu0 %v767
      %1059 = vmatprep.subr.bf16.mxu0 %v772
      %1060 = vmatpush1.bf16.msra.mxu0 %v771
      %1061 = vmatprep.subr.bf16.mxu0 %v776
      %1062 = vmatpush1.bf16.msra.mxu0 %v775
      %1063 = vmatprep.subr.bf16.mxu0 %v780
      %1064 = vmatpush1.bf16.msra.mxu0 %v779
      %1065 = vmatprep.subr.bf16.mxu0 0
      %1066 = vmatpush1.bf16.msra.mxu0 0
      %1067 = vmatprep.subr.bf16.mxu0 0
      %1068 = vmatpush1.bf16.msra.mxu0 0
      %1069 = vmatprep.subr.bf16.mxu0 0
      %1070 = vmatpush1.bf16.msra.mxu0 0
      %1071 = vmatprep.subr.bf16.mxu0 0
      %1072 = vmatpush1.bf16.msra.mxu0 0
      %1073 = vmatprep.subr.bf16.mxu0 0
      %1074 = vmatpush1.bf16.msra.mxu0 0
      %1075 = vmatprep.subr.bf16.mxu0 0
      %1076 = vmatpush1.bf16.msra.mxu0 0
      %1077 = vmatprep.subr.bf16.mxu0 0
      %1078 = vmatpush1.bf16.msra.mxu0 0
      %1079 = vmatprep.mubr.bf16.mxu0 %v883
      %1080 = vmatmul.mubr.bf16.gmra.mrb[0].mxu0 %v369
      %v1081 = vpop.f32.mrb[0].mxu0
      %v1082 = vadd.f32 %v1029, %v1081
      %v1083 = vpop.f32.mrb[0].mxu0
      %v1084 = vadd.f32 %v1031, %v1083
      %v1085 = vpop.f32.mrb[0].mxu0
      %v1086 = vadd.f32 %v1033, %v1085
      %v1087 = vpop.f32.mrb[0].mxu0
      %v1088 = vadd.f32 %v1035, %v1087
      %1089 = vmatprep.mubr.bf16.mxu0 %v886
      %1090 = vmatmul.mubr.bf16.gmra.mrb[0].mxu0 %v373
      %v1091 = vpop.f32.mrb[0].mxu0
      %v1092 = vadd.f32 %v1039, %v1091
      %v1093 = vpop.f32.mrb[0].mxu0
      %v1094 = vadd.f32 %v1041, %v1093
      %v1095 = vpop.f32.mrb[0].mxu0
      %v1096 = vadd.f32 %v1043, %v1095
      %v1097 = vpop.f32.mrb[0].mxu0
      %v1098 = vadd.f32 %v1045, %v1097
      %1099 = vdwg.mxu0
      %v1100 = vadd.f32 %v976, %v978
      %v1101 = vadd.f32 %v1100, %v1082
      %v1102 = vadd.f32 %v1101, %v1084
      %1103 = vadd.xlane.f32.xlu0 %v1102
      %v1104 = vpop.xlane.xlu0 %1103
      %v1105 = vadd.f32 %v980, %v982
      %v1106 = vadd.f32 %v1105, %v1086
      %v1107 = vadd.f32 %v1106, %v1088
      %1108 = vadd.xlane.f32.xlu0 %v1107
      %v1109 = vpop.xlane.xlu0 %1108
      %v1110 = vadd.f32 %v986, %v988
      %v1111 = vadd.f32 %v1110, %v1092
      %v1112 = vadd.f32 %v1111, %v1094
      %1113 = vadd.xlane.f32.xlu0 %v1112
      %v1114 = vpop.xlane.xlu0 %1113
      %v1115 = vadd.f32 %v990, %v992
      %v1116 = vadd.f32 %v1115, %v1096
      %v1117 = vadd.f32 %v1116, %v1098
      %1118 = vadd.xlane.f32.xlu0 %v1117
      %v1119 = vpop.xlane.xlu0 %1118
      %v1120 = vmul.f32 %v976, %v976
      %v1121 = vmul.f32 %v978, %v978
      %v1122 = vmul.f32 %v1082, %v1082
      %v1123 = vmul.f32 %v1084, %v1084
      %v1124 = vmul.f32 %v980, %v980
      %v1125 = vmul.f32 %v982, %v982
      %v1126 = vmul.f32 %v1086, %v1086
      %v1127 = vmul.f32 %v1088, %v1088
      %v1128 = vmul.f32 %v986, %v986
      %v1129 = vmul.f32 %v988, %v988
      %v1130 = vmul.f32 %v1092, %v1092
      %v1131 = vmul.f32 %v1094, %v1094
      %v1132 = vmul.f32 %v990, %v990
      %v1133 = vmul.f32 %v992, %v992
      %v1134 = vmul.f32 %v1096, %v1096
      %v1135 = vmul.f32 %v1098, %v1098
      %v1136 = vadd.f32 %v1120, %v1121
      %v1137 = vadd.f32 %v1136, %v1122
      %v1138 = vadd.f32 %v1137, %v1123
      %1139 = vadd.xlane.f32.xlu0 %v1138
      %v1140 = vpop.xlane.xlu0 %1139
      %v1141 = vadd.f32 %v1124, %v1125
      %v1142 = vadd.f32 %v1141, %v1126
      %v1143 = vadd.f32 %v1142, %v1127
      %1144 = vadd.xlane.f32.xlu0 %v1143
      %v1145 = vpop.xlane.xlu0 %1144
      %v1146 = vadd.f32 %v1128, %v1129
      %v1147 = vadd.f32 %v1146, %v1130
      %v1148 = vadd.f32 %v1147, %v1131
      %1149 = vadd.xlane.f32.xlu0 %v1148
      %v1150 = vpop.xlane.xlu0 %1149
      %v1151 = vadd.f32 %v1132, %v1133
      %v1152 = vadd.f32 %v1151, %v1134
      %v1153 = vadd.f32 %v1152, %v1135
      %1154 = vadd.xlane.f32.xlu0 %v1153
      %v1155 = vpop.xlane.xlu0 %1154
      %p1156 = scmp.eq.s32.totalorder %s16, 0
      // Predicated region
      $region41: #{conv_classify_forward.4} parent=39 // pred_check
        %p1157 = pneg %p1156
      $region42: #{conv_classify_forward.4} parent=39 // pred_check_branch
        %1159 = sbr.rel (%p1157) target = $region44
      $region43: #{conv_classify_forward.4} parent=39 // pred_region
        %vm1160 = vcmask 7168
        %1161 = vst.msk [vmem:[#allocation2] sm:$0xff] %vm1160, %v1104
        %1162 = vst.msk [vmem:[#allocation2 + $0x8] sm:$0xff] %vm1160, %v1109
        %1163 = vst.msk [vmem:[#allocation2 + $0x10] sm:$0xff] %vm1160, %v1114
        %1164 = vst.msk [vmem:[#allocation2 + $0x18] sm:$0xff] %vm1160, %v1119
        %1165 = vst.msk [vmem:[#allocation3] sm:$0xff] %vm1160, %v1140
        %1166 = vst.msk [vmem:[#allocation3 + $0x8] sm:$0xff] %vm1160, %v1145
        %1167 = vst.msk [vmem:[#allocation3 + $0x10] sm:$0xff] %vm1160, %v1150
        %1168 = vst.msk [vmem:[#allocation3 + $0x18] sm:$0xff] %vm1160, %v1155
        %1169 = vst [vmem:[%s5] sm:$0xff] %v976
        %1170 = vst [vmem:[%s5 + $0x8] sm:$0xff] %v978
        %1171 = vst [vmem:[%s5 + $0x10] sm:$0xff] %v1082
        %1172 = vst [vmem:[%s5 + $0x18] sm:$0xff] %v1084
        %1173 = vst [vmem:[%s5 + $0x20] sm:$0xff] %v980
        %1174 = vst [vmem:[%s5 + $0x28] sm:$0xff] %v982
        %1175 = vst [vmem:[%s5 + $0x30] sm:$0xff] %v1086
        %1176 = vst [vmem:[%s5 + $0x38] sm:$0xff] %v1088
        %1177 = vst [vmem:[%s5 + $0x40] sm:$0xff] %v986
        %1178 = vst [vmem:[%s5 + $0x48] sm:$0xff] %v988
        %1179 = vst [vmem:[%s5 + $0x50] sm:$0xff] %v1092
        %1180 = vst [vmem:[%s5 + $0x58] sm:$0xff] %v1094
        %1181 = vst [vmem:[%s5 + $0x60] sm:$0xff] %v990
        %1182 = vst [vmem:[%s5 + $0x68] sm:$0xff] %v992
        %1183 = vst [vmem:[%s5 + $0x70] sm:$0xff] %v1096
        %1184 = vst [vmem:[%s5 + $0x78] sm:$0xff] %v1098
      $region44: #{conv_classify_forward.4} parent=39 // pred_fallthru
        _
      %p1185 = scmp.gt.s32.totalorder %s16, 0
      // Predicated region
      $region45: #{conv_classify_forward.4} parent=39 // pred_check
        %p1186 = pneg %p1185
      $region46: #{conv_classify_forward.4} parent=39 // pred_check_branch
        %1188 = sbr.rel (%p1186) target = $region48
      $region47: #{conv_classify_forward.4} parent=39 // pred_region
        %v1189 = vld [vmem:[#allocation2] sm:$0xff]
        %v1190 = vld [vmem:[#allocation2 + $0x8] sm:$0xff]
        %v1191 = vld [vmem:[#allocation2 + $0x10] sm:$0xff]
        %v1192 = vld [vmem:[#allocation2 + $0x18] sm:$0xff]
        %v1193 = vadd.f32 %v1189, %v1104
        %v1194 = vadd.f32 %v1190, %v1109
        %v1195 = vadd.f32 %v1191, %v1114
        %v1196 = vadd.f32 %v1192, %v1119
        %vm1197 = vcmask 7168
        %1198 = vst.msk [vmem:[#allocation2] sm:$0xff] %vm1197, %v1193
        %1199 = vst.msk [vmem:[#allocation2 + $0x8] sm:$0xff] %vm1197, %v1194
        %1200 = vst.msk [vmem:[#allocation2 + $0x10] sm:$0xff] %vm1197, %v1195
        %1201 = vst.msk [vmem:[#allocation2 + $0x18] sm:$0xff] %vm1197, %v1196
        %v1202 = vld [vmem:[#allocation3] sm:$0xff]
        %v1203 = vld [vmem:[#allocation3 + $0x8] sm:$0xff]
        %v1204 = vld [vmem:[#allocation3 + $0x10] sm:$0xff]
        %v1205 = vld [vmem:[#allocation3 + $0x18] sm:$0xff]
        %v1206 = vadd.f32 %v1202, %v1140
        %v1207 = vadd.f32 %v1203, %v1145
        %v1208 = vadd.f32 %v1204, %v1150
        %v1209 = vadd.f32 %v1205, %v1155
        %1210 = vst.msk [vmem:[#allocation3] sm:$0xff] %vm1197, %v1206
        %1211 = vst.msk [vmem:[#allocation3 + $0x8] sm:$0xff] %vm1197, %v1207
        %1212 = vst.msk [vmem:[#allocation3 + $0x10] sm:$0xff] %vm1197, %v1208
        %1213 = vst.msk [vmem:[#allocation3 + $0x18] sm:$0xff] %vm1197, %v1209
        %v1214 = vld [vmem:[%s5] sm:$0xff]
        %v1215 = vld [vmem:[%s5 + $0x8] sm:$0xff]
        %v1216 = vld [vmem:[%s5 + $0x10] sm:$0xff]
        %v1217 = vld [vmem:[%s5 + $0x18] sm:$0xff]
        %v1218 = vld [vmem:[%s5 + $0x20] sm:$0xff]
        %v1219 = vld [vmem:[%s5 + $0x28] sm:$0xff]
        %v1220 = vld [vmem:[%s5 + $0x30] sm:$0xff]
        %v1221 = vld [vmem:[%s5 + $0x38] sm:$0xff]
        %v1222 = vld [vmem:[%s5 + $0x40] sm:$0xff]
        %v1223 = vld [vmem:[%s5 + $0x48] sm:$0xff]
        %v1224 = vld [vmem:[%s5 + $0x50] sm:$0xff]
        %v1225 = vld [vmem:[%s5 + $0x58] sm:$0xff]
        %v1226 = vld [vmem:[%s5 + $0x60] sm:$0xff]
        %v1227 = vld [vmem:[%s5 + $0x68] sm:$0xff]
        %v1228 = vld [vmem:[%s5 + $0x70] sm:$0xff]
        %v1229 = vld [vmem:[%s5 + $0x78] sm:$0xff]
        %v1230 = vmax.f32 %v1214, %v976
        %v1231 = vmax.f32 %v1215, %v978
        %v1232 = vmax.f32 %v1216, %v1082
        %v1233 = vmax.f32 %v1217, %v1084
        %v1234 = vmax.f32 %v1218, %v980
        %v1235 = vmax.f32 %v1219, %v982
        %v1236 = vmax.f32 %v1220, %v1086
        %v1237 = vmax.f32 %v1221, %v1088
        %v1238 = vmax.f32 %v1222, %v986
        %v1239 = vmax.f32 %v1223, %v988
        %v1240 = vmax.f32 %v1224, %v1092
        %v1241 = vmax.f32 %v1225, %v1094
        %v1242 = vmax.f32 %v1226, %v990
        %v1243 = vmax.f32 %v1227, %v992
        %v1244 = vmax.f32 %v1228, %v1096
        %v1245 = vmax.f32 %v1229, %v1098
        %1246 = vst [vmem:[%s5] sm:$0xff] %v1230
        %1247 = vst [vmem:[%s5 + $0x8] sm:$0xff] %v1231
        %1248 = vst [vmem:[%s5 + $0x10] sm:$0xff] %v1232
        %1249 = vst [vmem:[%s5 + $0x18] sm:$0xff] %v1233
        %1250 = vst [vmem:[%s5 + $0x20] sm:$0xff] %v1234
        %1251 = vst [vmem:[%s5 + $0x28] sm:$0xff] %v1235
        %1252 = vst [vmem:[%s5 + $0x30] sm:$0xff] %v1236
        %1253 = vst [vmem:[%s5 + $0x38] sm:$0xff] %v1237
        %1254 = vst [vmem:[%s5 + $0x40] sm:$0xff] %v1238
        %1255 = vst [vmem:[%s5 + $0x48] sm:$0xff] %v1239
        %1256 = vst [vmem:[%s5 + $0x50] sm:$0xff] %v1240
        %1257 = vst [vmem:[%s5 + $0x58] sm:$0xff] %v1241
        %1258 = vst [vmem:[%s5 + $0x60] sm:$0xff] %v1242
        %1259 = vst [vmem:[%s5 + $0x68] sm:$0xff] %v1243
        %1260 = vst [vmem:[%s5 + $0x70] sm:$0xff] %v1244
        %1261 = vst [vmem:[%s5 + $0x78] sm:$0xff] %v1245
      $region48: #{conv_classify_forward.4} parent=39 // pred_fallthru
        _
      %p1262 = scmp.eq.s32.totalorder %s16, 3
      // Predicated region
      $region49: #{conv_classify_forward.4} parent=39 // pred_check
        %p1263 = pneg %p1262
      $region50: #{conv_classify_forward.4} parent=39 // pred_check_branch
        %1265 = sbr.rel (%p1263) target = $region52
      $region51: #{conv_classify_forward.4} parent=39 // pred_region
        %v1266 = vld [vmem:[#allocation2] sm:$0xff]
        %v1267 = vld [vmem:[#allocation2 + $0x8] sm:$0xff]
        %v1268 = vld [vmem:[#allocation2 + $0x10] sm:$0xff]
        %v1269 = vld [vmem:[#allocation2 + $0x18] sm:$0xff]
        %v1270 = vmul.f32 %v1266, 0.00048828125
        %v1271 = vmul.f32 %v1267, 0.00048828125
        %v1272 = vmul.f32 %v1268, 0.00048828125
        %v1273 = vmul.f32 %v1269, 0.00048828125
        %v1274 = vld [vmem:[#allocation3] sm:$0xff]
        %v1275 = vld [vmem:[#allocation3 + $0x8] sm:$0xff]
        %v1276 = vld [vmem:[#allocation3 + $0x10] sm:$0xff]
        %v1277 = vld [vmem:[#allocation3 + $0x18] sm:$0xff]
        %v1278 = vmul.f32 %v1274, 0.00048828125
        %v1279 = vmul.f32 %v1275, 0.00048828125
        %v1280 = vmul.f32 %v1276, 0.00048828125
        %v1281 = vmul.f32 %v1277, 0.00048828125
        %v1282 = vmul.f32 %v1270, %v1270
        %v1283 = vmul.f32 %v1271, %v1271
        %v1284 = vmul.f32 %v1272, %v1272
        %v1285 = vmul.f32 %v1273, %v1273
        %v1286 = vsub.f32 %v1278, %v1282
        %v1287 = vsub.f32 %v1279, %v1283
        %v1288 = vsub.f32 %v1280, %v1284
        %v1289 = vsub.f32 %v1281, %v1285
        %v1290 = vadd.f32 %v1286, 1e-05
        %v1291 = vadd.f32 %v1287, 1e-05
        %v1292 = vadd.f32 %v1288, 1e-05
        %v1293 = vadd.f32 %v1289, 1e-05
        %v1294 = vrsqrt.pop %v1290
        %v1295 = vrsqrt.pop %v1291
        %v1296 = vrsqrt.pop %v1292
        %v1297 = vrsqrt.pop %v1293
        %v1298 = vld [vmem:[%s3] sm:$0xff]
        %v1299 = vld [vmem:[%s3 + $0x8] sm:$0xff]
        %v1300 = vld [vmem:[%s3 + $0x10] sm:$0xff]
        %v1301 = vld [vmem:[%s3 + $0x18] sm:$0xff]
        %v1302 = vmul.f32 %v1294, %v1298
        %v1303 = vmul.f32 %v1295, %v1299
        %v1304 = vmul.f32 %v1296, %v1300
        %v1305 = vmul.f32 %v1297, %v1301
        %v1306 = vld [vmem:[%s4] sm:$0xff]
        %v1307 = vld [vmem:[%s4 + $0x8] sm:$0xff]
        %v1308 = vld [vmem:[%s4 + $0x10] sm:$0xff]
        %v1309 = vld [vmem:[%s4 + $0x18] sm:$0xff]
        %v1310 = vmul.f32 %v1270, %v1302
        %v1311 = vmul.f32 %v1271, %v1303
        %v1312 = vmul.f32 %v1272, %v1304
        %v1313 = vmul.f32 %v1273, %v1305
        %v1314 = vsub.f32 %v1306, %v1310
        %v1315 = vsub.f32 %v1307, %v1311
        %v1316 = vsub.f32 %v1308, %v1312
        %v1317 = vsub.f32 %v1309, %v1313
        %v1318 = vld [vmem:[%s5] sm:$0xff]
        %v1319 = vld [vmem:[%s5 + $0x8] sm:$0xff]
        %v1320 = vld [vmem:[%s5 + $0x10] sm:$0xff]
        %v1321 = vld [vmem:[%s5 + $0x18] sm:$0xff]
        %v1322 = vld [vmem:[%s5 + $0x20] sm:$0xff]
        %v1323 = vld [vmem:[%s5 + $0x28] sm:$0xff]
        %v1324 = vld [vmem:[%s5 + $0x30] sm:$0xff]
        %v1325 = vld [vmem:[%s5 + $0x38] sm:$0xff]
        %v1326 = vld [vmem:[%s5 + $0x40] sm:$0xff]
        %v1327 = vld [vmem:[%s5 + $0x48] sm:$0xff]
        %v1328 = vld [vmem:[%s5 + $0x50] sm:$0xff]
        %v1329 = vld [vmem:[%s5 + $0x58] sm:$0xff]
        %v1330 = vld [vmem:[%s5 + $0x60] sm:$0xff]
        %v1331 = vld [vmem:[%s5 + $0x68] sm:$0xff]
        %v1332 = vld [vmem:[%s5 + $0x70] sm:$0xff]
        %v1333 = vld [vmem:[%s5 + $0x78] sm:$0xff]
        %1335 = vset.pattern.permute.xlu0 0
        %1336 = vperm.xlu0 %1335, %v1302
        %v1337 = vpop.permute.xlu0 %1336
        %1340 = vset.pattern.permute.xlu0 0
        %1341 = vperm.xlu0 %1340, %v1303
        %v1342 = vpop.permute.xlu0 %1341
        %1345 = vset.pattern.permute.xlu0 0
        %1346 = vperm.xlu0 %1345, %v1304
        %v1347 = vpop.permute.xlu0 %1346
        %1350 = vset.pattern.permute.xlu0 0
        %1351 = vperm.xlu0 %1350, %v1305
        %v1352 = vpop.permute.xlu0 %1351
        %v1354 = vmul.f32 %v1318, %v1337
        %v1355 = vmul.f32 %v1319, %v1337
        %v1356 = vmul.f32 %v1320, %v1337
        %v1357 = vmul.f32 %v1321, %v1337
        %v1358 = vmul.f32 %v1322, %v1342
        %v1359 = vmul.f32 %v1323, %v1342
        %v1360 = vmul.f32 %v1324, %v1342
        %v1361 = vmul.f32 %v1325, %v1342
        %v1362 = vmul.f32 %v1326, %v1347
        %v1363 = vmul.f32 %v1327, %v1347
        %v1364 = vmul.f32 %v1328, %v1347
        %v1365 = vmul.f32 %v1329, %v1347
        %v1366 = vmul.f32 %v1330, %v1352
        %v1367 = vmul.f32 %v1331, %v1352
        %v1368 = vmul.f32 %v1332, %v1352
        %v1369 = vmul.f32 %v1333, %v1352
        %1371 = vset.pattern.permute.xlu0 0
        %1372 = vperm.xlu0 %1371, %v1314
        %v1373 = vpop.permute.xlu0 %1372
        %1376 = vset.pattern.permute.xlu0 0
        %1377 = vperm.xlu0 %1376, %v1315
        %v1378 = vpop.permute.xlu0 %1377
        %1381 = vset.pattern.permute.xlu0 0
        %1382 = vperm.xlu0 %1381, %v1316
        %v1383 = vpop.permute.xlu0 %1382
        %1386 = vset.pattern.permute.xlu0 0
        %1387 = vperm.xlu0 %1386, %v1317
        %v1388 = vpop.permute.xlu0 %1387
        %v1390 = vadd.f32 %v1354, %v1373
        %v1391 = vadd.f32 %v1355, %v1373
        %v1392 = vadd.f32 %v1356, %v1373
        %v1393 = vadd.f32 %v1357, %v1373
        %v1394 = vadd.f32 %v1358, %v1378
        %v1395 = vadd.f32 %v1359, %v1378
        %v1396 = vadd.f32 %v1360, %v1378
        %v1397 = vadd.f32 %v1361, %v1378
        %v1398 = vadd.f32 %v1362, %v1383
        %v1399 = vadd.f32 %v1363, %v1383
        %v1400 = vadd.f32 %v1364, %v1383
        %v1401 = vadd.f32 %v1365, %v1383
        %v1402 = vadd.f32 %v1366, %v1388
        %v1403 = vadd.f32 %v1367, %v1388
        %v1404 = vadd.f32 %v1368, %v1388
        %v1405 = vadd.f32 %v1369, %v1388
        %1406 = vst [vmem:[%s5] sm:$0xff] %v1390
        %1407 = vst [vmem:[%s5 + $0x8] sm:$0xff] %v1391
        %1408 = vst [vmem:[%s5 + $0x10] sm:$0xff] %v1392
        %1409 = vst [vmem:[%s5 + $0x18] sm:$0xff] %v1393
        %1410 = vst [vmem:[%s5 + $0x20] sm:$0xff] %v1394
        %1411 = vst [vmem:[%s5 + $0x28] sm:$0xff] %v1395
        %1412 = vst [vmem:[%s5 + $0x30] sm:$0xff] %v1396
        %1413 = vst [vmem:[%s5 + $0x38] sm:$0xff] %v1397
        %1414 = vst [vmem:[%s5 + $0x40] sm:$0xff] %v1398
        %1415 = vst [vmem:[%s5 + $0x48] sm:$0xff] %v1399
        %1416 = vst [vmem:[%s5 + $0x50] sm:$0xff] %v1400
        %1417 = vst [vmem:[%s5 + $0x58] sm:$0xff] %v1401
        %1418 = vst [vmem:[%s5 + $0x60] sm:$0xff] %v1402
        %1419 = vst [vmem:[%s5 + $0x68] sm:$0xff] %v1403
        %1420 = vst [vmem:[%s5 + $0x70] sm:$0xff] %v1404
        %1421 = vst [vmem:[%s5 + $0x78] sm:$0xff] %v1405
      $region52: #{conv_classify_forward.4} parent=39 // pred_fallthru
        _
      // Predicated region
      $region53: #{conv_classify_forward.4} parent=39 // pred_check
        %p1422 = pneg %p139
      $region54: #{conv_classify_forward.4} parent=39 // pred_check_branch
        %1424 = sbr.rel (%p1422) target = $region56
      $region55: #{conv_classify_forward.4} parent=39 // pred_region
        _
      $region56: #{conv_classify_forward.4} parent=39 // pred_fallthru
        _
      // Predicated region
      $region57: #{conv_classify_forward.4} parent=39 // pred_check
        %p1425 = pneg %p139
      $region58: #{conv_classify_forward.4} parent=39 // pred_check_branch
        %1427 = sbr.rel (%p1425) target = $region60
      $region59: #{conv_classify_forward.4} parent=39 // pred_region
        _
      $region60: #{conv_classify_forward.4} parent=39 // pred_fallthru
        _
    $region40: #{conv_classify_forward.4} parent=5 // pred_fallthru
      _
    %p1428 = scmp.le.s32.totalorder 2, %s11
    // Predicated region
    $region61: #{conv_classify_forward.4} parent=5 // pred_check
      %p1429 = pneg %p1428
    $region62: #{conv_classify_forward.4} parent=5 // pred_check_branch
      %1431 = sbr.rel (%p1429) target = $region64
    $region63: #{conv_classify_forward.4} parent=5 // pred_region
      %s1432 = ssub.s32 %s11, 2
    $region64: #{conv_classify_forward.4} parent=5 // pred_fallthru
      _
  $region6: #{conv_classify_forward.4} parent=0 // loop_footer
    %s15 = sadd.s32 1, %s11
  $region7: #{conv_classify_forward.4} parent=0 // loop_footer_branch
    %10 = sbr.rel target = $region3
  $region8: #{conv_classify_forward.4} parent=0 // loop_exit
    _

// kernel: conv_classify_forward.5
$region0: #{conv_classify_forward.5}
  #allocation0 [shape = 'u32[]', space=smem, size = 0x4, offset = 0x4, fixed_abs, tag = 'smem constant byte address 0x4 - core index']
  #allocation1 [shape = 'u32[144,128]{1,0:T(1,128)}', space=vmem, size = 0x12000, scoped, tag = 'internal scratch']
  #allocation2 [shape = 'f32[2,512]{1,0:T(2,128)}', space=vmem, size = 0x1000, scoped, tag = 'scratch operand']
  %s0 = inlined_call_operand.vmem [shape: bf16[2,8192], index: 0, kind: input, shape index: {}]
  %s1 = inlined_call_operand.vmem [shape: bf16[8192,512], index: 1, kind: input, shape index: {}]
  %s2 = inlined_call_operand.vmem [shape: f32[1,512], index: 2, kind: input, shape index: {}]
  %s3 = inlined_call_operand.vmem [shape: f32[1,512], index: 3, kind: input, shape index: {}]
  %s4 = inlined_call_operand.vmem [shape: f32[1,512], index: 4, kind: input, shape index: {}]
  %s5 = inlined_call_operand.vmem [shape: f32[512,2], index: 5, kind: input, shape index: {}]
  %s6 = inlined_call_operand.vmem [shape: f32[1,2], index: 6, kind: input, shape index: {}]
  %s7 = inlined_call_operand.hbm [shape: f32[2,2], index: 7, kind: output, shape index: {}]
  %s8 = sld [smem:[#allocation0]]
  $region69: #{conv_classify_forward.5} parent=0
    _
  %s10 = ssub.s32 1, %s8
  %s11 = scalar_select 0, %s10, %s8
  $region1: #{conv_classify_forward.5} parent=0
    #allocation3 [shape = 'u8[1024]{0}', space=vmem, size = 0x400, scoped, tag = 'output window, operand 0, single buffered']
    #allocation4 [shape = 's32[2]{0}', space=sflag, size = 0x8, scoped, tag = 'scoped memory for conv_classify_forward.5']
    %12 = vsyncpa [#allocation4], 0
    loop: start=0, step=1, limit=4
    $region2: #{conv_classify_forward.5} parent=1 // loop_pre_header
      _
    $region3: #{conv_classify_forward.5} parent=1 // loop_header
      %s14 = sphi 0, %s18
      %p15 = scmp.ge.s32.totalorder %s14, 4
      %s22 = sphi 0, %s22
      %s24 = sphi 0, %s22
      %s25 = sphi 0, %s24
      %s39 = sphi 0, %s25
      %s45 = sphi 0, %s47
      %s48 = sphi 0, %s45
      %s49 = sphi 0, %s48
      %s65 = sphi 0, %s49
      %s69 = sphi 0, %s69
      %s71 = sphi 0, %s69
      %s72 = sphi 0, %s71
      %s86 = sphi 0, %s72
      %s90 = sphi 0, %s90
      %s92 = sphi 0, %s90
      %s93 = sphi 0, %s92
      %s107 = sphi 0, %s93
      %s111 = sphi 0, %s111
      %s113 = sphi 0, %s111
      %s114 = sphi 0, %s113
      %s128 = sphi 0, %s114
      %s132 = sphi 0, %s132
      %s134 = sphi 0, %s132
      %s135 = sphi 0, %s134
      %s149 = sphi 0, %s135
      %s153 = sphi 0, %s153
      %s155 = sphi 0, %s153
      %s156 = sphi 0, %s155
      %s170 = sphi 0, %s156
      %s174 = sphi 0, %s174
      %s176 = sphi 0, %s174
      %s177 = sphi 0, %s176
      %s191 = sphi 0, %s177
    $region4: #{conv_classify_forward.5} parent=1 // loop_header_branch
      %17 = sbr.rel (%p15) target = $region8
    $region5: #{conv_classify_forward.5} parent=1 // loop_body
      %s19 = ssub.s32 %s14, 1
      %s20 = ssub.s32 %s14, 2
      %s21 = sadd.s32 %s14, 1
      %s23 = sadd.s32 %s22, 1
      %p26 = scmp.eq.s32.totalorder %s14, 1
      %p27 = scmp.ne.s32.totalorder %s22, %s24
      %p28 = scmp.eq.s32.totalorder %s14, 0
      %p29 = por %p27, %p28
      %p30 = scmp.ne.s32.totalorder %s22, %s24
      %p31 = scmp.eq.s32.totalorder %s19, 1
      %p32 = por %p30, %p31
      %p33 = scmp.ne.s32.totalorder %s24, %s25
      %p34 = scmp.eq.s32.totalorder %s19, 0
      %p35 = por %p33, %p34
      %p36 = scmp.ne.s32.totalorder %s24, %s25
      %p37 = scmp.eq.s32.totalorder %s20, 1
      %p38 = por %p36, %p37
      %p40 = scmp.ne.s32.totalorder %s25, %s39
      %p41 = scmp.eq.s32.totalorder %s20, 0
      %p42 = por %p40, %p41
      %s43 = ssub.s32 %s14, %s21
      %p44 = scmp.eq.s32.totalorder %s43, 0
      %s46 = sadd.s32 %s45, 1
      %s47 = scalar_select %p44, %s45, %s46
      %p50 = pneg %p44
      %p51 = scmp.eq.s32.totalorder %s14, 1
      %p52 = por %p50, %p51
      %p53 = scmp.ne.s32.totalorder %s45, %s48
      %p54 = scmp.eq.s32.totalorder %s14, 0
      %p55 = por %p53, %p54
      %p56 = scmp.ne.s32.totalorder %s45, %s48
      %p57 = scmp.eq.s32.totalorder %s19, 1
      %p58 = por %p56, %p57
      %p59 = scmp.ne.s32.totalorder %s48, %s49
      %p60 = scmp.eq.s32.totalorder %s19, 0
      %p61 = por %p59, %p60
      %p62 = scmp.ne.s32.totalorder %s48, %s49
      %p63 = scmp.eq.s32.totalorder %s20, 1
      %p64 = por %p62, %p63
      %p66 = scmp.ne.s32.totalorder %s49, %s65
      %p67 = scmp.eq.s32.totalorder %s20, 0
      %p68 = por %p66, %p67
      %s70 = sadd.s32 %s69, 1
      %p73 = scmp.eq.s32.totalorder %s14, 1
      %p74 = scmp.ne.s32.totalorder %s69, %s71
      %p75 = scmp.eq.s32.totalorder %s14, 0
      %p76 = por %p74, %p75
      %p77 = scmp.ne.s32.totalorder %s69, %s71
      %p78 = scmp.eq.s32.totalorder %s19, 1
      %p79 = por %p77, %p78
      %p80 = scmp.ne.s32.totalorder %s71, %s72
      %p81 = scmp.eq.s32.totalorder %s19, 0
      %p82 = por %p80, %p81
      %p83 = scmp.ne.s32.totalorder %s71, %s72
      %p84 = scmp.eq.s32.totalorder %s20, 1
      %p85 = por %p83, %p84
      %p87 = scmp.ne.s32.totalorder %s72, %s86
      %p88 = scmp.eq.s32.totalorder %s20, 0
      %p89 = por %p87, %p88
      %s91 = sadd.s32 %s90, 1
      %p94 = scmp.eq.s32.totalorder %s14, 1
      %p95 = scmp.ne.s32.totalorder %s90, %s92
      %p96 = scmp.eq.s32.totalorder %s14, 0
      %p97 = por %p95, %p96
      %p98 = scmp.ne.s32.totalorder %s90, %s92
      %p99 = scmp.eq.s32.totalorder %s19, 1
      %p100 = por %p98, %p99
      %p101 = scmp.ne.s32.totalorder %s92, %s93
      %p102 = scmp.eq.s32.totalorder %s19, 0
      %p103 = por %p101, %p102
      %p104 = scmp.ne.s32.totalorder %s92, %s93
      %p105 = scmp.eq.s32.totalorder %s20, 1
      %p106 = por %p104, %p105
      %p108 = scmp.ne.s32.totalorder %s93, %s107
      %p109 = scmp.eq.s32.totalorder %s20, 0
      %p110 = por %p108, %p109
      %s112 = sadd.s32 %s111, 1
      %p115 = scmp.eq.s32.totalorder %s14, 1
      %p116 = scmp.ne.s32.totalorder %s111, %s113
      %p117 = scmp.eq.s32.totalorder %s14, 0
      %p118 = por %p116, %p117
      %p119 = scmp.ne.s32.totalorder %s111, %s113
      %p120 = scmp.eq.s32.totalorder %s19, 1
      %p121 = por %p119, %p120
      %p122 = scmp.ne.s32.totalorder %s113, %s114
      %p123 = scmp.eq.s32.totalorder %s19, 0
      %p124 = por %p122, %p123
      %p125 = scmp.ne.s32.totalorder %s113, %s114
      %p126 = scmp.eq.s32.totalorder %s20, 1
      %p127 = por %p125, %p126
      %p129 = scmp.ne.s32.totalorder %s114, %s128
      %p130 = scmp.eq.s32.totalorder %s20, 0
      %p131 = por %p129, %p130
      %s133 = sadd.s32 %s132, 1
      %p136 = scmp.eq.s32.totalorder %s14, 1
      %p137 = scmp.ne.s32.totalorder %s132, %s134
      %p138 = scmp.eq.s32.totalorder %s14, 0
      %p139 = por %p137, %p138
      %p140 = scmp.ne.s32.totalorder %s132, %s134
      %p141 = scmp.eq.s32.totalorder %s19, 1
      %p142 = por %p140, %p141
      %p143 = scmp.ne.s32.totalorder %s134, %s135
      %p144 = scmp.eq.s32.totalorder %s19, 0
      %p145 = por %p143, %p144
      %p146 = scmp.ne.s32.totalorder %s134, %s135
      %p147 = scmp.eq.s32.totalorder %s20, 1
      %p148 = por %p146, %p147
      %p150 = scmp.ne.s32.totalorder %s135, %s149
      %p151 = scmp.eq.s32.totalorder %s20, 0
      %p152 = por %p150, %p151
      %s154 = sadd.s32 %s153, 1
      %p157 = scmp.eq.s32.totalorder %s14, 1
      %p158 = scmp.ne.s32.totalorder %s153, %s155
      %p159 = scmp.eq.s32.totalorder %s14, 0
      %p160 = por %p158, %p159
      %p161 = scmp.ne.s32.totalorder %s153, %s155
      %p162 = scmp.eq.s32.totalorder %s19, 1
      %p163 = por %p161, %p162
      %p164 = scmp.ne.s32.totalorder %s155, %s156
      %p165 = scmp.eq.s32.totalorder %s19, 0
      %p166 = por %p164, %p165
      %p167 = scmp.ne.s32.totalorder %s155, %s156
      %p168 = scmp.eq.s32.totalorder %s20, 1
      %p169 = por %p167, %p168
      %p171 = scmp.ne.s32.totalorder %s156, %s170
      %p172 = scmp.eq.s32.totalorder %s20, 0
      %p173 = por %p171, %p172
      %s175 = sadd.s32 %s174, 1
      %p178 = scmp.eq.s32.totalorder %s14, 1
      %p179 = scmp.ne.s32.totalorder %s174, %s176
      %p180 = scmp.eq.s32.totalorder %s14, 0
      %p181 = por %p179, %p180
      %p182 = scmp.ne.s32.totalorder %s174, %s176
      %p183 = scmp.eq.s32.totalorder %s19, 1
      %p184 = por %p182, %p183
      %p185 = scmp.ne.s32.totalorder %s176, %s177
      %p186 = scmp.eq.s32.totalorder %s19, 0
      %p187 = por %p185, %p186
      %p188 = scmp.ne.s32.totalorder %s176, %s177
      %p189 = scmp.eq.s32.totalorder %s20, 1
      %p190 = por %p188, %p189
      %p192 = scmp.ne.s32.totalorder %s177, %s191
      %p193 = scmp.eq.s32.totalorder %s20, 0
      %p194 = por %p192, %p193
      %p195 = scmp.le.s32.totalorder 1, %s14
      %p196 = scmp.lt.s32.totalorder %s14, 3
      %p197 = pnand %p195, %p196
      %p198 = pneg %p197
      // Predicated region
      $region9: #{conv_classify_forward.5} parent=5 // pred_check
        _
      $region10: #{conv_classify_forward.5} parent=5 // pred_check_branch
        %200 = sbr.rel (%p197) target = $region12
      $region11: #{conv_classify_forward.5} parent=5 // pred_region
        %s201 = ssub.s32 %s14, 1
        // Predicated region
        $region13: #{conv_classify_forward.5} parent=11 // pred_check
          %p202 = pneg %p35
        $region14: #{conv_classify_forward.5} parent=11 // pred_check_branch
          %204 = sbr.rel (%p202) target = $region16
        $region15: #{conv_classify_forward.5} parent=11 // pred_region
          _
        $region16: #{conv_classify_forward.5} parent=11 // pred_fallthru
          _
        // Predicated region
        $region17: #{conv_classify_forward.5} parent=11 // pred_check
          %p205 = pneg %p82
        $region18: #{conv_classify_forward.5} parent=11 // pred_check_branch
          %207 = sbr.rel (%p205) target = $region20
        $region19: #{conv_classify_forward.5} parent=11 // pred_region
          _
        $region20: #{conv_classify_forward.5} parent=11 // pred_fallthru
          _
        // Predicated region
        $region21: #{conv_classify_forward.5} parent=11 // pred_check
          %p208 = pneg %p103
        $region22: #{conv_classify_forward.5} parent=11 // pred_check_branch
          %210 = sbr.rel (%p208) target = $region24
        $region23: #{conv_classify_forward.5} parent=11 // pred_region
          _
        $region24: #{conv_classify_forward.5} parent=11 // pred_fallthru
          _
        // Predicated region
        $region25: #{conv_classify_forward.5} parent=11 // pred_check
          %p211 = pneg %p124
        $region26: #{conv_classify_forward.5} parent=11 // pred_check_branch
          %213 = sbr.rel (%p211) target = $region28
        $region27: #{conv_classify_forward.5} parent=11 // pred_region
          _
        $region28: #{conv_classify_forward.5} parent=11 // pred_fallthru
          _
        // Predicated region
        $region29: #{conv_classify_forward.5} parent=11 // pred_check
          %p214 = pneg %p145
        $region30: #{conv_classify_forward.5} parent=11 // pred_check_branch
          %216 = sbr.rel (%p214) target = $region32
        $region31: #{conv_classify_forward.5} parent=11 // pred_region
          _
        $region32: #{conv_classify_forward.5} parent=11 // pred_fallthru
          _
        // Predicated region
        $region33: #{conv_classify_forward.5} parent=11 // pred_check
          %p217 = pneg %p166
        $region34: #{conv_classify_forward.5} parent=11 // pred_check_branch
          %219 = sbr.rel (%p217) target = $region36
        $region35: #{conv_classify_forward.5} parent=11 // pred_region
          _
        $region36: #{conv_classify_forward.5} parent=11 // pred_fallthru
          _
      $region12: #{conv_classify_forward.5} parent=5 // pred_fallthru
        _
      %p220 = scmp.lt.s32.totalorder %s14, 2
      // Predicated region
      $region37: #{conv_classify_forward.5} parent=5 // pred_check
        %p221 = pneg %p220
      $region38: #{conv_classify_forward.5} parent=5 // pred_check_branch
        %223 = sbr.rel (%p221) target = $region40
      $region39: #{conv_classify_forward.5} parent=5 // pred_region
        // Predicated region
        $region41: #{conv_classify_forward.5} parent=39 // pred_check
          %p224 = pneg %p55
        $region42: #{conv_classify_forward.5} parent=39 // pred_check_branch
          %226 = sbr.rel (%p224) target = $region44
        $region43: #{conv_classify_forward.5} parent=39 // pred_region
          %s227 = smul.u32 512, %s14
          %p228 = scmp.lt.s32.totalorder %s227, 1023
          %s229 = scalar_select %p228, %s227, 1023
          %s230 = smul.addr %s229, 4
          %s231 = smul.addr %s230, 4
          %s232 = scalar_lea.vmem %s1, %s231
          %s233 = smul.u32 512, %s14
        $region44: #{conv_classify_forward.5} parent=39 // pred_fallthru
          _
      $region40: #{conv_classify_forward.5} parent=5 // pred_fallthru
        _
      %p234 = scmp.le.s32.totalorder 1, %s14
      %p235 = scmp.lt.s32.totalorder %s14, 3
      %p236 = pnand %p234, %p235
      %p237 = pneg %p236
      // Predicated region
      $region45: #{conv_classify_forward.5} parent=5 // pred_check
        _
      $region46: #{conv_classify_forward.5} parent=5 // pred_check_branch
        %239 = sbr.rel (%p236) target = $region48
      $region47: #{conv_classify_forward.5} parent=5 // pred_region
        %s240 = ssub.s32 %s14, 1
        %p241 = pneg %p35
        %p242 = pneg %p32
        %s243 = smul.u32 512, %s19
        %p244 = scmp.lt.s32.totalorder %s243, 1023
        %s245 = scalar_select %p244, %s243, 1023
        %s246 = smul.addr %s245, 4
        %s247 = smul.addr %s246, 4
        %s248 = scalar_lea.vmem %s1, %s247
        %p249 = pneg %p61
        %p250 = pneg %p58
        %p251 = pneg %p82
        %p252 = pneg %p79
        %p253 = pneg %p103
        %p254 = pneg %p100
        %p255 = pneg %p124
        %p256 = pneg %p121
        %p257 = pneg %p145
        %p258 = pneg %p142
        %p259 = pneg %p166
        %p260 = pneg %p163
        %p261 = pneg %p187
        %p262 = pneg %p184
        %s263 = smul.u32 512, %s19
        %p264 = scmp.lt.s32.totalorder %s263, 1023
        %s265 = scalar_select %p264, %s263, 1023
        %s266 = smul.addr %s265, 4
        %s267 = smul.addr %s266, 4
        %s268 = scalar_lea.vmem %s1, %s267
        %s269 = smul.u32 512, %s19
        %p270 = scmp.eq.s32.totalorder %s19, 0
        // Predicated region
        $region49: #{conv_classify_forward.5} parent=47 // pred_check
          %p271 = pneg %p270
        $region50: #{conv_classify_forward.5} parent=47 // pred_check_branch
          %273 = sbr.rel (%p271) target = $region52
        $region51: #{conv_classify_forward.5} parent=47 // pred_region
          %274 = vst [vmem:[#allocation2] sm:$0xff] 0.0
        $region52: #{conv_classify_forward.5} parent=47 // pred_fallthru
          _
        %s275 = smul.u32 %s19, 4096
        %v276 = vld [vmem:[#allocation2] sm:$0xff]
        %s277 = sshra.s32 %s275, 7
        %s278 = sand.u32 %s275, 127
        %s279 = scalar_lea.vmem %s0, %s277
        %v280 = vld [vmem:[%s279] sm:$0xff]
        %v281 = vld [vmem:[%s279 + $0x8] sm:$0xff]
        %v282 = vld [vmem:[%s279 + $0x10] sm:$0xff]
        %v283 = vld [vmem:[%s279 + $0x18] sm:$0xff]
        %v284 = vld [vmem:[%s268] sm:$0xff]
        %v285 = vld [vmem:[%s268 + $0x8] sm:$0xff]
        %v286 = vld [vmem:[%s268 + $0x10] sm:$0xff]
        %v287 = vld [vmem:[%s268 + $0x18] sm:$0xff]
        %v288 = vld [vmem:[%s268 + $0x20] sm:$0xff]
        %v289 = vld [vmem:[%s268 + $0x28] sm:$0xff]
        %v290 = vld [vmem:[%s268 + $0x30] sm:$0xff]
        %v291 = vld [vmem:[%s268 + $0x38] sm:$0xff]
        %v292 = vld [vmem:[%s268 + $0x40] sm:$0xff]
        %v293 = vld [vmem:[%s268 + $0x48] sm:$0xff]
        %v294 = vld [vmem:[%s268 + $0x50] sm:$0xff]
        %v295 = vld [vmem:[%s268 + $0x58] sm:$0xff]
        %v296 = vld [vmem:[%s268 + $0x60] sm:$0xff]
        %v297 = vld [vmem:[%s268 + $0x68] sm:$0xff]
        %v298 = vld [vmem:[%s268 + $0x70] sm:$0xff]
        %v299 = vld [vmem:[%s268 + $0x78] sm:$0xff]
        %v300 = vld [vmem:[%s268 + $0x80] sm:$0xff]
        %v301 = vld [vmem:[%s268 + $0x88] sm:$0xff]
        %v302 = vld [vmem:[%s268 + $0x90] sm:$0xff]
        %v303 = vld [vmem:[%s268 + $0x98] sm:$0xff]
        %v304 = vld [vmem:[%s268 + $0xa0] sm:$0xff]
        %v305 = vld [vmem:[%s268 + $0xa8] sm:$0xff]
        %v306 = vld [vmem:[%s268 + $0xb0] sm:$0xff]
        %v307 = vld [vmem:[%s268 + $0xb8] sm:$0xff]
        %v308 = vld [vmem:[%s268 + $0xc0] sm:$0xff]
        %v309 = vld [vmem:[%s268 + $0xc8] sm:$0xff]
        %v310 = vld [vmem:[%s268 + $0xd0] sm:$0xff]
        %v311 = vld [vmem:[%s268 + $0xd8] sm:$0xff]
        %v312 = vld [vmem:[%s268 + $0xe0] sm:$0xff]
        %v313 = vld [vmem:[%s268 + $0xe8] sm:$0xff]
        %v314 = vld [vmem:[%s268 + $0xf0] sm:$0xff]
        %v315 = vld [vmem:[%s268 + $0xf8] sm:$0xff]
        %v316 = vld [vmem:[%s268 + $0x100] sm:$0xff]
        %v317 = vld [vmem:[%s268 + $0x108] sm:$0xff]
        %v318 = vld [vmem:[%s268 + $0x110] sm:$0xff]
        %v319 = vld [vmem:[%s268 + $0x118] sm:$0xff]
        %v320 = vld [vmem:[%s268 + $0x120] sm:$0xff]
        %v321 = vld [vmem:[%s268 + $0x128] sm:$0xff]
        %v322 = vld [vmem:[%s268 + $0x130] sm:$0xff]
        %v323 = vld [vmem:[%s268 + $0x138] sm:$0xff]
        %v324 = vld [vmem:[%s268 + $0x140] sm:$0xff]
        %v325 = vld [vmem:[%s268 + $0x148] sm:$0xff]
        %v326 = vld [vmem:[%s268 + $0x150] sm:$0xff]
        %v327 = vld [vmem:[%s268 + $0x158] sm:$0xff]
        %v328 = vld [vmem:[%s268 + $0x160] sm:$0xff]
        %v329 = vld [vmem:[%s268 + $0x168] sm:$0xff]
        %v330 = vld [vmem:[%s268 + $0x170] sm:$0xff]
        %v331 = vld [vmem:[%s268 + $0x178] sm:$0xff]
        %v332 = vld [vmem:[%s268 + $0x180] sm:$0xff]
        %v333 = vld [vmem:[%s268 + $0x188] sm:$0xff]
        %v334 = vld [vmem:[%s268 + $0x190] sm:$0xff]
        %v335 = vld [vmem:[%s268 + $0x198] sm:$0xff]
        %v336 = vld [vmem:[%s268 + $0x1a0] sm:$0xff]
        %v337 = vld [vmem:[%s268 + $0x1a8] sm:$0xff]
        %v338 = vld [vmem:[%s268 + $0x1b0] sm:$0xff]
        %v339 = vld [vmem:[%s268 + $0x1b8] sm:$0xff]
        %v340 = vld [vmem:[%s268 + $0x1c0] sm:$0xff]
        %v341 = vld [vmem:[%s268 + $0x1c8] sm:$0xff]
        %v342 = vld [vmem:[%s268 + $0x1d0] sm:$0xff]
        %v343 = vld [vmem:[%s268 + $0x1d8] sm:$0xff]
        %v344 = vld [vmem:[%s268 + $0x1e0] sm:$0xff]
        %v345 = vld [vmem:[%s268 + $0x1e8] sm:$0xff]
        %v346 = vld [vmem:[%s268 + $0x1f0] sm:$0xff]
        %v347 = vld [vmem:[%s268 + $0x1f8] sm:$0xff]
        %v348 = vld [vmem:[%s268 + $0x200] sm:$0xff]
        %v349 = vld [vmem:[%s268 + $0x208] sm:$0xff]
        %v350 = vld [vmem:[%s268 + $0x210] sm:$0xff]
        %v351 = vld [vmem:[%s268 + $0x218] sm:$0xff]
        %v352 = vld [vmem:[%s268 + $0x220] sm:$0xff]
        %v353 = vld [vmem:[%s268 + $0x228] sm:$0xff]
        %v354 = vld [vmem:[%s268 + $0x230] sm:$0xff]
        %v355 = vld [vmem:[%s268 + $0x238] sm:$0xff]
        %v356 = vld [vmem:[%s268 + $0x240] sm:$0xff]
        %v357 = vld [vmem:[%s268 + $0x248] sm:$0xff]
        %v358 = vld [vmem:[%s268 + $0x250] sm:$0xff]
        %v359 = vld [vmem:[%s268 + $0x258] sm:$0xff]
        %v360 = vld [vmem:[%s268 + $0x260] sm:$0xff]
        %v361 = vld [vmem:[%s268 + $0x268] sm:$0xff]
        %v362 = vld [vmem:[%s268 + $0x270] sm:$0xff]
        %v363 = vld [vmem:[%s268 + $0x278] sm:$0xff]
        %v364 = vld [vmem:[%s268 + $0x280] sm:$0xff]
        %v365 = vld [vmem:[%s268 + $0x288] sm:$0xff]
        %v366 = vld [vmem:[%s268 + $0x290] sm:$0xff]
        %v367 = vld [vmem:[%s268 + $0x298] sm:$0xff]
        %v368 = vld [vmem:[%s268 + $0x2a0] sm:$0xff]
        %v369 = vld [vmem:[%s268 + $0x2a8] sm:$0xff]
        %v370 = vld [vmem:[%s268 + $0x2b0] sm:$0xff]
        %v371 = vld [vmem:[%s268 + $0x2b8] sm:$0xff]
        %v372 = vld [vmem:[%s268 + $0x2c0] sm:$0xff]
        %v373 = vld [vmem:[%s268 + $0x2c8] sm:$0xff]
        %v374 = vld [vmem:[%s268 + $0x2d0] sm:$0xff]
        %v375 = vld [vmem:[%s268 + $0x2d8] sm:$0xff]
        %v376 = vld [vmem:[%s268 + $0x2e0] sm:$0xff]
        %v377 = vld [vmem:[%s268 + $0x2e8] sm:$0xff]
        %v378 = vld [vmem:[%s268 + $0x2f0] sm:$0xff]
        %v379 = vld [vmem:[%s268 + $0x2f8] sm:$0xff]
        %v380 = vld [vmem:[%s268 + $0x300] sm:$0xff]
        %v381 = vld [vmem:[%s268 + $0x308] sm:$0xff]
        %v382 = vld [vmem:[%s268 + $0x310] sm:$0xff]
        %v383 = vld [vmem:[%s268 + $0x318] sm:$0xff]
        %v384 = vld [vmem:[%s268 + $0x320] sm:$0xff]
        %v385 = vld [vmem:[%s268 + $0x328] sm:$0xff]
        %v386 = vld [vmem:[%s268 + $0x330] sm:$0xff]
        %v387 = vld [vmem:[%s268 + $0x338] sm:$0xff]
        %v388 = vld [vmem:[%s268 + $0x340] sm:$0xff]
        %v389 = vld [vmem:[%s268 + $0x348] sm:$0xff]
        %v390 = vld [vmem:[%s268 + $0x350] sm:$0xff]
        %v391 = vld [vmem:[%s268 + $0x358] sm:$0xff]
        %v392 = vld [vmem:[%s268 + $0x360] sm:$0xff]
        %v393 = vld [vmem:[%s268 + $0x368] sm:$0xff]
        %v394 = vld [vmem:[%s268 + $0x370] sm:$0xff]
        %v395 = vld [vmem:[%s268 + $0x378] sm:$0xff]
        %v396 = vld [vmem:[%s268 + $0x380] sm:$0xff]
        %v397 = vld [vmem:[%s268 + $0x388] sm:$0xff]
        %v398 = vld [vmem:[%s268 + $0x390] sm:$0xff]
        %v399 = vld [vmem:[%s268 + $0x398] sm:$0xff]
        %v400 = vld [vmem:[%s268 + $0x3a0] sm:$0xff]
        %v401 = vld [vmem:[%s268 + $0x3a8] sm:$0xff]
        %v402 = vld [vmem:[%s268 + $0x3b0] sm:$0xff]
        %v403 = vld [vmem:[%s268 + $0x3b8] sm:$0xff]
        %v404 = vld [vmem:[%s268 + $0x3c0] sm:$0xff]
        %v405 = vld [vmem:[%s268 + $0x3c8] sm:$0xff]
        %v406 = vld [vmem:[%s268 + $0x3d0] sm:$0xff]
        %v407 = vld [vmem:[%s268 + $0x3d8] sm:$0xff]
        %v408 = vld [vmem:[%s268 + $0x3e0] sm:$0xff]
        %v409 = vld [vmem:[%s268 + $0x3e8] sm:$0xff]
        %v410 = vld [vmem:[%s268 + $0x3f0] sm:$0xff]
        %v411 = vld [vmem:[%s268 + $0x3f8] sm:$0xff]
        %v412 = vld [vmem:[%s268 + $0x400] sm:$0xff]
        %v413 = vld [vmem:[%s268 + $0x408] sm:$0xff]
        %v414 = vld [vmem:[%s268 + $0x410] sm:$0xff]
        %v415 = vld [vmem:[%s268 + $0x418] sm:$0xff]
        %v416 = vld [vmem:[%s268 + $0x420] sm:$0xff]
        %v417 = vld [vmem:[%s268 + $0x428] sm:$0xff]
        %v418 = vld [vmem:[%s268 + $0x430] sm:$0xff]
        %v419 = vld [vmem:[%s268 + $0x438] sm:$0xff]
        %v420 = vld [vmem:[%s268 + $0x440] sm:$0xff]
        %v421 = vld [vmem:[%s268 + $0x448] sm:$0xff]
        %v422 = vld [vmem:[%s268 + $0x450] sm:$0xff]
        %v423 = vld [vmem:[%s268 + $0x458] sm:$0xff]
        %v424 = vld [vmem:[%s268 + $0x460] sm:$0xff]
        %v425 = vld [vmem:[%s268 + $0x468] sm:$0xff]
        %v426 = vld [vmem:[%s268 + $0x470] sm:$0xff]
        %v427 = vld [vmem:[%s268 + $0x478] sm:$0xff]
        %v428 = vld [vmem:[%s268 + $0x480] sm:$0xff]
        %v429 = vld [vmem:[%s268 + $0x488] sm:$0xff]
        %v430 = vld [vmem:[%s268 + $0x490] sm:$0xff]
        %v431 = vld [vmem:[%s268 + $0x498] sm:$0xff]
        %v432 = vld [vmem:[%s268 + $0x4a0] sm:$0xff]
        %v433 = vld [vmem:[%s268 + $0x4a8] sm:$0xff]
        %v434 = vld [vmem:[%s268 + $0x4b0] sm:$0xff]
        %v435 = vld [vmem:[%s268 + $0x4b8] sm:$0xff]
        %v436 = vld [vmem:[%s268 + $0x4c0] sm:$0xff]
        %v437 = vld [vmem:[%s268 + $0x4c8] sm:$0xff]
        %v438 = vld [vmem:[%s268 + $0x4d0] sm:$0xff]
        %v439 = vld [vmem:[%s268 + $0x4d8] sm:$0xff]
        %v440 = vld [vmem:[%s268 + $0x4e0] sm:$0xff]
        %v441 = vld [vmem:[%s268 + $0x4e8] sm:$0xff]
        %v442 = vld [vmem:[%s268 + $0x4f0] sm:$0xff]
        %v443 = vld [vmem:[%s268 + $0x4f8] sm:$0xff]
        %v444 = vld [vmem:[%s268 + $0x500] sm:$0xff]
        %v445 = vld [vmem:[%s268 + $0x508] sm:$0xff]
        %v446 = vld [vmem:[%s268 + $0x510] sm:$0xff]
        %v447 = vld [vmem:[%s268 + $0x518] sm:$0xff]
        %v448 = vld [vmem:[%s268 + $0x520] sm:$0xff]
        %v449 = vld [vmem:[%s268 + $0x528] sm:$0xff]
        %v450 = vld [vmem:[%s268 + $0x530] sm:$0xff]
        %v451 = vld [vmem:[%s268 + $0x538] sm:$0xff]
        %v452 = vld [vmem:[%s268 + $0x540] sm:$0xff]
        %v453 = vld [vmem:[%s268 + $0x548] sm:$0xff]
        %v454 = vld [vmem:[%s268 + $0x550] sm:$0xff]
        %v455 = vld [vmem:[%s268 + $0x558] sm:$0xff]
        %v456 = vld [vmem:[%s268 + $0x560] sm:$0xff]
        %v457 = vld [vmem:[%s268 + $0x568] sm:$0xff]
        %v458 = vld [vmem:[%s268 + $0x570] sm:$0xff]
        %v459 = vld [vmem:[%s268 + $0x578] sm:$0xff]
        %v460 = vld [vmem:[%s268 + $0x580] sm:$0xff]
        %v461 = vld [vmem:[%s268 + $0x588] sm:$0xff]
        %v462 = vld [vmem:[%s268 + $0x590] sm:$0xff]
        %v463 = vld [vmem:[%s268 + $0x598] sm:$0xff]
        %v464 = vld [vmem:[%s268 + $0x5a0] sm:$0xff]
        %v465 = vld [vmem:[%s268 + $0x5a8] sm:$0xff]
        %v466 = vld [vmem:[%s268 + $0x5b0] sm:$0xff]
        %v467 = vld [vmem:[%s268 + $0x5b8] sm:$0xff]
        %v468 = vld [vmem:[%s268 + $0x5c0] sm:$0xff]
        %v469 = vld [vmem:[%s268 + $0x5c8] sm:$0xff]
        %v470 = vld [vmem:[%s268 + $0x5d0] sm:$0xff]
        %v471 = vld [vmem:[%s268 + $0x5d8] sm:$0xff]
        %v472 = vld [vmem:[%s268 + $0x5e0] sm:$0xff]
        %v473 = vld [vmem:[%s268 + $0x5e8] sm:$0xff]
        %v474 = vld [vmem:[%s268 + $0x5f0] sm:$0xff]
        %v475 = vld [vmem:[%s268 + $0x5f8] sm:$0xff]
        %v476 = vld [vmem:[%s268 + $0x600] sm:$0xff]
        %v477 = vld [vmem:[%s268 + $0x608] sm:$0xff]
        %v478 = vld [vmem:[%s268 + $0x610] sm:$0xff]
        %v479 = vld [vmem:[%s268 + $0x618] sm:$0xff]
        %v480 = vld [vmem:[%s268 + $0x620] sm:$0xff]
        %v481 = vld [vmem:[%s268 + $0x628] sm:$0xff]
        %v482 = vld [vmem:[%s268 + $0x630] sm:$0xff]
        %v483 = vld [vmem:[%s268 + $0x638] sm:$0xff]
        %v484 = vld [vmem:[%s268 + $0x640] sm:$0xff]
        %v485 = vld [vmem:[%s268 + $0x648] sm:$0xff]
        %v486 = vld [vmem:[%s268 + $0x650] sm:$0xff]
        %v487 = vld [vmem:[%s268 + $0x658] sm:$0xff]
        %v488 = vld [vmem:[%s268 + $0x660] sm:$0xff]
        %v489 = vld [vmem:[%s268 + $0x668] sm:$0xff]
        %v490 = vld [vmem:[%s268 + $0x670] sm:$0xff]
        %v491 = vld [vmem:[%s268 + $0x678] sm:$0xff]
        %v492 = vld [vmem:[%s268 + $0x680] sm:$0xff]
        %v493 = vld [vmem:[%s268 + $0x688] sm:$0xff]
        %v494 = vld [vmem:[%s268 + $0x690] sm:$0xff]
        %v495 = vld [vmem:[%s268 + $0x698] sm:$0xff]
        %v496 = vld [vmem:[%s268 + $0x6a0] sm:$0xff]
        %v497 = vld [vmem:[%s268 + $0x6a8] sm:$0xff]
        %v498 = vld [vmem:[%s268 + $0x6b0] sm:$0xff]
        %v499 = vld [vmem:[%s268 + $0x6b8] sm:$0xff]
        %v500 = vld [vmem:[%s268 + $0x6c0] sm:$0xff]
        %v501 = vld [vmem:[%s268 + $0x6c8] sm:$0xff]
        %v502 = vld [vmem:[%s268 + $0x6d0] sm:$0xff]
        %v503 = vld [vmem:[%s268 + $0x6d8] sm:$0xff]
        %v504 = vld [vmem:[%s268 + $0x6e0] sm:$0xff]
        %v505 = vld [vmem:[%s268 + $0x6e8] sm:$0xff]
        %v506 = vld [vmem:[%s268 + $0x6f0] sm:$0xff]
        %v507 = vld [vmem:[%s268 + $0x6f8] sm:$0xff]
        %v508 = vld [vmem:[%s268 + $0x700] sm:$0xff]
        %v509 = vld [vmem:[%s268 + $0x708] sm:$0xff]
        %v510 = vld [vmem:[%s268 + $0x710] sm:$0xff]
        %v511 = vld [vmem:[%s268 + $0x718] sm:$0xff]
        %v512 = vld [vmem:[%s268 + $0x720] sm:$0xff]
        %v513 = vld [vmem:[%s268 + $0x728] sm:$0xff]
        %v514 = vld [vmem:[%s268 + $0x730] sm:$0xff]
        %v515 = vld [vmem:[%s268 + $0x738] sm:$0xff]
        %v516 = vld [vmem:[%s268 + $0x740] sm:$0xff]
        %v517 = vld [vmem:[%s268 + $0x748] sm:$0xff]
        %v518 = vld [vmem:[%s268 + $0x750] sm:$0xff]
        %v519 = vld [vmem:[%s268 + $0x758] sm:$0xff]
        %v520 = vld [vmem:[%s268 + $0x760] sm:$0xff]
        %v521 = vld [vmem:[%s268 + $0x768] sm:$0xff]
        %v522 = vld [vmem:[%s268 + $0x770] sm:$0xff]
        %v523 = vld [vmem:[%s268 + $0x778] sm:$0xff]
        %v524 = vld [vmem:[%s268 + $0x780] sm:$0xff]
        %v525 = vld [vmem:[%s268 + $0x788] sm:$0xff]
        %v526 = vld [vmem:[%s268 + $0x790] sm:$0xff]
        %v527 = vld [vmem:[%s268 + $0x798] sm:$0xff]
        %v528 = vld [vmem:[%s268 + $0x7a0] sm:$0xff]
        %v529 = vld [vmem:[%s268 + $0x7a8] sm:$0xff]
        %v530 = vld [vmem:[%s268 + $0x7b0] sm:$0xff]
        %v531 = vld [vmem:[%s268 + $0x7b8] sm:$0xff]
        %v532 = vld [vmem:[%s268 + $0x7c0] sm:$0xff]
        %v533 = vld [vmem:[%s268 + $0x7c8] sm:$0xff]
        %v534 = vld [vmem:[%s268 + $0x7d0] sm:$0xff]
        %v535 = vld [vmem:[%s268 + $0x7d8] sm:$0xff]
        %v536 = vld [vmem:[%s268 + $0x7e0] sm:$0xff]
        %v537 = vld [vmem:[%s268 + $0x7e8] sm:$0xff]
        %v538 = vld [vmem:[%s268 + $0x7f0] sm:$0xff]
        %v539 = vld [vmem:[%s268 + $0x7f8] sm:$0xff]
        %v540 = vld [vmem:[%s268 + $0x800] sm:$0xff]
        %v541 = vld [vmem:[%s268 + $0x808] sm:$0xff]
        %v542 = vld [vmem:[%s268 + $0x810] sm:$0xff]
        %v543 = vld [vmem:[%s268 + $0x818] sm:$0xff]
        %v544 = vld [vmem:[%s268 + $0x820] sm:$0xff]
        %v545 = vld [vmem:[%s268 + $0x828] sm:$0xff]
        %v546 = vld [vmem:[%s268 + $0x830] sm:$0xff]
        %v547 = vld [vmem:[%s268 + $0x838] sm:$0xff]
        %v548 = vld [vmem:[%s268 + $0x840] sm:$0xff]
        %v549 = vld [vmem:[%s268 + $0x848] sm:$0xff]
        %v550 = vld [vmem:[%s268 + $0x850] sm:$0xff]
        %v551 = vld [vmem:[%s268 + $0x858] sm:$0xff]
        %v552 = vld [vmem:[%s268 + $0x860] sm:$0xff]
        %v553 = vld [vmem:[%s268 + $0x868] sm:$0xff]
        %v554 = vld [vmem:[%s268 + $0x870] sm:$0xff]
        %v555 = vld [vmem:[%s268 + $0x878] sm:$0xff]
        %v556 = vld [vmem:[%s268 + $0x880] sm:$0xff]
        %v557 = vld [vmem:[%s268 + $0x888] sm:$0xff]
        %v558 = vld [vmem:[%s268 + $0x890] sm:$0xff]
        %v559 = vld [vmem:[%s268 + $0x898] sm:$0xff]
        %v560 = vld [vmem:[%s268 + $0x8a0] sm:$0xff]
        %v561 = vld [vmem:[%s268 + $0x8a8] sm:$0xff]
        %v562 = vld [vmem:[%s268 + $0x8b0] sm:$0xff]
        %v563 = vld [vmem:[%s268 + $0x8b8] sm:$0xff]
        %v564 = vld [vmem:[%s268 + $0x8c0] sm:$0xff]
        %v565 = vld [vmem:[%s268 + $0x8c8] sm:$0xff]
        %v566 = vld [vmem:[%s268 + $0x8d0] sm:$0xff]
        %v567 = vld [vmem:[%s268 + $0x8d8] sm:$0xff]
        %v568 = vld [vmem:[%s268 + $0x8e0] sm:$0xff]
        %v569 = vld [vmem:[%s268 + $0x8e8] sm:$0xff]
        %v570 = vld [vmem:[%s268 + $0x8f0] sm:$0xff]
        %v571 = vld [vmem:[%s268 + $0x8f8] sm:$0xff]
        %v572 = vld [vmem:[%s268 + $0x900] sm:$0xff]
        %v573 = vld [vmem:[%s268 + $0x908] sm:$0xff]
        %v574 = vld [vmem:[%s268 + $0x910] sm:$0xff]
        %v575 = vld [vmem:[%s268 + $0x918] sm:$0xff]
        %v576 = vld [vmem:[%s268 + $0x920] sm:$0xff]
        %v577 = vld [vmem:[%s268 + $0x928] sm:$0xff]
        %v578 = vld [vmem:[%s268 + $0x930] sm:$0xff]
        %v579 = vld [vmem:[%s268 + $0x938] sm:$0xff]
        %v580 = vld [vmem:[%s268 + $0x940] sm:$0xff]
        %v581 = vld [vmem:[%s268 + $0x948] sm:$0xff]
        %v582 = vld [vmem:[%s268 + $0x950] sm:$0xff]
        %v583 = vld [vmem:[%s268 + $0x958] sm:$0xff]
        %v584 = vld [vmem:[%s268 + $0x960] sm:$0xff]
        %v585 = vld [vmem:[%s268 + $0x968] sm:$0xff]
        %v586 = vld [vmem:[%s268 + $0x970] sm:$0xff]
        %v587 = vld [vmem:[%s268 + $0x978] sm:$0xff]
        %v588 = vld [vmem:[%s268 + $0x980] sm:$0xff]
        %v589 = vld [vmem:[%s268 + $0x988] sm:$0xff]
        %v590 = vld [vmem:[%s268 + $0x990] sm:$0xff]
        %v591 = vld [vmem:[%s268 + $0x998] sm:$0xff]
        %v592 = vld [vmem:[%s268 + $0x9a0] sm:$0xff]
        %v593 = vld [vmem:[%s268 + $0x9a8] sm:$0xff]
        %v594 = vld [vmem:[%s268 + $0x9b0] sm:$0xff]
        %v595 = vld [vmem:[%s268 + $0x9b8] sm:$0xff]
        %v596 = vld [vmem:[%s268 + $0x9c0] sm:$0xff]
        %v597 = vld [vmem:[%s268 + $0x9c8] sm:$0xff]
        %v598 = vld [vmem:[%s268 + $0x9d0] sm:$0xff]
        %v599 = vld [vmem:[%s268 + $0x9d8] sm:$0xff]
        %v600 = vld [vmem:[%s268 + $0x9e0] sm:$0xff]
        %v601 = vld [vmem:[%s268 + $0x9e8] sm:$0xff]
        %v602 = vld [vmem:[%s268 + $0x9f0] sm:$0xff]
        %v603 = vld [vmem:[%s268 + $0x9f8] sm:$0xff]
        %v604 = vld [vmem:[%s268 + $0xa00] sm:$0xff]
        %v605 = vld [vmem:[%s268 + $0xa08] sm:$0xff]
        %v606 = vld [vmem:[%s268 + $0xa10] sm:$0xff]
        %v607 = vld [vmem:[%s268 + $0xa18] sm:$0xff]
        %v608 = vld [vmem:[%s268 + $0xa20] sm:$0xff]
        %v609 = vld [vmem:[%s268 + $0xa28] sm:$0xff]
        %v610 = vld [vmem:[%s268 + $0xa30] sm:$0xff]
        %v611 = vld [vmem:[%s268 + $0xa38] sm:$0xff]
        %v612 = vld [vmem:[%s268 + $0xa40] sm:$0xff]
        %v613 = vld [vmem:[%s268 + $0xa48] sm:$0xff]
        %v614 = vld [vmem:[%s268 + $0xa50] sm:$0xff]
        %v615 = vld [vmem:[%s268 + $0xa58] sm:$0xff]
        %v616 = vld [vmem:[%s268 + $0xa60] sm:$0xff]
        %v617 = vld [vmem:[%s268 + $0xa68] sm:$0xff]
        %v618 = vld [vmem:[%s268 + $0xa70] sm:$0xff]
        %v619 = vld [vmem:[%s268 + $0xa78] sm:$0xff]
        %v620 = vld [vmem:[%s268 + $0xa80] sm:$0xff]
        %v621 = vld [vmem:[%s268 + $0xa88] sm:$0xff]
        %v622 = vld [vmem:[%s268 + $0xa90] sm:$0xff]
        %v623 = vld [vmem:[%s268 + $0xa98] sm:$0xff]
        %v624 = vld [vmem:[%s268 + $0xaa0] sm:$0xff]
        %v625 = vld [vmem:[%s268 + $0xaa8] sm:$0xff]
        %v626 = vld [vmem:[%s268 + $0xab0] sm:$0xff]
        %v627 = vld [vmem:[%s268 + $0xab8] sm:$0xff]
        %v628 = vld [vmem:[%s268 + $0xac0] sm:$0xff]
        %v629 = vld [vmem:[%s268 + $0xac8] sm:$0xff]
        %v630 = vld [vmem:[%s268 + $0xad0] sm:$0xff]
        %v631 = vld [vmem:[%s268 + $0xad8] sm:$0xff]
        %v632 = vld [vmem:[%s268 + $0xae0] sm:$0xff]
        %v633 = vld [vmem:[%s268 + $0xae8] sm:$0xff]
        %v634 = vld [vmem:[%s268 + $0xaf0] sm:$0xff]
        %v635 = vld [vmem:[%s268 + $0xaf8] sm:$0xff]
        %v636 = vld [vmem:[%s268 + $0xb00] sm:$0xff]
        %v637 = vld [vmem:[%s268 + $0xb08] sm:$0xff]
        %v638 = vld [vmem:[%s268 + $0xb10] sm:$0xff]
        %v639 = vld [vmem:[%s268 + $0xb18] sm:$0xff]
        %v640 = vld [vmem:[%s268 + $0xb20] sm:$0xff]
        %v641 = vld [vmem:[%s268 + $0xb28] sm:$0xff]
        %v642 = vld [vmem:[%s268 + $0xb30] sm:$0xff]
        %v643 = vld [vmem:[%s268 + $0xb38] sm:$0xff]
        %v644 = vld [vmem:[%s268 + $0xb40] sm:$0xff]
        %v645 = vld [vmem:[%s268 + $0xb48] sm:$0xff]
        %v646 = vld [vmem:[%s268 + $0xb50] sm:$0xff]
        %v647 = vld [vmem:[%s268 + $0xb58] sm:$0xff]
        %v648 = vld [vmem:[%s268 + $0xb60] sm:$0xff]
        %v649 = vld [vmem:[%s268 + $0xb68] sm:$0xff]
        %v650 = vld [vmem:[%s268 + $0xb70] sm:$0xff]
        %v651 = vld [vmem:[%s268 + $0xb78] sm:$0xff]
        %v652 = vld [vmem:[%s268 + $0xb80] sm:$0xff]
        %v653 = vld [vmem:[%s268 + $0xb88] sm:$0xff]
        %v654 = vld [vmem:[%s268 + $0xb90] sm:$0xff]
        %v655 = vld [vmem:[%s268 + $0xb98] sm:$0xff]
        %v656 = vld [vmem:[%s268 + $0xba0] sm:$0xff]
        %v657 = vld [vmem:[%s268 + $0xba8] sm:$0xff]
        %v658 = vld [vmem:[%s268 + $0xbb0] sm:$0xff]
        %v659 = vld [vmem:[%s268 + $0xbb8] sm:$0xff]
        %v660 = vld [vmem:[%s268 + $0xbc0] sm:$0xff]
        %v661 = vld [vmem:[%s268 + $0xbc8] sm:$0xff]
        %v662 = vld [vmem:[%s268 + $0xbd0] sm:$0xff]
        %v663 = vld [vmem:[%s268 + $0xbd8] sm:$0xff]
        %v664 = vld [vmem:[%s268 + $0xbe0] sm:$0xff]
        %v665 = vld [vmem:[%s268 + $0xbe8] sm:$0xff]
        %v666 = vld [vmem:[%s268 + $0xbf0] sm:$0xff]
        %v667 = vld [vmem:[%s268 + $0xbf8] sm:$0xff]
        %v668 = vld [vmem:[%s268 + $0xc00] sm:$0xff]
        %v669 = vld [vmem:[%s268 + $0xc08] sm:$0xff]
        %v670 = vld [vmem:[%s268 + $0xc10] sm:$0xff]
        %v671 = vld [vmem:[%s268 + $0xc18] sm:$0xff]
        %v672 = vld [vmem:[%s268 + $0xc20] sm:$0xff]
        %v673 = vld [vmem:[%s268 + $0xc28] sm:$0xff]
        %v674 = vld [vmem:[%s268 + $0xc30] sm:$0xff]
        %v675 = vld [vmem:[%s268 + $0xc38] sm:$0xff]
        %v676 = vld [vmem:[%s268 + $0xc40] sm:$0xff]
        %v677 = vld [vmem:[%s268 + $0xc48] sm:$0xff]
        %v678 = vld [vmem:[%s268 + $0xc50] sm:$0xff]
        %v679 = vld [vmem:[%s268 + $0xc58] sm:$0xff]
        %v680 = vld [vmem:[%s268 + $0xc60] sm:$0xff]
        %v681 = vld [vmem:[%s268 + $0xc68] sm:$0xff]
        %v682 = vld [vmem:[%s268 + $0xc70] sm:$0xff]
        %v683 = vld [vmem:[%s268 + $0xc78] sm:$0xff]
        %v684 = vld [vmem:[%s268 + $0xc80] sm:$0xff]
        %v685 = vld [vmem:[%s268 + $0xc88] sm:$0xff]
        %v686 = vld [vmem:[%s268 + $0xc90] sm:$0xff]
        %v687 = vld [vmem:[%s268 + $0xc98] sm:$0xff]
        %v688 = vld [vmem:[%s268 + $0xca0] sm:$0xff]
        %v689 = vld [vmem:[%s268 + $0xca8] sm:$0xff]
        %v690 = vld [vmem:[%s268 + $0xcb0] sm:$0xff]
        %v691 = vld [vmem:[%s268 + $0xcb8] sm:$0xff]
        %v692 = vld [vmem:[%s268 + $0xcc0] sm:$0xff]
        %v693 = vld [vmem:[%s268 + $0xcc8] sm:$0xff]
        %v694 = vld [vmem:[%s268 + $0xcd0] sm:$0xff]
        %v695 = vld [vmem:[%s268 + $0xcd8] sm:$0xff]
        %v696 = vld [vmem:[%s268 + $0xce0] sm:$0xff]
        %v697 = vld [vmem:[%s268 + $0xce8] sm:$0xff]
        %v698 = vld [vmem:[%s268 + $0xcf0] sm:$0xff]
        %v699 = vld [vmem:[%s268 + $0xcf8] sm:$0xff]
        %v700 = vld [vmem:[%s268 + $0xd00] sm:$0xff]
        %v701 = vld [vmem:[%s268 + $0xd08] sm:$0xff]
        %v702 = vld [vmem:[%s268 + $0xd10] sm:$0xff]
        %v703 = vld [vmem:[%s268 + $0xd18] sm:$0xff]
        %v704 = vld [vmem:[%s268 + $0xd20] sm:$0xff]
        %v705 = vld [vmem:[%s268 + $0xd28] sm:$0xff]
        %v706 = vld [vmem:[%s268 + $0xd30] sm:$0xff]
        %v707 = vld [vmem:[%s268 + $0xd38] sm:$0xff]
        %v708 = vld [vmem:[%s268 + $0xd40] sm:$0xff]
        %v709 = vld [vmem:[%s268 + $0xd48] sm:$0xff]
        %v710 = vld [vmem:[%s268 + $0xd50] sm:$0xff]
        %v711 = vld [vmem:[%s268 + $0xd58] sm:$0xff]
        %v712 = vld [vmem:[%s268 + $0xd60] sm:$0xff]
        %v713 = vld [vmem:[%s268 + $0xd68] sm:$0xff]
        %v714 = vld [vmem:[%s268 + $0xd70] sm:$0xff]
        %v715 = vld [vmem:[%s268 + $0xd78] sm:$0xff]
        %v716 = vld [vmem:[%s268 + $0xd80] sm:$0xff]
        %v717 = vld [vmem:[%s268 + $0xd88] sm:$0xff]
        %v718 = vld [vmem:[%s268 + $0xd90] sm:$0xff]
        %v719 = vld [vmem:[%s268 + $0xd98] sm:$0xff]
        %v720 = vld [vmem:[%s268 + $0xda0] sm:$0xff]
        %v721 = vld [vmem:[%s268 + $0xda8] sm:$0xff]
        %v722 = vld [vmem:[%s268 + $0xdb0] sm:$0xff]
        %v723 = vld [vmem:[%s268 + $0xdb8] sm:$0xff]
        %v724 = vld [vmem:[%s268 + $0xdc0] sm:$0xff]
        %v725 = vld [vmem:[%s268 + $0xdc8] sm:$0xff]
        %v726 = vld [vmem:[%s268 + $0xdd0] sm:$0xff]
        %v727 = vld [vmem:[%s268 + $0xdd8] sm:$0xff]
        %v728 = vld [vmem:[%s268 + $0xde0] sm:$0xff]
        %v729 = vld [vmem:[%s268 + $0xde8] sm:$0xff]
        %v730 = vld [vmem:[%s268 + $0xdf0] sm:$0xff]
        %v731 = vld [vmem:[%s268 + $0xdf8] sm:$0xff]
        %v732 = vld [vmem:[%s268 + $0xe00] sm:$0xff]
        %v733 = vld [vmem:[%s268 + $0xe08] sm:$0xff]
        %v734 = vld [vmem:[%s268 + $0xe10] sm:$0xff]
        %v735 = vld [vmem:[%s268 + $0xe18] sm:$0xff]
        %v736 = vld [vmem:[%s268 + $0xe20] sm:$0xff]
        %v737 = vld [vmem:[%s268 + $0xe28] sm:$0xff]
        %v738 = vld [vmem:[%s268 + $0xe30] sm:$0xff]
        %v739 = vld [vmem:[%s268 + $0xe38] sm:$0xff]
        %v740 = vld [vmem:[%s268 + $0xe40] sm:$0xff]
        %v741 = vld [vmem:[%s268 + $0xe48] sm:$0xff]
        %v742 = vld [vmem:[%s268 + $0xe50] sm:$0xff]
        %v743 = vld [vmem:[%s268 + $0xe58] sm:$0xff]
        %v744 = vld [vmem:[%s268 + $0xe60] sm:$0xff]
        %v745 = vld [vmem:[%s268 + $0xe68] sm:$0xff]
        %v746 = vld [vmem:[%s268 + $0xe70] sm:$0xff]
        %v747 = vld [vmem:[%s268 + $0xe78] sm:$0xff]
        %v748 = vld [vmem:[%s268 + $0xe80] sm:$0xff]
        %v749 = vld [vmem:[%s268 + $0xe88] sm:$0xff]
        %v750 = vld [vmem:[%s268 + $0xe90] sm:$0xff]
        %v751 = vld [vmem:[%s268 + $0xe98] sm:$0xff]
        %v752 = vld [vmem:[%s268 + $0xea0] sm:$0xff]
        %v753 = vld [vmem:[%s268 + $0xea8] sm:$0xff]
        %v754 = vld [vmem:[%s268 + $0xeb0] sm:$0xff]
        %v755 = vld [vmem:[%s268 + $0xeb8] sm:$0xff]
        %v756 = vld [vmem:[%s268 + $0xec0] sm:$0xff]
        %v757 = vld [vmem:[%s268 + $0xec8] sm:$0xff]
        %v758 = vld [vmem:[%s268 + $0xed0] sm:$0xff]
        %v759 = vld [vmem:[%s268 + $0xed8] sm:$0xff]
        %v760 = vld [vmem:[%s268 + $0xee0] sm:$0xff]
        %v761 = vld [vmem:[%s268 + $0xee8] sm:$0xff]
        %v762 = vld [vmem:[%s268 + $0xef0] sm:$0xff]
        %v763 = vld [vmem:[%s268 + $0xef8] sm:$0xff]
        %v764 = vld [vmem:[%s268 + $0xf00] sm:$0xff]
        %v765 = vld [vmem:[%s268 + $0xf08] sm:$0xff]
        %v766 = vld [vmem:[%s268 + $0xf10] sm:$0xff]
        %v767 = vld [vmem:[%s268 + $0xf18] sm:$0xff]
        %v768 = vld [vmem:[%s268 + $0xf20] sm:$0xff]
        %v769 = vld [vmem:[%s268 + $0xf28] sm:$0xff]
        %v770 = vld [vmem:[%s268 + $0xf30] sm:$0xff]
        %v771 = vld [vmem:[%s268 + $0xf38] sm:$0xff]
        %v772 = vld [vmem:[%s268 + $0xf40] sm:$0xff]
        %v773 = vld [vmem:[%s268 + $0xf48] sm:$0xff]
        %v774 = vld [vmem:[%s268 + $0xf50] sm:$0xff]
        %v775 = vld [vmem:[%s268 + $0xf58] sm:$0xff]
        %v776 = vld [vmem:[%s268 + $0xf60] sm:$0xff]
        %v777 = vld [vmem:[%s268 + $0xf68] sm:$0xff]
        %v778 = vld [vmem:[%s268 + $0xf70] sm:$0xff]
        %v779 = vld [vmem:[%s268 + $0xf78] sm:$0xff]
        %v780 = vld [vmem:[%s268 + $0xf80] sm:$0xff]
        %v781 = vld [vmem:[%s268 + $0xf88] sm:$0xff]
        %v782 = vld [vmem:[%s268 + $0xf90] sm:$0xff]
        %v783 = vld [vmem:[%s268 + $0xf98] sm:$0xff]
        %v784 = vld [vmem:[%s268 + $0xfa0] sm:$0xff]
        %v785 = vld [vmem:[%s268 + $0xfa8] sm:$0xff]
        %v786 = vld [vmem:[%s268 + $0xfb0] sm:$0xff]
        %v787 = vld [vmem:[%s268 + $0xfb8] sm:$0xff]
        %v788 = vld [vmem:[%s268 + $0xfc0] sm:$0xff]
        %v789 = vld [vmem:[%s268 + $0xfc8] sm:$0xff]
        %v790 = vld [vmem:[%s268 + $0xfd0] sm:$0xff]
        %v791 = vld [vmem:[%s268 + $0xfd8] sm:$0xff]
        %v792 = vld [vmem:[%s268 + $0xfe0] sm:$0xff]
        %v793 = vld [vmem:[%s268 + $0xfe8] sm:$0xff]
        %v794 = vld [vmem:[%s268 + $0xff0] sm:$0xff]
        %v795 = vld [vmem:[%s268 + $0xff8] sm:$0xff]
        %v796 = vld [vmem:[%s268 + $0x1000] sm:$0xff]
        %v797 = vld [vmem:[%s268 + $0x1008] sm:$0xff]
        %v798 = vld [vmem:[%s268 + $0x1010] sm:$0xff]
        %v799 = vld [vmem:[%s268 + $0x1018] sm:$0xff]
        %v800 = vld [vmem:[%s268 + $0x1020] sm:$0xff]
        %v801 = vld [vmem:[%s268 + $0x1028] sm:$0xff]
        %v802 = vld [vmem:[%s268 + $0x1030] sm:$0xff]
        %v803 = vld [vmem:[%s268 + $0x1038] sm:$0xff]
        %v804 = vld [vmem:[%s268 + $0x1040] sm:$0xff]
        %v805 = vld [vmem:[%s268 + $0x1048] sm:$0xff]
        %v806 = vld [vmem:[%s268 + $0x1050] sm:$0xff]
        %v807 = vld [vmem:[%s268 + $0x1058] sm:$0xff]
        %v808 = vld [vmem:[%s268 + $0x1060] sm:$0xff]
        %v809 = vld [vmem:[%s268 + $0x1068] sm:$0xff]
        %v810 = vld [vmem:[%s268 + $0x1070] sm:$0xff]
        %v811 = vld [vmem:[%s268 + $0x1078] sm:$0xff]
        %v812 = vld [vmem:[%s268 + $0x1080] sm:$0xff]
        %v813 = vld [vmem:[%s268 + $0x1088] sm:$0xff]
        %v814 = vld [vmem:[%s268 + $0x1090] sm:$0xff]
        %v815 = vld [vmem:[%s268 + $0x1098] sm:$0xff]
        %v816 = vld [vmem:[%s268 + $0x10a0] sm:$0xff]
        %v817 = vld [vmem:[%s268 + $0x10a8] sm:$0xff]
        %v818 = vld [vmem:[%s268 + $0x10b0] sm:$0xff]
        %v819 = vld [vmem:[%s268 + $0x10b8] sm:$0xff]
        %v820 = vld [vmem:[%s268 + $0x10c0] sm:$0xff]
        %v821 = vld [vmem:[%s268 + $0x10c8] sm:$0xff]
        %v822 = vld [vmem:[%s268 + $0x10d0] sm:$0xff]
        %v823 = vld [vmem:[%s268 + $0x10d8] sm:$0xff]
        %v824 = vld [vmem:[%s268 + $0x10e0] sm:$0xff]
        %v825 = vld [vmem:[%s268 + $0x10e8] sm:$0xff]
        %v826 = vld [vmem:[%s268 + $0x10f0] sm:$0xff]
        %v827 = vld [vmem:[%s268 + $0x10f8] sm:$0xff]
        %v828 = vld [vmem:[%s268 + $0x1100] sm:$0xff]
        %v829 = vld [vmem:[%s268 + $0x1108] sm:$0xff]
        %v830 = vld [vmem:[%s268 + $0x1110] sm:$0xff]
        %v831 = vld [vmem:[%s268 + $0x1118] sm:$0xff]
        %v832 = vld [vmem:[%s268 + $0x1120] sm:$0xff]
        %v833 = vld [vmem:[%s268 + $0x1128] sm:$0xff]
        %v834 = vld [vmem:[%s268 + $0x1130] sm:$0xff]
        %v835 = vld [vmem:[%s268 + $0x1138] sm:$0xff]
        %v836 = vld [vmem:[%s268 + $0x1140] sm:$0xff]
        %v837 = vld [vmem:[%s268 + $0x1148] sm:$0xff]
        %v838 = vld [vmem:[%s268 + $0x1150] sm:$0xff]
        %v839 = vld [vmem:[%s268 + $0x1158] sm:$0xff]
        %v840 = vld [vmem:[%s268 + $0x1160] sm:$0xff]
        %v841 = vld [vmem:[%s268 + $0x1168] sm:$0xff]
        %v842 = vld [vmem:[%s268 + $0x1170] sm:$0xff]
        %v843 = vld [vmem:[%s268 + $0x1178] sm:$0xff]
        %v844 = vld [vmem:[%s268 + $0x1180] sm:$0xff]
        %v845 = vld [vmem:[%s268 + $0x1188] sm:$0xff]
        %v846 = vld [vmem:[%s268 + $0x1190] sm:$0xff]
        %v847 = vld [vmem:[%s268 + $0x1198] sm:$0xff]
        %v848 = vld [vmem:[%s268 + $0x11a0] sm:$0xff]
        %v849 = vld [vmem:[%s268 + $0x11a8] sm:$0xff]
        %v850 = vld [vmem:[%s268 + $0x11b0] sm:$0xff]
        %v851 = vld [vmem:[%s268 + $0x11b8] sm:$0xff]
        %v852 = vld [vmem:[%s268 + $0x11c0] sm:$0xff]
        %v853 = vld [vmem:[%s268 + $0x11c8] sm:$0xff]
        %v854 = vld [vmem:[%s268 + $0x11d0] sm:$0xff]
        %v855 = vld [vmem:[%s268 + $0x11d8] sm:$0xff]
        %v856 = vld [vmem:[%s268 + $0x11e0] sm:$0xff]
        %v857 = vld [vmem:[%s268 + $0x11e8] sm:$0xff]
        %v858 = vld [vmem:[%s268 + $0x11f0] sm:$0xff]
        %v859 = vld [vmem:[%s268 + $0x11f8] sm:$0xff]
        %v860 = vld [vmem:[%s268 + $0x1200] sm:$0xff]
        %v861 = vld [vmem:[%s268 + $0x1208] sm:$0xff]
        %v862 = vld [vmem:[%s268 + $0x1210] sm:$0xff]
        %v863 = vld [vmem:[%s268 + $0x1218] sm:$0xff]
        %v864 = vld [vmem:[%s268 + $0x1220] sm:$0xff]
        %v865 = vld [vmem:[%s268 + $0x1228] sm:$0xff]
        %v866 = vld [vmem:[%s268 + $0x1230] sm:$0xff]
        %v867 = vld [vmem:[%s268 + $0x1238] sm:$0xff]
        %v868 = vld [vmem:[%s268 + $0x1240] sm:$0xff]
        %v869 = vld [vmem:[%s268 + $0x1248] sm:$0xff]
        %v870 = vld [vmem:[%s268 + $0x1250] sm:$0xff]
        %v871 = vld [vmem:[%s268 + $0x1258] sm:$0xff]
        %v872 = vld [vmem:[%s268 + $0x1260] sm:$0xff]
        %v873 = vld [vmem:[%s268 + $0x1268] sm:$0xff]
        %v874 = vld [vmem:[%s268 + $0x1270] sm:$0xff]
        %v875 = vld [vmem:[%s268 + $0x1278] sm:$0xff]
        %v876 = vld [vmem:[%s268 + $0x1280] sm:$0xff]
        %v877 = vld [vmem:[%s268 + $0x1288] sm:$0xff]
        %v878 = vld [vmem:[%s268 + $0x1290] sm:$0xff]
        %v879 = vld [vmem:[%s268 + $0x1298] sm:$0xff]
        %v880 = vld [vmem:[%s268 + $0x12a0] sm:$0xff]
        %v881 = vld [vmem:[%s268 + $0x12a8] sm:$0xff]
        %v882 = vld [vmem:[%s268 + $0x12b0] sm:$0xff]
        %v883 = vld [vmem:[%s268 + $0x12b8] sm:$0xff]
        %v884 = vld [vmem:[%s268 + $0x12c0] sm:$0xff]
        %v885 = vld [vmem:[%s268 + $0x12c8] sm:$0xff]
        %v886 = vld [vmem:[%s268 + $0x12d0] sm:$0xff]
        %v887 = vld [vmem:[%s268 + $0x12d8] sm:$0xff]
        %v888 = vld [vmem:[%s268 + $0x12e0] sm:$0xff]
        %v889 = vld [vmem:[%s268 + $0x12e8] sm:$0xff]
        %v890 = vld [vmem:[%s268 + $0x12f0] sm:$0xff]
        %v891 = vld [vmem:[%s268 + $0x12f8] sm:$0xff]
        %v892 = vld [vmem:[%s268 + $0x1300] sm:$0xff]
        %v893 = vld [vmem:[%s268 + $0x1308] sm:$0xff]
        %v894 = vld [vmem:[%s268 + $0x1310] sm:$0xff]
        %v895 = vld [vmem:[%s268 + $0x1318] sm:$0xff]
        %v896 = vld [vmem:[%s268 + $0x1320] sm:$0xff]
        %v897 = vld [vmem:[%s268 + $0x1328] sm:$0xff]
        %v898 = vld [vmem:[%s268 + $0x1330] sm:$0xff]
        %v899 = vld [vmem:[%s268 + $0x1338] sm:$0xff]
        %v900 = vld [vmem:[%s268 + $0x1340] sm:$0xff]
        %v901 = vld [vmem:[%s268 + $0x1348] sm:$0xff]
        %v902 = vld [vmem:[%s268 + $0x1350] sm:$0xff]
        %v903 = vld [vmem:[%s268 + $0x1358] sm:$0xff]
        %v904 = vld [vmem:[%s268 + $0x1360] sm:$0xff]
        %v905 = vld [vmem:[%s268 + $0x1368] sm:$0xff]
        %v906 = vld [vmem:[%s268 + $0x1370] sm:$0xff]
        %v907 = vld [vmem:[%s268 + $0x1378] sm:$0xff]
        %v908 = vld [vmem:[%s268 + $0x1380] sm:$0xff]
        %v909 = vld [vmem:[%s268 + $0x1388] sm:$0xff]
        %v910 = vld [vmem:[%s268 + $0x1390] sm:$0xff]
        %v911 = vld [vmem:[%s268 + $0x1398] sm:$0xff]
        %v912 = vld [vmem:[%s268 + $0x13a0] sm:$0xff]
        %v913 = vld [vmem:[%s268 + $0x13a8] sm:$0xff]
        %v914 = vld [vmem:[%s268 + $0x13b0] sm:$0xff]
        %v915 = vld [vmem:[%s268 + $0x13b8] sm:$0xff]
        %v916 = vld [vmem:[%s268 + $0x13c0] sm:$0xff]
        %v917 = vld [vmem:[%s268 + $0x13c8] sm:$0xff]
        %v918 = vld [vmem:[%s268 + $0x13d0] sm:$0xff]
        %v919 = vld [vmem:[%s268 + $0x13d8] sm:$0xff]
        %v920 = vld [vmem:[%s268 + $0x13e0] sm:$0xff]
        %v921 = vld [vmem:[%s268 + $0x13e8] sm:$0xff]
        %v922 = vld [vmem:[%s268 + $0x13f0] sm:$0xff]
        %v923 = vld [vmem:[%s268 + $0x13f8] sm:$0xff]
        %v924 = vld [vmem:[%s268 + $0x1400] sm:$0xff]
        %v925 = vld [vmem:[%s268 + $0x1408] sm:$0xff]
        %v926 = vld [vmem:[%s268 + $0x1410] sm:$0xff]
        %v927 = vld [vmem:[%s268 + $0x1418] sm:$0xff]
        %v928 = vld [vmem:[%s268 + $0x1420] sm:$0xff]
        %v929 = vld [vmem:[%s268 + $0x1428] sm:$0xff]
        %v930 = vld [vmem:[%s268 + $0x1430] sm:$0xff]
        %v931 = vld [vmem:[%s268 + $0x1438] sm:$0xff]
        %v932 = vld [vmem:[%s268 + $0x1440] sm:$0xff]
        %v933 = vld [vmem:[%s268 + $0x1448] sm:$0xff]
        %v934 = vld [vmem:[%s268 + $0x1450] sm:$0xff]
        %v935 = vld [vmem:[%s268 + $0x1458] sm:$0xff]
        %v936 = vld [vmem:[%s268 + $0x1460] sm:$0xff]
        %v937 = vld [vmem:[%s268 + $0x1468] sm:$0xff]
        %v938 = vld [vmem:[%s268 + $0x1470] sm:$0xff]
        %v939 = vld [vmem:[%s268 + $0x1478] sm:$0xff]
        %v940 = vld [vmem:[%s268 + $0x1480] sm:$0xff]
        %v941 = vld [vmem:[%s268 + $0x1488] sm:$0xff]
        %v942 = vld [vmem:[%s268 + $0x1490] sm:$0xff]
        %v943 = vld [vmem:[%s268 + $0x1498] sm:$0xff]
        %v944 = vld [vmem:[%s268 + $0x14a0] sm:$0xff]
        %v945 = vld [vmem:[%s268 + $0x14a8] sm:$0xff]
        %v946 = vld [vmem:[%s268 + $0x14b0] sm:$0xff]
        %v947 = vld [vmem:[%s268 + $0x14b8] sm:$0xff]
        %v948 = vld [vmem:[%s268 + $0x14c0] sm:$0xff]
        %v949 = vld [vmem:[%s268 + $0x14c8] sm:$0xff]
        %v950 = vld [vmem:[%s268 + $0x14d0] sm:$0xff]
        %v951 = vld [vmem:[%s268 + $0x14d8] sm:$0xff]
        %v952 = vld [vmem:[%s268 + $0x14e0] sm:$0xff]
        %v953 = vld [vmem:[%s268 + $0x14e8] sm:$0xff]
        %v954 = vld [vmem:[%s268 + $0x14f0] sm:$0xff]
        %v955 = vld [vmem:[%s268 + $0x14f8] sm:$0xff]
        %v956 = vld [vmem:[%s268 + $0x1500] sm:$0xff]
        %v957 = vld [vmem:[%s268 + $0x1508] sm:$0xff]
        %v958 = vld [vmem:[%s268 + $0x1510] sm:$0xff]
        %v959 = vld [vmem:[%s268 + $0x1518] sm:$0xff]
        %v960 = vld [vmem:[%s268 + $0x1520] sm:$0xff]
        %v961 = vld [vmem:[%s268 + $0x1528] sm:$0xff]
        %v962 = vld [vmem:[%s268 + $0x1530] sm:$0xff]
        %v963 = vld [vmem:[%s268 + $0x1538] sm:$0xff]
        %v964 = vld [vmem:[%s268 + $0x1540] sm:$0xff]
        %v965 = vld [vmem:[%s268 + $0x1548] sm:$0xff]
        %v966 = vld [vmem:[%s268 + $0x1550] sm:$0xff]
        %v967 = vld [vmem:[%s268 + $0x1558] sm:$0xff]
        %v968 = vld [vmem:[%s268 + $0x1560] sm:$0xff]
        %v969 = vld [vmem:[%s268 + $0x1568] sm:$0xff]
        %v970 = vld [vmem:[%s268 + $0x1570] sm:$0xff]
        %v971 = vld [vmem:[%s268 + $0x1578] sm:$0xff]
        %v972 = vld [vmem:[%s268 + $0x1580] sm:$0xff]
        %v973 = vld [vmem:[%s268 + $0x1588] sm:$0xff]
        %v974 = vld [vmem:[%s268 + $0x1590] sm:$0xff]
        %v975 = vld [vmem:[%s268 + $0x1598] sm:$0xff]
        %v976 = vld [vmem:[%s268 + $0x15a0] sm:$0xff]
        %v977 = vld [vmem:[%s268 + $0x15a8] sm:$0xff]
        %v978 = vld [vmem:[%s268 + $0x15b0] sm:$0xff]
        %v979 = vld [vmem:[%s268 + $0x15b8] sm:$0xff]
        %v980 = vld [vmem:[%s268 + $0x15c0] sm:$0xff]
        %v981 = vld [vmem:[%s268 + $0x15c8] sm:$0xff]
        %v982 = vld [vmem:[%s268 + $0x15d0] sm:$0xff]
        %v983 = vld [vmem:[%s268 + $0x15d8] sm:$0xff]
        %v984 = vld [vmem:[%s268 + $0x15e0] sm:$0xff]
        %v985 = vld [vmem:[%s268 + $0x15e8] sm:$0xff]
        %v986 = vld [vmem:[%s268 + $0x15f0] sm:$0xff]
        %v987 = vld [vmem:[%s268 + $0x15f8] sm:$0xff]
        %v988 = vld [vmem:[%s268 + $0x1600] sm:$0xff]
        %v989 = vld [vmem:[%s268 + $0x1608] sm:$0xff]
        %v990 = vld [vmem:[%s268 + $0x1610] sm:$0xff]
        %v991 = vld [vmem:[%s268 + $0x1618] sm:$0xff]
        %v992 = vld [vmem:[%s268 + $0x1620] sm:$0xff]
        %v993 = vld [vmem:[%s268 + $0x1628] sm:$0xff]
        %v994 = vld [vmem:[%s268 + $0x1630] sm:$0xff]
        %v995 = vld [vmem:[%s268 + $0x1638] sm:$0xff]
        %v996 = vld [vmem:[%s268 + $0x1640] sm:$0xff]
        %v997 = vld [vmem:[%s268 + $0x1648] sm:$0xff]
        %v998 = vld [vmem:[%s268 + $0x1650] sm:$0xff]
        %v999 = vld [vmem:[%s268 + $0x1658] sm:$0xff]
        %v1000 = vld [vmem:[%s268 + $0x1660] sm:$0xff]
        %v1001 = vld [vmem:[%s268 + $0x1668] sm:$0xff]
        %v1002 = vld [vmem:[%s268 + $0x1670] sm:$0xff]
        %v1003 = vld [vmem:[%s268 + $0x1678] sm:$0xff]
        %v1004 = vld [vmem:[%s268 + $0x1680] sm:$0xff]
        %v1005 = vld [vmem:[%s268 + $0x1688] sm:$0xff]
        %v1006 = vld [vmem:[%s268 + $0x1690] sm:$0xff]
        %v1007 = vld [vmem:[%s268 + $0x1698] sm:$0xff]
        %v1008 = vld [vmem:[%s268 + $0x16a0] sm:$0xff]
        %v1009 = vld [vmem:[%s268 + $0x16a8] sm:$0xff]
        %v1010 = vld [vmem:[%s268 + $0x16b0] sm:$0xff]
        %v1011 = vld [vmem:[%s268 + $0x16b8] sm:$0xff]
        %v1012 = vld [vmem:[%s268 + $0x16c0] sm:$0xff]
        %v1013 = vld [vmem:[%s268 + $0x16c8] sm:$0xff]
        %v1014 = vld [vmem:[%s268 + $0x16d0] sm:$0xff]
        %v1015 = vld [vmem:[%s268 + $0x16d8] sm:$0xff]
        %v1016 = vld [vmem:[%s268 + $0x16e0] sm:$0xff]
        %v1017 = vld [vmem:[%s268 + $0x16e8] sm:$0xff]
        %v1018 = vld [vmem:[%s268 + $0x16f0] sm:$0xff]
        %v1019 = vld [vmem:[%s268 + $0x16f8] sm:$0xff]
        %v1020 = vld [vmem:[%s268 + $0x1700] sm:$0xff]
        %v1021 = vld [vmem:[%s268 + $0x1708] sm:$0xff]
        %v1022 = vld [vmem:[%s268 + $0x1710] sm:$0xff]
        %v1023 = vld [vmem:[%s268 + $0x1718] sm:$0xff]
        %v1024 = vld [vmem:[%s268 + $0x1720] sm:$0xff]
        %v1025 = vld [vmem:[%s268 + $0x1728] sm:$0xff]
        %v1026 = vld [vmem:[%s268 + $0x1730] sm:$0xff]
        %v1027 = vld [vmem:[%s268 + $0x1738] sm:$0xff]
        %v1028 = vld [vmem:[%s268 + $0x1740] sm:$0xff]
        %v1029 = vld [vmem:[%s268 + $0x1748] sm:$0xff]
        %v1030 = vld [vmem:[%s268 + $0x1750] sm:$0xff]
        %v1031 = vld [vmem:[%s268 + $0x1758] sm:$0xff]
        %v1032 = vld [vmem:[%s268 + $0x1760] sm:$0xff]
        %v1033 = vld [vmem:[%s268 + $0x1768] sm:$0xff]
        %v1034 = vld [vmem:[%s268 + $0x1770] sm:$0xff]
        %v1035 = vld [vmem:[%s268 + $0x1778] sm:$0xff]
        %v1036 = vld [vmem:[%s268 + $0x1780] sm:$0xff]
        %v1037 = vld [vmem:[%s268 + $0x1788] sm:$0xff]
        %v1038 = vld [vmem:[%s268 + $0x1790] sm:$0xff]
        %v1039 = vld [vmem:[%s268 + $0x1798] sm:$0xff]
        %v1040 = vld [vmem:[%s268 + $0x17a0] sm:$0xff]
        %v1041 = vld [vmem:[%s268 + $0x17a8] sm:$0xff]
        %v1042 = vld [vmem:[%s268 + $0x17b0] sm:$0xff]
        %v1043 = vld [vmem:[%s268 + $0x17b8] sm:$0xff]
        %v1044 = vld [vmem:[%s268 + $0x17c0] sm:$0xff]
        %v1045 = vld [vmem:[%s268 + $0x17c8] sm:$0xff]
        %v1046 = vld [vmem:[%s268 + $0x17d0] sm:$0xff]
        %v1047 = vld [vmem:[%s268 + $0x17d8] sm:$0xff]
        %v1048 = vld [vmem:[%s268 + $0x17e0] sm:$0xff]
        %v1049 = vld [vmem:[%s268 + $0x17e8] sm:$0xff]
        %v1050 = vld [vmem:[%s268 + $0x17f0] sm:$0xff]
        %v1051 = vld [vmem:[%s268 + $0x17f8] sm:$0xff]
        %v1052 = vld [vmem:[%s268 + $0x1800] sm:$0xff]
        %v1053 = vld [vmem:[%s268 + $0x1808] sm:$0xff]
        %v1054 = vld [vmem:[%s268 + $0x1810] sm:$0xff]
        %v1055 = vld [vmem:[%s268 + $0x1818] sm:$0xff]
        %v1056 = vld [vmem:[%s268 + $0x1820] sm:$0xff]
        %v1057 = vld [vmem:[%s268 + $0x1828] sm:$0xff]
        %v1058 = vld [vmem:[%s268 + $0x1830] sm:$0xff]
        %v1059 = vld [vmem:[%s268 + $0x1838] sm:$0xff]
        %v1060 = vld [vmem:[%s268 + $0x1840] sm:$0xff]
        %v1061 = vld [vmem:[%s268 + $0x1848] sm:$0xff]
        %v1062 = vld [vmem:[%s268 + $0x1850] sm:$0xff]
        %v1063 = vld [vmem:[%s268 + $0x1858] sm:$0xff]
        %v1064 = vld [vmem:[%s268 + $0x1860] sm:$0xff]
        %v1065 = vld [vmem:[%s268 + $0x1868] sm:$0xff]
        %v1066 = vld [vmem:[%s268 + $0x1870] sm:$0xff]
        %v1067 = vld [vmem:[%s268 + $0x1878] sm:$0xff]
        %v1068 = vld [vmem:[%s268 + $0x1880] sm:$0xff]
        %v1069 = vld [vmem:[%s268 + $0x1888] sm:$0xff]
        %v1070 = vld [vmem:[%s268 + $0x1890] sm:$0xff]
        %v1071 = vld [vmem:[%s268 + $0x1898] sm:$0xff]
        %v1072 = vld [vmem:[%s268 + $0x18a0] sm:$0xff]
        %v1073 = vld [vmem:[%s268 + $0x18a8] sm:$0xff]
        %v1074 = vld [vmem:[%s268 + $0x18b0] sm:$0xff]
        %v1075 = vld [vmem:[%s268 + $0x18b8] sm:$0xff]
        %v1076 = vld [vmem:[%s268 + $0x18c0] sm:$0xff]
        %v1077 = vld [vmem:[%s268 + $0x18c8] sm:$0xff]
        %v1078 = vld [vmem:[%s268 + $0x18d0] sm:$0xff]
        %v1079 = vld [vmem:[%s268 + $0x18d8] sm:$0xff]
        %v1080 = vld [vmem:[%s268 + $0x18e0] sm:$0xff]
        %v1081 = vld [vmem:[%s268 + $0x18e8] sm:$0xff]
        %v1082 = vld [vmem:[%s268 + $0x18f0] sm:$0xff]
        %v1083 = vld [vmem:[%s268 + $0x18f8] sm:$0xff]
        %v1084 = vld [vmem:[%s268 + $0x1900] sm:$0xff]
        %v1085 = vld [vmem:[%s268 + $0x1908] sm:$0xff]
        %v1086 = vld [vmem:[%s268 + $0x1910] sm:$0xff]
        %v1087 = vld [vmem:[%s268 + $0x1918] sm:$0xff]
        %v1088 = vld [vmem:[%s268 + $0x1920] sm:$0xff]
        %v1089 = vld [vmem:[%s268 + $0x1928] sm:$0xff]
        %v1090 = vld [vmem:[%s268 + $0x1930] sm:$0xff]
        %v1091 = vld [vmem:[%s268 + $0x1938] sm:$0xff]
        %v1092 = vld [vmem:[%s268 + $0x1940] sm:$0xff]
        %v1093 = vld [vmem:[%s268 + $0x1948] sm:$0xff]
        %v1094 = vld [vmem:[%s268 + $0x1950] sm:$0xff]
        %v1095 = vld [vmem:[%s268 + $0x1958] sm:$0xff]
        %v1096 = vld [vmem:[%s268 + $0x1960] sm:$0xff]
        %v1097 = vld [vmem:[%s268 + $0x1968] sm:$0xff]
        %v1098 = vld [vmem:[%s268 + $0x1970] sm:$0xff]
        %v1099 = vld [vmem:[%s268 + $0x1978] sm:$0xff]
        %v1100 = vld [vmem:[%s268 + $0x1980] sm:$0xff]
        %v1101 = vld [vmem:[%s268 + $0x1988] sm:$0xff]
        %v1102 = vld [vmem:[%s268 + $0x1990] sm:$0xff]
        %v1103 = vld [vmem:[%s268 + $0x1998] sm:$0xff]
        %v1104 = vld [vmem:[%s268 + $0x19a0] sm:$0xff]
        %v1105 = vld [vmem:[%s268 + $0x19a8] sm:$0xff]
        %v1106 = vld [vmem:[%s268 + $0x19b0] sm:$0xff]
        %v1107 = vld [vmem:[%s268 + $0x19b8] sm:$0xff]
        %v1108 = vld [vmem:[%s268 + $0x19c0] sm:$0xff]
        %v1109 = vld [vmem:[%s268 + $0x19c8] sm:$0xff]
        %v1110 = vld [vmem:[%s268 + $0x19d0] sm:$0xff]
        %v1111 = vld [vmem:[%s268 + $0x19d8] sm:$0xff]
        %v1112 = vld [vmem:[%s268 + $0x19e0] sm:$0xff]
        %v1113 = vld [vmem:[%s268 + $0x19e8] sm:$0xff]
        %v1114 = vld [vmem:[%s268 + $0x19f0] sm:$0xff]
        %v1115 = vld [vmem:[%s268 + $0x19f8] sm:$0xff]
        %v1116 = vld [vmem:[%s268 + $0x1a00] sm:$0xff]
        %v1117 = vld [vmem:[%s268 + $0x1a08] sm:$0xff]
        %v1118 = vld [vmem:[%s268 + $0x1a10] sm:$0xff]
        %v1119 = vld [vmem:[%s268 + $0x1a18] sm:$0xff]
        %v1120 = vld [vmem:[%s268 + $0x1a20] sm:$0xff]
        %v1121 = vld [vmem:[%s268 + $0x1a28] sm:$0xff]
        %v1122 = vld [vmem:[%s268 + $0x1a30] sm:$0xff]
        %v1123 = vld [vmem:[%s268 + $0x1a38] sm:$0xff]
        %v1124 = vld [vmem:[%s268 + $0x1a40] sm:$0xff]
        %v1125 = vld [vmem:[%s268 + $0x1a48] sm:$0xff]
        %v1126 = vld [vmem:[%s268 + $0x1a50] sm:$0xff]
        %v1127 = vld [vmem:[%s268 + $0x1a58] sm:$0xff]
        %v1128 = vld [vmem:[%s268 + $0x1a60] sm:$0xff]
        %v1129 = vld [vmem:[%s268 + $0x1a68] sm:$0xff]
        %v1130 = vld [vmem:[%s268 + $0x1a70] sm:$0xff]
        %v1131 = vld [vmem:[%s268 + $0x1a78] sm:$0xff]
        %v1132 = vld [vmem:[%s268 + $0x1a80] sm:$0xff]
        %v1133 = vld [vmem:[%s268 + $0x1a88] sm:$0xff]
        %v1134 = vld [vmem:[%s268 + $0x1a90] sm:$0xff]
        %v1135 = vld [vmem:[%s268 + $0x1a98] sm:$0xff]
        %v1136 = vld [vmem:[%s268 + $0x1aa0] sm:$0xff]
        %v1137 = vld [vmem:[%s268 + $0x1aa8] sm:$0xff]
        %v1138 = vld [vmem:[%s268 + $0x1ab0] sm:$0xff]
        %v1139 = vld [vmem:[%s268 + $0x1ab8] sm:$0xff]
        %v1140 = vld [vmem:[%s268 + $0x1ac0] sm:$0xff]
        %v1141 = vld [vmem:[%s268 + $0x1ac8] sm:$0xff]
        %v1142 = vld [vmem:[%s268 + $0x1ad0] sm:$0xff]
        %v1143 = vld [vmem:[%s268 + $0x1ad8] sm:$0xff]
        %v1144 = vld [vmem:[%s268 + $0x1ae0] sm:$0xff]
        %v1145 = vld [vmem:[%s268 + $0x1ae8] sm:$0xff]
        %v1146 = vld [vmem:[%s268 + $0x1af0] sm:$0xff]
        %v1147 = vld [vmem:[%s268 + $0x1af8] sm:$0xff]
        %v1148 = vld [vmem:[%s268 + $0x1b00] sm:$0xff]
        %v1149 = vld [vmem:[%s268 + $0x1b08] sm:$0xff]
        %v1150 = vld [vmem:[%s268 + $0x1b10] sm:$0xff]
        %v1151 = vld [vmem:[%s268 + $0x1b18] sm:$0xff]
        %v1152 = vld [vmem:[%s268 + $0x1b20] sm:$0xff]
        %v1153 = vld [vmem:[%s268 + $0x1b28] sm:$0xff]
        %v1154 = vld [vmem:[%s268 + $0x1b30] sm:$0xff]
        %v1155 = vld [vmem:[%s268 + $0x1b38] sm:$0xff]
        %v1156 = vld [vmem:[%s268 + $0x1b40] sm:$0xff]
        %v1157 = vld [vmem:[%s268 + $0x1b48] sm:$0xff]
        %v1158 = vld [vmem:[%s268 + $0x1b50] sm:$0xff]
        %v1159 = vld [vmem:[%s268 + $0x1b58] sm:$0xff]
        %v1160 = vld [vmem:[%s268 + $0x1b60] sm:$0xff]
        %v1161 = vld [vmem:[%s268 + $0x1b68] sm:$0xff]
        %v1162 = vld [vmem:[%s268 + $0x1b70] sm:$0xff]
        %v1163 = vld [vmem:[%s268 + $0x1b78] sm:$0xff]
        %v1164 = vld [vmem:[%s268 + $0x1b80] sm:$0xff]
        %v1165 = vld [vmem:[%s268 + $0x1b88] sm:$0xff]
        %v1166 = vld [vmem:[%s268 + $0x1b90] sm:$0xff]
        %v1167 = vld [vmem:[%s268 + $0x1b98] sm:$0xff]
        %v1168 = vld [vmem:[%s268 + $0x1ba0] sm:$0xff]
        %v1169 = vld [vmem:[%s268 + $0x1ba8] sm:$0xff]
        %v1170 = vld [vmem:[%s268 + $0x1bb0] sm:$0xff]
        %v1171 = vld [vmem:[%s268 + $0x1bb8] sm:$0xff]
        %v1172 = vld [vmem:[%s268 + $0x1bc0] sm:$0xff]
        %v1173 = vld [vmem:[%s268 + $0x1bc8] sm:$0xff]
        %v1174 = vld [vmem:[%s268 + $0x1bd0] sm:$0xff]
        %v1175 = vld [vmem:[%s268 + $0x1bd8] sm:$0xff]
        %v1176 = vld [vmem:[%s268 + $0x1be0] sm:$0xff]
        %v1177 = vld [vmem:[%s268 + $0x1be8] sm:$0xff]
        %v1178 = vld [vmem:[%s268 + $0x1bf0] sm:$0xff]
        %v1179 = vld [vmem:[%s268 + $0x1bf8] sm:$0xff]
        %v1180 = vld [vmem:[%s268 + $0x1c00] sm:$0xff]
        %v1181 = vld [vmem:[%s268 + $0x1c08] sm:$0xff]
        %v1182 = vld [vmem:[%s268 + $0x1c10] sm:$0xff]
        %v1183 = vld [vmem:[%s268 + $0x1c18] sm:$0xff]
        %v1184 = vld [vmem:[%s268 + $0x1c20] sm:$0xff]
        %v1185 = vld [vmem:[%s268 + $0x1c28] sm:$0xff]
        %v1186 = vld [vmem:[%s268 + $0x1c30] sm:$0xff]
        %v1187 = vld [vmem:[%s268 + $0x1c38] sm:$0xff]
        %v1188 = vld [vmem:[%s268 + $0x1c40] sm:$0xff]
        %v1189 = vld [vmem:[%s268 + $0x1c48] sm:$0xff]
        %v1190 = vld [vmem:[%s268 + $0x1c50] sm:$0xff]
        %v1191 = vld [vmem:[%s268 + $0x1c58] sm:$0xff]
        %v1192 = vld [vmem:[%s268 + $0x1c60] sm:$0xff]
        %v1193 = vld [vmem:[%s268 + $0x1c68] sm:$0xff]
        %v1194 = vld [vmem:[%s268 + $0x1c70] sm:$0xff]
        %v1195 = vld [vmem:[%s268 + $0x1c78] sm:$0xff]
        %v1196 = vld [vmem:[%s268 + $0x1c80] sm:$0xff]
        %v1197 = vld [vmem:[%s268 + $0x1c88] sm:$0xff]
        %v1198 = vld [vmem:[%s268 + $0x1c90] sm:$0xff]
        %v1199 = vld [vmem:[%s268 + $0x1c98] sm:$0xff]
        %v1200 = vld [vmem:[%s268 + $0x1ca0] sm:$0xff]
        %v1201 = vld [vmem:[%s268 + $0x1ca8] sm:$0xff]
        %v1202 = vld [vmem:[%s268 + $0x1cb0] sm:$0xff]
        %v1203 = vld [vmem:[%s268 + $0x1cb8] sm:$0xff]
        %v1204 = vld [vmem:[%s268 + $0x1cc0] sm:$0xff]
        %v1205 = vld [vmem:[%s268 + $0x1cc8] sm:$0xff]
        %v1206 = vld [vmem:[%s268 + $0x1cd0] sm:$0xff]
        %v1207 = vld [vmem:[%s268 + $0x1cd8] sm:$0xff]
        %v1208 = vld [vmem:[%s268 + $0x1ce0] sm:$0xff]
        %v1209 = vld [vmem:[%s268 + $0x1ce8] sm:$0xff]
        %v1210 = vld [vmem:[%s268 + $0x1cf0] sm:$0xff]
        %v1211 = vld [vmem:[%s268 + $0x1cf8] sm:$0xff]
        %v1212 = vld [vmem:[%s268 + $0x1d00] sm:$0xff]
        %v1213 = vld [vmem:[%s268 + $0x1d08] sm:$0xff]
        %v1214 = vld [vmem:[%s268 + $0x1d10] sm:$0xff]
        %v1215 = vld [vmem:[%s268 + $0x1d18] sm:$0xff]
        %v1216 = vld [vmem:[%s268 + $0x1d20] sm:$0xff]
        %v1217 = vld [vmem:[%s268 + $0x1d28] sm:$0xff]
        %v1218 = vld [vmem:[%s268 + $0x1d30] sm:$0xff]
        %v1219 = vld [vmem:[%s268 + $0x1d38] sm:$0xff]
        %v1220 = vld [vmem:[%s268 + $0x1d40] sm:$0xff]
        %v1221 = vld [vmem:[%s268 + $0x1d48] sm:$0xff]
        %v1222 = vld [vmem:[%s268 + $0x1d50] sm:$0xff]
        %v1223 = vld [vmem:[%s268 + $0x1d58] sm:$0xff]
        %v1224 = vld [vmem:[%s268 + $0x1d60] sm:$0xff]
        %v1225 = vld [vmem:[%s268 + $0x1d68] sm:$0xff]
        %v1226 = vld [vmem:[%s268 + $0x1d70] sm:$0xff]
        %v1227 = vld [vmem:[%s268 + $0x1d78] sm:$0xff]
        %v1228 = vld [vmem:[%s268 + $0x1d80] sm:$0xff]
        %v1229 = vld [vmem:[%s268 + $0x1d88] sm:$0xff]
        %v1230 = vld [vmem:[%s268 + $0x1d90] sm:$0xff]
        %v1231 = vld [vmem:[%s268 + $0x1d98] sm:$0xff]
        %v1232 = vld [vmem:[%s268 + $0x1da0] sm:$0xff]
        %v1233 = vld [vmem:[%s268 + $0x1da8] sm:$0xff]
        %v1234 = vld [vmem:[%s268 + $0x1db0] sm:$0xff]
        %v1235 = vld [vmem:[%s268 + $0x1db8] sm:$0xff]
        %v1236 = vld [vmem:[%s268 + $0x1dc0] sm:$0xff]
        %v1237 = vld [vmem:[%s268 + $0x1dc8] sm:$0xff]
        %v1238 = vld [vmem:[%s268 + $0x1dd0] sm:$0xff]
        %v1239 = vld [vmem:[%s268 + $0x1dd8] sm:$0xff]
        %v1240 = vld [vmem:[%s268 + $0x1de0] sm:$0xff]
        %v1241 = vld [vmem:[%s268 + $0x1de8] sm:$0xff]
        %v1242 = vld [vmem:[%s268 + $0x1df0] sm:$0xff]
        %v1243 = vld [vmem:[%s268 + $0x1df8] sm:$0xff]
        %v1244 = vld [vmem:[%s268 + $0x1e00] sm:$0xff]
        %v1245 = vld [vmem:[%s268 + $0x1e08] sm:$0xff]
        %v1246 = vld [vmem:[%s268 + $0x1e10] sm:$0xff]
        %v1247 = vld [vmem:[%s268 + $0x1e18] sm:$0xff]
        %v1248 = vld [vmem:[%s268 + $0x1e20] sm:$0xff]
        %v1249 = vld [vmem:[%s268 + $0x1e28] sm:$0xff]
        %v1250 = vld [vmem:[%s268 + $0x1e30] sm:$0xff]
        %v1251 = vld [vmem:[%s268 + $0x1e38] sm:$0xff]
        %v1252 = vld [vmem:[%s268 + $0x1e40] sm:$0xff]
        %v1253 = vld [vmem:[%s268 + $0x1e48] sm:$0xff]
        %v1254 = vld [vmem:[%s268 + $0x1e50] sm:$0xff]
        %v1255 = vld [vmem:[%s268 + $0x1e58] sm:$0xff]
        %v1256 = vld [vmem:[%s268 + $0x1e60] sm:$0xff]
        %v1257 = vld [vmem:[%s268 + $0x1e68] sm:$0xff]
        %v1258 = vld [vmem:[%s268 + $0x1e70] sm:$0xff]
        %v1259 = vld [vmem:[%s268 + $0x1e78] sm:$0xff]
        %v1260 = vld [vmem:[%s268 + $0x1e80] sm:$0xff]
        %v1261 = vld [vmem:[%s268 + $0x1e88] sm:$0xff]
        %v1262 = vld [vmem:[%s268 + $0x1e90] sm:$0xff]
        %v1263 = vld [vmem:[%s268 + $0x1e98] sm:$0xff]
        %v1264 = vld [vmem:[%s268 + $0x1ea0] sm:$0xff]
        %v1265 = vld [vmem:[%s268 + $0x1ea8] sm:$0xff]
        %v1266 = vld [vmem:[%s268 + $0x1eb0] sm:$0xff]
        %v1267 = vld [vmem:[%s268 + $0x1eb8] sm:$0xff]
        %v1268 = vld [vmem:[%s268 + $0x1ec0] sm:$0xff]
        %v1269 = vld [vmem:[%s268 + $0x1ec8] sm:$0xff]
        %v1270 = vld [vmem:[%s268 + $0x1ed0] sm:$0xff]
        %v1271 = vld [vmem:[%s268 + $0x1ed8] sm:$0xff]
        %v1272 = vld [vmem:[%s268 + $0x1ee0] sm:$0xff]
        %v1273 = vld [vmem:[%s268 + $0x1ee8] sm:$0xff]
        %v1274 = vld [vmem:[%s268 + $0x1ef0] sm:$0xff]
        %v1275 = vld [vmem:[%s268 + $0x1ef8] sm:$0xff]
        %v1276 = vld [vmem:[%s268 + $0x1f00] sm:$0xff]
        %v1277 = vld [vmem:[%s268 + $0x1f08] sm:$0xff]
        %v1278 = vld [vmem:[%s268 + $0x1f10] sm:$0xff]
        %v1279 = vld [vmem:[%s268 + $0x1f18] sm:$0xff]
        %v1280 = vld [vmem:[%s268 + $0x1f20] sm:$0xff]
        %v1281 = vld [vmem:[%s268 + $0x1f28] sm:$0xff]
        %v1282 = vld [vmem:[%s268 + $0x1f30] sm:$0xff]
        %v1283 = vld [vmem:[%s268 + $0x1f38] sm:$0xff]
        %v1284 = vld [vmem:[%s268 + $0x1f40] sm:$0xff]
        %v1285 = vld [vmem:[%s268 + $0x1f48] sm:$0xff]
        %v1286 = vld [vmem:[%s268 + $0x1f50] sm:$0xff]
        %v1287 = vld [vmem:[%s268 + $0x1f58] sm:$0xff]
        %v1288 = vld [vmem:[%s268 + $0x1f60] sm:$0xff]
        %v1289 = vld [vmem:[%s268 + $0x1f68] sm:$0xff]
        %v1290 = vld [vmem:[%s268 + $0x1f70] sm:$0xff]
        %v1291 = vld [vmem:[%s268 + $0x1f78] sm:$0xff]
        %v1292 = vld [vmem:[%s268 + $0x1f80] sm:$0xff]
        %v1293 = vld [vmem:[%s268 + $0x1f88] sm:$0xff]
        %v1294 = vld [vmem:[%s268 + $0x1f90] sm:$0xff]
        %v1295 = vld [vmem:[%s268 + $0x1f98] sm:$0xff]
        %v1296 = vld [vmem:[%s268 + $0x1fa0] sm:$0xff]
        %v1297 = vld [vmem:[%s268 + $0x1fa8] sm:$0xff]
        %v1298 = vld [vmem:[%s268 + $0x1fb0] sm:$0xff]
        %v1299 = vld [vmem:[%s268 + $0x1fb8] sm:$0xff]
        %v1300 = vld [vmem:[%s268 + $0x1fc0] sm:$0xff]
        %v1301 = vld [vmem:[%s268 + $0x1fc8] sm:$0xff]
        %v1302 = vld [vmem:[%s268 + $0x1fd0] sm:$0xff]
        %v1303 = vld [vmem:[%s268 + $0x1fd8] sm:$0xff]
        %v1304 = vld [vmem:[%s268 + $0x1fe0] sm:$0xff]
        %v1305 = vld [vmem:[%s268 + $0x1fe8] sm:$0xff]
        %v1306 = vld [vmem:[%s268 + $0x1ff0] sm:$0xff]
        %v1307 = vld [vmem:[%s268 + $0x1ff8] sm:$0xff]
        %v1312 = vcombine.high %v280, %v280
        %v1314 = vunpack.c.l.s4 1966171168
        %v1315 = vunpack.c.0.s8 %v1314
        %v1316 = vlaneseq
        %v1317 = vshrl.u32 %v1316, 7
        %v1318 = vsub.s32 %v1315, %v1317
        %v1319 = vrot.slane %v280, %v1318
        %v1321 = vunpack.c.l.s4 1966171168
        %v1322 = vunpack.c.0.s8 %v1321
        %v1323 = vlaneseq
        %v1324 = vshrl.u32 %v1323, 7
        %v1325 = vsub.s32 %v1322, %v1324
        %v1326 = vrot.slane %v1312, %v1325
        %v1327 = vcombine.high %v1319, %v1319
        %v1328 = vcombine.high %v1326, %v1326
        %v1330 = vunpack.c.l.s4 1966171168
        %v1331 = vunpack.c.0.s8 %v1330
        %v1332 = vlaneseq
        %v1333 = vshrl.u32 %v1332, 7
        %v1334 = vsub.s32 %v1331, %v1333
        %v1335 = vrot.slane %v1319, %v1334
        %v1337 = vunpack.c.l.s4 1966171168
        %v1338 = vunpack.c.0.s8 %v1337
        %v1339 = vlaneseq
        %v1340 = vshrl.u32 %v1339, 7
        %v1341 = vsub.s32 %v1338, %v1340
        %v1342 = vrot.slane %v1326, %v1341
        %v1344 = vunpack.c.l.s4 1966171168
        %v1345 = vunpack.c.0.s8 %v1344
        %v1346 = vlaneseq
        %v1347 = vshrl.u32 %v1346, 7
        %v1348 = vsub.s32 %v1345, %v1347
        %v1349 = vrot.slane %v1327, %v1348
        %v1351 = vunpack.c.l.s4 1966171168
        %v1352 = vunpack.c.0.s8 %v1351
        %v1353 = vlaneseq
        %v1354 = vshrl.u32 %v1353, 7
        %v1355 = vsub.s32 %v1352, %v1354
        %v1356 = vrot.slane %v1328, %v1355
        %v1357 = vcombine.high %v1335, %v1335
        %v1358 = vcombine.high %v1342, %v1342
        %v1359 = vcombine.high %v1349, %v1349
        %v1360 = vcombine.high %v1356, %v1356
        %v1361 = vcombine.high %v281, %v281
        %v1363 = vunpack.c.l.s4 1966171168
        %v1364 = vunpack.c.0.s8 %v1363
        %v1365 = vlaneseq
        %v1366 = vshrl.u32 %v1365, 7
        %v1367 = vsub.s32 %v1364, %v1366
        %v1368 = vrot.slane %v281, %v1367
        %v1370 = vunpack.c.l.s4 1966171168
        %v1371 = vunpack.c.0.s8 %v1370
        %v1372 = vlaneseq
        %v1373 = vshrl.u32 %v1372, 7
        %v1374 = vsub.s32 %v1371, %v1373
        %v1375 = vrot.slane %v1361, %v1374
        %v1376 = vcombine.high %v1368, %v1368
        %v1377 = vcombine.high %v1375, %v1375
        %v1379 = vunpack.c.l.s4 1966171168
        %v1380 = vunpack.c.0.s8 %v1379
        %v1381 = vlaneseq
        %v1382 = vshrl.u32 %v1381, 7
        %v1383 = vsub.s32 %v1380, %v1382
        %v1384 = vrot.slane %v1368, %v1383
        %v1386 = vunpack.c.l.s4 1966171168
        %v1387 = vunpack.c.0.s8 %v1386
        %v1388 = vlaneseq
        %v1389 = vshrl.u32 %v1388, 7
        %v1390 = vsub.s32 %v1387, %v1389
        %v1391 = vrot.slane %v1375, %v1390
        %v1393 = vunpack.c.l.s4 1966171168
        %v1394 = vunpack.c.0.s8 %v1393
        %v1395 = vlaneseq
        %v1396 = vshrl.u32 %v1395, 7
        %v1397 = vsub.s32 %v1394, %v1396
        %v1398 = vrot.slane %v1376, %v1397
        %v1400 = vunpack.c.l.s4 1966171168
        %v1401 = vunpack.c.0.s8 %v1400
        %v1402 = vlaneseq
        %v1403 = vshrl.u32 %v1402, 7
        %v1404 = vsub.s32 %v1401, %v1403
        %v1405 = vrot.slane %v1377, %v1404
        %v1406 = vcombine.high %v1384, %v1384
        %v1407 = vcombine.high %v1391, %v1391
        %v1408 = vcombine.high %v1398, %v1398
        %v1409 = vcombine.high %v1405, %v1405
        %v1410 = vcombine.high %v282, %v282
        %v1412 = vunpack.c.l.s4 1966171168
        %v1413 = vunpack.c.0.s8 %v1412
        %v1414 = vlaneseq
        %v1415 = vshrl.u32 %v1414, 7
        %v1416 = vsub.s32 %v1413, %v1415
        %v1417 = vrot.slane %v282, %v1416
        %v1419 = vunpack.c.l.s4 1966171168
        %v1420 = vunpack.c.0.s8 %v1419
        %v1421 = vlaneseq
        %v1422 = vshrl.u32 %v1421, 7
        %v1423 = vsub.s32 %v1420, %v1422
        %v1424 = vrot.slane %v1410, %v1423
        %v1425 = vcombine.high %v1417, %v1417
        %v1426 = vcombine.high %v1424, %v1424
        %v1428 = vunpack.c.l.s4 1966171168
        %v1429 = vunpack.c.0.s8 %v1428
        %v1430 = vlaneseq
        %v1431 = vshrl.u32 %v1430, 7
        %v1432 = vsub.s32 %v1429, %v1431
        %v1433 = vrot.slane %v1417, %v1432
        %v1435 = vunpack.c.l.s4 1966171168
        %v1436 = vunpack.c.0.s8 %v1435
        %v1437 = vlaneseq
        %v1438 = vshrl.u32 %v1437, 7
        %v1439 = vsub.s32 %v1436, %v1438
        %v1440 = vrot.slane %v1424, %v1439
        %v1442 = vunpack.c.l.s4 1966171168
        %v1443 = vunpack.c.0.s8 %v1442
        %v1444 = vlaneseq
        %v1445 = vshrl.u32 %v1444, 7
        %v1446 = vsub.s32 %v1443, %v1445
        %v1447 = vrot.slane %v1425, %v1446
        %v1449 = vunpack.c.l.s4 1966171168
        %v1450 = vunpack.c.0.s8 %v1449
        %v1451 = vlaneseq
        %v1452 = vshrl.u32 %v1451, 7
        %v1453 = vsub.s32 %v1450, %v1452
        %v1454 = vrot.slane %v1426, %v1453
        %v1455 = vcombine.high %v1433, %v1433
        %v1456 = vcombine.high %v1440, %v1440
        %v1457 = vcombine.high %v1447, %v1447
        %v1458 = vcombine.high %v1454, %v1454
        %v1459 = vcombine.high %v283, %v283
        %v1461 = vunpack.c.l.s4 1966171168
        %v1462 = vunpack.c.0.s8 %v1461
        %v1463 = vlaneseq
        %v1464 = vshrl.u32 %v1463, 7
        %v1465 = vsub.s32 %v1462, %v1464
        %v1466 = vrot.slane %v283, %v1465
        %v1468 = vunpack.c.l.s4 1966171168
        %v1469 = vunpack.c.0.s8 %v1468
        %v1470 = vlaneseq
        %v1471 = vshrl.u32 %v1470, 7
        %v1472 = vsub.s32 %v1469, %v1471
        %v1473 = vrot.slane %v1459, %v1472
        %v1474 = vcombine.high %v1466, %v1466
        %v1475 = vcombine.high %v1473, %v1473
        %v1477 = vunpack.c.l.s4 1966171168
        %v1478 = vunpack.c.0.s8 %v1477
        %v1479 = vlaneseq
        %v1480 = vshrl.u32 %v1479, 7
        %v1481 = vsub.s32 %v1478, %v1480
        %v1482 = vrot.slane %v1466, %v1481
        %v1484 = vunpack.c.l.s4 1966171168
        %v1485 = vunpack.c.0.s8 %v1484
        %v1486 = vlaneseq
        %v1487 = vshrl.u32 %v1486, 7
        %v1488 = vsub.s32 %v1485, %v1487
        %v1489 = vrot.slane %v1473, %v1488
        %v1491 = vunpack.c.l.s4 1966171168
        %v1492 = vunpack.c.0.s8 %v1491
        %v1493 = vlaneseq
        %v1494 = vshrl.u32 %v1493, 7
        %v1495 = vsub.s32 %v1492, %v1494
        %v1496 = vrot.slane %v1474, %v1495
        %v1498 = vunpack.c.l.s4 1966171168
        %v1499 = vunpack.c.0.s8 %v1498
        %v1500 = vlaneseq
        %v1501 = vshrl.u32 %v1500, 7
        %v1502 = vsub.s32 %v1499, %v1501
        %v1503 = vrot.slane %v1475, %v1502
        %v1504 = vcombine.high %v1482, %v1482
        %v1505 = vcombine.high %v1489, %v1489
        %v1506 = vcombine.high %v1496, %v1496
        %v1507 = vcombine.high %v1503, %v1503
        %v2564 = vunpack.c.l.b16 %v284
        %v2565 = vunpack.c.h.b16 %v284
        %v2566 = vunpack.c.l.b16 %v285
        %v2567 = vunpack.c.h.b16 %v285
        %v2568 = vunpack.c.l.b16 %v286
        %v2569 = vunpack.c.h.b16 %v286
        %v2570 = vunpack.c.l.b16 %v287
        %v2571 = vunpack.c.h.b16 %v287
        %v2572 = vunpack.c.l.b16 %v288
        %v2573 = vunpack.c.h.b16 %v288
        %v2574 = vunpack.c.l.b16 %v289
        %v2575 = vunpack.c.h.b16 %v289
        %v2576 = vunpack.c.l.b16 %v290
        %v2577 = vunpack.c.h.b16 %v290
        %v2578 = vunpack.c.l.b16 %v291
        %v2579 = vunpack.c.h.b16 %v291
        %v2580 = vunpack.c.l.b16 %v292
        %v2581 = vunpack.c.h.b16 %v292
        %v2582 = vunpack.c.l.b16 %v293
        %v2583 = vunpack.c.h.b16 %v293
        %v2584 = vunpack.c.l.b16 %v294
        %v2585 = vunpack.c.h.b16 %v294
        %v2586 = vunpack.c.l.b16 %v295
        %v2587 = vunpack.c.h.b16 %v295
        %v2588 = vunpack.c.l.b16 %v296
        %v2589 = vunpack.c.h.b16 %v296
        %v2590 = vunpack.c.l.b16 %v297
        %v2591 = vunpack.c.h.b16 %v297
        %v2592 = vunpack.c.l.b16 %v298
        %v2593 = vunpack.c.h.b16 %v298
        %v2594 = vunpack.c.l.b16 %v299
        %v2595 = vunpack.c.h.b16 %v299
        %v2596 = vunpack.c.l.b16 %v300
        %v2597 = vunpack.c.h.b16 %v300
        %v2598 = vunpack.c.l.b16 %v301
        %v2599 = vunpack.c.h.b16 %v301
        %v2600 = vunpack.c.l.b16 %v302
        %v2601 = vunpack.c.h.b16 %v302
        %v2602 = vunpack.c.l.b16 %v303
        %v2603 = vunpack.c.h.b16 %v303
        %v2604 = vunpack.c.l.b16 %v304
        %v2605 = vunpack.c.h.b16 %v304
        %v2606 = vunpack.c.l.b16 %v305
        %v2607 = vunpack.c.h.b16 %v305
        %v2608 = vunpack.c.l.b16 %v306
        %v2609 = vunpack.c.h.b16 %v306
        %v2610 = vunpack.c.l.b16 %v307
        %v2611 = vunpack.c.h.b16 %v307
        %v2612 = vunpack.c.l.b16 %v308
        %v2613 = vunpack.c.h.b16 %v308
        %v2614 = vunpack.c.l.b16 %v309
        %v2615 = vunpack.c.h.b16 %v309
        %v2616 = vunpack.c.l.b16 %v310
        %v2617 = vunpack.c.h.b16 %v310
        %v2618 = vunpack.c.l.b16 %v311
        %v2619 = vunpack.c.h.b16 %v311
        %v2620 = vunpack.c.l.b16 %v312
        %v2621 = vunpack.c.h.b16 %v312
        %v2622 = vunpack.c.l.b16 %v313
        %v2623 = vunpack.c.h.b16 %v313
        %v2624 = vunpack.c.l.b16 %v314
        %v2625 = vunpack.c.h.b16 %v314
        %v2626 = vunpack.c.l.b16 %v315
        %v2627 = vunpack.c.h.b16 %v315
        %v2628 = vunpack.c.l.b16 %v316
        %v2629 = vunpack.c.h.b16 %v316
        %v2630 = vunpack.c.l.b16 %v317
        %v2631 = vunpack.c.h.b16 %v317
        %v2632 = vunpack.c.l.b16 %v318
        %v2633 = vunpack.c.h.b16 %v318
        %v2634 = vunpack.c.l.b16 %v319
        %v2635 = vunpack.c.h.b16 %v319
        %v2636 = vunpack.c.l.b16 %v320
        %v2637 = vunpack.c.h.b16 %v320
        %v2638 = vunpack.c.l.b16 %v321
        %v2639 = vunpack.c.h.b16 %v321
        %v2640 = vunpack.c.l.b16 %v322
        %v2641 = vunpack.c.h.b16 %v322
        %v2642 = vunpack.c.l.b16 %v323
        %v2643 = vunpack.c.h.b16 %v323
        %v2644 = vunpack.c.l.b16 %v324
        %v2645 = vunpack.c.h.b16 %v324
        %v2646 = vunpack.c.l.b16 %v325
        %v2647 = vunpack.c.h.b16 %v325
        %v2648 = vunpack.c.l.b16 %v326
        %v2649 = vunpack.c.h.b16 %v326
        %v2650 = vunpack.c.l.b16 %v327
        %v2651 = vunpack.c.h.b16 %v327
        %v2652 = vunpack.c.l.b16 %v328
        %v2653 = vunpack.c.h.b16 %v328
        %v2654 = vunpack.c.l.b16 %v329
        %v2655 = vunpack.c.h.b16 %v329
        %v2656 = vunpack.c.l.b16 %v330
        %v2657 = vunpack.c.h.b16 %v330
        %v2658 = vunpack.c.l.b16 %v331
        %v2659 = vunpack.c.h.b16 %v331
        %v2660 = vunpack.c.l.b16 %v332
        %v2661 = vunpack.c.h.b16 %v332
        %v2662 = vunpack.c.l.b16 %v333
        %v2663 = vunpack.c.h.b16 %v333
        %v2664 = vunpack.c.l.b16 %v334
        %v2665 = vunpack.c.h.b16 %v334
        %v2666 = vunpack.c.l.b16 %v335
        %v2667 = vunpack.c.h.b16 %v335
        %v2668 = vunpack.c.l.b16 %v336
        %v2669 = vunpack.c.h.b16 %v336
        %v2670 = vunpack.c.l.b16 %v337
        %v2671 = vunpack.c.h.b16 %v337
        %v2672 = vunpack.c.l.b16 %v338
        %v2673 = vunpack.c.h.b16 %v338
        %v2674 = vunpack.c.l.b16 %v339
        %v2675 = vunpack.c.h.b16 %v339
        %v2676 = vunpack.c.l.b16 %v340
        %v2677 = vunpack.c.h.b16 %v340
        %v2678 = vunpack.c.l.b16 %v341
        %v2679 = vunpack.c.h.b16 %v341
        %v2680 = vunpack.c.l.b16 %v342
        %v2681 = vunpack.c.h.b16 %v342
        %v2682 = vunpack.c.l.b16 %v343
        %v2683 = vunpack.c.h.b16 %v343
        %v2684 = vunpack.c.l.b16 %v344
        %v2685 = vunpack.c.h.b16 %v344
        %v2686 = vunpack.c.l.b16 %v345
        %v2687 = vunpack.c.h.b16 %v345
        %v2688 = vunpack.c.l.b16 %v346
        %v2689 = vunpack.c.h.b16 %v346
        %v2690 = vunpack.c.l.b16 %v347
        %v2691 = vunpack.c.h.b16 %v347
        %v2692 = vunpack.c.l.b16 %v348
        %v2693 = vunpack.c.h.b16 %v348
        %v2694 = vunpack.c.l.b16 %v349
        %v2695 = vunpack.c.h.b16 %v349
        %v2696 = vunpack.c.l.b16 %v350
        %v2697 = vunpack.c.h.b16 %v350
        %v2698 = vunpack.c.l.b16 %v351
        %v2699 = vunpack.c.h.b16 %v351
        %v2700 = vunpack.c.l.b16 %v352
        %v2701 = vunpack.c.h.b16 %v352
        %v2702 = vunpack.c.l.b16 %v353
        %v2703 = vunpack.c.h.b16 %v353
        %v2704 = vunpack.c.l.b16 %v354
        %v2705 = vunpack.c.h.b16 %v354
        %v2706 = vunpack.c.l.b16 %v355
        %v2707 = vunpack.c.h.b16 %v355
        %v2708 = vunpack.c.l.b16 %v356
        %v2709 = vunpack.c.h.b16 %v356
        %v2710 = vunpack.c.l.b16 %v357
        %v2711 = vunpack.c.h.b16 %v357
        %v2712 = vunpack.c.l.b16 %v358
        %v2713 = vunpack.c.h.b16 %v358
        %v2714 = vunpack.c.l.b16 %v359
        %v2715 = vunpack.c.h.b16 %v359
        %v2716 = vunpack.c.l.b16 %v360
        %v2717 = vunpack.c.h.b16 %v360
        %v2718 = vunpack.c.l.b16 %v361
        %v2719 = vunpack.c.h.b16 %v361
        %v2720 = vunpack.c.l.b16 %v362
        %v2721 = vunpack.c.h.b16 %v362
        %v2722 = vunpack.c.l.b16 %v363
        %v2723 = vunpack.c.h.b16 %v363
        %v2724 = vunpack.c.l.b16 %v364
        %v2725 = vunpack.c.h.b16 %v364
        %v2726 = vunpack.c.l.b16 %v365
        %v2727 = vunpack.c.h.b16 %v365
        %v2728 = vunpack.c.l.b16 %v366
        %v2729 = vunpack.c.h.b16 %v366
        %v2730 = vunpack.c.l.b16 %v367
        %v2731 = vunpack.c.h.b16 %v367
        %v2732 = vunpack.c.l.b16 %v368
        %v2733 = vunpack.c.h.b16 %v368
        %v2734 = vunpack.c.l.b16 %v369
        %v2735 = vunpack.c.h.b16 %v369
        %v2736 = vunpack.c.l.b16 %v370
        %v2737 = vunpack.c.h.b16 %v370
        %v2738 = vunpack.c.l.b16 %v371
        %v2739 = vunpack.c.h.b16 %v371
        %v2740 = vunpack.c.l.b16 %v372
        %v2741 = vunpack.c.h.b16 %v372
        %v2742 = vunpack.c.l.b16 %v373
        %v2743 = vunpack.c.h.b16 %v373
        %v2744 = vunpack.c.l.b16 %v374
        %v2745 = vunpack.c.h.b16 %v374
        %v2746 = vunpack.c.l.b16 %v375
        %v2747 = vunpack.c.h.b16 %v375
        %v2748 = vunpack.c.l.b16 %v376
        %v2749 = vunpack.c.h.b16 %v376
        %v2750 = vunpack.c.l.b16 %v377
        %v2751 = vunpack.c.h.b16 %v377
        %v2752 = vunpack.c.l.b16 %v378
        %v2753 = vunpack.c.h.b16 %v378
        %v2754 = vunpack.c.l.b16 %v379
        %v2755 = vunpack.c.h.b16 %v379
        %v2756 = vunpack.c.l.b16 %v380
        %v2757 = vunpack.c.h.b16 %v380
        %v2758 = vunpack.c.l.b16 %v381
        %v2759 = vunpack.c.h.b16 %v381
        %v2760 = vunpack.c.l.b16 %v382
        %v2761 = vunpack.c.h.b16 %v382
        %v2762 = vunpack.c.l.b16 %v383
        %v2763 = vunpack.c.h.b16 %v383
        %v2764 = vunpack.c.l.b16 %v384
        %v2765 = vunpack.c.h.b16 %v384
        %v2766 = vunpack.c.l.b16 %v385
        %v2767 = vunpack.c.h.b16 %v385
        %v2768 = vunpack.c.l.b16 %v386
        %v2769 = vunpack.c.h.b16 %v386
        %v2770 = vunpack.c.l.b16 %v387
        %v2771 = vunpack.c.h.b16 %v387
        %v2772 = vunpack.c.l.b16 %v388
        %v2773 = vunpack.c.h.b16 %v388
        %v2774 = vunpack.c.l.b16 %v389
        %v2775 = vunpack.c.h.b16 %v389
        %v2776 = vunpack.c.l.b16 %v390
        %v2777 = vunpack.c.h.b16 %v390
        %v2778 = vunpack.c.l.b16 %v391
        %v2779 = vunpack.c.h.b16 %v391
        %v2780 = vunpack.c.l.b16 %v392
        %v2781 = vunpack.c.h.b16 %v392
        %v2782 = vunpack.c.l.b16 %v393
        %v2783 = vunpack.c.h.b16 %v393
        %v2784 = vunpack.c.l.b16 %v394
        %v2785 = vunpack.c.h.b16 %v394
        %v2786 = vunpack.c.l.b16 %v395
        %v2787 = vunpack.c.h.b16 %v395
        %v2788 = vunpack.c.l.b16 %v396
        %v2789 = vunpack.c.h.b16 %v396
        %v2790 = vunpack.c.l.b16 %v397
        %v2791 = vunpack.c.h.b16 %v397
        %v2792 = vunpack.c.l.b16 %v398
        %v2793 = vunpack.c.h.b16 %v398
        %v2794 = vunpack.c.l.b16 %v399
        %v2795 = vunpack.c.h.b16 %v399
        %v2796 = vunpack.c.l.b16 %v400
        %v2797 = vunpack.c.h.b16 %v400
        %v2798 = vunpack.c.l.b16 %v401
        %v2799 = vunpack.c.h.b16 %v401
        %v2800 = vunpack.c.l.b16 %v402
        %v2801 = vunpack.c.h.b16 %v402
        %v2802 = vunpack.c.l.b16 %v403
        %v2803 = vunpack.c.h.b16 %v403
        %v2804 = vunpack.c.l.b16 %v404
        %v2805 = vunpack.c.h.b16 %v404
        %v2806 = vunpack.c.l.b16 %v405
        %v2807 = vunpack.c.h.b16 %v405
        %v2808 = vunpack.c.l.b16 %v406
        %v2809 = vunpack.c.h.b16 %v406
        %v2810 = vunpack.c.l.b16 %v407
        %v2811 = vunpack.c.h.b16 %v407
        %v2812 = vunpack.c.l.b16 %v408
        %v2813 = vunpack.c.h.b16 %v408
        %v2814 = vunpack.c.l.b16 %v409
        %v2815 = vunpack.c.h.b16 %v409
        %v2816 = vunpack.c.l.b16 %v410
        %v2817 = vunpack.c.h.b16 %v410
        %v2818 = vunpack.c.l.b16 %v411
        %v2819 = vunpack.c.h.b16 %v411
        %v2820 = vunpack.c.l.b16 %v412
        %v2821 = vunpack.c.h.b16 %v412
        %v2822 = vunpack.c.l.b16 %v413
        %v2823 = vunpack.c.h.b16 %v413
        %v2824 = vunpack.c.l.b16 %v414
        %v2825 = vunpack.c.h.b16 %v414
        %v2826 = vunpack.c.l.b16 %v415
        %v2827 = vunpack.c.h.b16 %v415
        %v2828 = vunpack.c.l.b16 %v416
        %v2829 = vunpack.c.h.b16 %v416
        %v2830 = vunpack.c.l.b16 %v417
        %v2831 = vunpack.c.h.b16 %v417
        %v2832 = vunpack.c.l.b16 %v418
        %v2833 = vunpack.c.h.b16 %v418
        %v2834 = vunpack.c.l.b16 %v419
        %v2835 = vunpack.c.h.b16 %v419
        %v2836 = vunpack.c.l.b16 %v420
        %v2837 = vunpack.c.h.b16 %v420
        %v2838 = vunpack.c.l.b16 %v421
        %v2839 = vunpack.c.h.b16 %v421
        %v2840 = vunpack.c.l.b16 %v422
        %v2841 = vunpack.c.h.b16 %v422
        %v2842 = vunpack.c.l.b16 %v423
        %v2843 = vunpack.c.h.b16 %v423
        %v2844 = vunpack.c.l.b16 %v424
        %v2845 = vunpack.c.h.b16 %v424
        %v2846 = vunpack.c.l.b16 %v425
        %v2847 = vunpack.c.h.b16 %v425
        %v2848 = vunpack.c.l.b16 %v426
        %v2849 = vunpack.c.h.b16 %v426
        %v2850 = vunpack.c.l.b16 %v427
        %v2851 = vunpack.c.h.b16 %v427
        %v2852 = vunpack.c.l.b16 %v428
        %v2853 = vunpack.c.h.b16 %v428
        %v2854 = vunpack.c.l.b16 %v429
        %v2855 = vunpack.c.h.b16 %v429
        %v2856 = vunpack.c.l.b16 %v430
        %v2857 = vunpack.c.h.b16 %v430
        %v2858 = vunpack.c.l.b16 %v431
        %v2859 = vunpack.c.h.b16 %v431
        %v2860 = vunpack.c.l.b16 %v432
        %v2861 = vunpack.c.h.b16 %v432
        %v2862 = vunpack.c.l.b16 %v433
        %v2863 = vunpack.c.h.b16 %v433
        %v2864 = vunpack.c.l.b16 %v434
        %v2865 = vunpack.c.h.b16 %v434
        %v2866 = vunpack.c.l.b16 %v435
        %v2867 = vunpack.c.h.b16 %v435
        %v2868 = vunpack.c.l.b16 %v436
        %v2869 = vunpack.c.h.b16 %v436
        %v2870 = vunpack.c.l.b16 %v437
        %v2871 = vunpack.c.h.b16 %v437
        %v2872 = vunpack.c.l.b16 %v438
        %v2873 = vunpack.c.h.b16 %v438
        %v2874 = vunpack.c.l.b16 %v439
        %v2875 = vunpack.c.h.b16 %v439
        %v2876 = vunpack.c.l.b16 %v440
        %v2877 = vunpack.c.h.b16 %v440
        %v2878 = vunpack.c.l.b16 %v441
        %v2879 = vunpack.c.h.b16 %v441
        %v2880 = vunpack.c.l.b16 %v442
        %v2881 = vunpack.c.h.b16 %v442
        %v2882 = vunpack.c.l.b16 %v443
        %v2883 = vunpack.c.h.b16 %v443
        %v2884 = vunpack.c.l.b16 %v444
        %v2885 = vunpack.c.h.b16 %v444
        %v2886 = vunpack.c.l.b16 %v445
        %v2887 = vunpack.c.h.b16 %v445
        %v2888 = vunpack.c.l.b16 %v446
        %v2889 = vunpack.c.h.b16 %v446
        %v2890 = vunpack.c.l.b16 %v447
        %v2891 = vunpack.c.h.b16 %v447
        %v2892 = vunpack.c.l.b16 %v448
        %v2893 = vunpack.c.h.b16 %v448
        %v2894 = vunpack.c.l.b16 %v449
        %v2895 = vunpack.c.h.b16 %v449
        %v2896 = vunpack.c.l.b16 %v450
        %v2897 = vunpack.c.h.b16 %v450
        %v2898 = vunpack.c.l.b16 %v451
        %v2899 = vunpack.c.h.b16 %v451
        %v2900 = vunpack.c.l.b16 %v452
        %v2901 = vunpack.c.h.b16 %v452
        %v2902 = vunpack.c.l.b16 %v453
        %v2903 = vunpack.c.h.b16 %v453
        %v2904 = vunpack.c.l.b16 %v454
        %v2905 = vunpack.c.h.b16 %v454
        %v2906 = vunpack.c.l.b16 %v455
        %v2907 = vunpack.c.h.b16 %v455
        %v2908 = vunpack.c.l.b16 %v456
        %v2909 = vunpack.c.h.b16 %v456
        %v2910 = vunpack.c.l.b16 %v457
        %v2911 = vunpack.c.h.b16 %v457
        %v2912 = vunpack.c.l.b16 %v458
        %v2913 = vunpack.c.h.b16 %v458
        %v2914 = vunpack.c.l.b16 %v459
        %v2915 = vunpack.c.h.b16 %v459
        %v2916 = vunpack.c.l.b16 %v460
        %v2917 = vunpack.c.h.b16 %v460
        %v2918 = vunpack.c.l.b16 %v461
        %v2919 = vunpack.c.h.b16 %v461
        %v2920 = vunpack.c.l.b16 %v462
        %v2921 = vunpack.c.h.b16 %v462
        %v2922 = vunpack.c.l.b16 %v463
        %v2923 = vunpack.c.h.b16 %v463
        %v2924 = vunpack.c.l.b16 %v464
        %v2925 = vunpack.c.h.b16 %v464
        %v2926 = vunpack.c.l.b16 %v465
        %v2927 = vunpack.c.h.b16 %v465
        %v2928 = vunpack.c.l.b16 %v466
        %v2929 = vunpack.c.h.b16 %v466
        %v2930 = vunpack.c.l.b16 %v467
        %v2931 = vunpack.c.h.b16 %v467
        %v2932 = vunpack.c.l.b16 %v468
        %v2933 = vunpack.c.h.b16 %v468
        %v2934 = vunpack.c.l.b16 %v469
        %v2935 = vunpack.c.h.b16 %v469
        %v2936 = vunpack.c.l.b16 %v470
        %v2937 = vunpack.c.h.b16 %v470
        %v2938 = vunpack.c.l.b16 %v471
        %v2939 = vunpack.c.h.b16 %v471
        %v2940 = vunpack.c.l.b16 %v472
        %v2941 = vunpack.c.h.b16 %v472
        %v2942 = vunpack.c.l.b16 %v473
        %v2943 = vunpack.c.h.b16 %v473
        %v2944 = vunpack.c.l.b16 %v474
        %v2945 = vunpack.c.h.b16 %v474
        %v2946 = vunpack.c.l.b16 %v475
        %v2947 = vunpack.c.h.b16 %v475
        %v2948 = vunpack.c.l.b16 %v476
        %v2949 = vunpack.c.h.b16 %v476
        %v2950 = vunpack.c.l.b16 %v477
        %v2951 = vunpack.c.h.b16 %v477
        %v2952 = vunpack.c.l.b16 %v478
        %v2953 = vunpack.c.h.b16 %v478
        %v2954 = vunpack.c.l.b16 %v479
        %v2955 = vunpack.c.h.b16 %v479
        %v2956 = vunpack.c.l.b16 %v480
        %v2957 = vunpack.c.h.b16 %v480
        %v2958 = vunpack.c.l.b16 %v481
        %v2959 = vunpack.c.h.b16 %v481
        %v2960 = vunpack.c.l.b16 %v482
        %v2961 = vunpack.c.h.b16 %v482
        %v2962 = vunpack.c.l.b16 %v483
        %v2963 = vunpack.c.h.b16 %v483
        %v2964 = vunpack.c.l.b16 %v484
        %v2965 = vunpack.c.h.b16 %v484
        %v2966 = vunpack.c.l.b16 %v485
        %v2967 = vunpack.c.h.b16 %v485
        %v2968 = vunpack.c.l.b16 %v486
        %v2969 = vunpack.c.h.b16 %v486
        %v2970 = vunpack.c.l.b16 %v487
        %v2971 = vunpack.c.h.b16 %v487
        %v2972 = vunpack.c.l.b16 %v488
        %v2973 = vunpack.c.h.b16 %v488
        %v2974 = vunpack.c.l.b16 %v489
        %v2975 = vunpack.c.h.b16 %v489
        %v2976 = vunpack.c.l.b16 %v490
        %v2977 = vunpack.c.h.b16 %v490
        %v2978 = vunpack.c.l.b16 %v491
        %v2979 = vunpack.c.h.b16 %v491
        %v2980 = vunpack.c.l.b16 %v492
        %v2981 = vunpack.c.h.b16 %v492
        %v2982 = vunpack.c.l.b16 %v493
        %v2983 = vunpack.c.h.b16 %v493
        %v2984 = vunpack.c.l.b16 %v494
        %v2985 = vunpack.c.h.b16 %v494
        %v2986 = vunpack.c.l.b16 %v495
        %v2987 = vunpack.c.h.b16 %v495
        %v2988 = vunpack.c.l.b16 %v496
        %v2989 = vunpack.c.h.b16 %v496
        %v2990 = vunpack.c.l.b16 %v497
        %v2991 = vunpack.c.h.b16 %v497
        %v2992 = vunpack.c.l.b16 %v498
        %v2993 = vunpack.c.h.b16 %v498
        %v2994 = vunpack.c.l.b16 %v499
        %v2995 = vunpack.c.h.b16 %v499
        %v2996 = vunpack.c.l.b16 %v500
        %v2997 = vunpack.c.h.b16 %v500
        %v2998 = vunpack.c.l.b16 %v501
        %v2999 = vunpack.c.h.b16 %v501
        %v3000 = vunpack.c.l.b16 %v502
        %v3001 = vunpack.c.h.b16 %v502
        %v3002 = vunpack.c.l.b16 %v503
        %v3003 = vunpack.c.h.b16 %v503
        %v3004 = vunpack.c.l.b16 %v504
        %v3005 = vunpack.c.h.b16 %v504
        %v3006 = vunpack.c.l.b16 %v505
        %v3007 = vunpack.c.h.b16 %v505
        %v3008 = vunpack.c.l.b16 %v506
        %v3009 = vunpack.c.h.b16 %v506
        %v3010 = vunpack.c.l.b16 %v507
        %v3011 = vunpack.c.h.b16 %v507
        %v3012 = vunpack.c.l.b16 %v508
        %v3013 = vunpack.c.h.b16 %v508
        %v3014 = vunpack.c.l.b16 %v509
        %v3015 = vunpack.c.h.b16 %v509
        %v3016 = vunpack.c.l.b16 %v510
        %v3017 = vunpack.c.h.b16 %v510
        %v3018 = vunpack.c.l.b16 %v511
        %v3019 = vunpack.c.h.b16 %v511
        %v3020 = vunpack.c.l.b16 %v512
        %v3021 = vunpack.c.h.b16 %v512
        %v3022 = vunpack.c.l.b16 %v513
        %v3023 = vunpack.c.h.b16 %v513
        %v3024 = vunpack.c.l.b16 %v514
        %v3025 = vunpack.c.h.b16 %v514
        %v3026 = vunpack.c.l.b16 %v515
        %v3027 = vunpack.c.h.b16 %v515
        %v3028 = vunpack.c.l.b16 %v516
        %v3029 = vunpack.c.h.b16 %v516
        %v3030 = vunpack.c.l.b16 %v517
        %v3031 = vunpack.c.h.b16 %v517
        %v3032 = vunpack.c.l.b16 %v518
        %v3033 = vunpack.c.h.b16 %v518
        %v3034 = vunpack.c.l.b16 %v519
        %v3035 = vunpack.c.h.b16 %v519
        %v3036 = vunpack.c.l.b16 %v520
        %v3037 = vunpack.c.h.b16 %v520
        %v3038 = vunpack.c.l.b16 %v521
        %v3039 = vunpack.c.h.b16 %v521
        %v3040 = vunpack.c.l.b16 %v522
        %v3041 = vunpack.c.h.b16 %v522
        %v3042 = vunpack.c.l.b16 %v523
        %v3043 = vunpack.c.h.b16 %v523
        %v3044 = vunpack.c.l.b16 %v524
        %v3045 = vunpack.c.h.b16 %v524
        %v3046 = vunpack.c.l.b16 %v525
        %v3047 = vunpack.c.h.b16 %v525
        %v3048 = vunpack.c.l.b16 %v526
        %v3049 = vunpack.c.h.b16 %v526
        %v3050 = vunpack.c.l.b16 %v527
        %v3051 = vunpack.c.h.b16 %v527
        %v3052 = vunpack.c.l.b16 %v528
        %v3053 = vunpack.c.h.b16 %v528
        %v3054 = vunpack.c.l.b16 %v529
        %v3055 = vunpack.c.h.b16 %v529
        %v3056 = vunpack.c.l.b16 %v530
        %v3057 = vunpack.c.h.b16 %v530
        %v3058 = vunpack.c.l.b16 %v531
        %v3059 = vunpack.c.h.b16 %v531
        %v3060 = vunpack.c.l.b16 %v532
        %v3061 = vunpack.c.h.b16 %v532
        %v3062 = vunpack.c.l.b16 %v533
        %v3063 = vunpack.c.h.b16 %v533
        %v3064 = vunpack.c.l.b16 %v534
        %v3065 = vunpack.c.h.b16 %v534
        %v3066 = vunpack.c.l.b16 %v535
        %v3067 = vunpack.c.h.b16 %v535
        %v3068 = vunpack.c.l.b16 %v536
        %v3069 = vunpack.c.h.b16 %v536
        %v3070 = vunpack.c.l.b16 %v537
        %v3071 = vunpack.c.h.b16 %v537
        %v3072 = vunpack.c.l.b16 %v538
        %v3073 = vunpack.c.h.b16 %v538
        %v3074 = vunpack.c.l.b16 %v539
        %v3075 = vunpack.c.h.b16 %v539
        %v3076 = vunpack.c.l.b16 %v540
        %v3077 = vunpack.c.h.b16 %v540
        %v3078 = vunpack.c.l.b16 %v541
        %v3079 = vunpack.c.h.b16 %v541
        %v3080 = vunpack.c.l.b16 %v542
        %v3081 = vunpack.c.h.b16 %v542
        %v3082 = vunpack.c.l.b16 %v543
        %v3083 = vunpack.c.h.b16 %v543
        %v3084 = vunpack.c.l.b16 %v544
        %v3085 = vunpack.c.h.b16 %v544
        %v3086 = vunpack.c.l.b16 %v545
        %v3087 = vunpack.c.h.b16 %v545
        %v3088 = vunpack.c.l.b16 %v546
        %v3089 = vunpack.c.h.b16 %v546
        %v3090 = vunpack.c.l.b16 %v547
        %v3091 = vunpack.c.h.b16 %v547
        %v3092 = vunpack.c.l.b16 %v548
        %v3093 = vunpack.c.h.b16 %v548
        %v3094 = vunpack.c.l.b16 %v549
        %v3095 = vunpack.c.h.b16 %v549
        %v3096 = vunpack.c.l.b16 %v550
        %v3097 = vunpack.c.h.b16 %v550
        %v3098 = vunpack.c.l.b16 %v551
        %v3099 = vunpack.c.h.b16 %v551
        %v3100 = vunpack.c.l.b16 %v552
        %v3101 = vunpack.c.h.b16 %v552
        %v3102 = vunpack.c.l.b16 %v553
        %v3103 = vunpack.c.h.b16 %v553
        %v3104 = vunpack.c.l.b16 %v554
        %v3105 = vunpack.c.h.b16 %v554
        %v3106 = vunpack.c.l.b16 %v555
        %v3107 = vunpack.c.h.b16 %v555
        %v3108 = vunpack.c.l.b16 %v556
        %v3109 = vunpack.c.h.b16 %v556
        %v3110 = vunpack.c.l.b16 %v557
        %v3111 = vunpack.c.h.b16 %v557
        %v3112 = vunpack.c.l.b16 %v558
        %v3113 = vunpack.c.h.b16 %v558
        %v3114 = vunpack.c.l.b16 %v559
        %v3115 = vunpack.c.h.b16 %v559
        %v3116 = vunpack.c.l.b16 %v560
        %v3117 = vunpack.c.h.b16 %v560
        %v3118 = vunpack.c.l.b16 %v561
        %v3119 = vunpack.c.h.b16 %v561
        %v3120 = vunpack.c.l.b16 %v562
        %v3121 = vunpack.c.h.b16 %v562
        %v3122 = vunpack.c.l.b16 %v563
        %v3123 = vunpack.c.h.b16 %v563
        %v3124 = vunpack.c.l.b16 %v564
        %v3125 = vunpack.c.h.b16 %v564
        %v3126 = vunpack.c.l.b16 %v565
        %v3127 = vunpack.c.h.b16 %v565
        %v3128 = vunpack.c.l.b16 %v566
        %v3129 = vunpack.c.h.b16 %v566
        %v3130 = vunpack.c.l.b16 %v567
        %v3131 = vunpack.c.h.b16 %v567
        %v3132 = vunpack.c.l.b16 %v568
        %v3133 = vunpack.c.h.b16 %v568
        %v3134 = vunpack.c.l.b16 %v569
        %v3135 = vunpack.c.h.b16 %v569
        %v3136 = vunpack.c.l.b16 %v570
        %v3137 = vunpack.c.h.b16 %v570
        %v3138 = vunpack.c.l.b16 %v571
        %v3139 = vunpack.c.h.b16 %v571
        %v3140 = vunpack.c.l.b16 %v572
        %v3141 = vunpack.c.h.b16 %v572
        %v3142 = vunpack.c.l.b16 %v573
        %v3143 = vunpack.c.h.b16 %v573
        %v3144 = vunpack.c.l.b16 %v574
        %v3145 = vunpack.c.h.b16 %v574
        %v3146 = vunpack.c.l.b16 %v575
        %v3147 = vunpack.c.h.b16 %v575
        %v3148 = vunpack.c.l.b16 %v576
        %v3149 = vunpack.c.h.b16 %v576
        %v3150 = vunpack.c.l.b16 %v577
        %v3151 = vunpack.c.h.b16 %v577
        %v3152 = vunpack.c.l.b16 %v578
        %v3153 = vunpack.c.h.b16 %v578
        %v3154 = vunpack.c.l.b16 %v579
        %v3155 = vunpack.c.h.b16 %v579
        %v3156 = vunpack.c.l.b16 %v580
        %v3157 = vunpack.c.h.b16 %v580
        %v3158 = vunpack.c.l.b16 %v581
        %v3159 = vunpack.c.h.b16 %v581
        %v3160 = vunpack.c.l.b16 %v582
        %v3161 = vunpack.c.h.b16 %v582
        %v3162 = vunpack.c.l.b16 %v583
        %v3163 = vunpack.c.h.b16 %v583
        %v3164 = vunpack.c.l.b16 %v584
        %v3165 = vunpack.c.h.b16 %v584
        %v3166 = vunpack.c.l.b16 %v585
        %v3167 = vunpack.c.h.b16 %v585
        %v3168 = vunpack.c.l.b16 %v586
        %v3169 = vunpack.c.h.b16 %v586
        %v3170 = vunpack.c.l.b16 %v587
        %v3171 = vunpack.c.h.b16 %v587
        %v3172 = vunpack.c.l.b16 %v588
        %v3173 = vunpack.c.h.b16 %v588
        %v3174 = vunpack.c.l.b16 %v589
        %v3175 = vunpack.c.h.b16 %v589
        %v3176 = vunpack.c.l.b16 %v590
        %v3177 = vunpack.c.h.b16 %v590
        %v3178 = vunpack.c.l.b16 %v591
        %v3179 = vunpack.c.h.b16 %v591
        %v3180 = vunpack.c.l.b16 %v592
        %v3181 = vunpack.c.h.b16 %v592
        %v3182 = vunpack.c.l.b16 %v593
        %v3183 = vunpack.c.h.b16 %v593
        %v3184 = vunpack.c.l.b16 %v594
        %v3185 = vunpack.c.h.b16 %v594
        %v3186 = vunpack.c.l.b16 %v595
        %v3187 = vunpack.c.h.b16 %v595
        %v3188 = vunpack.c.l.b16 %v596
        %v3189 = vunpack.c.h.b16 %v596
        %v3190 = vunpack.c.l.b16 %v597
        %v3191 = vunpack.c.h.b16 %v597
        %v3192 = vunpack.c.l.b16 %v598
        %v3193 = vunpack.c.h.b16 %v598
        %v3194 = vunpack.c.l.b16 %v599
        %v3195 = vunpack.c.h.b16 %v599
        %v3196 = vunpack.c.l.b16 %v600
        %v3197 = vunpack.c.h.b16 %v600
        %v3198 = vunpack.c.l.b16 %v601
        %v3199 = vunpack.c.h.b16 %v601
        %v3200 = vunpack.c.l.b16 %v602
        %v3201 = vunpack.c.h.b16 %v602
        %v3202 = vunpack.c.l.b16 %v603
        %v3203 = vunpack.c.h.b16 %v603
        %v3204 = vunpack.c.l.b16 %v604
        %v3205 = vunpack.c.h.b16 %v604
        %v3206 = vunpack.c.l.b16 %v605
        %v3207 = vunpack.c.h.b16 %v605
        %v3208 = vunpack.c.l.b16 %v606
        %v3209 = vunpack.c.h.b16 %v606
        %v3210 = vunpack.c.l.b16 %v607
        %v3211 = vunpack.c.h.b16 %v607
        %v3212 = vunpack.c.l.b16 %v608
        %v3213 = vunpack.c.h.b16 %v608
        %v3214 = vunpack.c.l.b16 %v609
        %v3215 = vunpack.c.h.b16 %v609
        %v3216 = vunpack.c.l.b16 %v610
        %v3217 = vunpack.c.h.b16 %v610
        %v3218 = vunpack.c.l.b16 %v611
        %v3219 = vunpack.c.h.b16 %v611
        %v3220 = vunpack.c.l.b16 %v612
        %v3221 = vunpack.c.h.b16 %v612
        %v3222 = vunpack.c.l.b16 %v613
        %v3223 = vunpack.c.h.b16 %v613
        %v3224 = vunpack.c.l.b16 %v614
        %v3225 = vunpack.c.h.b16 %v614
        %v3226 = vunpack.c.l.b16 %v615
        %v3227 = vunpack.c.h.b16 %v615
        %v3228 = vunpack.c.l.b16 %v616
        %v3229 = vunpack.c.h.b16 %v616
        %v3230 = vunpack.c.l.b16 %v617
        %v3231 = vunpack.c.h.b16 %v617
        %v3232 = vunpack.c.l.b16 %v618
        %v3233 = vunpack.c.h.b16 %v618
        %v3234 = vunpack.c.l.b16 %v619
        %v3235 = vunpack.c.h.b16 %v619
        %v3236 = vunpack.c.l.b16 %v620
        %v3237 = vunpack.c.h.b16 %v620
        %v3238 = vunpack.c.l.b16 %v621
        %v3239 = vunpack.c.h.b16 %v621
        %v3240 = vunpack.c.l.b16 %v622
        %v3241 = vunpack.c.h.b16 %v622
        %v3242 = vunpack.c.l.b16 %v623
        %v3243 = vunpack.c.h.b16 %v623
        %v3244 = vunpack.c.l.b16 %v624
        %v3245 = vunpack.c.h.b16 %v624
        %v3246 = vunpack.c.l.b16 %v625
        %v3247 = vunpack.c.h.b16 %v625
        %v3248 = vunpack.c.l.b16 %v626
        %v3249 = vunpack.c.h.b16 %v626
        %v3250 = vunpack.c.l.b16 %v627
        %v3251 = vunpack.c.h.b16 %v627
        %v3252 = vunpack.c.l.b16 %v628
        %v3253 = vunpack.c.h.b16 %v628
        %v3254 = vunpack.c.l.b16 %v629
        %v3255 = vunpack.c.h.b16 %v629
        %v3256 = vunpack.c.l.b16 %v630
        %v3257 = vunpack.c.h.b16 %v630
        %v3258 = vunpack.c.l.b16 %v631
        %v3259 = vunpack.c.h.b16 %v631
        %v3260 = vunpack.c.l.b16 %v632
        %v3261 = vunpack.c.h.b16 %v632
        %v3262 = vunpack.c.l.b16 %v633
        %v3263 = vunpack.c.h.b16 %v633
        %v3264 = vunpack.c.l.b16 %v634
        %v3265 = vunpack.c.h.b16 %v634
        %v3266 = vunpack.c.l.b16 %v635
        %v3267 = vunpack.c.h.b16 %v635
        %v3268 = vunpack.c.l.b16 %v636
        %v3269 = vunpack.c.h.b16 %v636
        %v3270 = vunpack.c.l.b16 %v637
        %v3271 = vunpack.c.h.b16 %v637
        %v3272 = vunpack.c.l.b16 %v638
        %v3273 = vunpack.c.h.b16 %v638
        %v3274 = vunpack.c.l.b16 %v639
        %v3275 = vunpack.c.h.b16 %v639
        %v3276 = vunpack.c.l.b16 %v640
        %v3277 = vunpack.c.h.b16 %v640
        %v3278 = vunpack.c.l.b16 %v641
        %v3279 = vunpack.c.h.b16 %v641
        %v3280 = vunpack.c.l.b16 %v642
        %v3281 = vunpack.c.h.b16 %v642
        %v3282 = vunpack.c.l.b16 %v643
        %v3283 = vunpack.c.h.b16 %v643
        %v3284 = vunpack.c.l.b16 %v644
        %v3285 = vunpack.c.h.b16 %v644
        %v3286 = vunpack.c.l.b16 %v645
        %v3287 = vunpack.c.h.b16 %v645
        %v3288 = vunpack.c.l.b16 %v646
        %v3289 = vunpack.c.h.b16 %v646
        %v3290 = vunpack.c.l.b16 %v647
        %v3291 = vunpack.c.h.b16 %v647
        %v3292 = vunpack.c.l.b16 %v648
        %v3293 = vunpack.c.h.b16 %v648
        %v3294 = vunpack.c.l.b16 %v649
        %v3295 = vunpack.c.h.b16 %v649
        %v3296 = vunpack.c.l.b16 %v650
        %v3297 = vunpack.c.h.b16 %v650
        %v3298 = vunpack.c.l.b16 %v651
        %v3299 = vunpack.c.h.b16 %v651
        %v3300 = vunpack.c.l.b16 %v652
        %v3301 = vunpack.c.h.b16 %v652
        %v3302 = vunpack.c.l.b16 %v653
        %v3303 = vunpack.c.h.b16 %v653
        %v3304 = vunpack.c.l.b16 %v654
        %v3305 = vunpack.c.h.b16 %v654
        %v3306 = vunpack.c.l.b16 %v655
        %v3307 = vunpack.c.h.b16 %v655
        %v3308 = vunpack.c.l.b16 %v656
        %v3309 = vunpack.c.h.b16 %v656
        %v3310 = vunpack.c.l.b16 %v657
        %v3311 = vunpack.c.h.b16 %v657
        %v3312 = vunpack.c.l.b16 %v658
        %v3313 = vunpack.c.h.b16 %v658
        %v3314 = vunpack.c.l.b16 %v659
        %v3315 = vunpack.c.h.b16 %v659
        %v3316 = vunpack.c.l.b16 %v660
        %v3317 = vunpack.c.h.b16 %v660
        %v3318 = vunpack.c.l.b16 %v661
        %v3319 = vunpack.c.h.b16 %v661
        %v3320 = vunpack.c.l.b16 %v662
        %v3321 = vunpack.c.h.b16 %v662
        %v3322 = vunpack.c.l.b16 %v663
        %v3323 = vunpack.c.h.b16 %v663
        %v3324 = vunpack.c.l.b16 %v664
        %v3325 = vunpack.c.h.b16 %v664
        %v3326 = vunpack.c.l.b16 %v665
        %v3327 = vunpack.c.h.b16 %v665
        %v3328 = vunpack.c.l.b16 %v666
        %v3329 = vunpack.c.h.b16 %v666
        %v3330 = vunpack.c.l.b16 %v667
        %v3331 = vunpack.c.h.b16 %v667
        %v3332 = vunpack.c.l.b16 %v668
        %v3333 = vunpack.c.h.b16 %v668
        %v3334 = vunpack.c.l.b16 %v669
        %v3335 = vunpack.c.h.b16 %v669
        %v3336 = vunpack.c.l.b16 %v670
        %v3337 = vunpack.c.h.b16 %v670
        %v3338 = vunpack.c.l.b16 %v671
        %v3339 = vunpack.c.h.b16 %v671
        %v3340 = vunpack.c.l.b16 %v672
        %v3341 = vunpack.c.h.b16 %v672
        %v3342 = vunpack.c.l.b16 %v673
        %v3343 = vunpack.c.h.b16 %v673
        %v3344 = vunpack.c.l.b16 %v674
        %v3345 = vunpack.c.h.b16 %v674
        %v3346 = vunpack.c.l.b16 %v675
        %v3347 = vunpack.c.h.b16 %v675
        %v3348 = vunpack.c.l.b16 %v676
        %v3349 = vunpack.c.h.b16 %v676
        %v3350 = vunpack.c.l.b16 %v677
        %v3351 = vunpack.c.h.b16 %v677
        %v3352 = vunpack.c.l.b16 %v678
        %v3353 = vunpack.c.h.b16 %v678
        %v3354 = vunpack.c.l.b16 %v679
        %v3355 = vunpack.c.h.b16 %v679
        %v3356 = vunpack.c.l.b16 %v680
        %v3357 = vunpack.c.h.b16 %v680
        %v3358 = vunpack.c.l.b16 %v681
        %v3359 = vunpack.c.h.b16 %v681
        %v3360 = vunpack.c.l.b16 %v682
        %v3361 = vunpack.c.h.b16 %v682
        %v3362 = vunpack.c.l.b16 %v683
        %v3363 = vunpack.c.h.b16 %v683
        %v3364 = vunpack.c.l.b16 %v684
        %v3365 = vunpack.c.h.b16 %v684
        %v3366 = vunpack.c.l.b16 %v685
        %v3367 = vunpack.c.h.b16 %v685
        %v3368 = vunpack.c.l.b16 %v686
        %v3369 = vunpack.c.h.b16 %v686
        %v3370 = vunpack.c.l.b16 %v687
        %v3371 = vunpack.c.h.b16 %v687
        %v3372 = vunpack.c.l.b16 %v688
        %v3373 = vunpack.c.h.b16 %v688
        %v3374 = vunpack.c.l.b16 %v689
        %v3375 = vunpack.c.h.b16 %v689
        %v3376 = vunpack.c.l.b16 %v690
        %v3377 = vunpack.c.h.b16 %v690
        %v3378 = vunpack.c.l.b16 %v691
        %v3379 = vunpack.c.h.b16 %v691
        %v3380 = vunpack.c.l.b16 %v692
        %v3381 = vunpack.c.h.b16 %v692
        %v3382 = vunpack.c.l.b16 %v693
        %v3383 = vunpack.c.h.b16 %v693
        %v3384 = vunpack.c.l.b16 %v694
        %v3385 = vunpack.c.h.b16 %v694
        %v3386 = vunpack.c.l.b16 %v695
        %v3387 = vunpack.c.h.b16 %v695
        %v3388 = vunpack.c.l.b16 %v696
        %v3389 = vunpack.c.h.b16 %v696
        %v3390 = vunpack.c.l.b16 %v697
        %v3391 = vunpack.c.h.b16 %v697
        %v3392 = vunpack.c.l.b16 %v698
        %v3393 = vunpack.c.h.b16 %v698
        %v3394 = vunpack.c.l.b16 %v699
        %v3395 = vunpack.c.h.b16 %v699
        %v3396 = vunpack.c.l.b16 %v700
        %v3397 = vunpack.c.h.b16 %v700
        %v3398 = vunpack.c.l.b16 %v701
        %v3399 = vunpack.c.h.b16 %v701
        %v3400 = vunpack.c.l.b16 %v702
        %v3401 = vunpack.c.h.b16 %v702
        %v3402 = vunpack.c.l.b16 %v703
        %v3403 = vunpack.c.h.b16 %v703
        %v3404 = vunpack.c.l.b16 %v704
        %v3405 = vunpack.c.h.b16 %v704
        %v3406 = vunpack.c.l.b16 %v705
        %v3407 = vunpack.c.h.b16 %v705
        %v3408 = vunpack.c.l.b16 %v706
        %v3409 = vunpack.c.h.b16 %v706
        %v3410 = vunpack.c.l.b16 %v707
        %v3411 = vunpack.c.h.b16 %v707
        %v3412 = vunpack.c.l.b16 %v708
        %v3413 = vunpack.c.h.b16 %v708
        %v3414 = vunpack.c.l.b16 %v709
        %v3415 = vunpack.c.h.b16 %v709
        %v3416 = vunpack.c.l.b16 %v710
        %v3417 = vunpack.c.h.b16 %v710
        %v3418 = vunpack.c.l.b16 %v711
        %v3419 = vunpack.c.h.b16 %v711
        %v3420 = vunpack.c.l.b16 %v712
        %v3421 = vunpack.c.h.b16 %v712
        %v3422 = vunpack.c.l.b16 %v713
        %v3423 = vunpack.c.h.b16 %v713
        %v3424 = vunpack.c.l.b16 %v714
        %v3425 = vunpack.c.h.b16 %v714
        %v3426 = vunpack.c.l.b16 %v715
        %v3427 = vunpack.c.h.b16 %v715
        %v3428 = vunpack.c.l.b16 %v716
        %v3429 = vunpack.c.h.b16 %v716
        %v3430 = vunpack.c.l.b16 %v717
        %v3431 = vunpack.c.h.b16 %v717
        %v3432 = vunpack.c.l.b16 %v718
        %v3433 = vunpack.c.h.b16 %v718
        %v3434 = vunpack.c.l.b16 %v719
        %v3435 = vunpack.c.h.b16 %v719
        %v3436 = vunpack.c.l.b16 %v720
        %v3437 = vunpack.c.h.b16 %v720
        %v3438 = vunpack.c.l.b16 %v721
        %v3439 = vunpack.c.h.b16 %v721
        %v3440 = vunpack.c.l.b16 %v722
        %v3441 = vunpack.c.h.b16 %v722
        %v3442 = vunpack.c.l.b16 %v723
        %v3443 = vunpack.c.h.b16 %v723
        %v3444 = vunpack.c.l.b16 %v724
        %v3445 = vunpack.c.h.b16 %v724
        %v3446 = vunpack.c.l.b16 %v725
        %v3447 = vunpack.c.h.b16 %v725
        %v3448 = vunpack.c.l.b16 %v726
        %v3449 = vunpack.c.h.b16 %v726
        %v3450 = vunpack.c.l.b16 %v727
        %v3451 = vunpack.c.h.b16 %v727
        %v3452 = vunpack.c.l.b16 %v728
        %v3453 = vunpack.c.h.b16 %v728
        %v3454 = vunpack.c.l.b16 %v729
        %v3455 = vunpack.c.h.b16 %v729
        %v3456 = vunpack.c.l.b16 %v730
        %v3457 = vunpack.c.h.b16 %v730
        %v3458 = vunpack.c.l.b16 %v731
        %v3459 = vunpack.c.h.b16 %v731
        %v3460 = vunpack.c.l.b16 %v732
        %v3461 = vunpack.c.h.b16 %v732
        %v3462 = vunpack.c.l.b16 %v733
        %v3463 = vunpack.c.h.b16 %v733
        %v3464 = vunpack.c.l.b16 %v734
        %v3465 = vunpack.c.h.b16 %v734
        %v3466 = vunpack.c.l.b16 %v735
        %v3467 = vunpack.c.h.b16 %v735
        %v3468 = vunpack.c.l.b16 %v736
        %v3469 = vunpack.c.h.b16 %v736
        %v3470 = vunpack.c.l.b16 %v737
        %v3471 = vunpack.c.h.b16 %v737
        %v3472 = vunpack.c.l.b16 %v738
        %v3473 = vunpack.c.h.b16 %v738
        %v3474 = vunpack.c.l.b16 %v739
        %v3475 = vunpack.c.h.b16 %v739
        %v3476 = vunpack.c.l.b16 %v740
        %v3477 = vunpack.c.h.b16 %v740
        %v3478 = vunpack.c.l.b16 %v741
        %v3479 = vunpack.c.h.b16 %v741
        %v3480 = vunpack.c.l.b16 %v742
        %v3481 = vunpack.c.h.b16 %v742
        %v3482 = vunpack.c.l.b16 %v743
        %v3483 = vunpack.c.h.b16 %v743
        %v3484 = vunpack.c.l.b16 %v744
        %v3485 = vunpack.c.h.b16 %v744
        %v3486 = vunpack.c.l.b16 %v745
        %v3487 = vunpack.c.h.b16 %v745
        %v3488 = vunpack.c.l.b16 %v746
        %v3489 = vunpack.c.h.b16 %v746
        %v3490 = vunpack.c.l.b16 %v747
        %v3491 = vunpack.c.h.b16 %v747
        %v3492 = vunpack.c.l.b16 %v748
        %v3493 = vunpack.c.h.b16 %v748
        %v3494 = vunpack.c.l.b16 %v749
        %v3495 = vunpack.c.h.b16 %v749
        %v3496 = vunpack.c.l.b16 %v750
        %v3497 = vunpack.c.h.b16 %v750
        %v3498 = vunpack.c.l.b16 %v751
        %v3499 = vunpack.c.h.b16 %v751
        %v3500 = vunpack.c.l.b16 %v752
        %v3501 = vunpack.c.h.b16 %v752
        %v3502 = vunpack.c.l.b16 %v753
        %v3503 = vunpack.c.h.b16 %v753
        %v3504 = vunpack.c.l.b16 %v754
        %v3505 = vunpack.c.h.b16 %v754
        %v3506 = vunpack.c.l.b16 %v755
        %v3507 = vunpack.c.h.b16 %v755
        %v3508 = vunpack.c.l.b16 %v756
        %v3509 = vunpack.c.h.b16 %v756
        %v3510 = vunpack.c.l.b16 %v757
        %v3511 = vunpack.c.h.b16 %v757
        %v3512 = vunpack.c.l.b16 %v758
        %v3513 = vunpack.c.h.b16 %v758
        %v3514 = vunpack.c.l.b16 %v759
        %v3515 = vunpack.c.h.b16 %v759
        %v3516 = vunpack.c.l.b16 %v760
        %v3517 = vunpack.c.h.b16 %v760
        %v3518 = vunpack.c.l.b16 %v761
        %v3519 = vunpack.c.h.b16 %v761
        %v3520 = vunpack.c.l.b16 %v762
        %v3521 = vunpack.c.h.b16 %v762
        %v3522 = vunpack.c.l.b16 %v763
        %v3523 = vunpack.c.h.b16 %v763
        %v3524 = vunpack.c.l.b16 %v764
        %v3525 = vunpack.c.h.b16 %v764
        %v3526 = vunpack.c.l.b16 %v765
        %v3527 = vunpack.c.h.b16 %v765
        %v3528 = vunpack.c.l.b16 %v766
        %v3529 = vunpack.c.h.b16 %v766
        %v3530 = vunpack.c.l.b16 %v767
        %v3531 = vunpack.c.h.b16 %v767
        %v3532 = vunpack.c.l.b16 %v768
        %v3533 = vunpack.c.h.b16 %v768
        %v3534 = vunpack.c.l.b16 %v769
        %v3535 = vunpack.c.h.b16 %v769
        %v3536 = vunpack.c.l.b16 %v770
        %v3537 = vunpack.c.h.b16 %v770
        %v3538 = vunpack.c.l.b16 %v771
        %v3539 = vunpack.c.h.b16 %v771
        %v3540 = vunpack.c.l.b16 %v772
        %v3541 = vunpack.c.h.b16 %v772
        %v3542 = vunpack.c.l.b16 %v773
        %v3543 = vunpack.c.h.b16 %v773
        %v3544 = vunpack.c.l.b16 %v774
        %v3545 = vunpack.c.h.b16 %v774
        %v3546 = vunpack.c.l.b16 %v775
        %v3547 = vunpack.c.h.b16 %v775
        %v3548 = vunpack.c.l.b16 %v776
        %v3549 = vunpack.c.h.b16 %v776
        %v3550 = vunpack.c.l.b16 %v777
        %v3551 = vunpack.c.h.b16 %v777
        %v3552 = vunpack.c.l.b16 %v778
        %v3553 = vunpack.c.h.b16 %v778
        %v3554 = vunpack.c.l.b16 %v779
        %v3555 = vunpack.c.h.b16 %v779
        %v3556 = vunpack.c.l.b16 %v780
        %v3557 = vunpack.c.h.b16 %v780
        %v3558 = vunpack.c.l.b16 %v781
        %v3559 = vunpack.c.h.b16 %v781
        %v3560 = vunpack.c.l.b16 %v782
        %v3561 = vunpack.c.h.b16 %v782
        %v3562 = vunpack.c.l.b16 %v783
        %v3563 = vunpack.c.h.b16 %v783
        %v3564 = vunpack.c.l.b16 %v784
        %v3565 = vunpack.c.h.b16 %v784
        %v3566 = vunpack.c.l.b16 %v785
        %v3567 = vunpack.c.h.b16 %v785
        %v3568 = vunpack.c.l.b16 %v786
        %v3569 = vunpack.c.h.b16 %v786
        %v3570 = vunpack.c.l.b16 %v787
        %v3571 = vunpack.c.h.b16 %v787
        %v3572 = vunpack.c.l.b16 %v788
        %v3573 = vunpack.c.h.b16 %v788
        %v3574 = vunpack.c.l.b16 %v789
        %v3575 = vunpack.c.h.b16 %v789
        %v3576 = vunpack.c.l.b16 %v790
        %v3577 = vunpack.c.h.b16 %v790
        %v3578 = vunpack.c.l.b16 %v791
        %v3579 = vunpack.c.h.b16 %v791
        %v3580 = vunpack.c.l.b16 %v792
        %v3581 = vunpack.c.h.b16 %v792
        %v3582 = vunpack.c.l.b16 %v793
        %v3583 = vunpack.c.h.b16 %v793
        %v3584 = vunpack.c.l.b16 %v794
        %v3585 = vunpack.c.h.b16 %v794
        %v3586 = vunpack.c.l.b16 %v795
        %v3587 = vunpack.c.h.b16 %v795
        %v3588 = vunpack.c.l.b16 %v796
        %v3589 = vunpack.c.h.b16 %v796
        %v3590 = vunpack.c.l.b16 %v797
        %v3591 = vunpack.c.h.b16 %v797
        %v3592 = vunpack.c.l.b16 %v798
        %v3593 = vunpack.c.h.b16 %v798
        %v3594 = vunpack.c.l.b16 %v799
        %v3595 = vunpack.c.h.b16 %v799
        %v3596 = vunpack.c.l.b16 %v800
        %v3597 = vunpack.c.h.b16 %v800
        %v3598 = vunpack.c.l.b16 %v801
        %v3599 = vunpack.c.h.b16 %v801
        %v3600 = vunpack.c.l.b16 %v802
        %v3601 = vunpack.c.h.b16 %v802
        %v3602 = vunpack.c.l.b16 %v803
        %v3603 = vunpack.c.h.b16 %v803
        %v3604 = vunpack.c.l.b16 %v804
        %v3605 = vunpack.c.h.b16 %v804
        %v3606 = vunpack.c.l.b16 %v805
        %v3607 = vunpack.c.h.b16 %v805
        %v3608 = vunpack.c.l.b16 %v806
        %v3609 = vunpack.c.h.b16 %v806
        %v3610 = vunpack.c.l.b16 %v807
        %v3611 = vunpack.c.h.b16 %v807
        %v3612 = vunpack.c.l.b16 %v808
        %v3613 = vunpack.c.h.b16 %v808
        %v3614 = vunpack.c.l.b16 %v809
        %v3615 = vunpack.c.h.b16 %v809
        %v3616 = vunpack.c.l.b16 %v810
        %v3617 = vunpack.c.h.b16 %v810
        %v3618 = vunpack.c.l.b16 %v811
        %v3619 = vunpack.c.h.b16 %v811
        %v3620 = vunpack.c.l.b16 %v812
        %v3621 = vunpack.c.h.b16 %v812
        %v3622 = vunpack.c.l.b16 %v813
        %v3623 = vunpack.c.h.b16 %v813
        %v3624 = vunpack.c.l.b16 %v814
        %v3625 = vunpack.c.h.b16 %v814
        %v3626 = vunpack.c.l.b16 %v815
        %v3627 = vunpack.c.h.b16 %v815
        %v3628 = vunpack.c.l.b16 %v816
        %v3629 = vunpack.c.h.b16 %v816
        %v3630 = vunpack.c.l.b16 %v817
        %v3631 = vunpack.c.h.b16 %v817
        %v3632 = vunpack.c.l.b16 %v818
        %v3633 = vunpack.c.h.b16 %v818
        %v3634 = vunpack.c.l.b16 %v819
        %v3635 = vunpack.c.h.b16 %v819
        %v3636 = vunpack.c.l.b16 %v820
        %v3637 = vunpack.c.h.b16 %v820
        %v3638 = vunpack.c.l.b16 %v821
        %v3639 = vunpack.c.h.b16 %v821
        %v3640 = vunpack.c.l.b16 %v822
        %v3641 = vunpack.c.h.b16 %v822
        %v3642 = vunpack.c.l.b16 %v823
        %v3643 = vunpack.c.h.b16 %v823
        %v3644 = vunpack.c.l.b16 %v824
        %v3645 = vunpack.c.h.b16 %v824
        %v3646 = vunpack.c.l.b16 %v825
        %v3647 = vunpack.c.h.b16 %v825
        %v3648 = vunpack.c.l.b16 %v826
        %v3649 = vunpack.c.h.b16 %v826
        %v3650 = vunpack.c.l.b16 %v827
        %v3651 = vunpack.c.h.b16 %v827
        %v3652 = vunpack.c.l.b16 %v828
        %v3653 = vunpack.c.h.b16 %v828
        %v3654 = vunpack.c.l.b16 %v829
        %v3655 = vunpack.c.h.b16 %v829
        %v3656 = vunpack.c.l.b16 %v830
        %v3657 = vunpack.c.h.b16 %v830
        %v3658 = vunpack.c.l.b16 %v831
        %v3659 = vunpack.c.h.b16 %v831
        %v3660 = vunpack.c.l.b16 %v832
        %v3661 = vunpack.c.h.b16 %v832
        %v3662 = vunpack.c.l.b16 %v833
        %v3663 = vunpack.c.h.b16 %v833
        %v3664 = vunpack.c.l.b16 %v834
        %v3665 = vunpack.c.h.b16 %v834
        %v3666 = vunpack.c.l.b16 %v835
        %v3667 = vunpack.c.h.b16 %v835
        %v3668 = vunpack.c.l.b16 %v836
        %v3669 = vunpack.c.h.b16 %v836
        %v3670 = vunpack.c.l.b16 %v837
        %v3671 = vunpack.c.h.b16 %v837
        %v3672 = vunpack.c.l.b16 %v838
        %v3673 = vunpack.c.h.b16 %v838
        %v3674 = vunpack.c.l.b16 %v839
        %v3675 = vunpack.c.h.b16 %v839
        %v3676 = vunpack.c.l.b16 %v840
        %v3677 = vunpack.c.h.b16 %v840
        %v3678 = vunpack.c.l.b16 %v841
        %v3679 = vunpack.c.h.b16 %v841
        %v3680 = vunpack.c.l.b16 %v842
        %v3681 = vunpack.c.h.b16 %v842
        %v3682 = vunpack.c.l.b16 %v843
        %v3683 = vunpack.c.h.b16 %v843
        %v3684 = vunpack.c.l.b16 %v844
        %v3685 = vunpack.c.h.b16 %v844
        %v3686 = vunpack.c.l.b16 %v845
        %v3687 = vunpack.c.h.b16 %v845
        %v3688 = vunpack.c.l.b16 %v846
        %v3689 = vunpack.c.h.b16 %v846
        %v3690 = vunpack.c.l.b16 %v847
        %v3691 = vunpack.c.h.b16 %v847
        %v3692 = vunpack.c.l.b16 %v848
        %v3693 = vunpack.c.h.b16 %v848
        %v3694 = vunpack.c.l.b16 %v849
        %v3695 = vunpack.c.h.b16 %v849
        %v3696 = vunpack.c.l.b16 %v850
        %v3697 = vunpack.c.h.b16 %v850
        %v3698 = vunpack.c.l.b16 %v851
        %v3699 = vunpack.c.h.b16 %v851
        %v3700 = vunpack.c.l.b16 %v852
        %v3701 = vunpack.c.h.b16 %v852
        %v3702 = vunpack.c.l.b16 %v853
        %v3703 = vunpack.c.h.b16 %v853
        %v3704 = vunpack.c.l.b16 %v854
        %v3705 = vunpack.c.h.b16 %v854
        %v3706 = vunpack.c.l.b16 %v855
        %v3707 = vunpack.c.h.b16 %v855
        %v3708 = vunpack.c.l.b16 %v856
        %v3709 = vunpack.c.h.b16 %v856
        %v3710 = vunpack.c.l.b16 %v857
        %v3711 = vunpack.c.h.b16 %v857
        %v3712 = vunpack.c.l.b16 %v858
        %v3713 = vunpack.c.h.b16 %v858
        %v3714 = vunpack.c.l.b16 %v859
        %v3715 = vunpack.c.h.b16 %v859
        %v3716 = vunpack.c.l.b16 %v860
        %v3717 = vunpack.c.h.b16 %v860
        %v3718 = vunpack.c.l.b16 %v861
        %v3719 = vunpack.c.h.b16 %v861
        %v3720 = vunpack.c.l.b16 %v862
        %v3721 = vunpack.c.h.b16 %v862
        %v3722 = vunpack.c.l.b16 %v863
        %v3723 = vunpack.c.h.b16 %v863
        %v3724 = vunpack.c.l.b16 %v864
        %v3725 = vunpack.c.h.b16 %v864
        %v3726 = vunpack.c.l.b16 %v865
        %v3727 = vunpack.c.h.b16 %v865
        %v3728 = vunpack.c.l.b16 %v866
        %v3729 = vunpack.c.h.b16 %v866
        %v3730 = vunpack.c.l.b16 %v867
        %v3731 = vunpack.c.h.b16 %v867
        %v3732 = vunpack.c.l.b16 %v868
        %v3733 = vunpack.c.h.b16 %v868
        %v3734 = vunpack.c.l.b16 %v869
        %v3735 = vunpack.c.h.b16 %v869
        %v3736 = vunpack.c.l.b16 %v870
        %v3737 = vunpack.c.h.b16 %v870
        %v3738 = vunpack.c.l.b16 %v871
        %v3739 = vunpack.c.h.b16 %v871
        %v3740 = vunpack.c.l.b16 %v872
        %v3741 = vunpack.c.h.b16 %v872
        %v3742 = vunpack.c.l.b16 %v873
        %v3743 = vunpack.c.h.b16 %v873
        %v3744 = vunpack.c.l.b16 %v874
        %v3745 = vunpack.c.h.b16 %v874
        %v3746 = vunpack.c.l.b16 %v875
        %v3747 = vunpack.c.h.b16 %v875
        %v3748 = vunpack.c.l.b16 %v876
        %v3749 = vunpack.c.h.b16 %v876
        %v3750 = vunpack.c.l.b16 %v877
        %v3751 = vunpack.c.h.b16 %v877
        %v3752 = vunpack.c.l.b16 %v878
        %v3753 = vunpack.c.h.b16 %v878
        %v3754 = vunpack.c.l.b16 %v879
        %v3755 = vunpack.c.h.b16 %v879
        %v3756 = vunpack.c.l.b16 %v880
        %v3757 = vunpack.c.h.b16 %v880
        %v3758 = vunpack.c.l.b16 %v881
        %v3759 = vunpack.c.h.b16 %v881
        %v3760 = vunpack.c.l.b16 %v882
        %v3761 = vunpack.c.h.b16 %v882
        %v3762 = vunpack.c.l.b16 %v883
        %v3763 = vunpack.c.h.b16 %v883
        %v3764 = vunpack.c.l.b16 %v884
        %v3765 = vunpack.c.h.b16 %v884
        %v3766 = vunpack.c.l.b16 %v885
        %v3767 = vunpack.c.h.b16 %v885
        %v3768 = vunpack.c.l.b16 %v886
        %v3769 = vunpack.c.h.b16 %v886
        %v3770 = vunpack.c.l.b16 %v887
        %v3771 = vunpack.c.h.b16 %v887
        %v3772 = vunpack.c.l.b16 %v888
        %v3773 = vunpack.c.h.b16 %v888
        %v3774 = vunpack.c.l.b16 %v889
        %v3775 = vunpack.c.h.b16 %v889
        %v3776 = vunpack.c.l.b16 %v890
        %v3777 = vunpack.c.h.b16 %v890
        %v3778 = vunpack.c.l.b16 %v891
        %v3779 = vunpack.c.h.b16 %v891
        %v3780 = vunpack.c.l.b16 %v892
        %v3781 = vunpack.c.h.b16 %v892
        %v3782 = vunpack.c.l.b16 %v893
        %v3783 = vunpack.c.h.b16 %v893
        %v3784 = vunpack.c.l.b16 %v894
        %v3785 = vunpack.c.h.b16 %v894
        %v3786 = vunpack.c.l.b16 %v895
        %v3787 = vunpack.c.h.b16 %v895
        %v3788 = vunpack.c.l.b16 %v896
        %v3789 = vunpack.c.h.b16 %v896
        %v3790 = vunpack.c.l.b16 %v897
        %v3791 = vunpack.c.h.b16 %v897
        %v3792 = vunpack.c.l.b16 %v898
        %v3793 = vunpack.c.h.b16 %v898
        %v3794 = vunpack.c.l.b16 %v899
        %v3795 = vunpack.c.h.b16 %v899
        %v3796 = vunpack.c.l.b16 %v900
        %v3797 = vunpack.c.h.b16 %v900
        %v3798 = vunpack.c.l.b16 %v901
        %v3799 = vunpack.c.h.b16 %v901
        %v3800 = vunpack.c.l.b16 %v902
        %v3801 = vunpack.c.h.b16 %v902
        %v3802 = vunpack.c.l.b16 %v903
        %v3803 = vunpack.c.h.b16 %v903
        %v3804 = vunpack.c.l.b16 %v904
        %v3805 = vunpack.c.h.b16 %v904
        %v3806 = vunpack.c.l.b16 %v905
        %v3807 = vunpack.c.h.b16 %v905
        %v3808 = vunpack.c.l.b16 %v906
        %v3809 = vunpack.c.h.b16 %v906
        %v3810 = vunpack.c.l.b16 %v907
        %v3811 = vunpack.c.h.b16 %v907
        %v3812 = vunpack.c.l.b16 %v908
        %v3813 = vunpack.c.h.b16 %v908
        %v3814 = vunpack.c.l.b16 %v909
        %v3815 = vunpack.c.h.b16 %v909
        %v3816 = vunpack.c.l.b16 %v910
        %v3817 = vunpack.c.h.b16 %v910
        %v3818 = vunpack.c.l.b16 %v911
        %v3819 = vunpack.c.h.b16 %v911
        %v3820 = vunpack.c.l.b16 %v912
        %v3821 = vunpack.c.h.b16 %v912
        %v3822 = vunpack.c.l.b16 %v913
        %v3823 = vunpack.c.h.b16 %v913
        %v3824 = vunpack.c.l.b16 %v914
        %v3825 = vunpack.c.h.b16 %v914
        %v3826 = vunpack.c.l.b16 %v915
        %v3827 = vunpack.c.h.b16 %v915
        %v3828 = vunpack.c.l.b16 %v916
        %v3829 = vunpack.c.h.b16 %v916
        %v3830 = vunpack.c.l.b16 %v917
        %v3831 = vunpack.c.h.b16 %v917
        %v3832 = vunpack.c.l.b16 %v918
        %v3833 = vunpack.c.h.b16 %v918
        %v3834 = vunpack.c.l.b16 %v919
        %v3835 = vunpack.c.h.b16 %v919
        %v3836 = vunpack.c.l.b16 %v920
        %v3837 = vunpack.c.h.b16 %v920
        %v3838 = vunpack.c.l.b16 %v921
        %v3839 = vunpack.c.h.b16 %v921
        %v3840 = vunpack.c.l.b16 %v922
        %v3841 = vunpack.c.h.b16 %v922
        %v3842 = vunpack.c.l.b16 %v923
        %v3843 = vunpack.c.h.b16 %v923
        %v3844 = vunpack.c.l.b16 %v924
        %v3845 = vunpack.c.h.b16 %v924
        %v3846 = vunpack.c.l.b16 %v925
        %v3847 = vunpack.c.h.b16 %v925
        %v3848 = vunpack.c.l.b16 %v926
        %v3849 = vunpack.c.h.b16 %v926
        %v3850 = vunpack.c.l.b16 %v927
        %v3851 = vunpack.c.h.b16 %v927
        %v3852 = vunpack.c.l.b16 %v928
        %v3853 = vunpack.c.h.b16 %v928
        %v3854 = vunpack.c.l.b16 %v929
        %v3855 = vunpack.c.h.b16 %v929
        %v3856 = vunpack.c.l.b16 %v930
        %v3857 = vunpack.c.h.b16 %v930
        %v3858 = vunpack.c.l.b16 %v931
        %v3859 = vunpack.c.h.b16 %v931
        %v3860 = vunpack.c.l.b16 %v932
        %v3861 = vunpack.c.h.b16 %v932
        %v3862 = vunpack.c.l.b16 %v933
        %v3863 = vunpack.c.h.b16 %v933
        %v3864 = vunpack.c.l.b16 %v934
        %v3865 = vunpack.c.h.b16 %v934
        %v3866 = vunpack.c.l.b16 %v935
        %v3867 = vunpack.c.h.b16 %v935
        %v3868 = vunpack.c.l.b16 %v936
        %v3869 = vunpack.c.h.b16 %v936
        %v3870 = vunpack.c.l.b16 %v937
        %v3871 = vunpack.c.h.b16 %v937
        %v3872 = vunpack.c.l.b16 %v938
        %v3873 = vunpack.c.h.b16 %v938
        %v3874 = vunpack.c.l.b16 %v939
        %v3875 = vunpack.c.h.b16 %v939
        %v3876 = vunpack.c.l.b16 %v940
        %v3877 = vunpack.c.h.b16 %v940
        %v3878 = vunpack.c.l.b16 %v941
        %v3879 = vunpack.c.h.b16 %v941
        %v3880 = vunpack.c.l.b16 %v942
        %v3881 = vunpack.c.h.b16 %v942
        %v3882 = vunpack.c.l.b16 %v943
        %v3883 = vunpack.c.h.b16 %v943
        %v3884 = vunpack.c.l.b16 %v944
        %v3885 = vunpack.c.h.b16 %v944
        %v3886 = vunpack.c.l.b16 %v945
        %v3887 = vunpack.c.h.b16 %v945
        %v3888 = vunpack.c.l.b16 %v946
        %v3889 = vunpack.c.h.b16 %v946
        %v3890 = vunpack.c.l.b16 %v947
        %v3891 = vunpack.c.h.b16 %v947
        %v3892 = vunpack.c.l.b16 %v948
        %v3893 = vunpack.c.h.b16 %v948
        %v3894 = vunpack.c.l.b16 %v949
        %v3895 = vunpack.c.h.b16 %v949
        %v3896 = vunpack.c.l.b16 %v950
        %v3897 = vunpack.c.h.b16 %v950
        %v3898 = vunpack.c.l.b16 %v951
        %v3899 = vunpack.c.h.b16 %v951
        %v3900 = vunpack.c.l.b16 %v952
        %v3901 = vunpack.c.h.b16 %v952
        %v3902 = vunpack.c.l.b16 %v953
        %v3903 = vunpack.c.h.b16 %v953
        %v3904 = vunpack.c.l.b16 %v954
        %v3905 = vunpack.c.h.b16 %v954
        %v3906 = vunpack.c.l.b16 %v955
        %v3907 = vunpack.c.h.b16 %v955
        %v3908 = vunpack.c.l.b16 %v956
        %v3909 = vunpack.c.h.b16 %v956
        %v3910 = vunpack.c.l.b16 %v957
        %v3911 = vunpack.c.h.b16 %v957
        %v3912 = vunpack.c.l.b16 %v958
        %v3913 = vunpack.c.h.b16 %v958
        %v3914 = vunpack.c.l.b16 %v959
        %v3915 = vunpack.c.h.b16 %v959
        %v3916 = vunpack.c.l.b16 %v960
        %v3917 = vunpack.c.h.b16 %v960
        %v3918 = vunpack.c.l.b16 %v961
        %v3919 = vunpack.c.h.b16 %v961
        %v3920 = vunpack.c.l.b16 %v962
        %v3921 = vunpack.c.h.b16 %v962
        %v3922 = vunpack.c.l.b16 %v963
        %v3923 = vunpack.c.h.b16 %v963
        %v3924 = vunpack.c.l.b16 %v964
        %v3925 = vunpack.c.h.b16 %v964
        %v3926 = vunpack.c.l.b16 %v965
        %v3927 = vunpack.c.h.b16 %v965
        %v3928 = vunpack.c.l.b16 %v966
        %v3929 = vunpack.c.h.b16 %v966
        %v3930 = vunpack.c.l.b16 %v967
        %v3931 = vunpack.c.h.b16 %v967
        %v3932 = vunpack.c.l.b16 %v968
        %v3933 = vunpack.c.h.b16 %v968
        %v3934 = vunpack.c.l.b16 %v969
        %v3935 = vunpack.c.h.b16 %v969
        %v3936 = vunpack.c.l.b16 %v970
        %v3937 = vunpack.c.h.b16 %v970
        %v3938 = vunpack.c.l.b16 %v971
        %v3939 = vunpack.c.h.b16 %v971
        %v3940 = vunpack.c.l.b16 %v972
        %v3941 = vunpack.c.h.b16 %v972
        %v3942 = vunpack.c.l.b16 %v973
        %v3943 = vunpack.c.h.b16 %v973
        %v3944 = vunpack.c.l.b16 %v974
        %v3945 = vunpack.c.h.b16 %v974
        %v3946 = vunpack.c.l.b16 %v975
        %v3947 = vunpack.c.h.b16 %v975
        %v3948 = vunpack.c.l.b16 %v976
        %v3949 = vunpack.c.h.b16 %v976
        %v3950 = vunpack.c.l.b16 %v977
        %v3951 = vunpack.c.h.b16 %v977
        %v3952 = vunpack.c.l.b16 %v978
        %v3953 = vunpack.c.h.b16 %v978
        %v3954 = vunpack.c.l.b16 %v979
        %v3955 = vunpack.c.h.b16 %v979
        %v3956 = vunpack.c.l.b16 %v980
        %v3957 = vunpack.c.h.b16 %v980
        %v3958 = vunpack.c.l.b16 %v981
        %v3959 = vunpack.c.h.b16 %v981
        %v3960 = vunpack.c.l.b16 %v982
        %v3961 = vunpack.c.h.b16 %v982
        %v3962 = vunpack.c.l.b16 %v983
        %v3963 = vunpack.c.h.b16 %v983
        %v3964 = vunpack.c.l.b16 %v984
        %v3965 = vunpack.c.h.b16 %v984
        %v3966 = vunpack.c.l.b16 %v985
        %v3967 = vunpack.c.h.b16 %v985
        %v3968 = vunpack.c.l.b16 %v986
        %v3969 = vunpack.c.h.b16 %v986
        %v3970 = vunpack.c.l.b16 %v987
        %v3971 = vunpack.c.h.b16 %v987
        %v3972 = vunpack.c.l.b16 %v988
        %v3973 = vunpack.c.h.b16 %v988
        %v3974 = vunpack.c.l.b16 %v989
        %v3975 = vunpack.c.h.b16 %v989
        %v3976 = vunpack.c.l.b16 %v990
        %v3977 = vunpack.c.h.b16 %v990
        %v3978 = vunpack.c.l.b16 %v991
        %v3979 = vunpack.c.h.b16 %v991
        %v3980 = vunpack.c.l.b16 %v992
        %v3981 = vunpack.c.h.b16 %v992
        %v3982 = vunpack.c.l.b16 %v993
        %v3983 = vunpack.c.h.b16 %v993
        %v3984 = vunpack.c.l.b16 %v994
        %v3985 = vunpack.c.h.b16 %v994
        %v3986 = vunpack.c.l.b16 %v995
        %v3987 = vunpack.c.h.b16 %v995
        %v3988 = vunpack.c.l.b16 %v996
        %v3989 = vunpack.c.h.b16 %v996
        %v3990 = vunpack.c.l.b16 %v997
        %v3991 = vunpack.c.h.b16 %v997
        %v3992 = vunpack.c.l.b16 %v998
        %v3993 = vunpack.c.h.b16 %v998
        %v3994 = vunpack.c.l.b16 %v999
        %v3995 = vunpack.c.h.b16 %v999
        %v3996 = vunpack.c.l.b16 %v1000
        %v3997 = vunpack.c.h.b16 %v1000
        %v3998 = vunpack.c.l.b16 %v1001
        %v3999 = vunpack.c.h.b16 %v1001
        %v4000 = vunpack.c.l.b16 %v1002
        %v4001 = vunpack.c.h.b16 %v1002
        %v4002 = vunpack.c.l.b16 %v1003
        %v4003 = vunpack.c.h.b16 %v1003
        %v4004 = vunpack.c.l.b16 %v1004
        %v4005 = vunpack.c.h.b16 %v1004
        %v4006 = vunpack.c.l.b16 %v1005
        %v4007 = vunpack.c.h.b16 %v1005
        %v4008 = vunpack.c.l.b16 %v1006
        %v4009 = vunpack.c.h.b16 %v1006
        %v4010 = vunpack.c.l.b16 %v1007
        %v4011 = vunpack.c.h.b16 %v1007
        %v4012 = vunpack.c.l.b16 %v1008
        %v4013 = vunpack.c.h.b16 %v1008
        %v4014 = vunpack.c.l.b16 %v1009
        %v4015 = vunpack.c.h.b16 %v1009
        %v4016 = vunpack.c.l.b16 %v1010
        %v4017 = vunpack.c.h.b16 %v1010
        %v4018 = vunpack.c.l.b16 %v1011
        %v4019 = vunpack.c.h.b16 %v1011
        %v4020 = vunpack.c.l.b16 %v1012
        %v4021 = vunpack.c.h.b16 %v1012
        %v4022 = vunpack.c.l.b16 %v1013
        %v4023 = vunpack.c.h.b16 %v1013
        %v4024 = vunpack.c.l.b16 %v1014
        %v4025 = vunpack.c.h.b16 %v1014
        %v4026 = vunpack.c.l.b16 %v1015
        %v4027 = vunpack.c.h.b16 %v1015
        %v4028 = vunpack.c.l.b16 %v1016
        %v4029 = vunpack.c.h.b16 %v1016
        %v4030 = vunpack.c.l.b16 %v1017
        %v4031 = vunpack.c.h.b16 %v1017
        %v4032 = vunpack.c.l.b16 %v1018
        %v4033 = vunpack.c.h.b16 %v1018
        %v4034 = vunpack.c.l.b16 %v1019
        %v4035 = vunpack.c.h.b16 %v1019
        %v4036 = vunpack.c.l.b16 %v1020
        %v4037 = vunpack.c.h.b16 %v1020
        %v4038 = vunpack.c.l.b16 %v1021
        %v4039 = vunpack.c.h.b16 %v1021
        %v4040 = vunpack.c.l.b16 %v1022
        %v4041 = vunpack.c.h.b16 %v1022
        %v4042 = vunpack.c.l.b16 %v1023
        %v4043 = vunpack.c.h.b16 %v1023
        %v4044 = vunpack.c.l.b16 %v1024
        %v4045 = vunpack.c.h.b16 %v1024
        %v4046 = vunpack.c.l.b16 %v1025
        %v4047 = vunpack.c.h.b16 %v1025
        %v4048 = vunpack.c.l.b16 %v1026
        %v4049 = vunpack.c.h.b16 %v1026
        %v4050 = vunpack.c.l.b16 %v1027
        %v4051 = vunpack.c.h.b16 %v1027
        %v4052 = vunpack.c.l.b16 %v1028
        %v4053 = vunpack.c.h.b16 %v1028
        %v4054 = vunpack.c.l.b16 %v1029
        %v4055 = vunpack.c.h.b16 %v1029
        %v4056 = vunpack.c.l.b16 %v1030
        %v4057 = vunpack.c.h.b16 %v1030
        %v4058 = vunpack.c.l.b16 %v1031
        %v4059 = vunpack.c.h.b16 %v1031
        %v4060 = vunpack.c.l.b16 %v1032
        %v4061 = vunpack.c.h.b16 %v1032
        %v4062 = vunpack.c.l.b16 %v1033
        %v4063 = vunpack.c.h.b16 %v1033
        %v4064 = vunpack.c.l.b16 %v1034
        %v4065 = vunpack.c.h.b16 %v1034
        %v4066 = vunpack.c.l.b16 %v1035
        %v4067 = vunpack.c.h.b16 %v1035
        %v4068 = vunpack.c.l.b16 %v1036
        %v4069 = vunpack.c.h.b16 %v1036
        %v4070 = vunpack.c.l.b16 %v1037
        %v4071 = vunpack.c.h.b16 %v1037
        %v4072 = vunpack.c.l.b16 %v1038
        %v4073 = vunpack.c.h.b16 %v1038
        %v4074 = vunpack.c.l.b16 %v1039
        %v4075 = vunpack.c.h.b16 %v1039
        %v4076 = vunpack.c.l.b16 %v1040
        %v4077 = vunpack.c.h.b16 %v1040
        %v4078 = vunpack.c.l.b16 %v1041
        %v4079 = vunpack.c.h.b16 %v1041
        %v4080 = vunpack.c.l.b16 %v1042
        %v4081 = vunpack.c.h.b16 %v1042
        %v4082 = vunpack.c.l.b16 %v1043
        %v4083 = vunpack.c.h.b16 %v1043
        %v4084 = vunpack.c.l.b16 %v1044
        %v4085 = vunpack.c.h.b16 %v1044
        %v4086 = vunpack.c.l.b16 %v1045
        %v4087 = vunpack.c.h.b16 %v1045
        %v4088 = vunpack.c.l.b16 %v1046
        %v4089 = vunpack.c.h.b16 %v1046
        %v4090 = vunpack.c.l.b16 %v1047
        %v4091 = vunpack.c.h.b16 %v1047
        %v4092 = vunpack.c.l.b16 %v1048
        %v4093 = vunpack.c.h.b16 %v1048
        %v4094 = vunpack.c.l.b16 %v1049
        %v4095 = vunpack.c.h.b16 %v1049
        %v4096 = vunpack.c.l.b16 %v1050
        %v4097 = vunpack.c.h.b16 %v1050
        %v4098 = vunpack.c.l.b16 %v1051
        %v4099 = vunpack.c.h.b16 %v1051
        %v4100 = vunpack.c.l.b16 %v1052
        %v4101 = vunpack.c.h.b16 %v1052
        %v4102 = vunpack.c.l.b16 %v1053
        %v4103 = vunpack.c.h.b16 %v1053
        %v4104 = vunpack.c.l.b16 %v1054
        %v4105 = vunpack.c.h.b16 %v1054
        %v4106 = vunpack.c.l.b16 %v1055
        %v4107 = vunpack.c.h.b16 %v1055
        %v4108 = vunpack.c.l.b16 %v1056
        %v4109 = vunpack.c.h.b16 %v1056
        %v4110 = vunpack.c.l.b16 %v1057
        %v4111 = vunpack.c.h.b16 %v1057
        %v4112 = vunpack.c.l.b16 %v1058
        %v4113 = vunpack.c.h.b16 %v1058
        %v4114 = vunpack.c.l.b16 %v1059
        %v4115 = vunpack.c.h.b16 %v1059
        %v4116 = vunpack.c.l.b16 %v1060
        %v4117 = vunpack.c.h.b16 %v1060
        %v4118 = vunpack.c.l.b16 %v1061
        %v4119 = vunpack.c.h.b16 %v1061
        %v4120 = vunpack.c.l.b16 %v1062
        %v4121 = vunpack.c.h.b16 %v1062
        %v4122 = vunpack.c.l.b16 %v1063
        %v4123 = vunpack.c.h.b16 %v1063
        %v4124 = vunpack.c.l.b16 %v1064
        %v4125 = vunpack.c.h.b16 %v1064
        %v4126 = vunpack.c.l.b16 %v1065
        %v4127 = vunpack.c.h.b16 %v1065
        %v4128 = vunpack.c.l.b16 %v1066
        %v4129 = vunpack.c.h.b16 %v1066
        %v4130 = vunpack.c.l.b16 %v1067
        %v4131 = vunpack.c.h.b16 %v1067
        %v4132 = vunpack.c.l.b16 %v1068
        %v4133 = vunpack.c.h.b16 %v1068
        %v4134 = vunpack.c.l.b16 %v1069
        %v4135 = vunpack.c.h.b16 %v1069
        %v4136 = vunpack.c.l.b16 %v1070
        %v4137 = vunpack.c.h.b16 %v1070
        %v4138 = vunpack.c.l.b16 %v1071
        %v4139 = vunpack.c.h.b16 %v1071
        %v4140 = vunpack.c.l.b16 %v1072
        %v4141 = vunpack.c.h.b16 %v1072
        %v4142 = vunpack.c.l.b16 %v1073
        %v4143 = vunpack.c.h.b16 %v1073
        %v4144 = vunpack.c.l.b16 %v1074
        %v4145 = vunpack.c.h.b16 %v1074
        %v4146 = vunpack.c.l.b16 %v1075
        %v4147 = vunpack.c.h.b16 %v1075
        %v4148 = vunpack.c.l.b16 %v1076
        %v4149 = vunpack.c.h.b16 %v1076
        %v4150 = vunpack.c.l.b16 %v1077
        %v4151 = vunpack.c.h.b16 %v1077
        %v4152 = vunpack.c.l.b16 %v1078
        %v4153 = vunpack.c.h.b16 %v1078
        %v4154 = vunpack.c.l.b16 %v1079
        %v4155 = vunpack.c.h.b16 %v1079
        %v4156 = vunpack.c.l.b16 %v1080
        %v4157 = vunpack.c.h.b16 %v1080
        %v4158 = vunpack.c.l.b16 %v1081
        %v4159 = vunpack.c.h.b16 %v1081
        %v4160 = vunpack.c.l.b16 %v1082
        %v4161 = vunpack.c.h.b16 %v1082
        %v4162 = vunpack.c.l.b16 %v1083
        %v4163 = vunpack.c.h.b16 %v1083
        %v4164 = vunpack.c.l.b16 %v1084
        %v4165 = vunpack.c.h.b16 %v1084
        %v4166 = vunpack.c.l.b16 %v1085
        %v4167 = vunpack.c.h.b16 %v1085
        %v4168 = vunpack.c.l.b16 %v1086
        %v4169 = vunpack.c.h.b16 %v1086
        %v4170 = vunpack.c.l.b16 %v1087
        %v4171 = vunpack.c.h.b16 %v1087
        %v4172 = vunpack.c.l.b16 %v1088
        %v4173 = vunpack.c.h.b16 %v1088
        %v4174 = vunpack.c.l.b16 %v1089
        %v4175 = vunpack.c.h.b16 %v1089
        %v4176 = vunpack.c.l.b16 %v1090
        %v4177 = vunpack.c.h.b16 %v1090
        %v4178 = vunpack.c.l.b16 %v1091
        %v4179 = vunpack.c.h.b16 %v1091
        %v4180 = vunpack.c.l.b16 %v1092
        %v4181 = vunpack.c.h.b16 %v1092
        %v4182 = vunpack.c.l.b16 %v1093
        %v4183 = vunpack.c.h.b16 %v1093
        %v4184 = vunpack.c.l.b16 %v1094
        %v4185 = vunpack.c.h.b16 %v1094
        %v4186 = vunpack.c.l.b16 %v1095
        %v4187 = vunpack.c.h.b16 %v1095
        %v4188 = vunpack.c.l.b16 %v1096
        %v4189 = vunpack.c.h.b16 %v1096
        %v4190 = vunpack.c.l.b16 %v1097
        %v4191 = vunpack.c.h.b16 %v1097
        %v4192 = vunpack.c.l.b16 %v1098
        %v4193 = vunpack.c.h.b16 %v1098
        %v4194 = vunpack.c.l.b16 %v1099
        %v4195 = vunpack.c.h.b16 %v1099
        %v4196 = vunpack.c.l.b16 %v1100
        %v4197 = vunpack.c.h.b16 %v1100
        %v4198 = vunpack.c.l.b16 %v1101
        %v4199 = vunpack.c.h.b16 %v1101
        %v4200 = vunpack.c.l.b16 %v1102
        %v4201 = vunpack.c.h.b16 %v1102
        %v4202 = vunpack.c.l.b16 %v1103
        %v4203 = vunpack.c.h.b16 %v1103
        %v4204 = vunpack.c.l.b16 %v1104
        %v4205 = vunpack.c.h.b16 %v1104
        %v4206 = vunpack.c.l.b16 %v1105
        %v4207 = vunpack.c.h.b16 %v1105
        %v4208 = vunpack.c.l.b16 %v1106
        %v4209 = vunpack.c.h.b16 %v1106
        %v4210 = vunpack.c.l.b16 %v1107
        %v4211 = vunpack.c.h.b16 %v1107
        %v4212 = vunpack.c.l.b16 %v1108
        %v4213 = vunpack.c.h.b16 %v1108
        %v4214 = vunpack.c.l.b16 %v1109
        %v4215 = vunpack.c.h.b16 %v1109
        %v4216 = vunpack.c.l.b16 %v1110
        %v4217 = vunpack.c.h.b16 %v1110
        %v4218 = vunpack.c.l.b16 %v1111
        %v4219 = vunpack.c.h.b16 %v1111
        %v4220 = vunpack.c.l.b16 %v1112
        %v4221 = vunpack.c.h.b16 %v1112
        %v4222 = vunpack.c.l.b16 %v1113
        %v4223 = vunpack.c.h.b16 %v1113
        %v4224 = vunpack.c.l.b16 %v1114
        %v4225 = vunpack.c.h.b16 %v1114
        %v4226 = vunpack.c.l.b16 %v1115
        %v4227 = vunpack.c.h.b16 %v1115
        %v4228 = vunpack.c.l.b16 %v1116
        %v4229 = vunpack.c.h.b16 %v1116
        %v4230 = vunpack.c.l.b16 %v1117
        %v4231 = vunpack.c.h.b16 %v1117
        %v4232 = vunpack.c.l.b16 %v1118
        %v4233 = vunpack.c.h.b16 %v1118
        %v4234 = vunpack.c.l.b16 %v1119
        %v4235 = vunpack.c.h.b16 %v1119
        %v4236 = vunpack.c.l.b16 %v1120
        %v4237 = vunpack.c.h.b16 %v1120
        %v4238 = vunpack.c.l.b16 %v1121
        %v4239 = vunpack.c.h.b16 %v1121
        %v4240 = vunpack.c.l.b16 %v1122
        %v4241 = vunpack.c.h.b16 %v1122
        %v4242 = vunpack.c.l.b16 %v1123
        %v4243 = vunpack.c.h.b16 %v1123
        %v4244 = vunpack.c.l.b16 %v1124
        %v4245 = vunpack.c.h.b16 %v1124
        %v4246 = vunpack.c.l.b16 %v1125
        %v4247 = vunpack.c.h.b16 %v1125
        %v4248 = vunpack.c.l.b16 %v1126
        %v4249 = vunpack.c.h.b16 %v1126
        %v4250 = vunpack.c.l.b16 %v1127
        %v4251 = vunpack.c.h.b16 %v1127
        %v4252 = vunpack.c.l.b16 %v1128
        %v4253 = vunpack.c.h.b16 %v1128
        %v4254 = vunpack.c.l.b16 %v1129
        %v4255 = vunpack.c.h.b16 %v1129
        %v4256 = vunpack.c.l.b16 %v1130
        %v4257 = vunpack.c.h.b16 %v1130
        %v4258 = vunpack.c.l.b16 %v1131
        %v4259 = vunpack.c.h.b16 %v1131
        %v4260 = vunpack.c.l.b16 %v1132
        %v4261 = vunpack.c.h.b16 %v1132
        %v4262 = vunpack.c.l.b16 %v1133
        %v4263 = vunpack.c.h.b16 %v1133
        %v4264 = vunpack.c.l.b16 %v1134
        %v4265 = vunpack.c.h.b16 %v1134
        %v4266 = vunpack.c.l.b16 %v1135
        %v4267 = vunpack.c.h.b16 %v1135
        %v4268 = vunpack.c.l.b16 %v1136
        %v4269 = vunpack.c.h.b16 %v1136
        %v4270 = vunpack.c.l.b16 %v1137
        %v4271 = vunpack.c.h.b16 %v1137
        %v4272 = vunpack.c.l.b16 %v1138
        %v4273 = vunpack.c.h.b16 %v1138
        %v4274 = vunpack.c.l.b16 %v1139
        %v4275 = vunpack.c.h.b16 %v1139
        %v4276 = vunpack.c.l.b16 %v1140
        %v4277 = vunpack.c.h.b16 %v1140
        %v4278 = vunpack.c.l.b16 %v1141
        %v4279 = vunpack.c.h.b16 %v1141
        %v4280 = vunpack.c.l.b16 %v1142
        %v4281 = vunpack.c.h.b16 %v1142
        %v4282 = vunpack.c.l.b16 %v1143
        %v4283 = vunpack.c.h.b16 %v1143
        %v4284 = vunpack.c.l.b16 %v1144
        %v4285 = vunpack.c.h.b16 %v1144
        %v4286 = vunpack.c.l.b16 %v1145
        %v4287 = vunpack.c.h.b16 %v1145
        %v4288 = vunpack.c.l.b16 %v1146
        %v4289 = vunpack.c.h.b16 %v1146
        %v4290 = vunpack.c.l.b16 %v1147
        %v4291 = vunpack.c.h.b16 %v1147
        %v4292 = vunpack.c.l.b16 %v1148
        %v4293 = vunpack.c.h.b16 %v1148
        %v4294 = vunpack.c.l.b16 %v1149
        %v4295 = vunpack.c.h.b16 %v1149
        %v4296 = vunpack.c.l.b16 %v1150
        %v4297 = vunpack.c.h.b16 %v1150
        %v4298 = vunpack.c.l.b16 %v1151
        %v4299 = vunpack.c.h.b16 %v1151
        %v4300 = vunpack.c.l.b16 %v1152
        %v4301 = vunpack.c.h.b16 %v1152
        %v4302 = vunpack.c.l.b16 %v1153
        %v4303 = vunpack.c.h.b16 %v1153
        %v4304 = vunpack.c.l.b16 %v1154
        %v4305 = vunpack.c.h.b16 %v1154
        %v4306 = vunpack.c.l.b16 %v1155
        %v4307 = vunpack.c.h.b16 %v1155
        %v4308 = vunpack.c.l.b16 %v1156
        %v4309 = vunpack.c.h.b16 %v1156
        %v4310 = vunpack.c.l.b16 %v1157
        %v4311 = vunpack.c.h.b16 %v1157
        %v4312 = vunpack.c.l.b16 %v1158
        %v4313 = vunpack.c.h.b16 %v1158
        %v4314 = vunpack.c.l.b16 %v1159
        %v4315 = vunpack.c.h.b16 %v1159
        %v4316 = vunpack.c.l.b16 %v1160
        %v4317 = vunpack.c.h.b16 %v1160
        %v4318 = vunpack.c.l.b16 %v1161
        %v4319 = vunpack.c.h.b16 %v1161
        %v4320 = vunpack.c.l.b16 %v1162
        %v4321 = vunpack.c.h.b16 %v1162
        %v4322 = vunpack.c.l.b16 %v1163
        %v4323 = vunpack.c.h.b16 %v1163
        %v4324 = vunpack.c.l.b16 %v1164
        %v4325 = vunpack.c.h.b16 %v1164
        %v4326 = vunpack.c.l.b16 %v1165
        %v4327 = vunpack.c.h.b16 %v1165
        %v4328 = vunpack.c.l.b16 %v1166
        %v4329 = vunpack.c.h.b16 %v1166
        %v4330 = vunpack.c.l.b16 %v1167
        %v4331 = vunpack.c.h.b16 %v1167
        %v4332 = vunpack.c.l.b16 %v1168
        %v4333 = vunpack.c.h.b16 %v1168
        %v4334 = vunpack.c.l.b16 %v1169
        %v4335 = vunpack.c.h.b16 %v1169
        %v4336 = vunpack.c.l.b16 %v1170
        %v4337 = vunpack.c.h.b16 %v1170
        %v4338 = vunpack.c.l.b16 %v1171
        %v4339 = vunpack.c.h.b16 %v1171
        %v4340 = vunpack.c.l.b16 %v1172
        %v4341 = vunpack.c.h.b16 %v1172
        %v4342 = vunpack.c.l.b16 %v1173
        %v4343 = vunpack.c.h.b16 %v1173
        %v4344 = vunpack.c.l.b16 %v1174
        %v4345 = vunpack.c.h.b16 %v1174
        %v4346 = vunpack.c.l.b16 %v1175
        %v4347 = vunpack.c.h.b16 %v1175
        %v4348 = vunpack.c.l.b16 %v1176
        %v4349 = vunpack.c.h.b16 %v1176
        %v4350 = vunpack.c.l.b16 %v1177
        %v4351 = vunpack.c.h.b16 %v1177
        %v4352 = vunpack.c.l.b16 %v1178
        %v4353 = vunpack.c.h.b16 %v1178
        %v4354 = vunpack.c.l.b16 %v1179
        %v4355 = vunpack.c.h.b16 %v1179
        %v4356 = vunpack.c.l.b16 %v1180
        %v4357 = vunpack.c.h.b16 %v1180
        %v4358 = vunpack.c.l.b16 %v1181
        %v4359 = vunpack.c.h.b16 %v1181
        %v4360 = vunpack.c.l.b16 %v1182
        %v4361 = vunpack.c.h.b16 %v1182
        %v4362 = vunpack.c.l.b16 %v1183
        %v4363 = vunpack.c.h.b16 %v1183
        %v4364 = vunpack.c.l.b16 %v1184
        %v4365 = vunpack.c.h.b16 %v1184
        %v4366 = vunpack.c.l.b16 %v1185
        %v4367 = vunpack.c.h.b16 %v1185
        %v4368 = vunpack.c.l.b16 %v1186
        %v4369 = vunpack.c.h.b16 %v1186
        %v4370 = vunpack.c.l.b16 %v1187
        %v4371 = vunpack.c.h.b16 %v1187
        %v4372 = vunpack.c.l.b16 %v1188
        %v4373 = vunpack.c.h.b16 %v1188
        %v4374 = vunpack.c.l.b16 %v1189
        %v4375 = vunpack.c.h.b16 %v1189
        %v4376 = vunpack.c.l.b16 %v1190
        %v4377 = vunpack.c.h.b16 %v1190
        %v4378 = vunpack.c.l.b16 %v1191
        %v4379 = vunpack.c.h.b16 %v1191
        %v4380 = vunpack.c.l.b16 %v1192
        %v4381 = vunpack.c.h.b16 %v1192
        %v4382 = vunpack.c.l.b16 %v1193
        %v4383 = vunpack.c.h.b16 %v1193
        %v4384 = vunpack.c.l.b16 %v1194
        %v4385 = vunpack.c.h.b16 %v1194
        %v4386 = vunpack.c.l.b16 %v1195
        %v4387 = vunpack.c.h.b16 %v1195
        %v4388 = vunpack.c.l.b16 %v1196
        %v4389 = vunpack.c.h.b16 %v1196
        %v4390 = vunpack.c.l.b16 %v1197
        %v4391 = vunpack.c.h.b16 %v1197
        %v4392 = vunpack.c.l.b16 %v1198
        %v4393 = vunpack.c.h.b16 %v1198
        %v4394 = vunpack.c.l.b16 %v1199
        %v4395 = vunpack.c.h.b16 %v1199
        %v4396 = vunpack.c.l.b16 %v1200
        %v4397 = vunpack.c.h.b16 %v1200
        %v4398 = vunpack.c.l.b16 %v1201
        %v4399 = vunpack.c.h.b16 %v1201
        %v4400 = vunpack.c.l.b16 %v1202
        %v4401 = vunpack.c.h.b16 %v1202
        %v4402 = vunpack.c.l.b16 %v1203
        %v4403 = vunpack.c.h.b16 %v1203
        %v4404 = vunpack.c.l.b16 %v1204
        %v4405 = vunpack.c.h.b16 %v1204
        %v4406 = vunpack.c.l.b16 %v1205
        %v4407 = vunpack.c.h.b16 %v1205
        %v4408 = vunpack.c.l.b16 %v1206
        %v4409 = vunpack.c.h.b16 %v1206
        %v4410 = vunpack.c.l.b16 %v1207
        %v4411 = vunpack.c.h.b16 %v1207
        %v4412 = vunpack.c.l.b16 %v1208
        %v4413 = vunpack.c.h.b16 %v1208
        %v4414 = vunpack.c.l.b16 %v1209
        %v4415 = vunpack.c.h.b16 %v1209
        %v4416 = vunpack.c.l.b16 %v1210
        %v4417 = vunpack.c.h.b16 %v1210
        %v4418 = vunpack.c.l.b16 %v1211
        %v4419 = vunpack.c.h.b16 %v1211
        %v4420 = vunpack.c.l.b16 %v1212
        %v4421 = vunpack.c.h.b16 %v1212
        %v4422 = vunpack.c.l.b16 %v1213
        %v4423 = vunpack.c.h.b16 %v1213
        %v4424 = vunpack.c.l.b16 %v1214
        %v4425 = vunpack.c.h.b16 %v1214
        %v4426 = vunpack.c.l.b16 %v1215
        %v4427 = vunpack.c.h.b16 %v1215
        %v4428 = vunpack.c.l.b16 %v1216
        %v4429 = vunpack.c.h.b16 %v1216
        %v4430 = vunpack.c.l.b16 %v1217
        %v4431 = vunpack.c.h.b16 %v1217
        %v4432 = vunpack.c.l.b16 %v1218
        %v4433 = vunpack.c.h.b16 %v1218
        %v4434 = vunpack.c.l.b16 %v1219
        %v4435 = vunpack.c.h.b16 %v1219
        %v4436 = vunpack.c.l.b16 %v1220
        %v4437 = vunpack.c.h.b16 %v1220
        %v4438 = vunpack.c.l.b16 %v1221
        %v4439 = vunpack.c.h.b16 %v1221
        %v4440 = vunpack.c.l.b16 %v1222
        %v4441 = vunpack.c.h.b16 %v1222
        %v4442 = vunpack.c.l.b16 %v1223
        %v4443 = vunpack.c.h.b16 %v1223
        %v4444 = vunpack.c.l.b16 %v1224
        %v4445 = vunpack.c.h.b16 %v1224
        %v4446 = vunpack.c.l.b16 %v1225
        %v4447 = vunpack.c.h.b16 %v1225
        %v4448 = vunpack.c.l.b16 %v1226
        %v4449 = vunpack.c.h.b16 %v1226
        %v4450 = vunpack.c.l.b16 %v1227
        %v4451 = vunpack.c.h.b16 %v1227
        %v4452 = vunpack.c.l.b16 %v1228
        %v4453 = vunpack.c.h.b16 %v1228
        %v4454 = vunpack.c.l.b16 %v1229
        %v4455 = vunpack.c.h.b16 %v1229
        %v4456 = vunpack.c.l.b16 %v1230
        %v4457 = vunpack.c.h.b16 %v1230
        %v4458 = vunpack.c.l.b16 %v1231
        %v4459 = vunpack.c.h.b16 %v1231
        %v4460 = vunpack.c.l.b16 %v1232
        %v4461 = vunpack.c.h.b16 %v1232
        %v4462 = vunpack.c.l.b16 %v1233
        %v4463 = vunpack.c.h.b16 %v1233
        %v4464 = vunpack.c.l.b16 %v1234
        %v4465 = vunpack.c.h.b16 %v1234
        %v4466 = vunpack.c.l.b16 %v1235
        %v4467 = vunpack.c.h.b16 %v1235
        %v4468 = vunpack.c.l.b16 %v1236
        %v4469 = vunpack.c.h.b16 %v1236
        %v4470 = vunpack.c.l.b16 %v1237
        %v4471 = vunpack.c.h.b16 %v1237
        %v4472 = vunpack.c.l.b16 %v1238
        %v4473 = vunpack.c.h.b16 %v1238
        %v4474 = vunpack.c.l.b16 %v1239
        %v4475 = vunpack.c.h.b16 %v1239
        %v4476 = vunpack.c.l.b16 %v1240
        %v4477 = vunpack.c.h.b16 %v1240
        %v4478 = vunpack.c.l.b16 %v1241
        %v4479 = vunpack.c.h.b16 %v1241
        %v4480 = vunpack.c.l.b16 %v1242
        %v4481 = vunpack.c.h.b16 %v1242
        %v4482 = vunpack.c.l.b16 %v1243
        %v4483 = vunpack.c.h.b16 %v1243
        %v4484 = vunpack.c.l.b16 %v1244
        %v4485 = vunpack.c.h.b16 %v1244
        %v4486 = vunpack.c.l.b16 %v1245
        %v4487 = vunpack.c.h.b16 %v1245
        %v4488 = vunpack.c.l.b16 %v1246
        %v4489 = vunpack.c.h.b16 %v1246
        %v4490 = vunpack.c.l.b16 %v1247
        %v4491 = vunpack.c.h.b16 %v1247
        %v4492 = vunpack.c.l.b16 %v1248
        %v4493 = vunpack.c.h.b16 %v1248
        %v4494 = vunpack.c.l.b16 %v1249
        %v4495 = vunpack.c.h.b16 %v1249
        %v4496 = vunpack.c.l.b16 %v1250
        %v4497 = vunpack.c.h.b16 %v1250
        %v4498 = vunpack.c.l.b16 %v1251
        %v4499 = vunpack.c.h.b16 %v1251
        %v4500 = vunpack.c.l.b16 %v1252
        %v4501 = vunpack.c.h.b16 %v1252
        %v4502 = vunpack.c.l.b16 %v1253
        %v4503 = vunpack.c.h.b16 %v1253
        %v4504 = vunpack.c.l.b16 %v1254
        %v4505 = vunpack.c.h.b16 %v1254
        %v4506 = vunpack.c.l.b16 %v1255
        %v4507 = vunpack.c.h.b16 %v1255
        %v4508 = vunpack.c.l.b16 %v1256
        %v4509 = vunpack.c.h.b16 %v1256
        %v4510 = vunpack.c.l.b16 %v1257
        %v4511 = vunpack.c.h.b16 %v1257
        %v4512 = vunpack.c.l.b16 %v1258
        %v4513 = vunpack.c.h.b16 %v1258
        %v4514 = vunpack.c.l.b16 %v1259
        %v4515 = vunpack.c.h.b16 %v1259
        %v4516 = vunpack.c.l.b16 %v1260
        %v4517 = vunpack.c.h.b16 %v1260
        %v4518 = vunpack.c.l.b16 %v1261
        %v4519 = vunpack.c.h.b16 %v1261
        %v4520 = vunpack.c.l.b16 %v1262
        %v4521 = vunpack.c.h.b16 %v1262
        %v4522 = vunpack.c.l.b16 %v1263
        %v4523 = vunpack.c.h.b16 %v1263
        %v4524 = vunpack.c.l.b16 %v1264
        %v4525 = vunpack.c.h.b16 %v1264
        %v4526 = vunpack.c.l.b16 %v1265
        %v4527 = vunpack.c.h.b16 %v1265
        %v4528 = vunpack.c.l.b16 %v1266
        %v4529 = vunpack.c.h.b16 %v1266
        %v4530 = vunpack.c.l.b16 %v1267
        %v4531 = vunpack.c.h.b16 %v1267
        %v4532 = vunpack.c.l.b16 %v1268
        %v4533 = vunpack.c.h.b16 %v1268
        %v4534 = vunpack.c.l.b16 %v1269
        %v4535 = vunpack.c.h.b16 %v1269
        %v4536 = vunpack.c.l.b16 %v1270
        %v4537 = vunpack.c.h.b16 %v1270
        %v4538 = vunpack.c.l.b16 %v1271
        %v4539 = vunpack.c.h.b16 %v1271
        %v4540 = vunpack.c.l.b16 %v1272
        %v4541 = vunpack.c.h.b16 %v1272
        %v4542 = vunpack.c.l.b16 %v1273
        %v4543 = vunpack.c.h.b16 %v1273
        %v4544 = vunpack.c.l.b16 %v1274
        %v4545 = vunpack.c.h.b16 %v1274
        %v4546 = vunpack.c.l.b16 %v1275
        %v4547 = vunpack.c.h.b16 %v1275
        %v4548 = vunpack.c.l.b16 %v1276
        %v4549 = vunpack.c.h.b16 %v1276
        %v4550 = vunpack.c.l.b16 %v1277
        %v4551 = vunpack.c.h.b16 %v1277
        %v4552 = vunpack.c.l.b16 %v1278
        %v4553 = vunpack.c.h.b16 %v1278
        %v4554 = vunpack.c.l.b16 %v1279
        %v4555 = vunpack.c.h.b16 %v1279
        %v4556 = vunpack.c.l.b16 %v1280
        %v4557 = vunpack.c.h.b16 %v1280
        %v4558 = vunpack.c.l.b16 %v1281
        %v4559 = vunpack.c.h.b16 %v1281
        %v4560 = vunpack.c.l.b16 %v1282
        %v4561 = vunpack.c.h.b16 %v1282
        %v4562 = vunpack.c.l.b16 %v1283
        %v4563 = vunpack.c.h.b16 %v1283
        %v4564 = vunpack.c.l.b16 %v1284
        %v4565 = vunpack.c.h.b16 %v1284
        %v4566 = vunpack.c.l.b16 %v1285
        %v4567 = vunpack.c.h.b16 %v1285
        %v4568 = vunpack.c.l.b16 %v1286
        %v4569 = vunpack.c.h.b16 %v1286
        %v4570 = vunpack.c.l.b16 %v1287
        %v4571 = vunpack.c.h.b16 %v1287
        %v4572 = vunpack.c.l.b16 %v1288
        %v4573 = vunpack.c.h.b16 %v1288
        %v4574 = vunpack.c.l.b16 %v1289
        %v4575 = vunpack.c.h.b16 %v1289
        %v4576 = vunpack.c.l.b16 %v1290
        %v4577 = vunpack.c.h.b16 %v1290
        %v4578 = vunpack.c.l.b16 %v1291
        %v4579 = vunpack.c.h.b16 %v1291
        %v4580 = vunpack.c.l.b16 %v1292
        %v4581 = vunpack.c.h.b16 %v1292
        %v4582 = vunpack.c.l.b16 %v1293
        %v4583 = vunpack.c.h.b16 %v1293
        %v4584 = vunpack.c.l.b16 %v1294
        %v4585 = vunpack.c.h.b16 %v1294
        %v4586 = vunpack.c.l.b16 %v1295
        %v4587 = vunpack.c.h.b16 %v1295
        %v4588 = vunpack.c.l.b16 %v1296
        %v4589 = vunpack.c.h.b16 %v1296
        %v4590 = vunpack.c.l.b16 %v1297
        %v4591 = vunpack.c.h.b16 %v1297
        %v4592 = vunpack.c.l.b16 %v1298
        %v4593 = vunpack.c.h.b16 %v1298
        %v4594 = vunpack.c.l.b16 %v1299
        %v4595 = vunpack.c.h.b16 %v1299
        %v4596 = vunpack.c.l.b16 %v1300
        %v4597 = vunpack.c.h.b16 %v1300
        %v4598 = vunpack.c.l.b16 %v1301
        %v4599 = vunpack.c.h.b16 %v1301
        %v4600 = vunpack.c.l.b16 %v1302
        %v4601 = vunpack.c.h.b16 %v1302
        %v4602 = vunpack.c.l.b16 %v1303
        %v4603 = vunpack.c.h.b16 %v1303
        %v4604 = vunpack.c.l.b16 %v1304
        %v4605 = vunpack.c.h.b16 %v1304
        %v4606 = vunpack.c.l.b16 %v1305
        %v4607 = vunpack.c.h.b16 %v1305
        %v4608 = vunpack.c.l.b16 %v1306
        %v4609 = vunpack.c.h.b16 %v1306
        %v4610 = vunpack.c.l.b16 %v1307
        %v4611 = vunpack.c.h.b16 %v1307
        %v4612 = vpack.c.b16 %v2568, %v2564
        %v4613 = vpack.c.b16 %v2569, %v2565
        %v4614 = vpack.c.b16 %v2570, %v2566
        %v4615 = vpack.c.b16 %v2571, %v2567
        %v4616 = vpack.c.b16 %v2576, %v2572
        %v4617 = vpack.c.b16 %v2577, %v2573
        %v4618 = vpack.c.b16 %v2578, %v2574
        %v4619 = vpack.c.b16 %v2579, %v2575
        %v4620 = vpack.c.b16 %v2584, %v2580
        %v4621 = vpack.c.b16 %v2585, %v2581
        %v4622 = vpack.c.b16 %v2586, %v2582
        %v4623 = vpack.c.b16 %v2587, %v2583
        %v4624 = vpack.c.b16 %v2592, %v2588
        %v4625 = vpack.c.b16 %v2593, %v2589
        %v4626 = vpack.c.b16 %v2594, %v2590
        %v4627 = vpack.c.b16 %v2595, %v2591
        %v4628 = vpack.c.b16 %v2600, %v2596
        %v4629 = vpack.c.b16 %v2601, %v2597
        %v4630 = vpack.c.b16 %v2602, %v2598
        %v4631 = vpack.c.b16 %v2603, %v2599
        %v4632 = vpack.c.b16 %v2608, %v2604
        %v4633 = vpack.c.b16 %v2609, %v2605
        %v4634 = vpack.c.b16 %v2610, %v2606
        %v4635 = vpack.c.b16 %v2611, %v2607
        %v4636 = vpack.c.b16 %v2616, %v2612
        %v4637 = vpack.c.b16 %v2617, %v2613
        %v4638 = vpack.c.b16 %v2618, %v2614
        %v4639 = vpack.c.b16 %v2619, %v2615
        %v4640 = vpack.c.b16 %v2624, %v2620
        %v4641 = vpack.c.b16 %v2625, %v2621
        %v4642 = vpack.c.b16 %v2626, %v2622
        %v4643 = vpack.c.b16 %v2627, %v2623
        %v4644 = vpack.c.b16 %v2632, %v2628
        %v4645 = vpack.c.b16 %v2633, %v2629
        %v4646 = vpack.c.b16 %v2634, %v2630
        %v4647 = vpack.c.b16 %v2635, %v2631
        %v4648 = vpack.c.b16 %v2640, %v2636
        %v4649 = vpack.c.b16 %v2641, %v2637
        %v4650 = vpack.c.b16 %v2642, %v2638
        %v4651 = vpack.c.b16 %v2643, %v2639
        %v4652 = vpack.c.b16 %v2648, %v2644
        %v4653 = vpack.c.b16 %v2649, %v2645
        %v4654 = vpack.c.b16 %v2650, %v2646
        %v4655 = vpack.c.b16 %v2651, %v2647
        %v4656 = vpack.c.b16 %v2656, %v2652
        %v4657 = vpack.c.b16 %v2657, %v2653
        %v4658 = vpack.c.b16 %v2658, %v2654
        %v4659 = vpack.c.b16 %v2659, %v2655
        %v4660 = vpack.c.b16 %v2664, %v2660
        %v4661 = vpack.c.b16 %v2665, %v2661
        %v4662 = vpack.c.b16 %v2666, %v2662
        %v4663 = vpack.c.b16 %v2667, %v2663
        %v4664 = vpack.c.b16 %v2672, %v2668
        %v4665 = vpack.c.b16 %v2673, %v2669
        %v4666 = vpack.c.b16 %v2674, %v2670
        %v4667 = vpack.c.b16 %v2675, %v2671
        %v4668 = vpack.c.b16 %v2680, %v2676
        %v4669 = vpack.c.b16 %v2681, %v2677
        %v4670 = vpack.c.b16 %v2682, %v2678
        %v4671 = vpack.c.b16 %v2683, %v2679
        %v4672 = vpack.c.b16 %v2688, %v2684
        %v4673 = vpack.c.b16 %v2689, %v2685
        %v4674 = vpack.c.b16 %v2690, %v2686
        %v4675 = vpack.c.b16 %v2691, %v2687
        %v4676 = vpack.c.b16 %v2696, %v2692
        %v4677 = vpack.c.b16 %v2697, %v2693
        %v4678 = vpack.c.b16 %v2698, %v2694
        %v4679 = vpack.c.b16 %v2699, %v2695
        %v4680 = vpack.c.b16 %v2704, %v2700
        %v4681 = vpack.c.b16 %v2705, %v2701
        %v4682 = vpack.c.b16 %v2706, %v2702
        %v4683 = vpack.c.b16 %v2707, %v2703
        %v4684 = vpack.c.b16 %v2712, %v2708
        %v4685 = vpack.c.b16 %v2713, %v2709
        %v4686 = vpack.c.b16 %v2714, %v2710
        %v4687 = vpack.c.b16 %v2715, %v2711
        %v4688 = vpack.c.b16 %v2720, %v2716
        %v4689 = vpack.c.b16 %v2721, %v2717
        %v4690 = vpack.c.b16 %v2722, %v2718
        %v4691 = vpack.c.b16 %v2723, %v2719
        %v4692 = vpack.c.b16 %v2728, %v2724
        %v4693 = vpack.c.b16 %v2729, %v2725
        %v4694 = vpack.c.b16 %v2730, %v2726
        %v4695 = vpack.c.b16 %v2731, %v2727
        %v4696 = vpack.c.b16 %v2736, %v2732
        %v4697 = vpack.c.b16 %v2737, %v2733
        %v4698 = vpack.c.b16 %v2738, %v2734
        %v4699 = vpack.c.b16 %v2739, %v2735
        %v4700 = vpack.c.b16 %v2744, %v2740
        %v4701 = vpack.c.b16 %v2745, %v2741
        %v4702 = vpack.c.b16 %v2746, %v2742
        %v4703 = vpack.c.b16 %v2747, %v2743
        %v4704 = vpack.c.b16 %v2752, %v2748
        %v4705 = vpack.c.b16 %v2753, %v2749
        %v4706 = vpack.c.b16 %v2754, %v2750
        %v4707 = vpack.c.b16 %v2755, %v2751
        %v4708 = vpack.c.b16 %v2760, %v2756
        %v4709 = vpack.c.b16 %v2761, %v2757
        %v4710 = vpack.c.b16 %v2762, %v2758
        %v4711 = vpack.c.b16 %v2763, %v2759
        %v4712 = vpack.c.b16 %v2768, %v2764
        %v4713 = vpack.c.b16 %v2769, %v2765
        %v4714 = vpack.c.b16 %v2770, %v2766
        %v4715 = vpack.c.b16 %v2771, %v2767
        %v4716 = vpack.c.b16 %v2776, %v2772
        %v4717 = vpack.c.b16 %v2777, %v2773
        %v4718 = vpack.c.b16 %v2778, %v2774
        %v4719 = vpack.c.b16 %v2779, %v2775
        %v4720 = vpack.c.b16 %v2784, %v2780
        %v4721 = vpack.c.b16 %v2785, %v2781
        %v4722 = vpack.c.b16 %v2786, %v2782
        %v4723 = vpack.c.b16 %v2787, %v2783
        %v4724 = vpack.c.b16 %v2792, %v2788
        %v4725 = vpack.c.b16 %v2793, %v2789
        %v4726 = vpack.c.b16 %v2794, %v2790
        %v4727 = vpack.c.b16 %v2795, %v2791
        %v4728 = vpack.c.b16 %v2800, %v2796
        %v4729 = vpack.c.b16 %v2801, %v2797
        %v4730 = vpack.c.b16 %v2802, %v2798
        %v4731 = vpack.c.b16 %v2803, %v2799
        %v4732 = vpack.c.b16 %v2808, %v2804
        %v4733 = vpack.c.b16 %v2809, %v2805
        %v4734 = vpack.c.b16 %v2810, %v2806
        %v4735 = vpack.c.b16 %v2811, %v2807
        %v4736 = vpack.c.b16 %v2816, %v2812
        %v4737 = vpack.c.b16 %v2817, %v2813
        %v4738 = vpack.c.b16 %v2818, %v2814
        %v4739 = vpack.c.b16 %v2819, %v2815
        %v4740 = vpack.c.b16 %v2824, %v2820
        %v4741 = vpack.c.b16 %v2825, %v2821
        %v4742 = vpack.c.b16 %v2826, %v2822
        %v4743 = vpack.c.b16 %v2827, %v2823
        %v4744 = vpack.c.b16 %v2832, %v2828
        %v4745 = vpack.c.b16 %v2833, %v2829
        %v4746 = vpack.c.b16 %v2834, %v2830
        %v4747 = vpack.c.b16 %v2835, %v2831
        %v4748 = vpack.c.b16 %v2840, %v2836
        %v4749 = vpack.c.b16 %v2841, %v2837
        %v4750 = vpack.c.b16 %v2842, %v2838
        %v4751 = vpack.c.b16 %v2843, %v2839
        %v4752 = vpack.c.b16 %v2848, %v2844
        %v4753 = vpack.c.b16 %v2849, %v2845
        %v4754 = vpack.c.b16 %v2850, %v2846
        %v4755 = vpack.c.b16 %v2851, %v2847
        %v4756 = vpack.c.b16 %v2856, %v2852
        %v4757 = vpack.c.b16 %v2857, %v2853
        %v4758 = vpack.c.b16 %v2858, %v2854
        %v4759 = vpack.c.b16 %v2859, %v2855
        %v4760 = vpack.c.b16 %v2864, %v2860
        %v4761 = vpack.c.b16 %v2865, %v2861
        %v4762 = vpack.c.b16 %v2866, %v2862
        %v4763 = vpack.c.b16 %v2867, %v2863
        %v4764 = vpack.c.b16 %v2872, %v2868
        %v4765 = vpack.c.b16 %v2873, %v2869
        %v4766 = vpack.c.b16 %v2874, %v2870
        %v4767 = vpack.c.b16 %v2875, %v2871
        %v4768 = vpack.c.b16 %v2880, %v2876
        %v4769 = vpack.c.b16 %v2881, %v2877
        %v4770 = vpack.c.b16 %v2882, %v2878
        %v4771 = vpack.c.b16 %v2883, %v2879
        %v4772 = vpack.c.b16 %v2888, %v2884
        %v4773 = vpack.c.b16 %v2889, %v2885
        %v4774 = vpack.c.b16 %v2890, %v2886
        %v4775 = vpack.c.b16 %v2891, %v2887
        %v4776 = vpack.c.b16 %v2896, %v2892
        %v4777 = vpack.c.b16 %v2897, %v2893
        %v4778 = vpack.c.b16 %v2898, %v2894
        %v4779 = vpack.c.b16 %v2899, %v2895
        %v4780 = vpack.c.b16 %v2904, %v2900
        %v4781 = vpack.c.b16 %v2905, %v2901
        %v4782 = vpack.c.b16 %v2906, %v2902
        %v4783 = vpack.c.b16 %v2907, %v2903
        %v4784 = vpack.c.b16 %v2912, %v2908
        %v4785 = vpack.c.b16 %v2913, %v2909
        %v4786 = vpack.c.b16 %v2914, %v2910
        %v4787 = vpack.c.b16 %v2915, %v2911
        %v4788 = vpack.c.b16 %v2920, %v2916
        %v4789 = vpack.c.b16 %v2921, %v2917
        %v4790 = vpack.c.b16 %v2922, %v2918
        %v4791 = vpack.c.b16 %v2923, %v2919
        %v4792 = vpack.c.b16 %v2928, %v2924
        %v4793 = vpack.c.b16 %v2929, %v2925
        %v4794 = vpack.c.b16 %v2930, %v2926
        %v4795 = vpack.c.b16 %v2931, %v2927
        %v4796 = vpack.c.b16 %v2936, %v2932
        %v4797 = vpack.c.b16 %v2937, %v2933
        %v4798 = vpack.c.b16 %v2938, %v2934
        %v4799 = vpack.c.b16 %v2939, %v2935
        %v4800 = vpack.c.b16 %v2944, %v2940
        %v4801 = vpack.c.b16 %v2945, %v2941
        %v4802 = vpack.c.b16 %v2946, %v2942
        %v4803 = vpack.c.b16 %v2947, %v2943
        %v4804 = vpack.c.b16 %v2952, %v2948
        %v4805 = vpack.c.b16 %v2953, %v2949
        %v4806 = vpack.c.b16 %v2954, %v2950
        %v4807 = vpack.c.b16 %v2955, %v2951
        %v4808 = vpack.c.b16 %v2960, %v2956
        %v4809 = vpack.c.b16 %v2961, %v2957
        %v4810 = vpack.c.b16 %v2962, %v2958
        %v4811 = vpack.c.b16 %v2963, %v2959
        %v4812 = vpack.c.b16 %v2968, %v2964
        %v4813 = vpack.c.b16 %v2969, %v2965
        %v4814 = vpack.c.b16 %v2970, %v2966
        %v4815 = vpack.c.b16 %v2971, %v2967
        %v4816 = vpack.c.b16 %v2976, %v2972
        %v4817 = vpack.c.b16 %v2977, %v2973
        %v4818 = vpack.c.b16 %v2978, %v2974
        %v4819 = vpack.c.b16 %v2979, %v2975
        %v4820 = vpack.c.b16 %v2984, %v2980
        %v4821 = vpack.c.b16 %v2985, %v2981
        %v4822 = vpack.c.b16 %v2986, %v2982
        %v4823 = vpack.c.b16 %v2987, %v2983
        %v4824 = vpack.c.b16 %v2992, %v2988
        %v4825 = vpack.c.b16 %v2993, %v2989
        %v4826 = vpack.c.b16 %v2994, %v2990
        %v4827 = vpack.c.b16 %v2995, %v2991
        %v4828 = vpack.c.b16 %v3000, %v2996
        %v4829 = vpack.c.b16 %v3001, %v2997
        %v4830 = vpack.c.b16 %v3002, %v2998
        %v4831 = vpack.c.b16 %v3003, %v2999
        %v4832 = vpack.c.b16 %v3008, %v3004
        %v4833 = vpack.c.b16 %v3009, %v3005
        %v4834 = vpack.c.b16 %v3010, %v3006
        %v4835 = vpack.c.b16 %v3011, %v3007
        %v4836 = vpack.c.b16 %v3016, %v3012
        %v4837 = vpack.c.b16 %v3017, %v3013
        %v4838 = vpack.c.b16 %v3018, %v3014
        %v4839 = vpack.c.b16 %v3019, %v3015
        %v4840 = vpack.c.b16 %v3024, %v3020
        %v4841 = vpack.c.b16 %v3025, %v3021
        %v4842 = vpack.c.b16 %v3026, %v3022
        %v4843 = vpack.c.b16 %v3027, %v3023
        %v4844 = vpack.c.b16 %v3032, %v3028
        %v4845 = vpack.c.b16 %v3033, %v3029
        %v4846 = vpack.c.b16 %v3034, %v3030
        %v4847 = vpack.c.b16 %v3035, %v3031
        %v4848 = vpack.c.b16 %v3040, %v3036
        %v4849 = vpack.c.b16 %v3041, %v3037
        %v4850 = vpack.c.b16 %v3042, %v3038
        %v4851 = vpack.c.b16 %v3043, %v3039
        %v4852 = vpack.c.b16 %v3048, %v3044
        %v4853 = vpack.c.b16 %v3049, %v3045
        %v4854 = vpack.c.b16 %v3050, %v3046
        %v4855 = vpack.c.b16 %v3051, %v3047
        %v4856 = vpack.c.b16 %v3056, %v3052
        %v4857 = vpack.c.b16 %v3057, %v3053
        %v4858 = vpack.c.b16 %v3058, %v3054
        %v4859 = vpack.c.b16 %v3059, %v3055
        %v4860 = vpack.c.b16 %v3064, %v3060
        %v4861 = vpack.c.b16 %v3065, %v3061
        %v4862 = vpack.c.b16 %v3066, %v3062
        %v4863 = vpack.c.b16 %v3067, %v3063
        %v4864 = vpack.c.b16 %v3072, %v3068
        %v4865 = vpack.c.b16 %v3073, %v3069
        %v4866 = vpack.c.b16 %v3074, %v3070
        %v4867 = vpack.c.b16 %v3075, %v3071
        %v4868 = vpack.c.b16 %v3080, %v3076
        %v4869 = vpack.c.b16 %v3081, %v3077
        %v4870 = vpack.c.b16 %v3082, %v3078
        %v4871 = vpack.c.b16 %v3083, %v3079
        %v4872 = vpack.c.b16 %v3088, %v3084
        %v4873 = vpack.c.b16 %v3089, %v3085
        %v4874 = vpack.c.b16 %v3090, %v3086
        %v4875 = vpack.c.b16 %v3091, %v3087
        %v4876 = vpack.c.b16 %v3096, %v3092
        %v4877 = vpack.c.b16 %v3097, %v3093
        %v4878 = vpack.c.b16 %v3098, %v3094
        %v4879 = vpack.c.b16 %v3099, %v3095
        %v4880 = vpack.c.b16 %v3104, %v3100
        %v4881 = vpack.c.b16 %v3105, %v3101
        %v4882 = vpack.c.b16 %v3106, %v3102
        %v4883 = vpack.c.b16 %v3107, %v3103
        %v4884 = vpack.c.b16 %v3112, %v3108
        %v4885 = vpack.c.b16 %v3113, %v3109
        %v4886 = vpack.c.b16 %v3114, %v3110
        %v4887 = vpack.c.b16 %v3115, %v3111
        %v4888 = vpack.c.b16 %v3120, %v3116
        %v4889 = vpack.c.b16 %v3121, %v3117
        %v4890 = vpack.c.b16 %v3122, %v3118
        %v4891 = vpack.c.b16 %v3123, %v3119
        %v4892 = vpack.c.b16 %v3128, %v3124
        %v4893 = vpack.c.b16 %v3129, %v3125
        %v4894 = vpack.c.b16 %v3130, %v3126
        %v4895 = vpack.c.b16 %v3131, %v3127
        %v4896 = vpack.c.b16 %v3136, %v3132
        %v4897 = vpack.c.b16 %v3137, %v3133
        %v4898 = vpack.c.b16 %v3138, %v3134
        %v4899 = vpack.c.b16 %v3139, %v3135
        %v4900 = vpack.c.b16 %v3144, %v3140
        %v4901 = vpack.c.b16 %v3145, %v3141
        %v4902 = vpack.c.b16 %v3146, %v3142
        %v4903 = vpack.c.b16 %v3147, %v3143
        %v4904 = vpack.c.b16 %v3152, %v3148
        %v4905 = vpack.c.b16 %v3153, %v3149
        %v4906 = vpack.c.b16 %v3154, %v3150
        %v4907 = vpack.c.b16 %v3155, %v3151
        %v4908 = vpack.c.b16 %v3160, %v3156
        %v4909 = vpack.c.b16 %v3161, %v3157
        %v4910 = vpack.c.b16 %v3162, %v3158
        %v4911 = vpack.c.b16 %v3163, %v3159
        %v4912 = vpack.c.b16 %v3168, %v3164
        %v4913 = vpack.c.b16 %v3169, %v3165
        %v4914 = vpack.c.b16 %v3170, %v3166
        %v4915 = vpack.c.b16 %v3171, %v3167
        %v4916 = vpack.c.b16 %v3176, %v3172
        %v4917 = vpack.c.b16 %v3177, %v3173
        %v4918 = vpack.c.b16 %v3178, %v3174
        %v4919 = vpack.c.b16 %v3179, %v3175
        %v4920 = vpack.c.b16 %v3184, %v3180
        %v4921 = vpack.c.b16 %v3185, %v3181
        %v4922 = vpack.c.b16 %v3186, %v3182
        %v4923 = vpack.c.b16 %v3187, %v3183
        %v4924 = vpack.c.b16 %v3192, %v3188
        %v4925 = vpack.c.b16 %v3193, %v3189
        %v4926 = vpack.c.b16 %v3194, %v3190
        %v4927 = vpack.c.b16 %v3195, %v3191
        %v4928 = vpack.c.b16 %v3200, %v3196
        %v4929 = vpack.c.b16 %v3201, %v3197
        %v4930 = vpack.c.b16 %v3202, %v3198
        %v4931 = vpack.c.b16 %v3203, %v3199
        %v4932 = vpack.c.b16 %v3208, %v3204
        %v4933 = vpack.c.b16 %v3209, %v3205
        %v4934 = vpack.c.b16 %v3210, %v3206
        %v4935 = vpack.c.b16 %v3211, %v3207
        %v4936 = vpack.c.b16 %v3216, %v3212
        %v4937 = vpack.c.b16 %v3217, %v3213
        %v4938 = vpack.c.b16 %v3218, %v3214
        %v4939 = vpack.c.b16 %v3219, %v3215
        %v4940 = vpack.c.b16 %v3224, %v3220
        %v4941 = vpack.c.b16 %v3225, %v3221
        %v4942 = vpack.c.b16 %v3226, %v3222
        %v4943 = vpack.c.b16 %v3227, %v3223
        %v4944 = vpack.c.b16 %v3232, %v3228
        %v4945 = vpack.c.b16 %v3233, %v3229
        %v4946 = vpack.c.b16 %v3234, %v3230
        %v4947 = vpack.c.b16 %v3235, %v3231
        %v4948 = vpack.c.b16 %v3240, %v3236
        %v4949 = vpack.c.b16 %v3241, %v3237
        %v4950 = vpack.c.b16 %v3242, %v3238
        %v4951 = vpack.c.b16 %v3243, %v3239
        %v4952 = vpack.c.b16 %v3248, %v3244
        %v4953 = vpack.c.b16 %v3249, %v3245
        %v4954 = vpack.c.b16 %v3250, %v3246
        %v4955 = vpack.c.b16 %v3251, %v3247
        %v4956 = vpack.c.b16 %v3256, %v3252
        %v4957 = vpack.c.b16 %v3257, %v3253
        %v4958 = vpack.c.b16 %v3258, %v3254
        %v4959 = vpack.c.b16 %v3259, %v3255
        %v4960 = vpack.c.b16 %v3264, %v3260
        %v4961 = vpack.c.b16 %v3265, %v3261
        %v4962 = vpack.c.b16 %v3266, %v3262
        %v4963 = vpack.c.b16 %v3267, %v3263
        %v4964 = vpack.c.b16 %v3272, %v3268
        %v4965 = vpack.c.b16 %v3273, %v3269
        %v4966 = vpack.c.b16 %v3274, %v3270
        %v4967 = vpack.c.b16 %v3275, %v3271
        %v4968 = vpack.c.b16 %v3280, %v3276
        %v4969 = vpack.c.b16 %v3281, %v3277
        %v4970 = vpack.c.b16 %v3282, %v3278
        %v4971 = vpack.c.b16 %v3283, %v3279
        %v4972 = vpack.c.b16 %v3288, %v3284
        %v4973 = vpack.c.b16 %v3289, %v3285
        %v4974 = vpack.c.b16 %v3290, %v3286
        %v4975 = vpack.c.b16 %v3291, %v3287
        %v4976 = vpack.c.b16 %v3296, %v3292
        %v4977 = vpack.c.b16 %v3297, %v3293
        %v4978 = vpack.c.b16 %v3298, %v3294
        %v4979 = vpack.c.b16 %v3299, %v3295
        %v4980 = vpack.c.b16 %v3304, %v3300
        %v4981 = vpack.c.b16 %v3305, %v3301
        %v4982 = vpack.c.b16 %v3306, %v3302
        %v4983 = vpack.c.b16 %v3307, %v3303
        %v4984 = vpack.c.b16 %v3312, %v3308
        %v4985 = vpack.c.b16 %v3313, %v3309
        %v4986 = vpack.c.b16 %v3314, %v3310
        %v4987 = vpack.c.b16 %v3315, %v3311
        %v4988 = vpack.c.b16 %v3320, %v3316
        %v4989 = vpack.c.b16 %v3321, %v3317
        %v4990 = vpack.c.b16 %v3322, %v3318
        %v4991 = vpack.c.b16 %v3323, %v3319
        %v4992 = vpack.c.b16 %v3328, %v3324
        %v4993 = vpack.c.b16 %v3329, %v3325
        %v4994 = vpack.c.b16 %v3330, %v3326
        %v4995 = vpack.c.b16 %v3331, %v3327
        %v4996 = vpack.c.b16 %v3336, %v3332
        %v4997 = vpack.c.b16 %v3337, %v3333
        %v4998 = vpack.c.b16 %v3338, %v3334
        %v4999 = vpack.c.b16 %v3339, %v3335
        %v5000 = vpack.c.b16 %v3344, %v3340
        %v5001 = vpack.c.b16 %v3345, %v3341
        %v5002 = vpack.c.b16 %v3346, %v3342
        %v5003 = vpack.c.b16 %v3347, %v3343
        %v5004 = vpack.c.b16 %v3352, %v3348
        %v5005 = vpack.c.b16 %v3353, %v3349
        %v5006 = vpack.c.b16 %v3354, %v3350
        %v5007 = vpack.c.b16 %v3355, %v3351
        %v5008 = vpack.c.b16 %v3360, %v3356
        %v5009 = vpack.c.b16 %v3361, %v3357
        %v5010 = vpack.c.b16 %v3362, %v3358
        %v5011 = vpack.c.b16 %v3363, %v3359
        %v5012 = vpack.c.b16 %v3368, %v3364
        %v5013 = vpack.c.b16 %v3369, %v3365
        %v5014 = vpack.c.b16 %v3370, %v3366
        %v5015 = vpack.c.b16 %v3371, %v3367
        %v5016 = vpack.c.b16 %v3376, %v3372
        %v5017 = vpack.c.b16 %v3377, %v3373
        %v5018 = vpack.c.b16 %v3378, %v3374
        %v5019 = vpack.c.b16 %v3379, %v3375
        %v5020 = vpack.c.b16 %v3384, %v3380
        %v5021 = vpack.c.b16 %v3385, %v3381
        %v5022 = vpack.c.b16 %v3386, %v3382
        %v5023 = vpack.c.b16 %v3387, %v3383
        %v5024 = vpack.c.b16 %v3392, %v3388
        %v5025 = vpack.c.b16 %v3393, %v3389
        %v5026 = vpack.c.b16 %v3394, %v3390
        %v5027 = vpack.c.b16 %v3395, %v3391
        %v5028 = vpack.c.b16 %v3400, %v3396
        %v5029 = vpack.c.b16 %v3401, %v3397
        %v5030 = vpack.c.b16 %v3402, %v3398
        %v5031 = vpack.c.b16 %v3403, %v3399
        %v5032 = vpack.c.b16 %v3408, %v3404
        %v5033 = vpack.c.b16 %v3409, %v3405
        %v5034 = vpack.c.b16 %v3410, %v3406
        %v5035 = vpack.c.b16 %v3411, %v3407
        %v5036 = vpack.c.b16 %v3416, %v3412
        %v5037 = vpack.c.b16 %v3417, %v3413
        %v5038 = vpack.c.b16 %v3418, %v3414
        %v5039 = vpack.c.b16 %v3419, %v3415
        %v5040 = vpack.c.b16 %v3424, %v3420
        %v5041 = vpack.c.b16 %v3425, %v3421
        %v5042 = vpack.c.b16 %v3426, %v3422
        %v5043 = vpack.c.b16 %v3427, %v3423
        %v5044 = vpack.c.b16 %v3432, %v3428
        %v5045 = vpack.c.b16 %v3433, %v3429
        %v5046 = vpack.c.b16 %v3434, %v3430
        %v5047 = vpack.c.b16 %v3435, %v3431
        %v5048 = vpack.c.b16 %v3440, %v3436
        %v5049 = vpack.c.b16 %v3441, %v3437
        %v5050 = vpack.c.b16 %v3442, %v3438
        %v5051 = vpack.c.b16 %v3443, %v3439
        %v5052 = vpack.c.b16 %v3448, %v3444
        %v5053 = vpack.c.b16 %v3449, %v3445
        %v5054 = vpack.c.b16 %v3450, %v3446
        %v5055 = vpack.c.b16 %v3451, %v3447
        %v5056 = vpack.c.b16 %v3456, %v3452
        %v5057 = vpack.c.b16 %v3457, %v3453
        %v5058 = vpack.c.b16 %v3458, %v3454
        %v5059 = vpack.c.b16 %v3459, %v3455
        %v5060 = vpack.c.b16 %v3464, %v3460
        %v5061 = vpack.c.b16 %v3465, %v3461
        %v5062 = vpack.c.b16 %v3466, %v3462
        %v5063 = vpack.c.b16 %v3467, %v3463
        %v5064 = vpack.c.b16 %v3472, %v3468
        %v5065 = vpack.c.b16 %v3473, %v3469
        %v5066 = vpack.c.b16 %v3474, %v3470
        %v5067 = vpack.c.b16 %v3475, %v3471
        %v5068 = vpack.c.b16 %v3480, %v3476
        %v5069 = vpack.c.b16 %v3481, %v3477
        %v5070 = vpack.c.b16 %v3482, %v3478
        %v5071 = vpack.c.b16 %v3483, %v3479
        %v5072 = vpack.c.b16 %v3488, %v3484
        %v5073 = vpack.c.b16 %v3489, %v3485
        %v5074 = vpack.c.b16 %v3490, %v3486
        %v5075 = vpack.c.b16 %v3491, %v3487
        %v5076 = vpack.c.b16 %v3496, %v3492
        %v5077 = vpack.c.b16 %v3497, %v3493
        %v5078 = vpack.c.b16 %v3498, %v3494
        %v5079 = vpack.c.b16 %v3499, %v3495
        %v5080 = vpack.c.b16 %v3504, %v3500
        %v5081 = vpack.c.b16 %v3505, %v3501
        %v5082 = vpack.c.b16 %v3506, %v3502
        %v5083 = vpack.c.b16 %v3507, %v3503
        %v5084 = vpack.c.b16 %v3512, %v3508
        %v5085 = vpack.c.b16 %v3513, %v3509
        %v5086 = vpack.c.b16 %v3514, %v3510
        %v5087 = vpack.c.b16 %v3515, %v3511
        %v5088 = vpack.c.b16 %v3520, %v3516
        %v5089 = vpack.c.b16 %v3521, %v3517
        %v5090 = vpack.c.b16 %v3522, %v3518
        %v5091 = vpack.c.b16 %v3523, %v3519
        %v5092 = vpack.c.b16 %v3528, %v3524
        %v5093 = vpack.c.b16 %v3529, %v3525
        %v5094 = vpack.c.b16 %v3530, %v3526
        %v5095 = vpack.c.b16 %v3531, %v3527
        %v5096 = vpack.c.b16 %v3536, %v3532
        %v5097 = vpack.c.b16 %v3537, %v3533
        %v5098 = vpack.c.b16 %v3538, %v3534
        %v5099 = vpack.c.b16 %v3539, %v3535
        %v5100 = vpack.c.b16 %v3544, %v3540
        %v5101 = vpack.c.b16 %v3545, %v3541
        %v5102 = vpack.c.b16 %v3546, %v3542
        %v5103 = vpack.c.b16 %v3547, %v3543
        %v5104 = vpack.c.b16 %v3552, %v3548
        %v5105 = vpack.c.b16 %v3553, %v3549
        %v5106 = vpack.c.b16 %v3554, %v3550
        %v5107 = vpack.c.b16 %v3555, %v3551
        %v5108 = vpack.c.b16 %v3560, %v3556
        %v5109 = vpack.c.b16 %v3561, %v3557
        %v5110 = vpack.c.b16 %v3562, %v3558
        %v5111 = vpack.c.b16 %v3563, %v3559
        %v5112 = vpack.c.b16 %v3568, %v3564
        %v5113 = vpack.c.b16 %v3569, %v3565
        %v5114 = vpack.c.b16 %v3570, %v3566
        %v5115 = vpack.c.b16 %v3571, %v3567
        %v5116 = vpack.c.b16 %v3576, %v3572
        %v5117 = vpack.c.b16 %v3577, %v3573
        %v5118 = vpack.c.b16 %v3578, %v3574
        %v5119 = vpack.c.b16 %v3579, %v3575
        %v5120 = vpack.c.b16 %v3584, %v3580
        %v5121 = vpack.c.b16 %v3585, %v3581
        %v5122 = vpack.c.b16 %v3586, %v3582
        %v5123 = vpack.c.b16 %v3587, %v3583
        %v5124 = vpack.c.b16 %v3592, %v3588
        %v5125 = vpack.c.b16 %v3593, %v3589
        %v5126 = vpack.c.b16 %v3594, %v3590
        %v5127 = vpack.c.b16 %v3595, %v3591
        %v5128 = vpack.c.b16 %v3600, %v3596
        %v5129 = vpack.c.b16 %v3601, %v3597
        %v5130 = vpack.c.b16 %v3602, %v3598
        %v5131 = vpack.c.b16 %v3603, %v3599
        %v5132 = vpack.c.b16 %v3608, %v3604
        %v5133 = vpack.c.b16 %v3609, %v3605
        %v5134 = vpack.c.b16 %v3610, %v3606
        %v5135 = vpack.c.b16 %v3611, %v3607
        %v5136 = vpack.c.b16 %v3616, %v3612
        %v5137 = vpack.c.b16 %v3617, %v3613
        %v5138 = vpack.c.b16 %v3618, %v3614
        %v5139 = vpack.c.b16 %v3619, %v3615
        %v5140 = vpack.c.b16 %v3624, %v3620
        %v5141 = vpack.c.b16 %v3625, %v3621
        %v5142 = vpack.c.b16 %v3626, %v3622
        %v5143 = vpack.c.b16 %v3627, %v3623
        %v5144 = vpack.c.b16 %v3632, %v3628
        %v5145 = vpack.c.b16 %v3633, %v3629
        %v5146 = vpack.c.b16 %v3634, %v3630
        %v5147 = vpack.c.b16 %v3635, %v3631
        %v5148 = vpack.c.b16 %v3640, %v3636
        %v5149 = vpack.c.b16 %v3641, %v3637
        %v5150 = vpack.c.b16 %v3642, %v3638
        %v5151 = vpack.c.b16 %v3643, %v3639
        %v5152 = vpack.c.b16 %v3648, %v3644
        %v5153 = vpack.c.b16 %v3649, %v3645
        %v5154 = vpack.c.b16 %v3650, %v3646
        %v5155 = vpack.c.b16 %v3651, %v3647
        %v5156 = vpack.c.b16 %v3656, %v3652
        %v5157 = vpack.c.b16 %v3657, %v3653
        %v5158 = vpack.c.b16 %v3658, %v3654
        %v5159 = vpack.c.b16 %v3659, %v3655
        %v5160 = vpack.c.b16 %v3664, %v3660
        %v5161 = vpack.c.b16 %v3665, %v3661
        %v5162 = vpack.c.b16 %v3666, %v3662
        %v5163 = vpack.c.b16 %v3667, %v3663
        %v5164 = vpack.c.b16 %v3672, %v3668
        %v5165 = vpack.c.b16 %v3673, %v3669
        %v5166 = vpack.c.b16 %v3674, %v3670
        %v5167 = vpack.c.b16 %v3675, %v3671
        %v5168 = vpack.c.b16 %v3680, %v3676
        %v5169 = vpack.c.b16 %v3681, %v3677
        %v5170 = vpack.c.b16 %v3682, %v3678
        %v5171 = vpack.c.b16 %v3683, %v3679
        %v5172 = vpack.c.b16 %v3688, %v3684
        %v5173 = vpack.c.b16 %v3689, %v3685
        %v5174 = vpack.c.b16 %v3690, %v3686
        %v5175 = vpack.c.b16 %v3691, %v3687
        %v5176 = vpack.c.b16 %v3696, %v3692
        %v5177 = vpack.c.b16 %v3697, %v3693
        %v5178 = vpack.c.b16 %v3698, %v3694
        %v5179 = vpack.c.b16 %v3699, %v3695
        %v5180 = vpack.c.b16 %v3704, %v3700
        %v5181 = vpack.c.b16 %v3705, %v3701
        %v5182 = vpack.c.b16 %v3706, %v3702
        %v5183 = vpack.c.b16 %v3707, %v3703
        %v5184 = vpack.c.b16 %v3712, %v3708
        %v5185 = vpack.c.b16 %v3713, %v3709
        %v5186 = vpack.c.b16 %v3714, %v3710
        %v5187 = vpack.c.b16 %v3715, %v3711
        %v5188 = vpack.c.b16 %v3720, %v3716
        %v5189 = vpack.c.b16 %v3721, %v3717
        %v5190 = vpack.c.b16 %v3722, %v3718
        %v5191 = vpack.c.b16 %v3723, %v3719
        %v5192 = vpack.c.b16 %v3728, %v3724
        %v5193 = vpack.c.b16 %v3729, %v3725
        %v5194 = vpack.c.b16 %v3730, %v3726
        %v5195 = vpack.c.b16 %v3731, %v3727
        %v5196 = vpack.c.b16 %v3736, %v3732
        %v5197 = vpack.c.b16 %v3737, %v3733
        %v5198 = vpack.c.b16 %v3738, %v3734
        %v5199 = vpack.c.b16 %v3739, %v3735
        %v5200 = vpack.c.b16 %v3744, %v3740
        %v5201 = vpack.c.b16 %v3745, %v3741
        %v5202 = vpack.c.b16 %v3746, %v3742
        %v5203 = vpack.c.b16 %v3747, %v3743
        %v5204 = vpack.c.b16 %v3752, %v3748
        %v5205 = vpack.c.b16 %v3753, %v3749
        %v5206 = vpack.c.b16 %v3754, %v3750
        %v5207 = vpack.c.b16 %v3755, %v3751
        %v5208 = vpack.c.b16 %v3760, %v3756
        %v5209 = vpack.c.b16 %v3761, %v3757
        %v5210 = vpack.c.b16 %v3762, %v3758
        %v5211 = vpack.c.b16 %v3763, %v3759
        %v5212 = vpack.c.b16 %v3768, %v3764
        %v5213 = vpack.c.b16 %v3769, %v3765
        %v5214 = vpack.c.b16 %v3770, %v3766
        %v5215 = vpack.c.b16 %v3771, %v3767
        %v5216 = vpack.c.b16 %v3776, %v3772
        %v5217 = vpack.c.b16 %v3777, %v3773
        %v5218 = vpack.c.b16 %v3778, %v3774
        %v5219 = vpack.c.b16 %v3779, %v3775
        %v5220 = vpack.c.b16 %v3784, %v3780
        %v5221 = vpack.c.b16 %v3785, %v3781
        %v5222 = vpack.c.b16 %v3786, %v3782
        %v5223 = vpack.c.b16 %v3787, %v3783
        %v5224 = vpack.c.b16 %v3792, %v3788
        %v5225 = vpack.c.b16 %v3793, %v3789
        %v5226 = vpack.c.b16 %v3794, %v3790
        %v5227 = vpack.c.b16 %v3795, %v3791
        %v5228 = vpack.c.b16 %v3800, %v3796
        %v5229 = vpack.c.b16 %v3801, %v3797
        %v5230 = vpack.c.b16 %v3802, %v3798
        %v5231 = vpack.c.b16 %v3803, %v3799
        %v5232 = vpack.c.b16 %v3808, %v3804
        %v5233 = vpack.c.b16 %v3809, %v3805
        %v5234 = vpack.c.b16 %v3810, %v3806
        %v5235 = vpack.c.b16 %v3811, %v3807
        %v5236 = vpack.c.b16 %v3816, %v3812
        %v5237 = vpack.c.b16 %v3817, %v3813
        %v5238 = vpack.c.b16 %v3818, %v3814
        %v5239 = vpack.c.b16 %v3819, %v3815
        %v5240 = vpack.c.b16 %v3824, %v3820
        %v5241 = vpack.c.b16 %v3825, %v3821
        %v5242 = vpack.c.b16 %v3826, %v3822
        %v5243 = vpack.c.b16 %v3827, %v3823
        %v5244 = vpack.c.b16 %v3832, %v3828
        %v5245 = vpack.c.b16 %v3833, %v3829
        %v5246 = vpack.c.b16 %v3834, %v3830
        %v5247 = vpack.c.b16 %v3835, %v3831
        %v5248 = vpack.c.b16 %v3840, %v3836
        %v5249 = vpack.c.b16 %v3841, %v3837
        %v5250 = vpack.c.b16 %v3842, %v3838
        %v5251 = vpack.c.b16 %v3843, %v3839
        %v5252 = vpack.c.b16 %v3848, %v3844
        %v5253 = vpack.c.b16 %v3849, %v3845
        %v5254 = vpack.c.b16 %v3850, %v3846
        %v5255 = vpack.c.b16 %v3851, %v3847
        %v5256 = vpack.c.b16 %v3856, %v3852
        %v5257 = vpack.c.b16 %v3857, %v3853
        %v5258 = vpack.c.b16 %v3858, %v3854
        %v5259 = vpack.c.b16 %v3859, %v3855
        %v5260 = vpack.c.b16 %v3864, %v3860
        %v5261 = vpack.c.b16 %v3865, %v3861
        %v5262 = vpack.c.b16 %v3866, %v3862
        %v5263 = vpack.c.b16 %v3867, %v3863
        %v5264 = vpack.c.b16 %v3872, %v3868
        %v5265 = vpack.c.b16 %v3873, %v3869
        %v5266 = vpack.c.b16 %v3874, %v3870
        %v5267 = vpack.c.b16 %v3875, %v3871
        %v5268 = vpack.c.b16 %v3880, %v3876
        %v5269 = vpack.c.b16 %v3881, %v3877
        %v5270 = vpack.c.b16 %v3882, %v3878
        %v5271 = vpack.c.b16 %v3883, %v3879
        %v5272 = vpack.c.b16 %v3888, %v3884
        %v5273 = vpack.c.b16 %v3889, %v3885
        %v5274 = vpack.c.b16 %v3890, %v3886
        %v5275 = vpack.c.b16 %v3891, %v3887
        %v5276 = vpack.c.b16 %v3896, %v3892
        %v5277 = vpack.c.b16 %v3897, %v3893
        %v5278 = vpack.c.b16 %v3898, %v3894
        %v5279 = vpack.c.b16 %v3899, %v3895
        %v5280 = vpack.c.b16 %v3904, %v3900
        %v5281 = vpack.c.b16 %v3905, %v3901
        %v5282 = vpack.c.b16 %v3906, %v3902
        %v5283 = vpack.c.b16 %v3907, %v3903
        %v5284 = vpack.c.b16 %v3912, %v3908
        %v5285 = vpack.c.b16 %v3913, %v3909
        %v5286 = vpack.c.b16 %v3914, %v3910
        %v5287 = vpack.c.b16 %v3915, %v3911
        %v5288 = vpack.c.b16 %v3920, %v3916
        %v5289 = vpack.c.b16 %v3921, %v3917
        %v5290 = vpack.c.b16 %v3922, %v3918
        %v5291 = vpack.c.b16 %v3923, %v3919
        %v5292 = vpack.c.b16 %v3928, %v3924
        %v5293 = vpack.c.b16 %v3929, %v3925
        %v5294 = vpack.c.b16 %v3930, %v3926
        %v5295 = vpack.c.b16 %v3931, %v3927
        %v5296 = vpack.c.b16 %v3936, %v3932
        %v5297 = vpack.c.b16 %v3937, %v3933
        %v5298 = vpack.c.b16 %v3938, %v3934
        %v5299 = vpack.c.b16 %v3939, %v3935
        %v5300 = vpack.c.b16 %v3944, %v3940
        %v5301 = vpack.c.b16 %v3945, %v3941
        %v5302 = vpack.c.b16 %v3946, %v3942
        %v5303 = vpack.c.b16 %v3947, %v3943
        %v5304 = vpack.c.b16 %v3952, %v3948
        %v5305 = vpack.c.b16 %v3953, %v3949
        %v5306 = vpack.c.b16 %v3954, %v3950
        %v5307 = vpack.c.b16 %v3955, %v3951
        %v5308 = vpack.c.b16 %v3960, %v3956
        %v5309 = vpack.c.b16 %v3961, %v3957
        %v5310 = vpack.c.b16 %v3962, %v3958
        %v5311 = vpack.c.b16 %v3963, %v3959
        %v5312 = vpack.c.b16 %v3968, %v3964
        %v5313 = vpack.c.b16 %v3969, %v3965
        %v5314 = vpack.c.b16 %v3970, %v3966
        %v5315 = vpack.c.b16 %v3971, %v3967
        %v5316 = vpack.c.b16 %v3976, %v3972
        %v5317 = vpack.c.b16 %v3977, %v3973
        %v5318 = vpack.c.b16 %v3978, %v3974
        %v5319 = vpack.c.b16 %v3979, %v3975
        %v5320 = vpack.c.b16 %v3984, %v3980
        %v5321 = vpack.c.b16 %v3985, %v3981
        %v5322 = vpack.c.b16 %v3986, %v3982
        %v5323 = vpack.c.b16 %v3987, %v3983
        %v5324 = vpack.c.b16 %v3992, %v3988
        %v5325 = vpack.c.b16 %v3993, %v3989
        %v5326 = vpack.c.b16 %v3994, %v3990
        %v5327 = vpack.c.b16 %v3995, %v3991
        %v5328 = vpack.c.b16 %v4000, %v3996
        %v5329 = vpack.c.b16 %v4001, %v3997
        %v5330 = vpack.c.b16 %v4002, %v3998
        %v5331 = vpack.c.b16 %v4003, %v3999
        %v5332 = vpack.c.b16 %v4008, %v4004
        %v5333 = vpack.c.b16 %v4009, %v4005
        %v5334 = vpack.c.b16 %v4010, %v4006
        %v5335 = vpack.c.b16 %v4011, %v4007
        %v5336 = vpack.c.b16 %v4016, %v4012
        %v5337 = vpack.c.b16 %v4017, %v4013
        %v5338 = vpack.c.b16 %v4018, %v4014
        %v5339 = vpack.c.b16 %v4019, %v4015
        %v5340 = vpack.c.b16 %v4024, %v4020
        %v5341 = vpack.c.b16 %v4025, %v4021
        %v5342 = vpack.c.b16 %v4026, %v4022
        %v5343 = vpack.c.b16 %v4027, %v4023
        %v5344 = vpack.c.b16 %v4032, %v4028
        %v5345 = vpack.c.b16 %v4033, %v4029
        %v5346 = vpack.c.b16 %v4034, %v4030
        %v5347 = vpack.c.b16 %v4035, %v4031
        %v5348 = vpack.c.b16 %v4040, %v4036
        %v5349 = vpack.c.b16 %v4041, %v4037
        %v5350 = vpack.c.b16 %v4042, %v4038
        %v5351 = vpack.c.b16 %v4043, %v4039
        %v5352 = vpack.c.b16 %v4048, %v4044
        %v5353 = vpack.c.b16 %v4049, %v4045
        %v5354 = vpack.c.b16 %v4050, %v4046
        %v5355 = vpack.c.b16 %v4051, %v4047
        %v5356 = vpack.c.b16 %v4056, %v4052
        %v5357 = vpack.c.b16 %v4057, %v4053
        %v5358 = vpack.c.b16 %v4058, %v4054
        %v5359 = vpack.c.b16 %v4059, %v4055
        %v5360 = vpack.c.b16 %v4064, %v4060
        %v5361 = vpack.c.b16 %v4065, %v4061
        %v5362 = vpack.c.b16 %v4066, %v4062
        %v5363 = vpack.c.b16 %v4067, %v4063
        %v5364 = vpack.c.b16 %v4072, %v4068
        %v5365 = vpack.c.b16 %v4073, %v4069
        %v5366 = vpack.c.b16 %v4074, %v4070
        %v5367 = vpack.c.b16 %v4075, %v4071
        %v5368 = vpack.c.b16 %v4080, %v4076
        %v5369 = vpack.c.b16 %v4081, %v4077
        %v5370 = vpack.c.b16 %v4082, %v4078
        %v5371 = vpack.c.b16 %v4083, %v4079
        %v5372 = vpack.c.b16 %v4088, %v4084
        %v5373 = vpack.c.b16 %v4089, %v4085
        %v5374 = vpack.c.b16 %v4090, %v4086
        %v5375 = vpack.c.b16 %v4091, %v4087
        %v5376 = vpack.c.b16 %v4096, %v4092
        %v5377 = vpack.c.b16 %v4097, %v4093
        %v5378 = vpack.c.b16 %v4098, %v4094
        %v5379 = vpack.c.b16 %v4099, %v4095
        %v5380 = vpack.c.b16 %v4104, %v4100
        %v5381 = vpack.c.b16 %v4105, %v4101
        %v5382 = vpack.c.b16 %v4106, %v4102
        %v5383 = vpack.c.b16 %v4107, %v4103
        %v5384 = vpack.c.b16 %v4112, %v4108
        %v5385 = vpack.c.b16 %v4113, %v4109
        %v5386 = vpack.c.b16 %v4114, %v4110
        %v5387 = vpack.c.b16 %v4115, %v4111
        %v5388 = vpack.c.b16 %v4120, %v4116
        %v5389 = vpack.c.b16 %v4121, %v4117
        %v5390 = vpack.c.b16 %v4122, %v4118
        %v5391 = vpack.c.b16 %v4123, %v4119
        %v5392 = vpack.c.b16 %v4128, %v4124
        %v5393 = vpack.c.b16 %v4129, %v4125
        %v5394 = vpack.c.b16 %v4130, %v4126
        %v5395 = vpack.c.b16 %v4131, %v4127
        %v5396 = vpack.c.b16 %v4136, %v4132
        %v5397 = vpack.c.b16 %v4137, %v4133
        %v5398 = vpack.c.b16 %v4138, %v4134
        %v5399 = vpack.c.b16 %v4139, %v4135
        %v5400 = vpack.c.b16 %v4144, %v4140
        %v5401 = vpack.c.b16 %v4145, %v4141
        %v5402 = vpack.c.b16 %v4146, %v4142
        %v5403 = vpack.c.b16 %v4147, %v4143
        %v5404 = vpack.c.b16 %v4152, %v4148
        %v5405 = vpack.c.b16 %v4153, %v4149
        %v5406 = vpack.c.b16 %v4154, %v4150
        %v5407 = vpack.c.b16 %v4155, %v4151
        %v5408 = vpack.c.b16 %v4160, %v4156
        %v5409 = vpack.c.b16 %v4161, %v4157
        %v5410 = vpack.c.b16 %v4162, %v4158
        %v5411 = vpack.c.b16 %v4163, %v4159
        %v5412 = vpack.c.b16 %v4168, %v4164
        %v5413 = vpack.c.b16 %v4169, %v4165
        %v5414 = vpack.c.b16 %v4170, %v4166
        %v5415 = vpack.c.b16 %v4171, %v4167
        %v5416 = vpack.c.b16 %v4176, %v4172
        %v5417 = vpack.c.b16 %v4177, %v4173
        %v5418 = vpack.c.b16 %v4178, %v4174
        %v5419 = vpack.c.b16 %v4179, %v4175
        %v5420 = vpack.c.b16 %v4184, %v4180
        %v5421 = vpack.c.b16 %v4185, %v4181
        %v5422 = vpack.c.b16 %v4186, %v4182
        %v5423 = vpack.c.b16 %v4187, %v4183
        %v5424 = vpack.c.b16 %v4192, %v4188
        %v5425 = vpack.c.b16 %v4193, %v4189
        %v5426 = vpack.c.b16 %v4194, %v4190
        %v5427 = vpack.c.b16 %v4195, %v4191
        %v5428 = vpack.c.b16 %v4200, %v4196
        %v5429 = vpack.c.b16 %v4201, %v4197
        %v5430 = vpack.c.b16 %v4202, %v4198
        %v5431 = vpack.c.b16 %v4203, %v4199
        %v5432 = vpack.c.b16 %v4208, %v4204
        %v5433 = vpack.c.b16 %v4209, %v4205
        %v5434 = vpack.c.b16 %v4210, %v4206
        %v5435 = vpack.c.b16 %v4211, %v4207
        %v5436 = vpack.c.b16 %v4216, %v4212
        %v5437 = vpack.c.b16 %v4217, %v4213
        %v5438 = vpack.c.b16 %v4218, %v4214
        %v5439 = vpack.c.b16 %v4219, %v4215
        %v5440 = vpack.c.b16 %v4224, %v4220
        %v5441 = vpack.c.b16 %v4225, %v4221
        %v5442 = vpack.c.b16 %v4226, %v4222
        %v5443 = vpack.c.b16 %v4227, %v4223
        %v5444 = vpack.c.b16 %v4232, %v4228
        %v5445 = vpack.c.b16 %v4233, %v4229
        %v5446 = vpack.c.b16 %v4234, %v4230
        %v5447 = vpack.c.b16 %v4235, %v4231
        %v5448 = vpack.c.b16 %v4240, %v4236
        %v5449 = vpack.c.b16 %v4241, %v4237
        %v5450 = vpack.c.b16 %v4242, %v4238
        %v5451 = vpack.c.b16 %v4243, %v4239
        %v5452 = vpack.c.b16 %v4248, %v4244
        %v5453 = vpack.c.b16 %v4249, %v4245
        %v5454 = vpack.c.b16 %v4250, %v4246
        %v5455 = vpack.c.b16 %v4251, %v4247
        %v5456 = vpack.c.b16 %v4256, %v4252
        %v5457 = vpack.c.b16 %v4257, %v4253
        %v5458 = vpack.c.b16 %v4258, %v4254
        %v5459 = vpack.c.b16 %v4259, %v4255
        %v5460 = vpack.c.b16 %v4264, %v4260
        %v5461 = vpack.c.b16 %v4265, %v4261
        %v5462 = vpack.c.b16 %v4266, %v4262
        %v5463 = vpack.c.b16 %v4267, %v4263
        %v5464 = vpack.c.b16 %v4272, %v4268
        %v5465 = vpack.c.b16 %v4273, %v4269
        %v5466 = vpack.c.b16 %v4274, %v4270
        %v5467 = vpack.c.b16 %v4275, %v4271
        %v5468 = vpack.c.b16 %v4280, %v4276
        %v5469 = vpack.c.b16 %v4281, %v4277
        %v5470 = vpack.c.b16 %v4282, %v4278
        %v5471 = vpack.c.b16 %v4283, %v4279
        %v5472 = vpack.c.b16 %v4288, %v4284
        %v5473 = vpack.c.b16 %v4289, %v4285
        %v5474 = vpack.c.b16 %v4290, %v4286
        %v5475 = vpack.c.b16 %v4291, %v4287
        %v5476 = vpack.c.b16 %v4296, %v4292
        %v5477 = vpack.c.b16 %v4297, %v4293
        %v5478 = vpack.c.b16 %v4298, %v4294
        %v5479 = vpack.c.b16 %v4299, %v4295
        %v5480 = vpack.c.b16 %v4304, %v4300
        %v5481 = vpack.c.b16 %v4305, %v4301
        %v5482 = vpack.c.b16 %v4306, %v4302
        %v5483 = vpack.c.b16 %v4307, %v4303
        %v5484 = vpack.c.b16 %v4312, %v4308
        %v5485 = vpack.c.b16 %v4313, %v4309
        %v5486 = vpack.c.b16 %v4314, %v4310
        %v5487 = vpack.c.b16 %v4315, %v4311
        %v5488 = vpack.c.b16 %v4320, %v4316
        %v5489 = vpack.c.b16 %v4321, %v4317
        %v5490 = vpack.c.b16 %v4322, %v4318
        %v5491 = vpack.c.b16 %v4323, %v4319
        %v5492 = vpack.c.b16 %v4328, %v4324
        %v5493 = vpack.c.b16 %v4329, %v4325
        %v5494 = vpack.c.b16 %v4330, %v4326
        %v5495 = vpack.c.b16 %v4331, %v4327
        %v5496 = vpack.c.b16 %v4336, %v4332
        %v5497 = vpack.c.b16 %v4337, %v4333
        %v5498 = vpack.c.b16 %v4338, %v4334
        %v5499 = vpack.c.b16 %v4339, %v4335
        %v5500 = vpack.c.b16 %v4344, %v4340
        %v5501 = vpack.c.b16 %v4345, %v4341
        %v5502 = vpack.c.b16 %v4346, %v4342
        %v5503 = vpack.c.b16 %v4347, %v4343
        %v5504 = vpack.c.b16 %v4352, %v4348
        %v5505 = vpack.c.b16 %v4353, %v4349
        %v5506 = vpack.c.b16 %v4354, %v4350
        %v5507 = vpack.c.b16 %v4355, %v4351
        %v5508 = vpack.c.b16 %v4360, %v4356
        %v5509 = vpack.c.b16 %v4361, %v4357
        %v5510 = vpack.c.b16 %v4362, %v4358
        %v5511 = vpack.c.b16 %v4363, %v4359
        %v5512 = vpack.c.b16 %v4368, %v4364
        %v5513 = vpack.c.b16 %v4369, %v4365
        %v5514 = vpack.c.b16 %v4370, %v4366
        %v5515 = vpack.c.b16 %v4371, %v4367
        %v5516 = vpack.c.b16 %v4376, %v4372
        %v5517 = vpack.c.b16 %v4377, %v4373
        %v5518 = vpack.c.b16 %v4378, %v4374
        %v5519 = vpack.c.b16 %v4379, %v4375
        %v5520 = vpack.c.b16 %v4384, %v4380
        %v5521 = vpack.c.b16 %v4385, %v4381
        %v5522 = vpack.c.b16 %v4386, %v4382
        %v5523 = vpack.c.b16 %v4387, %v4383
        %v5524 = vpack.c.b16 %v4392, %v4388
        %v5525 = vpack.c.b16 %v4393, %v4389
        %v5526 = vpack.c.b16 %v4394, %v4390
        %v5527 = vpack.c.b16 %v4395, %v4391
        %v5528 = vpack.c.b16 %v4400, %v4396
        %v5529 = vpack.c.b16 %v4401, %v4397
        %v5530 = vpack.c.b16 %v4402, %v4398
        %v5531 = vpack.c.b16 %v4403, %v4399
        %v5532 = vpack.c.b16 %v4408, %v4404
        %v5533 = vpack.c.b16 %v4409, %v4405
        %v5534 = vpack.c.b16 %v4410, %v4406
        %v5535 = vpack.c.b16 %v4411, %v4407
        %v5536 = vpack.c.b16 %v4416, %v4412
        %v5537 = vpack.c.b16 %v4417, %v4413
        %v5538 = vpack.c.b16 %v4418, %v4414
        %v5539 = vpack.c.b16 %v4419, %v4415
        %v5540 = vpack.c.b16 %v4424, %v4420
        %v5541 = vpack.c.b16 %v4425, %v4421
        %v5542 = vpack.c.b16 %v4426, %v4422
        %v5543 = vpack.c.b16 %v4427, %v4423
        %v5544 = vpack.c.b16 %v4432, %v4428
        %v5545 = vpack.c.b16 %v4433, %v4429
        %v5546 = vpack.c.b16 %v4434, %v4430
        %v5547 = vpack.c.b16 %v4435, %v4431
        %v5548 = vpack.c.b16 %v4440, %v4436
        %v5549 = vpack.c.b16 %v4441, %v4437
        %v5550 = vpack.c.b16 %v4442, %v4438
        %v5551 = vpack.c.b16 %v4443, %v4439
        %v5552 = vpack.c.b16 %v4448, %v4444
        %v5553 = vpack.c.b16 %v4449, %v4445
        %v5554 = vpack.c.b16 %v4450, %v4446
        %v5555 = vpack.c.b16 %v4451, %v4447
        %v5556 = vpack.c.b16 %v4456, %v4452
        %v5557 = vpack.c.b16 %v4457, %v4453
        %v5558 = vpack.c.b16 %v4458, %v4454
        %v5559 = vpack.c.b16 %v4459, %v4455
        %v5560 = vpack.c.b16 %v4464, %v4460
        %v5561 = vpack.c.b16 %v4465, %v4461
        %v5562 = vpack.c.b16 %v4466, %v4462
        %v5563 = vpack.c.b16 %v4467, %v4463
        %v5564 = vpack.c.b16 %v4472, %v4468
        %v5565 = vpack.c.b16 %v4473, %v4469
        %v5566 = vpack.c.b16 %v4474, %v4470
        %v5567 = vpack.c.b16 %v4475, %v4471
        %v5568 = vpack.c.b16 %v4480, %v4476
        %v5569 = vpack.c.b16 %v4481, %v4477
        %v5570 = vpack.c.b16 %v4482, %v4478
        %v5571 = vpack.c.b16 %v4483, %v4479
        %v5572 = vpack.c.b16 %v4488, %v4484
        %v5573 = vpack.c.b16 %v4489, %v4485
        %v5574 = vpack.c.b16 %v4490, %v4486
        %v5575 = vpack.c.b16 %v4491, %v4487
        %v5576 = vpack.c.b16 %v4496, %v4492
        %v5577 = vpack.c.b16 %v4497, %v4493
        %v5578 = vpack.c.b16 %v4498, %v4494
        %v5579 = vpack.c.b16 %v4499, %v4495
        %v5580 = vpack.c.b16 %v4504, %v4500
        %v5581 = vpack.c.b16 %v4505, %v4501
        %v5582 = vpack.c.b16 %v4506, %v4502
        %v5583 = vpack.c.b16 %v4507, %v4503
        %v5584 = vpack.c.b16 %v4512, %v4508
        %v5585 = vpack.c.b16 %v4513, %v4509
        %v5586 = vpack.c.b16 %v4514, %v4510
        %v5587 = vpack.c.b16 %v4515, %v4511
        %v5588 = vpack.c.b16 %v4520, %v4516
        %v5589 = vpack.c.b16 %v4521, %v4517
        %v5590 = vpack.c.b16 %v4522, %v4518
        %v5591 = vpack.c.b16 %v4523, %v4519
        %v5592 = vpack.c.b16 %v4528, %v4524
        %v5593 = vpack.c.b16 %v4529, %v4525
        %v5594 = vpack.c.b16 %v4530, %v4526
        %v5595 = vpack.c.b16 %v4531, %v4527
        %v5596 = vpack.c.b16 %v4536, %v4532
        %v5597 = vpack.c.b16 %v4537, %v4533
        %v5598 = vpack.c.b16 %v4538, %v4534
        %v5599 = vpack.c.b16 %v4539, %v4535
        %v5600 = vpack.c.b16 %v4544, %v4540
        %v5601 = vpack.c.b16 %v4545, %v4541
        %v5602 = vpack.c.b16 %v4546, %v4542
        %v5603 = vpack.c.b16 %v4547, %v4543
        %v5604 = vpack.c.b16 %v4552, %v4548
        %v5605 = vpack.c.b16 %v4553, %v4549
        %v5606 = vpack.c.b16 %v4554, %v4550
        %v5607 = vpack.c.b16 %v4555, %v4551
        %v5608 = vpack.c.b16 %v4560, %v4556
        %v5609 = vpack.c.b16 %v4561, %v4557
        %v5610 = vpack.c.b16 %v4562, %v4558
        %v5611 = vpack.c.b16 %v4563, %v4559
        %v5612 = vpack.c.b16 %v4568, %v4564
        %v5613 = vpack.c.b16 %v4569, %v4565
        %v5614 = vpack.c.b16 %v4570, %v4566
        %v5615 = vpack.c.b16 %v4571, %v4567
        %v5616 = vpack.c.b16 %v4576, %v4572
        %v5617 = vpack.c.b16 %v4577, %v4573
        %v5618 = vpack.c.b16 %v4578, %v4574
        %v5619 = vpack.c.b16 %v4579, %v4575
        %v5620 = vpack.c.b16 %v4584, %v4580
        %v5621 = vpack.c.b16 %v4585, %v4581
        %v5622 = vpack.c.b16 %v4586, %v4582
        %v5623 = vpack.c.b16 %v4587, %v4583
        %v5624 = vpack.c.b16 %v4592, %v4588
        %v5625 = vpack.c.b16 %v4593, %v4589
        %v5626 = vpack.c.b16 %v4594, %v4590
        %v5627 = vpack.c.b16 %v4595, %v4591
        %v5628 = vpack.c.b16 %v4600, %v4596
        %v5629 = vpack.c.b16 %v4601, %v4597
        %v5630 = vpack.c.b16 %v4602, %v4598
        %v5631 = vpack.c.b16 %v4603, %v4599
        %v5632 = vpack.c.b16 %v4608, %v4604
        %v5633 = vpack.c.b16 %v4609, %v4605
        %v5634 = vpack.c.b16 %v4610, %v4606
        %v5635 = vpack.c.b16 %v4611, %v4607
        %6660 = vmatprep.subr.bf16.mxu0 %v4613
        %6661 = vmatpush1.bf16.msra.mxu0 %v4612
        %6662 = vmatprep.subr.bf16.mxu0 %v4617
        %6663 = vmatpush1.bf16.msra.mxu0 %v4616
        %6664 = vmatprep.subr.bf16.mxu0 %v4621
        %6665 = vmatpush1.bf16.msra.mxu0 %v4620
        %6666 = vmatprep.subr.bf16.mxu0 %v4625
        %6667 = vmatpush1.bf16.msra.mxu0 %v4624
        %6668 = vmatprep.subr.bf16.mxu0 %v4629
        %6669 = vmatpush1.bf16.msra.mxu0 %v4628
        %6670 = vmatprep.subr.bf16.mxu0 %v4633
        %6671 = vmatpush1.bf16.msra.mxu0 %v4632
        %6672 = vmatprep.subr.bf16.mxu0 %v4637
        %6673 = vmatpush1.bf16.msra.mxu0 %v4636
        %6674 = vmatprep.subr.bf16.mxu0 %v4641
        %6675 = vmatpush1.bf16.msra.mxu0 %v4640
        %6676 = vmatprep.subr.bf16.mxu0 %v4645
        %6677 = vmatpush1.bf16.msra.mxu0 %v4644
        %6678 = vmatprep.subr.bf16.mxu0 %v4649
        %6679 = vmatpush1.bf16.msra.mxu0 %v4648
        %6680 = vmatprep.subr.bf16.mxu0 %v4653
        %6681 = vmatpush1.bf16.msra.mxu0 %v4652
        %6682 = vmatprep.subr.bf16.mxu0 %v4657
        %6683 = vmatpush1.bf16.msra.mxu0 %v4656
        %6684 = vmatprep.subr.bf16.mxu0 %v4661
        %6685 = vmatpush1.bf16.msra.mxu0 %v4660
        %6686 = vmatprep.subr.bf16.mxu0 %v4665
        %6687 = vmatpush1.bf16.msra.mxu0 %v4664
        %6688 = vmatprep.subr.bf16.mxu0 %v4669
        %6689 = vmatpush1.bf16.msra.mxu0 %v4668
        %6690 = vmatprep.subr.bf16.mxu0 %v4673
        %6691 = vmatpush1.bf16.msra.mxu0 %v4672
        %6692 = vmatprep.mubr.bf16.mxu0 %v1349
        %6693 = vmatmul.mubr.bf16.gmra.mrb[0].mxu0 %v1335
        %v6694 = vpop.f32.mrb[0].mxu0
        %v6695 = vadd.f32 0.0, %v6694
        %v6696 = vpop.f32.mrb[0].mxu0
        %v6697 = vadd.f32 0.0, %v6696
        %v6698 = vpop.f32.mrb[0].mxu0
        %v6699 = vpop.f32.mrb[0].mxu0
        %6700 = vdwg.mxu0
        %6701 = vmatprep.subr.bf16.mxu0 %v4677
        %6702 = vmatpush1.bf16.msra.mxu0 %v4676
        %6703 = vmatprep.subr.bf16.mxu0 %v4681
        %6704 = vmatpush1.bf16.msra.mxu0 %v4680
        %6705 = vmatprep.subr.bf16.mxu0 %v4685
        %6706 = vmatpush1.bf16.msra.mxu0 %v4684
        %6707 = vmatprep.subr.bf16.mxu0 %v4689
        %6708 = vmatpush1.bf16.msra.mxu0 %v4688
        %6709 = vmatprep.subr.bf16.mxu0 %v4693
        %6710 = vmatpush1.bf16.msra.mxu0 %v4692
        %6711 = vmatprep.subr.bf16.mxu0 %v4697
        %6712 = vmatpush1.bf16.msra.mxu0 %v4696
        %6713 = vmatprep.subr.bf16.mxu0 %v4701
        %6714 = vmatpush1.bf16.msra.mxu0 %v4700
        %6715 = vmatprep.subr.bf16.mxu0 %v4705
        %6716 = vmatpush1.bf16.msra.mxu0 %v4704
        %6717 = vmatprep.subr.bf16.mxu0 %v4709
        %6718 = vmatpush1.bf16.msra.mxu0 %v4708
        %6719 = vmatprep.subr.bf16.mxu0 %v4713
        %6720 = vmatpush1.bf16.msra.mxu0 %v4712
        %6721 = vmatprep.subr.bf16.mxu0 %v4717
        %6722 = vmatpush1.bf16.msra.mxu0 %v4716
        %6723 = vmatprep.subr.bf16.mxu0 %v4721
        %6724 = vmatpush1.bf16.msra.mxu0 %v4720
        %6725 = vmatprep.subr.bf16.mxu0 %v4725
        %6726 = vmatpush1.bf16.msra.mxu0 %v4724
        %6727 = vmatprep.subr.bf16.mxu0 %v4729
        %6728 = vmatpush1.bf16.msra.mxu0 %v4728
        %6729 = vmatprep.subr.bf16.mxu0 %v4733
        %6730 = vmatpush1.bf16.msra.mxu0 %v4732
        %6731 = vmatprep.subr.bf16.mxu0 %v4737
        %6732 = vmatpush1.bf16.msra.mxu0 %v4736
        %6733 = vmatprep.mubr.bf16.mxu0 %v1359
        %6734 = vmatmul.mubr.bf16.gmra.mrb[0].mxu0 %v1357
        %v6735 = vpop.f32.mrb[0].mxu0
        %v6736 = vadd.f32 %v6695, %v6735
        %v6737 = vpop.f32.mrb[0].mxu0
        %v6738 = vadd.f32 %v6697, %v6737
        %v6739 = vpop.f32.mrb[0].mxu0
        %v6740 = vpop.f32.mrb[0].mxu0
        %6741 = vdwg.mxu0
        %6742 = vmatprep.subr.bf16.mxu0 %v4741
        %6743 = vmatpush1.bf16.msra.mxu0 %v4740
        %6744 = vmatprep.subr.bf16.mxu0 %v4745
        %6745 = vmatpush1.bf16.msra.mxu0 %v4744
        %6746 = vmatprep.subr.bf16.mxu0 %v4749
        %6747 = vmatpush1.bf16.msra.mxu0 %v4748
        %6748 = vmatprep.subr.bf16.mxu0 %v4753
        %6749 = vmatpush1.bf16.msra.mxu0 %v4752
        %6750 = vmatprep.subr.bf16.mxu0 %v4757
        %6751 = vmatpush1.bf16.msra.mxu0 %v4756
        %6752 = vmatprep.subr.bf16.mxu0 %v4761
        %6753 = vmatpush1.bf16.msra.mxu0 %v4760
        %6754 = vmatprep.subr.bf16.mxu0 %v4765
        %6755 = vmatpush1.bf16.msra.mxu0 %v4764
        %6756 = vmatprep.subr.bf16.mxu0 %v4769
        %6757 = vmatpush1.bf16.msra.mxu0 %v4768
        %6758 = vmatprep.subr.bf16.mxu0 %v4773
        %6759 = vmatpush1.bf16.msra.mxu0 %v4772
        %6760 = vmatprep.subr.bf16.mxu0 %v4777
        %6761 = vmatpush1.bf16.msra.mxu0 %v4776
        %6762 = vmatprep.subr.bf16.mxu0 %v4781
        %6763 = vmatpush1.bf16.msra.mxu0 %v4780
        %6764 = vmatprep.subr.bf16.mxu0 %v4785
        %6765 = vmatpush1.bf16.msra.mxu0 %v4784
        %6766 = vmatprep.subr.bf16.mxu0 %v4789
        %6767 = vmatpush1.bf16.msra.mxu0 %v4788
        %6768 = vmatprep.subr.bf16.mxu0 %v4793
        %6769 = vmatpush1.bf16.msra.mxu0 %v4792
        %6770 = vmatprep.subr.bf16.mxu0 %v4797
        %6771 = vmatpush1.bf16.msra.mxu0 %v4796
        %6772 = vmatprep.subr.bf16.mxu0 %v4801
        %6773 = vmatpush1.bf16.msra.mxu0 %v4800
        %6774 = vmatprep.mubr.bf16.mxu0 %v1356
        %6775 = vmatmul.mubr.bf16.gmra.mrb[0].mxu0 %v1342
        %v6776 = vpop.f32.mrb[0].mxu0
        %v6777 = vadd.f32 %v6736, %v6776
        %v6778 = vpop.f32.mrb[0].mxu0
        %v6779 = vadd.f32 %v6738, %v6778
        %v6780 = vpop.f32.mrb[0].mxu0
        %v6781 = vpop.f32.mrb[0].mxu0
        %6782 = vdwg.mxu0
        %6783 = vmatprep.subr.bf16.mxu0 %v4805
        %6784 = vmatpush1.bf16.msra.mxu0 %v4804
        %6785 = vmatprep.subr.bf16.mxu0 %v4809
        %6786 = vmatpush1.bf16.msra.mxu0 %v4808
        %6787 = vmatprep.subr.bf16.mxu0 %v4813
        %6788 = vmatpush1.bf16.msra.mxu0 %v4812
        %6789 = vmatprep.subr.bf16.mxu0 %v4817
        %6790 = vmatpush1.bf16.msra.mxu0 %v4816
        %6791 = vmatprep.subr.bf16.mxu0 %v4821
        %6792 = vmatpush1.bf16.msra.mxu0 %v4820
        %6793 = vmatprep.subr.bf16.mxu0 %v4825
        %6794 = vmatpush1.bf16.msra.mxu0 %v4824
        %6795 = vmatprep.subr.bf16.mxu0 %v4829
        %6796 = vmatpush1.bf16.msra.mxu0 %v4828
        %6797 = vmatprep.subr.bf16.mxu0 %v4833
        %6798 = vmatpush1.bf16.msra.mxu0 %v4832
        %6799 = vmatprep.subr.bf16.mxu0 %v4837
        %6800 = vmatpush1.bf16.msra.mxu0 %v4836
        %6801 = vmatprep.subr.bf16.mxu0 %v4841
        %6802 = vmatpush1.bf16.msra.mxu0 %v4840
        %6803 = vmatprep.subr.bf16.mxu0 %v4845
        %6804 = vmatpush1.bf16.msra.mxu0 %v4844
        %6805 = vmatprep.subr.bf16.mxu0 %v4849
        %6806 = vmatpush1.bf16.msra.mxu0 %v4848
        %6807 = vmatprep.subr.bf16.mxu0 %v4853
        %6808 = vmatpush1.bf16.msra.mxu0 %v4852
        %6809 = vmatprep.subr.bf16.mxu0 %v4857
        %6810 = vmatpush1.bf16.msra.mxu0 %v4856
        %6811 = vmatprep.subr.bf16.mxu0 %v4861
        %6812 = vmatpush1.bf16.msra.mxu0 %v4860
        %6813 = vmatprep.subr.bf16.mxu0 %v4865
        %6814 = vmatpush1.bf16.msra.mxu0 %v4864
        %6815 = vmatprep.mubr.bf16.mxu0 %v1360
        %6816 = vmatmul.mubr.bf16.gmra.mrb[0].mxu0 %v1358
        %v6817 = vpop.f32.mrb[0].mxu0
        %v6818 = vadd.f32 %v6777, %v6817
        %v6819 = vpop.f32.mrb[0].mxu0
        %v6820 = vadd.f32 %v6779, %v6819
        %v6821 = vpop.f32.mrb[0].mxu0
        %v6822 = vpop.f32.mrb[0].mxu0
        %6823 = vdwg.mxu0
        %6824 = vmatprep.subr.bf16.mxu0 %v4869
        %6825 = vmatpush1.bf16.msra.mxu0 %v4868
        %6826 = vmatprep.subr.bf16.mxu0 %v4873
        %6827 = vmatpush1.bf16.msra.mxu0 %v4872
        %6828 = vmatprep.subr.bf16.mxu0 %v4877
        %6829 = vmatpush1.bf16.msra.mxu0 %v4876
        %6830 = vmatprep.subr.bf16.mxu0 %v4881
        %6831 = vmatpush1.bf16.msra.mxu0 %v4880
        %6832 = vmatprep.subr.bf16.mxu0 %v4885
        %6833 = vmatpush1.bf16.msra.mxu0 %v4884
        %6834 = vmatprep.subr.bf16.mxu0 %v4889
        %6835 = vmatpush1.bf16.msra.mxu0 %v4888
        %6836 = vmatprep.subr.bf16.mxu0 %v4893
        %6837 = vmatpush1.bf16.msra.mxu0 %v4892
        %6838 = vmatprep.subr.bf16.mxu0 %v4897
        %6839 = vmatpush1.bf16.msra.mxu0 %v4896
        %6840 = vmatprep.subr.bf16.mxu0 %v4901
        %6841 = vmatpush1.bf16.msra.mxu0 %v4900
        %6842 = vmatprep.subr.bf16.mxu0 %v4905
        %6843 = vmatpush1.bf16.msra.mxu0 %v4904
        %6844 = vmatprep.subr.bf16.mxu0 %v4909
        %6845 = vmatpush1.bf16.msra.mxu0 %v4908
        %6846 = vmatprep.subr.bf16.mxu0 %v4913
        %6847 = vmatpush1.bf16.msra.mxu0 %v4912
        %6848 = vmatprep.subr.bf16.mxu0 %v4917
        %6849 = vmatpush1.bf16.msra.mxu0 %v4916
        %6850 = vmatprep.subr.bf16.mxu0 %v4921
        %6851 = vmatpush1.bf16.msra.mxu0 %v4920
        %6852 = vmatprep.subr.bf16.mxu0 %v4925
        %6853 = vmatpush1.bf16.msra.mxu0 %v4924
        %6854 = vmatprep.subr.bf16.mxu0 %v4929
        %6855 = vmatpush1.bf16.msra.mxu0 %v4928
        %6856 = vmatprep.mubr.bf16.mxu0 %v1398
        %6857 = vmatmul.mubr.bf16.gmra.mrb[0].mxu0 %v1384
        %v6858 = vpop.f32.mrb[0].mxu0
        %v6859 = vadd.f32 %v6818, %v6858
        %v6860 = vpop.f32.mrb[0].mxu0
        %v6861 = vadd.f32 %v6820, %v6860
        %v6862 = vpop.f32.mrb[0].mxu0
        %v6863 = vpop.f32.mrb[0].mxu0
        %6864 = vdwg.mxu0
        %6865 = vmatprep.subr.bf16.mxu0 %v4933
        %6866 = vmatpush1.bf16.msra.mxu0 %v4932
        %6867 = vmatprep.subr.bf16.mxu0 %v4937
        %6868 = vmatpush1.bf16.msra.mxu0 %v4936
        %6869 = vmatprep.subr.bf16.mxu0 %v4941
        %6870 = vmatpush1.bf16.msra.mxu0 %v4940
        %6871 = vmatprep.subr.bf16.mxu0 %v4945
        %6872 = vmatpush1.bf16.msra.mxu0 %v4944
        %6873 = vmatprep.subr.bf16.mxu0 %v4949
        %6874 = vmatpush1.bf16.msra.mxu0 %v4948
        %6875 = vmatprep.subr.bf16.mxu0 %v4953
        %6876 = vmatpush1.bf16.msra.mxu0 %v4952
        %6877 = vmatprep.subr.bf16.mxu0 %v4957
        %6878 = vmatpush1.bf16.msra.mxu0 %v4956
        %6879 = vmatprep.subr.bf16.mxu0 %v4961
        %6880 = vmatpush1.bf16.msra.mxu0 %v4960
        %6881 = vmatprep.subr.bf16.mxu0 %v4965
        %6882 = vmatpush1.bf16.msra.mxu0 %v4964
        %6883 = vmatprep.subr.bf16.mxu0 %v4969
        %6884 = vmatpush1.bf16.msra.mxu0 %v4968
        %6885 = vmatprep.subr.bf16.mxu0 %v4973
        %6886 = vmatpush1.bf16.msra.mxu0 %v4972
        %6887 = vmatprep.subr.bf16.mxu0 %v4977
        %6888 = vmatpush1.bf16.msra.mxu0 %v4976
        %6889 = vmatprep.subr.bf16.mxu0 %v4981
        %6890 = vmatpush1.bf16.msra.mxu0 %v4980
        %6891 = vmatprep.subr.bf16.mxu0 %v4985
        %6892 = vmatpush1.bf16.msra.mxu0 %v4984
        %6893 = vmatprep.subr.bf16.mxu0 %v4989
        %6894 = vmatpush1.bf16.msra.mxu0 %v4988
        %6895 = vmatprep.subr.bf16.mxu0 %v4993
        %6896 = vmatpush1.bf16.msra.mxu0 %v4992
        %6897 = vmatprep.mubr.bf16.mxu0 %v1408
        %6898 = vmatmul.mubr.bf16.gmra.mrb[0].mxu0 %v1406
        %v6899 = vpop.f32.mrb[0].mxu0
        %v6900 = vadd.f32 %v6859, %v6899
        %v6901 = vpop.f32.mrb[0].mxu0
        %v6902 = vadd.f32 %v6861, %v6901
        %v6903 = vpop.f32.mrb[0].mxu0
        %v6904 = vpop.f32.mrb[0].mxu0
        %6905 = vdwg.mxu0
        %6906 = vmatprep.subr.bf16.mxu0 %v4997
        %6907 = vmatpush1.bf16.msra.mxu0 %v4996
        %6908 = vmatprep.subr.bf16.mxu0 %v5001
        %6909 = vmatpush1.bf16.msra.mxu0 %v5000
        %6910 = vmatprep.subr.bf16.mxu0 %v5005
        %6911 = vmatpush1.bf16.msra.mxu0 %v5004
        %6912 = vmatprep.subr.bf16.mxu0 %v5009
        %6913 = vmatpush1.bf16.msra.mxu0 %v5008
        %6914 = vmatprep.subr.bf16.mxu0 %v5013
        %6915 = vmatpush1.bf16.msra.mxu0 %v5012
        %6916 = vmatprep.subr.bf16.mxu0 %v5017
        %6917 = vmatpush1.bf16.msra.mxu0 %v5016
        %6918 = vmatprep.subr.bf16.mxu0 %v5021
        %6919 = vmatpush1.bf16.msra.mxu0 %v5020
        %6920 = vmatprep.subr.bf16.mxu0 %v5025
        %6921 = vmatpush1.bf16.msra.mxu0 %v5024
        %6922 = vmatprep.subr.bf16.mxu0 %v5029
        %6923 = vmatpush1.bf16.msra.mxu0 %v5028
        %6924 = vmatprep.subr.bf16.mxu0 %v5033
        %6925 = vmatpush1.bf16.msra.mxu0 %v5032
        %6926 = vmatprep.subr.bf16.mxu0 %v5037
        %6927 = vmatpush1.bf16.msra.mxu0 %v5036
        %6928 = vmatprep.subr.bf16.mxu0 %v5041
        %6929 = vmatpush1.bf16.msra.mxu0 %v5040
        %6930 = vmatprep.subr.bf16.mxu0 %v5045
        %6931 = vmatpush1.bf16.msra.mxu0 %v5044
        %6932 = vmatprep.subr.bf16.mxu0 %v5049
        %6933 = vmatpush1.bf16.msra.mxu0 %v5048
        %6934 = vmatprep.subr.bf16.mxu0 %v5053
        %6935 = vmatpush1.bf16.msra.mxu0 %v5052
        %6936 = vmatprep.subr.bf16.mxu0 %v5057
        %6937 = vmatpush1.bf16.msra.mxu0 %v5056
        %6938 = vmatprep.mubr.bf16.mxu0 %v1405
        %6939 = vmatmul.mubr.bf16.gmra.mrb[0].mxu0 %v1391
        %v6940 = vpop.f32.mrb[0].mxu0
        %v6941 = vadd.f32 %v6900, %v6940
        %v6942 = vpop.f32.mrb[0].mxu0
        %v6943 = vadd.f32 %v6902, %v6942
        %v6944 = vpop.f32.mrb[0].mxu0
        %v6945 = vpop.f32.mrb[0].mxu0
        %6946 = vdwg.mxu0
        %6947 = vmatprep.subr.bf16.mxu0 %v5061
        %6948 = vmatpush1.bf16.msra.mxu0 %v5060
        %6949 = vmatprep.subr.bf16.mxu0 %v5065
        %6950 = vmatpush1.bf16.msra.mxu0 %v5064
        %6951 = vmatprep.subr.bf16.mxu0 %v5069
        %6952 = vmatpush1.bf16.msra.mxu0 %v5068
        %6953 = vmatprep.subr.bf16.mxu0 %v5073
        %6954 = vmatpush1.bf16.msra.mxu0 %v5072
        %6955 = vmatprep.subr.bf16.mxu0 %v5077
        %6956 = vmatpush1.bf16.msra.mxu0 %v5076
        %6957 = vmatprep.subr.bf16.mxu0 %v5081
        %6958 = vmatpush1.bf16.msra.mxu0 %v5080
        %6959 = vmatprep.subr.bf16.mxu0 %v5085
        %6960 = vmatpush1.bf16.msra.mxu0 %v5084
        %6961 = vmatprep.subr.bf16.mxu0 %v5089
        %6962 = vmatpush1.bf16.msra.mxu0 %v5088
        %6963 = vmatprep.subr.bf16.mxu0 %v5093
        %6964 = vmatpush1.bf16.msra.mxu0 %v5092
        %6965 = vmatprep.subr.bf16.mxu0 %v5097
        %6966 = vmatpush1.bf16.msra.mxu0 %v5096
        %6967 = vmatprep.subr.bf16.mxu0 %v5101
        %6968 = vmatpush1.bf16.msra.mxu0 %v5100
        %6969 = vmatprep.subr.bf16.mxu0 %v5105
        %6970 = vmatpush1.bf16.msra.mxu0 %v5104
        %6971 = vmatprep.subr.bf16.mxu0 %v5109
        %6972 = vmatpush1.bf16.msra.mxu0 %v5108
        %6973 = vmatprep.subr.bf16.mxu0 %v5113
        %6974 = vmatpush1.bf16.msra.mxu0 %v5112
        %6975 = vmatprep.subr.bf16.mxu0 %v5117
        %6976 = vmatpush1.bf16.msra.mxu0 %v5116
        %6977 = vmatprep.subr.bf16.mxu0 %v5121
        %6978 = vmatpush1.bf16.msra.mxu0 %v5120
        %6979 = vmatprep.mubr.bf16.mxu0 %v1409
        %6980 = vmatmul.mubr.bf16.gmra.mrb[0].mxu0 %v1407
        %v6981 = vpop.f32.mrb[0].mxu0
        %v6982 = vadd.f32 %v6941, %v6981
        %v6983 = vpop.f32.mrb[0].mxu0
        %v6984 = vadd.f32 %v6943, %v6983
        %v6985 = vpop.f32.mrb[0].mxu0
        %v6986 = vpop.f32.mrb[0].mxu0
        %6987 = vdwg.mxu0
        %6988 = vmatprep.subr.bf16.mxu0 %v5125
        %6989 = vmatpush1.bf16.msra.mxu0 %v5124
        %6990 = vmatprep.subr.bf16.mxu0 %v5129
        %6991 = vmatpush1.bf16.msra.mxu0 %v5128
        %6992 = vmatprep.subr.bf16.mxu0 %v5133
        %6993 = vmatpush1.bf16.msra.mxu0 %v5132
        %6994 = vmatprep.subr.bf16.mxu0 %v5137
        %6995 = vmatpush1.bf16.msra.mxu0 %v5136
        %6996 = vmatprep.subr.bf16.mxu0 %v5141
        %6997 = vmatpush1.bf16.msra.mxu0 %v5140
        %6998 = vmatprep.subr.bf16.mxu0 %v5145
        %6999 = vmatpush1.bf16.msra.mxu0 %v5144
        %7000 = vmatprep.subr.bf16.mxu0 %v5149
        %7001 = vmatpush1.bf16.msra.mxu0 %v5148
        %7002 = vmatprep.subr.bf16.mxu0 %v5153
        %7003 = vmatpush1.bf16.msra.mxu0 %v5152
        %7004 = vmatprep.subr.bf16.mxu0 %v5157
        %7005 = vmatpush1.bf16.msra.mxu0 %v5156
        %7006 = vmatprep.subr.bf16.mxu0 %v5161
        %7007 = vmatpush1.bf16.msra.mxu0 %v5160
        %7008 = vmatprep.subr.bf16.mxu0 %v5165
        %7009 = vmatpush1.bf16.msra.mxu0 %v5164
        %7010 = vmatprep.subr.bf16.mxu0 %v5169
        %7011 = vmatpush1.bf16.msra.mxu0 %v5168
        %7012 = vmatprep.subr.bf16.mxu0 %v5173
        %7013 = vmatpush1.bf16.msra.mxu0 %v5172
        %7014 = vmatprep.subr.bf16.mxu0 %v5177
        %7015 = vmatpush1.bf16.msra.mxu0 %v5176
        %7016 = vmatprep.subr.bf16.mxu0 %v5181
        %7017 = vmatpush1.bf16.msra.mxu0 %v5180
        %7018 = vmatprep.subr.bf16.mxu0 %v5185
        %7019 = vmatpush1.bf16.msra.mxu0 %v5184
        %7020 = vmatprep.mubr.bf16.mxu0 %v1447
        %7021 = vmatmul.mubr.bf16.gmra.mrb[0].mxu0 %v1433
        %v7022 = vpop.f32.mrb[0].mxu0
        %v7023 = vadd.f32 %v6982, %v7022
        %v7024 = vpop.f32.mrb[0].mxu0
        %v7025 = vadd.f32 %v6984, %v7024
        %v7026 = vpop.f32.mrb[0].mxu0
        %v7027 = vpop.f32.mrb[0].mxu0
        %7028 = vdwg.mxu0
        %7029 = vmatprep.subr.bf16.mxu0 %v5189
        %7030 = vmatpush1.bf16.msra.mxu0 %v5188
        %7031 = vmatprep.subr.bf16.mxu0 %v5193
        %7032 = vmatpush1.bf16.msra.mxu0 %v5192
        %7033 = vmatprep.subr.bf16.mxu0 %v5197
        %7034 = vmatpush1.bf16.msra.mxu0 %v5196
        %7035 = vmatprep.subr.bf16.mxu0 %v5201
        %7036 = vmatpush1.bf16.msra.mxu0 %v5200
        %7037 = vmatprep.subr.bf16.mxu0 %v5205
        %7038 = vmatpush1.bf16.msra.mxu0 %v5204
        %7039 = vmatprep.subr.bf16.mxu0 %v5209
        %7040 = vmatpush1.bf16.msra.mxu0 %v5208
        %7041 = vmatprep.subr.bf16.mxu0 %v5213
        %7042 = vmatpush1.bf16.msra.mxu0 %v5212
        %7043 = vmatprep.subr.bf16.mxu0 %v5217
        %7044 = vmatpush1.bf16.msra.mxu0 %v5216
        %7045 = vmatprep.subr.bf16.mxu0 %v5221
        %7046 = vmatpush1.bf16.msra.mxu0 %v5220
        %7047 = vmatprep.subr.bf16.mxu0 %v5225
        %7048 = vmatpush1.bf16.msra.mxu0 %v5224
        %7049 = vmatprep.subr.bf16.mxu0 %v5229
        %7050 = vmatpush1.bf16.msra.mxu0 %v5228
        %7051 = vmatprep.subr.bf16.mxu0 %v5233
        %7052 = vmatpush1.bf16.msra.mxu0 %v5232
        %7053 = vmatprep.subr.bf16.mxu0 %v5237
        %7054 = vmatpush1.bf16.msra.mxu0 %v5236
        %7055 = vmatprep.subr.bf16.mxu0 %v5241
        %7056 = vmatpush1.bf16.msra.mxu0 %v5240
        %7057 = vmatprep.subr.bf16.mxu0 %v5245
        %7058 = vmatpush1.bf16.msra.mxu0 %v5244
        %7059 = vmatprep.subr.bf16.mxu0 %v5249
        %7060 = vmatpush1.bf16.msra.mxu0 %v5248
        %7061 = vmatprep.mubr.bf16.mxu0 %v1457
        %7062 = vmatmul.mubr.bf16.gmra.mrb[0].mxu0 %v1455
        %v7063 = vpop.f32.mrb[0].mxu0
        %v7064 = vadd.f32 %v7023, %v7063
        %v7065 = vpop.f32.mrb[0].mxu0
        %v7066 = vadd.f32 %v7025, %v7065
        %v7067 = vpop.f32.mrb[0].mxu0
        %v7068 = vpop.f32.mrb[0].mxu0
        %7069 = vdwg.mxu0
        %7070 = vmatprep.subr.bf16.mxu0 %v5253
        %7071 = vmatpush1.bf16.msra.mxu0 %v5252
        %7072 = vmatprep.subr.bf16.mxu0 %v5257
        %7073 = vmatpush1.bf16.msra.mxu0 %v5256
        %7074 = vmatprep.subr.bf16.mxu0 %v5261
        %7075 = vmatpush1.bf16.msra.mxu0 %v5260
        %7076 = vmatprep.subr.bf16.mxu0 %v5265
        %7077 = vmatpush1.bf16.msra.mxu0 %v5264
        %7078 = vmatprep.subr.bf16.mxu0 %v5269
        %7079 = vmatpush1.bf16.msra.mxu0 %v5268
        %7080 = vmatprep.subr.bf16.mxu0 %v5273
        %7081 = vmatpush1.bf16.msra.mxu0 %v5272
        %7082 = vmatprep.subr.bf16.mxu0 %v5277
        %7083 = vmatpush1.bf16.msra.mxu0 %v5276
        %7084 = vmatprep.subr.bf16.mxu0 %v5281
        %7085 = vmatpush1.bf16.msra.mxu0 %v5280
        %7086 = vmatprep.subr.bf16.mxu0 %v5285
        %7087 = vmatpush1.bf16.msra.mxu0 %v5284
        %7088 = vmatprep.subr.bf16.mxu0 %v5289
        %7089 = vmatpush1.bf16.msra.mxu0 %v5288
        %7090 = vmatprep.subr.bf16.mxu0 %v5293
        %7091 = vmatpush1.bf16.msra.mxu0 %v5292
        %7092 = vmatprep.subr.bf16.mxu0 %v5297
        %7093 = vmatpush1.bf16.msra.mxu0 %v5296
        %7094 = vmatprep.subr.bf16.mxu0 %v5301
        %7095 = vmatpush1.bf16.msra.mxu0 %v5300
        %7096 = vmatprep.subr.bf16.mxu0 %v5305
        %7097 = vmatpush1.bf16.msra.mxu0 %v5304
        %7098 = vmatprep.subr.bf16.mxu0 %v5309
        %7099 = vmatpush1.bf16.msra.mxu0 %v5308
        %7100 = vmatprep.subr.bf16.mxu0 %v5313
        %7101 = vmatpush1.bf16.msra.mxu0 %v5312
        %7102 = vmatprep.mubr.bf16.mxu0 %v1454
        %7103 = vmatmul.mubr.bf16.gmra.mrb[0].mxu0 %v1440
        %v7104 = vpop.f32.mrb[0].mxu0
        %v7105 = vadd.f32 %v7064, %v7104
        %v7106 = vpop.f32.mrb[0].mxu0
        %v7107 = vadd.f32 %v7066, %v7106
        %v7108 = vpop.f32.mrb[0].mxu0
        %v7109 = vpop.f32.mrb[0].mxu0
        %7110 = vdwg.mxu0
        %7111 = vmatprep.subr.bf16.mxu0 %v5317
        %7112 = vmatpush1.bf16.msra.mxu0 %v5316
        %7113 = vmatprep.subr.bf16.mxu0 %v5321
        %7114 = vmatpush1.bf16.msra.mxu0 %v5320
        %7115 = vmatprep.subr.bf16.mxu0 %v5325
        %7116 = vmatpush1.bf16.msra.mxu0 %v5324
        %7117 = vmatprep.subr.bf16.mxu0 %v5329
        %7118 = vmatpush1.bf16.msra.mxu0 %v5328
        %7119 = vmatprep.subr.bf16.mxu0 %v5333
        %7120 = vmatpush1.bf16.msra.mxu0 %v5332
        %7121 = vmatprep.subr.bf16.mxu0 %v5337
        %7122 = vmatpush1.bf16.msra.mxu0 %v5336
        %7123 = vmatprep.subr.bf16.mxu0 %v5341
        %7124 = vmatpush1.bf16.msra.mxu0 %v5340
        %7125 = vmatprep.subr.bf16.mxu0 %v5345
        %7126 = vmatpush1.bf16.msra.mxu0 %v5344
        %7127 = vmatprep.subr.bf16.mxu0 %v5349
        %7128 = vmatpush1.bf16.msra.mxu0 %v5348
        %7129 = vmatprep.subr.bf16.mxu0 %v5353
        %7130 = vmatpush1.bf16.msra.mxu0 %v5352
        %7131 = vmatprep.subr.bf16.mxu0 %v5357
        %7132 = vmatpush1.bf16.msra.mxu0 %v5356
        %7133 = vmatprep.subr.bf16.mxu0 %v5361
        %7134 = vmatpush1.bf16.msra.mxu0 %v5360
        %7135 = vmatprep.subr.bf16.mxu0 %v5365
        %7136 = vmatpush1.bf16.msra.mxu0 %v5364
        %7137 = vmatprep.subr.bf16.mxu0 %v5369
        %7138 = vmatpush1.bf16.msra.mxu0 %v5368
        %7139 = vmatprep.subr.bf16.mxu0 %v5373
        %7140 = vmatpush1.bf16.msra.mxu0 %v5372
        %7141 = vmatprep.subr.bf16.mxu0 %v5377
        %7142 = vmatpush1.bf16.msra.mxu0 %v5376
        %7143 = vmatprep.mubr.bf16.mxu0 %v1458
        %7144 = vmatmul.mubr.bf16.gmra.mrb[0].mxu0 %v1456
        %v7145 = vpop.f32.mrb[0].mxu0
        %v7146 = vadd.f32 %v7105, %v7145
        %v7147 = vpop.f32.mrb[0].mxu0
        %v7148 = vadd.f32 %v7107, %v7147
        %v7149 = vpop.f32.mrb[0].mxu0
        %v7150 = vpop.f32.mrb[0].mxu0
        %7151 = vdwg.mxu0
        %7152 = vmatprep.subr.bf16.mxu0 %v5381
        %7153 = vmatpush1.bf16.msra.mxu0 %v5380
        %7154 = vmatprep.subr.bf16.mxu0 %v5385
        %7155 = vmatpush1.bf16.msra.mxu0 %v5384
        %7156 = vmatprep.subr.bf16.mxu0 %v5389
        %7157 = vmatpush1.bf16.msra.mxu0 %v5388
        %7158 = vmatprep.subr.bf16.mxu0 %v5393
        %7159 = vmatpush1.bf16.msra.mxu0 %v5392
        %7160 = vmatprep.subr.bf16.mxu0 %v5397
        %7161 = vmatpush1.bf16.msra.mxu0 %v5396
        %7162 = vmatprep.subr.bf16.mxu0 %v5401
        %7163 = vmatpush1.bf16.msra.mxu0 %v5400
        %7164 = vmatprep.subr.bf16.mxu0 %v5405
        %7165 = vmatpush1.bf16.msra.mxu0 %v5404
        %7166 = vmatprep.subr.bf16.mxu0 %v5409
        %7167 = vmatpush1.bf16.msra.mxu0 %v5408
        %7168 = vmatprep.subr.bf16.mxu0 %v5413
        %7169 = vmatpush1.bf16.msra.mxu0 %v5412
        %7170 = vmatprep.subr.bf16.mxu0 %v5417
        %7171 = vmatpush1.bf16.msra.mxu0 %v5416
        %7172 = vmatprep.subr.bf16.mxu0 %v5421
        %7173 = vmatpush1.bf16.msra.mxu0 %v5420
        %7174 = vmatprep.subr.bf16.mxu0 %v5425
        %7175 = vmatpush1.bf16.msra.mxu0 %v5424
        %7176 = vmatprep.subr.bf16.mxu0 %v5429
        %7177 = vmatpush1.bf16.msra.mxu0 %v5428
        %7178 = vmatprep.subr.bf16.mxu0 %v5433
        %7179 = vmatpush1.bf16.msra.mxu0 %v5432
        %7180 = vmatprep.subr.bf16.mxu0 %v5437
        %7181 = vmatpush1.bf16.msra.mxu0 %v5436
        %7182 = vmatprep.subr.bf16.mxu0 %v5441
        %7183 = vmatpush1.bf16.msra.mxu0 %v5440
        %7184 = vmatprep.mubr.bf16.mxu0 %v1496
        %7185 = vmatmul.mubr.bf16.gmra.mrb[0].mxu0 %v1482
        %v7186 = vpop.f32.mrb[0].mxu0
        %v7187 = vadd.f32 %v7146, %v7186
        %v7188 = vpop.f32.mrb[0].mxu0
        %v7189 = vadd.f32 %v7148, %v7188
        %v7190 = vpop.f32.mrb[0].mxu0
        %v7191 = vpop.f32.mrb[0].mxu0
        %7192 = vdwg.mxu0
        %7193 = vmatprep.subr.bf16.mxu0 %v5445
        %7194 = vmatpush1.bf16.msra.mxu0 %v5444
        %7195 = vmatprep.subr.bf16.mxu0 %v5449
        %7196 = vmatpush1.bf16.msra.mxu0 %v5448
        %7197 = vmatprep.subr.bf16.mxu0 %v5453
        %7198 = vmatpush1.bf16.msra.mxu0 %v5452
        %7199 = vmatprep.subr.bf16.mxu0 %v5457
        %7200 = vmatpush1.bf16.msra.mxu0 %v5456
        %7201 = vmatprep.subr.bf16.mxu0 %v5461
        %7202 = vmatpush1.bf16.msra.mxu0 %v5460
        %7203 = vmatprep.subr.bf16.mxu0 %v5465
        %7204 = vmatpush1.bf16.msra.mxu0 %v5464
        %7205 = vmatprep.subr.bf16.mxu0 %v5469
        %7206 = vmatpush1.bf16.msra.mxu0 %v5468
        %7207 = vmatprep.subr.bf16.mxu0 %v5473
        %7208 = vmatpush1.bf16.msra.mxu0 %v5472
        %7209 = vmatprep.subr.bf16.mxu0 %v5477
        %7210 = vmatpush1.bf16.msra.mxu0 %v5476
        %7211 = vmatprep.subr.bf16.mxu0 %v5481
        %7212 = vmatpush1.bf16.msra.mxu0 %v5480
        %7213 = vmatprep.subr.bf16.mxu0 %v5485
        %7214 = vmatpush1.bf16.msra.mxu0 %v5484
        %7215 = vmatprep.subr.bf16.mxu0 %v5489
        %7216 = vmatpush1.bf16.msra.mxu0 %v5488
        %7217 = vmatprep.subr.bf16.mxu0 %v5493
        %7218 = vmatpush1.bf16.msra.mxu0 %v5492
        %7219 = vmatprep.subr.bf16.mxu0 %v5497
        %7220 = vmatpush1.bf16.msra.mxu0 %v5496
        %7221 = vmatprep.subr.bf16.mxu0 %v5501
        %7222 = vmatpush1.bf16.msra.mxu0 %v5500
        %7223 = vmatprep.subr.bf16.mxu0 %v5505
        %7224 = vmatpush1.bf16.msra.mxu0 %v5504
        %7225 = vmatprep.mubr.bf16.mxu0 %v1506
        %7226 = vmatmul.mubr.bf16.gmra.mrb[0].mxu0 %v1504
        %v7227 = vpop.f32.mrb[0].mxu0
        %v7228 = vadd.f32 %v7187, %v7227
        %v7229 = vpop.f32.mrb[0].mxu0
        %v7230 = vadd.f32 %v7189, %v7229
        %v7231 = vpop.f32.mrb[0].mxu0
        %v7232 = vpop.f32.mrb[0].mxu0
        %7233 = vdwg.mxu0
        %7234 = vmatprep.subr.bf16.mxu0 %v5509
        %7235 = vmatpush1.bf16.msra.mxu0 %v5508
        %7236 = vmatprep.subr.bf16.mxu0 %v5513
        %7237 = vmatpush1.bf16.msra.mxu0 %v5512
        %7238 = vmatprep.subr.bf16.mxu0 %v5517
        %7239 = vmatpush1.bf16.msra.mxu0 %v5516
        %7240 = vmatprep.subr.bf16.mxu0 %v5521
        %7241 = vmatpush1.bf16.msra.mxu0 %v5520
        %7242 = vmatprep.subr.bf16.mxu0 %v5525
        %7243 = vmatpush1.bf16.msra.mxu0 %v5524
        %7244 = vmatprep.subr.bf16.mxu0 %v5529
        %7245 = vmatpush1.bf16.msra.mxu0 %v5528
        %7246 = vmatprep.subr.bf16.mxu0 %v5533
        %7247 = vmatpush1.bf16.msra.mxu0 %v5532
        %7248 = vmatprep.subr.bf16.mxu0 %v5537
        %7249 = vmatpush1.bf16.msra.mxu0 %v5536
        %7250 = vmatprep.subr.bf16.mxu0 %v5541
        %7251 = vmatpush1.bf16.msra.mxu0 %v5540
        %7252 = vmatprep.subr.bf16.mxu0 %v5545
        %7253 = vmatpush1.bf16.msra.mxu0 %v5544
        %7254 = vmatprep.subr.bf16.mxu0 %v5549
        %7255 = vmatpush1.bf16.msra.mxu0 %v5548
        %7256 = vmatprep.subr.bf16.mxu0 %v5553
        %7257 = vmatpush1.bf16.msra.mxu0 %v5552
        %7258 = vmatprep.subr.bf16.mxu0 %v5557
        %7259 = vmatpush1.bf16.msra.mxu0 %v5556
        %7260 = vmatprep.subr.bf16.mxu0 %v5561
        %7261 = vmatpush1.bf16.msra.mxu0 %v5560
        %7262 = vmatprep.subr.bf16.mxu0 %v5565
        %7263 = vmatpush1.bf16.msra.mxu0 %v5564
        %7264 = vmatprep.subr.bf16.mxu0 %v5569
        %7265 = vmatpush1.bf16.msra.mxu0 %v5568
        %7266 = vmatprep.mubr.bf16.mxu0 %v1503
        %7267 = vmatmul.mubr.bf16.gmra.mrb[0].mxu0 %v1489
        %v7268 = vpop.f32.mrb[0].mxu0
        %v7269 = vadd.f32 %v7228, %v7268
        %v7270 = vpop.f32.mrb[0].mxu0
        %v7271 = vadd.f32 %v7230, %v7270
        %v7272 = vpop.f32.mrb[0].mxu0
        %v7273 = vpop.f32.mrb[0].mxu0
        %7274 = vdwg.mxu0
        %7275 = vmatprep.subr.bf16.mxu0 %v5573
        %7276 = vmatpush1.bf16.msra.mxu0 %v5572
        %7277 = vmatprep.subr.bf16.mxu0 %v5577
        %7278 = vmatpush1.bf16.msra.mxu0 %v5576
        %7279 = vmatprep.subr.bf16.mxu0 %v5581
        %7280 = vmatpush1.bf16.msra.mxu0 %v5580
        %7281 = vmatprep.subr.bf16.mxu0 %v5585
        %7282 = vmatpush1.bf16.msra.mxu0 %v5584
        %7283 = vmatprep.subr.bf16.mxu0 %v5589
        %7284 = vmatpush1.bf16.msra.mxu0 %v5588
        %7285 = vmatprep.subr.bf16.mxu0 %v5593
        %7286 = vmatpush1.bf16.msra.mxu0 %v5592
        %7287 = vmatprep.subr.bf16.mxu0 %v5597
        %7288 = vmatpush1.bf16.msra.mxu0 %v5596
        %7289 = vmatprep.subr.bf16.mxu0 %v5601
        %7290 = vmatpush1.bf16.msra.mxu0 %v5600
        %7291 = vmatprep.subr.bf16.mxu0 %v5605
        %7292 = vmatpush1.bf16.msra.mxu0 %v5604
        %7293 = vmatprep.subr.bf16.mxu0 %v5609
        %7294 = vmatpush1.bf16.msra.mxu0 %v5608
        %7295 = vmatprep.subr.bf16.mxu0 %v5613
        %7296 = vmatpush1.bf16.msra.mxu0 %v5612
        %7297 = vmatprep.subr.bf16.mxu0 %v5617
        %7298 = vmatpush1.bf16.msra.mxu0 %v5616
        %7299 = vmatprep.subr.bf16.mxu0 %v5621
        %7300 = vmatpush1.bf16.msra.mxu0 %v5620
        %7301 = vmatprep.subr.bf16.mxu0 %v5625
        %7302 = vmatpush1.bf16.msra.mxu0 %v5624
        %7303 = vmatprep.subr.bf16.mxu0 %v5629
        %7304 = vmatpush1.bf16.msra.mxu0 %v5628
        %7305 = vmatprep.subr.bf16.mxu0 %v5633
        %7306 = vmatpush1.bf16.msra.mxu0 %v5632
        %7307 = vmatprep.mubr.bf16.mxu0 %v1507
        %7308 = vmatmul.mubr.bf16.gmra.mrb[0].mxu0 %v1505
        %v7309 = vpop.f32.mrb[0].mxu0
        %v7310 = vadd.f32 %v7269, %v7309
        %v7311 = vpop.f32.mrb[0].mxu0
        %v7312 = vadd.f32 %v7271, %v7311
        %v7313 = vpop.f32.mrb[0].mxu0
        %v7314 = vpop.f32.mrb[0].mxu0
        %7315 = vdwg.mxu0
        %7316 = vmatprep.subr.bf16.mxu0 %v4615
        %7317 = vmatpush1.bf16.msra.mxu0 %v4614
        %7318 = vmatprep.subr.bf16.mxu0 %v4619
        %7319 = vmatpush1.bf16.msra.mxu0 %v4618
        %7320 = vmatprep.subr.bf16.mxu0 %v4623
        %7321 = vmatpush1.bf16.msra.mxu0 %v4622
        %7322 = vmatprep.subr.bf16.mxu0 %v4627
        %7323 = vmatpush1.bf16.msra.mxu0 %v4626
        %7324 = vmatprep.subr.bf16.mxu0 %v4631
        %7325 = vmatpush1.bf16.msra.mxu0 %v4630
        %7326 = vmatprep.subr.bf16.mxu0 %v4635
        %7327 = vmatpush1.bf16.msra.mxu0 %v4634
        %7328 = vmatprep.subr.bf16.mxu0 %v4639
        %7329 = vmatpush1.bf16.msra.mxu0 %v4638
        %7330 = vmatprep.subr.bf16.mxu0 %v4643
        %7331 = vmatpush1.bf16.msra.mxu0 %v4642
        %7332 = vmatprep.subr.bf16.mxu0 %v4647
        %7333 = vmatpush1.bf16.msra.mxu0 %v4646
        %7334 = vmatprep.subr.bf16.mxu0 %v4651
        %7335 = vmatpush1.bf16.msra.mxu0 %v4650
        %7336 = vmatprep.subr.bf16.mxu0 %v4655
        %7337 = vmatpush1.bf16.msra.mxu0 %v4654
        %7338 = vmatprep.subr.bf16.mxu0 %v4659
        %7339 = vmatpush1.bf16.msra.mxu0 %v4658
        %7340 = vmatprep.subr.bf16.mxu0 %v4663
        %7341 = vmatpush1.bf16.msra.mxu0 %v4662
        %7342 = vmatprep.subr.bf16.mxu0 %v4667
        %7343 = vmatpush1.bf16.msra.mxu0 %v4666
        %7344 = vmatprep.subr.bf16.mxu0 %v4671
        %7345 = vmatpush1.bf16.msra.mxu0 %v4670
        %7346 = vmatprep.subr.bf16.mxu0 %v4675
        %7347 = vmatpush1.bf16.msra.mxu0 %v4674
        %7348 = vmatprep.mubr.bf16.mxu0 %v1349
        %7349 = vmatmul.mubr.bf16.gmra.mrb[0].mxu0 %v1335
        %v7350 = vpop.f32.mrb[0].mxu0
        %v7351 = vadd.f32 0.0, %v7350
        %v7352 = vpop.f32.mrb[0].mxu0
        %v7353 = vadd.f32 0.0, %v7352
        %v7354 = vpop.f32.mrb[0].mxu0
        %v7355 = vpop.f32.mrb[0].mxu0
        %7356 = vdwg.mxu0
        %7357 = vmatprep.subr.bf16.mxu0 %v4679
        %7358 = vmatpush1.bf16.msra.mxu0 %v4678
        %7359 = vmatprep.subr.bf16.mxu0 %v4683
        %7360 = vmatpush1.bf16.msra.mxu0 %v4682
        %7361 = vmatprep.subr.bf16.mxu0 %v4687
        %7362 = vmatpush1.bf16.msra.mxu0 %v4686
        %7363 = vmatprep.subr.bf16.mxu0 %v4691
        %7364 = vmatpush1.bf16.msra.mxu0 %v4690
        %7365 = vmatprep.subr.bf16.mxu0 %v4695
        %7366 = vmatpush1.bf16.msra.mxu0 %v4694
        %7367 = vmatprep.subr.bf16.mxu0 %v4699
        %7368 = vmatpush1.bf16.msra.mxu0 %v4698
        %7369 = vmatprep.subr.bf16.mxu0 %v4703
        %7370 = vmatpush1.bf16.msra.mxu0 %v4702
        %7371 = vmatprep.subr.bf16.mxu0 %v4707
        %7372 = vmatpush1.bf16.msra.mxu0 %v4706
        %7373 = vmatprep.subr.bf16.mxu0 %v4711
        %7374 = vmatpush1.bf16.msra.mxu0 %v4710
        %7375 = vmatprep.subr.bf16.mxu0 %v4715
        %7376 = vmatpush1.bf16.msra.mxu0 %v4714
        %7377 = vmatprep.subr.bf16.mxu0 %v4719
        %7378 = vmatpush1.bf16.msra.mxu0 %v4718
        %7379 = vmatprep.subr.bf16.mxu0 %v4723
        %7380 = vmatpush1.bf16.msra.mxu0 %v4722
        %7381 = vmatprep.subr.bf16.mxu0 %v4727
        %7382 = vmatpush1.bf16.msra.mxu0 %v4726
        %7383 = vmatprep.subr.bf16.mxu0 %v4731
        %7384 = vmatpush1.bf16.msra.mxu0 %v4730
        %7385 = vmatprep.subr.bf16.mxu0 %v4735
        %7386 = vmatpush1.bf16.msra.mxu0 %v4734
        %7387 = vmatprep.subr.bf16.mxu0 %v4739
        %7388 = vmatpush1.bf16.msra.mxu0 %v4738
        %7389 = vmatprep.mubr.bf16.mxu0 %v1359
        %7390 = vmatmul.mubr.bf16.gmra.mrb[0].mxu0 %v1357
        %v7391 = vpop.f32.mrb[0].mxu0
        %v7392 = vadd.f32 %v7351, %v7391
        %v7393 = vpop.f32.mrb[0].mxu0
        %v7394 = vadd.f32 %v7353, %v7393
        %v7395 = vpop.f32.mrb[0].mxu0
        %v7396 = vpop.f32.mrb[0].mxu0
        %7397 = vdwg.mxu0
        %7398 = vmatprep.subr.bf16.mxu0 %v4743
        %7399 = vmatpush1.bf16.msra.mxu0 %v4742
        %7400 = vmatprep.subr.bf16.mxu0 %v4747
        %7401 = vmatpush1.bf16.msra.mxu0 %v4746
        %7402 = vmatprep.subr.bf16.mxu0 %v4751
        %7403 = vmatpush1.bf16.msra.mxu0 %v4750
        %7404 = vmatprep.subr.bf16.mxu0 %v4755
        %7405 = vmatpush1.bf16.msra.mxu0 %v4754
        %7406 = vmatprep.subr.bf16.mxu0 %v4759
        %7407 = vmatpush1.bf16.msra.mxu0 %v4758
        %7408 = vmatprep.subr.bf16.mxu0 %v4763
        %7409 = vmatpush1.bf16.msra.mxu0 %v4762
        %7410 = vmatprep.subr.bf16.mxu0 %v4767
        %7411 = vmatpush1.bf16.msra.mxu0 %v4766
        %7412 = vmatprep.subr.bf16.mxu0 %v4771
        %7413 = vmatpush1.bf16.msra.mxu0 %v4770
        %7414 = vmatprep.subr.bf16.mxu0 %v4775
        %7415 = vmatpush1.bf16.msra.mxu0 %v4774
        %7416 = vmatprep.subr.bf16.mxu0 %v4779
        %7417 = vmatpush1.bf16.msra.mxu0 %v4778
        %7418 = vmatprep.subr.bf16.mxu0 %v4783
        %7419 = vmatpush1.bf16.msra.mxu0 %v4782
        %7420 = vmatprep.subr.bf16.mxu0 %v4787
        %7421 = vmatpush1.bf16.msra.mxu0 %v4786
        %7422 = vmatprep.subr.bf16.mxu0 %v4791
        %7423 = vmatpush1.bf16.msra.mxu0 %v4790
        %7424 = vmatprep.subr.bf16.mxu0 %v4795
        %7425 = vmatpush1.bf16.msra.mxu0 %v4794
        %7426 = vmatprep.subr.bf16.mxu0 %v4799
        %7427 = vmatpush1.bf16.msra.mxu0 %v4798
        %7428 = vmatprep.subr.bf16.mxu0 %v4803
        %7429 = vmatpush1.bf16.msra.mxu0 %v4802
        %7430 = vmatprep.mubr.bf16.mxu0 %v1356
        %7431 = vmatmul.mubr.bf16.gmra.mrb[0].mxu0 %v1342
        %v7432 = vpop.f32.mrb[0].mxu0
        %v7433 = vadd.f32 %v7392, %v7432
        %v7434 = vpop.f32.mrb[0].mxu0
        %v7435 = vadd.f32 %v7394, %v7434
        %v7436 = vpop.f32.mrb[0].mxu0
        %v7437 = vpop.f32.mrb[0].mxu0
        %7438 = vdwg.mxu0
        %7439 = vmatprep.subr.bf16.mxu0 %v4807
        %7440 = vmatpush1.bf16.msra.mxu0 %v4806
        %7441 = vmatprep.subr.bf16.mxu0 %v4811
        %7442 = vmatpush1.bf16.msra.mxu0 %v4810
        %7443 = vmatprep.subr.bf16.mxu0 %v4815
        %7444 = vmatpush1.bf16.msra.mxu0 %v4814
        %7445 = vmatprep.subr.bf16.mxu0 %v4819
        %7446 = vmatpush1.bf16.msra.mxu0 %v4818
        %7447 = vmatprep.subr.bf16.mxu0 %v4823
        %7448 = vmatpush1.bf16.msra.mxu0 %v4822
        %7449 = vmatprep.subr.bf16.mxu0 %v4827
        %7450 = vmatpush1.bf16.msra.mxu0 %v4826
        %7451 = vmatprep.subr.bf16.mxu0 %v4831
        %7452 = vmatpush1.bf16.msra.mxu0 %v4830
        %7453 = vmatprep.subr.bf16.mxu0 %v4835
        %7454 = vmatpush1.bf16.msra.mxu0 %v4834
        %7455 = vmatprep.subr.bf16.mxu0 %v4839
        %7456 = vmatpush1.bf16.msra.mxu0 %v4838
        %7457 = vmatprep.subr.bf16.mxu0 %v4843
        %7458 = vmatpush1.bf16.msra.mxu0 %v4842
        %7459 = vmatprep.subr.bf16.mxu0 %v4847
        %7460 = vmatpush1.bf16.msra.mxu0 %v4846
        %7461 = vmatprep.subr.bf16.mxu0 %v4851
        %7462 = vmatpush1.bf16.msra.mxu0 %v4850
        %7463 = vmatprep.subr.bf16.mxu0 %v4855
        %7464 = vmatpush1.bf16.msra.mxu0 %v4854
        %7465 = vmatprep.subr.bf16.mxu0 %v4859
        %7466 = vmatpush1.bf16.msra.mxu0 %v4858
        %7467 = vmatprep.subr.bf16.mxu0 %v4863
        %7468 = vmatpush1.bf16.msra.mxu0 %v4862
        %7469 = vmatprep.subr.bf16.mxu0 %v4867
        %7470 = vmatpush1.bf16.msra.mxu0 %v4866
        %7471 = vmatprep.mubr.bf16.mxu0 %v1360
        %7472 = vmatmul.mubr.bf16.gmra.mrb[0].mxu0 %v1358
        %v7473 = vpop.f32.mrb[0].mxu0
        %v7474 = vadd.f32 %v7433, %v7473
        %v7475 = vpop.f32.mrb[0].mxu0
        %v7476 = vadd.f32 %v7435, %v7475
        %v7477 = vpop.f32.mrb[0].mxu0
        %v7478 = vpop.f32.mrb[0].mxu0
        %7479 = vdwg.mxu0
        %7480 = vmatprep.subr.bf16.mxu0 %v4871
        %7481 = vmatpush1.bf16.msra.mxu0 %v4870
        %7482 = vmatprep.subr.bf16.mxu0 %v4875
        %7483 = vmatpush1.bf16.msra.mxu0 %v4874
        %7484 = vmatprep.subr.bf16.mxu0 %v4879
        %7485 = vmatpush1.bf16.msra.mxu0 %v4878
        %7486 = vmatprep.subr.bf16.mxu0 %v4883
        %7487 = vmatpush1.bf16.msra.mxu0 %v4882
        %7488 = vmatprep.subr.bf16.mxu0 %v4887
        %7489 = vmatpush1.bf16.msra.mxu0 %v4886
        %7490 = vmatprep.subr.bf16.mxu0 %v4891
        %7491 = vmatpush1.bf16.msra.mxu0 %v4890
        %7492 = vmatprep.subr.bf16.mxu0 %v4895
        %7493 = vmatpush1.bf16.msra.mxu0 %v4894
        %7494 = vmatprep.subr.bf16.mxu0 %v4899
        %7495 = vmatpush1.bf16.msra.mxu0 %v4898
        %7496 = vmatprep.subr.bf16.mxu0 %v4903
        %7497 = vmatpush1.bf16.msra.mxu0 %v4902
        %7498 = vmatprep.subr.bf16.mxu0 %v4907
        %7499 = vmatpush1.bf16.msra.mxu0 %v4906
        %7500 = vmatprep.subr.bf16.mxu0 %v4911
        %7501 = vmatpush1.bf16.msra.mxu0 %v4910
        %7502 = vmatprep.subr.bf16.mxu0 %v4915
        %7503 = vmatpush1.bf16.msra.mxu0 %v4914
        %7504 = vmatprep.subr.bf16.mxu0 %v4919
        %7505 = vmatpush1.bf16.msra.mxu0 %v4918
        %7506 = vmatprep.subr.bf16.mxu0 %v4923
        %7507 = vmatpush1.bf16.msra.mxu0 %v4922
        %7508 = vmatprep.subr.bf16.mxu0 %v4927
        %7509 = vmatpush1.bf16.msra.mxu0 %v4926
        %7510 = vmatprep.subr.bf16.mxu0 %v4931
        %7511 = vmatpush1.bf16.msra.mxu0 %v4930
        %7512 = vmatprep.mubr.bf16.mxu0 %v1398
        %7513 = vmatmul.mubr.bf16.gmra.mrb[0].mxu0 %v1384
        %v7514 = vpop.f32.mrb[0].mxu0
        %v7515 = vadd.f32 %v7474, %v7514
        %v7516 = vpop.f32.mrb[0].mxu0
        %v7517 = vadd.f32 %v7476, %v7516
        %v7518 = vpop.f32.mrb[0].mxu0
        %v7519 = vpop.f32.mrb[0].mxu0
        %7520 = vdwg.mxu0
        %7521 = vmatprep.subr.bf16.mxu0 %v4935
        %7522 = vmatpush1.bf16.msra.mxu0 %v4934
        %7523 = vmatprep.subr.bf16.mxu0 %v4939
        %7524 = vmatpush1.bf16.msra.mxu0 %v4938
        %7525 = vmatprep.subr.bf16.mxu0 %v4943
        %7526 = vmatpush1.bf16.msra.mxu0 %v4942
        %7527 = vmatprep.subr.bf16.mxu0 %v4947
        %7528 = vmatpush1.bf16.msra.mxu0 %v4946
        %7529 = vmatprep.subr.bf16.mxu0 %v4951
        %7530 = vmatpush1.bf16.msra.mxu0 %v4950
        %7531 = vmatprep.subr.bf16.mxu0 %v4955
        %7532 = vmatpush1.bf16.msra.mxu0 %v4954
        %7533 = vmatprep.subr.bf16.mxu0 %v4959
        %7534 = vmatpush1.bf16.msra.mxu0 %v4958
        %7535 = vmatprep.subr.bf16.mxu0 %v4963
        %7536 = vmatpush1.bf16.msra.mxu0 %v4962
        %7537 = vmatprep.subr.bf16.mxu0 %v4967
        %7538 = vmatpush1.bf16.msra.mxu0 %v4966
        %7539 = vmatprep.subr.bf16.mxu0 %v4971
        %7540 = vmatpush1.bf16.msra.mxu0 %v4970
        %7541 = vmatprep.subr.bf16.mxu0 %v4975
        %7542 = vmatpush1.bf16.msra.mxu0 %v4974
        %7543 = vmatprep.subr.bf16.mxu0 %v4979
        %7544 = vmatpush1.bf16.msra.mxu0 %v4978
        %7545 = vmatprep.subr.bf16.mxu0 %v4983
        %7546 = vmatpush1.bf16.msra.mxu0 %v4982
        %7547 = vmatprep.subr.bf16.mxu0 %v4987
        %7548 = vmatpush1.bf16.msra.mxu0 %v4986
        %7549 = vmatprep.subr.bf16.mxu0 %v4991
        %7550 = vmatpush1.bf16.msra.mxu0 %v4990
        %7551 = vmatprep.subr.bf16.mxu0 %v4995
        %7552 = vmatpush1.bf16.msra.mxu0 %v4994
        %7553 = vmatprep.mubr.bf16.mxu0 %v1408
        %7554 = vmatmul.mubr.bf16.gmra.mrb[0].mxu0 %v1406
        %v7555 = vpop.f32.mrb[0].mxu0
        %v7556 = vadd.f32 %v7515, %v7555
        %v7557 = vpop.f32.mrb[0].mxu0
        %v7558 = vadd.f32 %v7517, %v7557
        %v7559 = vpop.f32.mrb[0].mxu0
        %v7560 = vpop.f32.mrb[0].mxu0
        %7561 = vdwg.mxu0
        %7562 = vmatprep.subr.bf16.mxu0 %v4999
        %7563 = vmatpush1.bf16.msra.mxu0 %v4998
        %7564 = vmatprep.subr.bf16.mxu0 %v5003
        %7565 = vmatpush1.bf16.msra.mxu0 %v5002
        %7566 = vmatprep.subr.bf16.mxu0 %v5007
        %7567 = vmatpush1.bf16.msra.mxu0 %v5006
        %7568 = vmatprep.subr.bf16.mxu0 %v5011
        %7569 = vmatpush1.bf16.msra.mxu0 %v5010
        %7570 = vmatprep.subr.bf16.mxu0 %v5015
        %7571 = vmatpush1.bf16.msra.mxu0 %v5014
        %7572 = vmatprep.subr.bf16.mxu0 %v5019
        %7573 = vmatpush1.bf16.msra.mxu0 %v5018
        %7574 = vmatprep.subr.bf16.mxu0 %v5023
        %7575 = vmatpush1.bf16.msra.mxu0 %v5022
        %7576 = vmatprep.subr.bf16.mxu0 %v5027
        %7577 = vmatpush1.bf16.msra.mxu0 %v5026
        %7578 = vmatprep.subr.bf16.mxu0 %v5031
        %7579 = vmatpush1.bf16.msra.mxu0 %v5030
        %7580 = vmatprep.subr.bf16.mxu0 %v5035
        %7581 = vmatpush1.bf16.msra.mxu0 %v5034
        %7582 = vmatprep.subr.bf16.mxu0 %v5039
        %7583 = vmatpush1.bf16.msra.mxu0 %v5038
        %7584 = vmatprep.subr.bf16.mxu0 %v5043
        %7585 = vmatpush1.bf16.msra.mxu0 %v5042
        %7586 = vmatprep.subr.bf16.mxu0 %v5047
        %7587 = vmatpush1.bf16.msra.mxu0 %v5046
        %7588 = vmatprep.subr.bf16.mxu0 %v5051
        %7589 = vmatpush1.bf16.msra.mxu0 %v5050
        %7590 = vmatprep.subr.bf16.mxu0 %v5055
        %7591 = vmatpush1.bf16.msra.mxu0 %v5054
        %7592 = vmatprep.subr.bf16.mxu0 %v5059
        %7593 = vmatpush1.bf16.msra.mxu0 %v5058
        %7594 = vmatprep.mubr.bf16.mxu0 %v1405
        %7595 = vmatmul.mubr.bf16.gmra.mrb[0].mxu0 %v1391
        %v7596 = vpop.f32.mrb[0].mxu0
        %v7597 = vadd.f32 %v7556, %v7596
        %v7598 = vpop.f32.mrb[0].mxu0
        %v7599 = vadd.f32 %v7558, %v7598
        %v7600 = vpop.f32.mrb[0].mxu0
        %v7601 = vpop.f32.mrb[0].mxu0
        %7602 = vdwg.mxu0
        %7603 = vmatprep.subr.bf16.mxu0 %v5063
        %7604 = vmatpush1.bf16.msra.mxu0 %v5062
        %7605 = vmatprep.subr.bf16.mxu0 %v5067
        %7606 = vmatpush1.bf16.msra.mxu0 %v5066
        %7607 = vmatprep.subr.bf16.mxu0 %v5071
        %7608 = vmatpush1.bf16.msra.mxu0 %v5070
        %7609 = vmatprep.subr.bf16.mxu0 %v5075
        %7610 = vmatpush1.bf16.msra.mxu0 %v5074
        %7611 = vmatprep.subr.bf16.mxu0 %v5079
        %7612 = vmatpush1.bf16.msra.mxu0 %v5078
        %7613 = vmatprep.subr.bf16.mxu0 %v5083
        %7614 = vmatpush1.bf16.msra.mxu0 %v5082
        %7615 = vmatprep.subr.bf16.mxu0 %v5087
        %7616 = vmatpush1.bf16.msra.mxu0 %v5086
        %7617 = vmatprep.subr.bf16.mxu0 %v5091
        %7618 = vmatpush1.bf16.msra.mxu0 %v5090
        %7619 = vmatprep.subr.bf16.mxu0 %v5095
        %7620 = vmatpush1.bf16.msra.mxu0 %v5094
        %7621 = vmatprep.subr.bf16.mxu0 %v5099
        %7622 = vmatpush1.bf16.msra.mxu0 %v5098
        %7623 = vmatprep.subr.bf16.mxu0 %v5103
        %7624 = vmatpush1.bf16.msra.mxu0 %v5102
        %7625 = vmatprep.subr.bf16.mxu0 %v5107
        %7626 = vmatpush1.bf16.msra.mxu0 %v5106
        %7627 = vmatprep.subr.bf16.mxu0 %v5111
        %7628 = vmatpush1.bf16.msra.mxu0 %v5110
        %7629 = vmatprep.subr.bf16.mxu0 %v5115
        %7630 = vmatpush1.bf16.msra.mxu0 %v5114
        %7631 = vmatprep.subr.bf16.mxu0 %v5119
        %7632 = vmatpush1.bf16.msra.mxu0 %v5118
        %7633 = vmatprep.subr.bf16.mxu0 %v5123
        %7634 = vmatpush1.bf16.msra.mxu0 %v5122
        %7635 = vmatprep.mubr.bf16.mxu0 %v1409
        %7636 = vmatmul.mubr.bf16.gmra.mrb[0].mxu0 %v1407
        %v7637 = vpop.f32.mrb[0].mxu0
        %v7638 = vadd.f32 %v7597, %v7637
        %v7639 = vpop.f32.mrb[0].mxu0
        %v7640 = vadd.f32 %v7599, %v7639
        %v7641 = vpop.f32.mrb[0].mxu0
        %v7642 = vpop.f32.mrb[0].mxu0
        %7643 = vdwg.mxu0
        %7644 = vmatprep.subr.bf16.mxu0 %v5127
        %7645 = vmatpush1.bf16.msra.mxu0 %v5126
        %7646 = vmatprep.subr.bf16.mxu0 %v5131
        %7647 = vmatpush1.bf16.msra.mxu0 %v5130
        %7648 = vmatprep.subr.bf16.mxu0 %v5135
        %7649 = vmatpush1.bf16.msra.mxu0 %v5134
        %7650 = vmatprep.subr.bf16.mxu0 %v5139
        %7651 = vmatpush1.bf16.msra.mxu0 %v5138
        %7652 = vmatprep.subr.bf16.mxu0 %v5143
        %7653 = vmatpush1.bf16.msra.mxu0 %v5142
        %7654 = vmatprep.subr.bf16.mxu0 %v5147
        %7655 = vmatpush1.bf16.msra.mxu0 %v5146
        %7656 = vmatprep.subr.bf16.mxu0 %v5151
        %7657 = vmatpush1.bf16.msra.mxu0 %v5150
        %7658 = vmatprep.subr.bf16.mxu0 %v5155
        %7659 = vmatpush1.bf16.msra.mxu0 %v5154
        %7660 = vmatprep.subr.bf16.mxu0 %v5159
        %7661 = vmatpush1.bf16.msra.mxu0 %v5158
        %7662 = vmatprep.subr.bf16.mxu0 %v5163
        %7663 = vmatpush1.bf16.msra.mxu0 %v5162
        %7664 = vmatprep.subr.bf16.mxu0 %v5167
        %7665 = vmatpush1.bf16.msra.mxu0 %v5166
        %7666 = vmatprep.subr.bf16.mxu0 %v5171
        %7667 = vmatpush1.bf16.msra.mxu0 %v5170
        %7668 = vmatprep.subr.bf16.mxu0 %v5175
        %7669 = vmatpush1.bf16.msra.mxu0 %v5174
        %7670 = vmatprep.subr.bf16.mxu0 %v5179
        %7671 = vmatpush1.bf16.msra.mxu0 %v5178
        %7672 = vmatprep.subr.bf16.mxu0 %v5183
        %7673 = vmatpush1.bf16.msra.mxu0 %v5182
        %7674 = vmatprep.subr.bf16.mxu0 %v5187
        %7675 = vmatpush1.bf16.msra.mxu0 %v5186
        %7676 = vmatprep.mubr.bf16.mxu0 %v1447
        %7677 = vmatmul.mubr.bf16.gmra.mrb[0].mxu0 %v1433
        %v7678 = vpop.f32.mrb[0].mxu0
        %v7679 = vadd.f32 %v7638, %v7678
        %v7680 = vpop.f32.mrb[0].mxu0
        %v7681 = vadd.f32 %v7640, %v7680
        %v7682 = vpop.f32.mrb[0].mxu0
        %v7683 = vpop.f32.mrb[0].mxu0
        %7684 = vdwg.mxu0
        %7685 = vmatprep.subr.bf16.mxu0 %v5191
        %7686 = vmatpush1.bf16.msra.mxu0 %v5190
        %7687 = vmatprep.subr.bf16.mxu0 %v5195
        %7688 = vmatpush1.bf16.msra.mxu0 %v5194
        %7689 = vmatprep.subr.bf16.mxu0 %v5199
        %7690 = vmatpush1.bf16.msra.mxu0 %v5198
        %7691 = vmatprep.subr.bf16.mxu0 %v5203
        %7692 = vmatpush1.bf16.msra.mxu0 %v5202
        %7693 = vmatprep.subr.bf16.mxu0 %v5207
        %7694 = vmatpush1.bf16.msra.mxu0 %v5206
        %7695 = vmatprep.subr.bf16.mxu0 %v5211
        %7696 = vmatpush1.bf16.msra.mxu0 %v5210
        %7697 = vmatprep.subr.bf16.mxu0 %v5215
        %7698 = vmatpush1.bf16.msra.mxu0 %v5214
        %7699 = vmatprep.subr.bf16.mxu0 %v5219
        %7700 = vmatpush1.bf16.msra.mxu0 %v5218
        %7701 = vmatprep.subr.bf16.mxu0 %v5223
        %7702 = vmatpush1.bf16.msra.mxu0 %v5222
        %7703 = vmatprep.subr.bf16.mxu0 %v5227
        %7704 = vmatpush1.bf16.msra.mxu0 %v5226
        %7705 = vmatprep.subr.bf16.mxu0 %v5231
        %7706 = vmatpush1.bf16.msra.mxu0 %v5230
        %7707 = vmatprep.subr.bf16.mxu0 %v5235
        %7708 = vmatpush1.bf16.msra.mxu0 %v5234
        %7709 = vmatprep.subr.bf16.mxu0 %v5239
        %7710 = vmatpush1.bf16.msra.mxu0 %v5238
        %7711 = vmatprep.subr.bf16.mxu0 %v5243
        %7712 = vmatpush1.bf16.msra.mxu0 %v5242
        %7713 = vmatprep.subr.bf16.mxu0 %v5247
        %7714 = vmatpush1.bf16.msra.mxu0 %v5246
        %7715 = vmatprep.subr.bf16.mxu0 %v5251
        %7716 = vmatpush1.bf16.msra.mxu0 %v5250
        %7717 = vmatprep.mubr.bf16.mxu0 %v1457
        %7718 = vmatmul.mubr.bf16.gmra.mrb[0].mxu0 %v1455
        %v7719 = vpop.f32.mrb[0].mxu0
        %v7720 = vadd.f32 %v7679, %v7719
        %v7721 = vpop.f32.mrb[0].mxu0
        %v7722 = vadd.f32 %v7681, %v7721
        %v7723 = vpop.f32.mrb[0].mxu0
        %v7724 = vpop.f32.mrb[0].mxu0
        %7725 = vdwg.mxu0
        %7726 = vmatprep.subr.bf16.mxu0 %v5255
        %7727 = vmatpush1.bf16.msra.mxu0 %v5254
        %7728 = vmatprep.subr.bf16.mxu0 %v5259
        %7729 = vmatpush1.bf16.msra.mxu0 %v5258
        %7730 = vmatprep.subr.bf16.mxu0 %v5263
        %7731 = vmatpush1.bf16.msra.mxu0 %v5262
        %7732 = vmatprep.subr.bf16.mxu0 %v5267
        %7733 = vmatpush1.bf16.msra.mxu0 %v5266
        %7734 = vmatprep.subr.bf16.mxu0 %v5271
        %7735 = vmatpush1.bf16.msra.mxu0 %v5270
        %7736 = vmatprep.subr.bf16.mxu0 %v5275
        %7737 = vmatpush1.bf16.msra.mxu0 %v5274
        %7738 = vmatprep.subr.bf16.mxu0 %v5279
        %7739 = vmatpush1.bf16.msra.mxu0 %v5278
        %7740 = vmatprep.subr.bf16.mxu0 %v5283
        %7741 = vmatpush1.bf16.msra.mxu0 %v5282
        %7742 = vmatprep.subr.bf16.mxu0 %v5287
        %7743 = vmatpush1.bf16.msra.mxu0 %v5286
        %7744 = vmatprep.subr.bf16.mxu0 %v5291
        %7745 = vmatpush1.bf16.msra.mxu0 %v5290
        %7746 = vmatprep.subr.bf16.mxu0 %v5295
        %7747 = vmatpush1.bf16.msra.mxu0 %v5294
        %7748 = vmatprep.subr.bf16.mxu0 %v5299
        %7749 = vmatpush1.bf16.msra.mxu0 %v5298
        %7750 = vmatprep.subr.bf16.mxu0 %v5303
        %7751 = vmatpush1.bf16.msra.mxu0 %v5302
        %7752 = vmatprep.subr.bf16.mxu0 %v5307
        %7753 = vmatpush1.bf16.msra.mxu0 %v5306
        %7754 = vmatprep.subr.bf16.mxu0 %v5311
        %7755 = vmatpush1.bf16.msra.mxu0 %v5310
        %7756 = vmatprep.subr.bf16.mxu0 %v5315
        %7757 = vmatpush1.bf16.msra.mxu0 %v5314
        %7758 = vmatprep.mubr.bf16.mxu0 %v1454
        %7759 = vmatmul.mubr.bf16.gmra.mrb[0].mxu0 %v1440
        %v7760 = vpop.f32.mrb[0].mxu0
        %v7761 = vadd.f32 %v7720, %v7760
        %v7762 = vpop.f32.mrb[0].mxu0
        %v7763 = vadd.f32 %v7722, %v7762
        %v7764 = vpop.f32.mrb[0].mxu0
        %v7765 = vpop.f32.mrb[0].mxu0
        %7766 = vdwg.mxu0
        %7767 = vmatprep.subr.bf16.mxu0 %v5319
        %7768 = vmatpush1.bf16.msra.mxu0 %v5318
        %7769 = vmatprep.subr.bf16.mxu0 %v5323
        %7770 = vmatpush1.bf16.msra.mxu0 %v5322
        %7771 = vmatprep.subr.bf16.mxu0 %v5327
        %7772 = vmatpush1.bf16.msra.mxu0 %v5326
        %7773 = vmatprep.subr.bf16.mxu0 %v5331
        %7774 = vmatpush1.bf16.msra.mxu0 %v5330
        %7775 = vmatprep.subr.bf16.mxu0 %v5335
        %7776 = vmatpush1.bf16.msra.mxu0 %v5334
        %7777 = vmatprep.subr.bf16.mxu0 %v5339
        %7778 = vmatpush1.bf16.msra.mxu0 %v5338
        %7779 = vmatprep.subr.bf16.mxu0 %v5343
        %7780 = vmatpush1.bf16.msra.mxu0 %v5342
        %7781 = vmatprep.subr.bf16.mxu0 %v5347
        %7782 = vmatpush1.bf16.msra.mxu0 %v5346
        %7783 = vmatprep.subr.bf16.mxu0 %v5351
        %7784 = vmatpush1.bf16.msra.mxu0 %v5350
        %7785 = vmatprep.subr.bf16.mxu0 %v5355
        %7786 = vmatpush1.bf16.msra.mxu0 %v5354
        %7787 = vmatprep.subr.bf16.mxu0 %v5359
        %7788 = vmatpush1.bf16.msra.mxu0 %v5358
        %7789 = vmatprep.subr.bf16.mxu0 %v5363
        %7790 = vmatpush1.bf16.msra.mxu0 %v5362
        %7791 = vmatprep.subr.bf16.mxu0 %v5367
        %7792 = vmatpush1.bf16.msra.mxu0 %v5366
        %7793 = vmatprep.subr.bf16.mxu0 %v5371
        %7794 = vmatpush1.bf16.msra.mxu0 %v5370
        %7795 = vmatprep.subr.bf16.mxu0 %v5375
        %7796 = vmatpush1.bf16.msra.mxu0 %v5374
        %7797 = vmatprep.subr.bf16.mxu0 %v5379
        %7798 = vmatpush1.bf16.msra.mxu0 %v5378
        %7799 = vmatprep.mubr.bf16.mxu0 %v1458
        %7800 = vmatmul.mubr.bf16.gmra.mrb[0].mxu0 %v1456
        %v7801 = vpop.f32.mrb[0].mxu0
        %v7802 = vadd.f32 %v7761, %v7801
        %v7803 = vpop.f32.mrb[0].mxu0
        %v7804 = vadd.f32 %v7763, %v7803
        %v7805 = vpop.f32.mrb[0].mxu0
        %v7806 = vpop.f32.mrb[0].mxu0
        %7807 = vdwg.mxu0
        %7808 = vmatprep.subr.bf16.mxu0 %v5383
        %7809 = vmatpush1.bf16.msra.mxu0 %v5382
        %7810 = vmatprep.subr.bf16.mxu0 %v5387
        %7811 = vmatpush1.bf16.msra.mxu0 %v5386
        %7812 = vmatprep.subr.bf16.mxu0 %v5391
        %7813 = vmatpush1.bf16.msra.mxu0 %v5390
        %7814 = vmatprep.subr.bf16.mxu0 %v5395
        %7815 = vmatpush1.bf16.msra.mxu0 %v5394
        %7816 = vmatprep.subr.bf16.mxu0 %v5399
        %7817 = vmatpush1.bf16.msra.mxu0 %v5398
        %7818 = vmatprep.subr.bf16.mxu0 %v5403
        %7819 = vmatpush1.bf16.msra.mxu0 %v5402
        %7820 = vmatprep.subr.bf16.mxu0 %v5407
        %7821 = vmatpush1.bf16.msra.mxu0 %v5406
        %7822 = vmatprep.subr.bf16.mxu0 %v5411
        %7823 = vmatpush1.bf16.msra.mxu0 %v5410
        %7824 = vmatprep.subr.bf16.mxu0 %v5415
        %7825 = vmatpush1.bf16.msra.mxu0 %v5414
        %7826 = vmatprep.subr.bf16.mxu0 %v5419
        %7827 = vmatpush1.bf16.msra.mxu0 %v5418
        %7828 = vmatprep.subr.bf16.mxu0 %v5423
        %7829 = vmatpush1.bf16.msra.mxu0 %v5422
        %7830 = vmatprep.subr.bf16.mxu0 %v5427
        %7831 = vmatpush1.bf16.msra.mxu0 %v5426
        %7832 = vmatprep.subr.bf16.mxu0 %v5431
        %7833 = vmatpush1.bf16.msra.mxu0 %v5430
        %7834 = vmatprep.subr.bf16.mxu0 %v5435
        %7835 = vmatpush1.bf16.msra.mxu0 %v5434
        %7836 = vmatprep.subr.bf16.mxu0 %v5439
        %7837 = vmatpush1.bf16.msra.mxu0 %v5438
        %7838 = vmatprep.subr.bf16.mxu0 %v5443
        %7839 = vmatpush1.bf16.msra.mxu0 %v5442
        %7840 = vmatprep.mubr.bf16.mxu0 %v1496
        %7841 = vmatmul.mubr.bf16.gmra.mrb[0].mxu0 %v1482
        %v7842 = vpop.f32.mrb[0].mxu0
        %v7843 = vadd.f32 %v7802, %v7842
        %v7844 = vpop.f32.mrb[0].mxu0
        %v7845 = vadd.f32 %v7804, %v7844
        %v7846 = vpop.f32.mrb[0].mxu0
        %v7847 = vpop.f32.mrb[0].mxu0
        %7848 = vdwg.mxu0
        %7849 = vmatprep.subr.bf16.mxu0 %v5447
        %7850 = vmatpush1.bf16.msra.mxu0 %v5446
        %7851 = vmatprep.subr.bf16.mxu0 %v5451
        %7852 = vmatpush1.bf16.msra.mxu0 %v5450
        %7853 = vmatprep.subr.bf16.mxu0 %v5455
        %7854 = vmatpush1.bf16.msra.mxu0 %v5454
        %7855 = vmatprep.subr.bf16.mxu0 %v5459
        %7856 = vmatpush1.bf16.msra.mxu0 %v5458
        %7857 = vmatprep.subr.bf16.mxu0 %v5463
        %7858 = vmatpush1.bf16.msra.mxu0 %v5462
        %7859 = vmatprep.subr.bf16.mxu0 %v5467
        %7860 = vmatpush1.bf16.msra.mxu0 %v5466
        %7861 = vmatprep.subr.bf16.mxu0 %v5471
        %7862 = vmatpush1.bf16.msra.mxu0 %v5470
        %7863 = vmatprep.subr.bf16.mxu0 %v5475
        %7864 = vmatpush1.bf16.msra.mxu0 %v5474
        %7865 = vmatprep.subr.bf16.mxu0 %v5479
        %7866 = vmatpush1.bf16.msra.mxu0 %v5478
        %7867 = vmatprep.subr.bf16.mxu0 %v5483
        %7868 = vmatpush1.bf16.msra.mxu0 %v5482
        %7869 = vmatprep.subr.bf16.mxu0 %v5487
        %7870 = vmatpush1.bf16.msra.mxu0 %v5486
        %7871 = vmatprep.subr.bf16.mxu0 %v5491
        %7872 = vmatpush1.bf16.msra.mxu0 %v5490
        %7873 = vmatprep.subr.bf16.mxu0 %v5495
        %7874 = vmatpush1.bf16.msra.mxu0 %v5494
        %7875 = vmatprep.subr.bf16.mxu0 %v5499
        %7876 = vmatpush1.bf16.msra.mxu0 %v5498
        %7877 = vmatprep.subr.bf16.mxu0 %v5503
        %7878 = vmatpush1.bf16.msra.mxu0 %v5502
        %7879 = vmatprep.subr.bf16.mxu0 %v5507
        %7880 = vmatpush1.bf16.msra.mxu0 %v5506
        %7881 = vmatprep.mubr.bf16.mxu0 %v1506
        %7882 = vmatmul.mubr.bf16.gmra.mrb[0].mxu0 %v1504
        %v7883 = vpop.f32.mrb[0].mxu0
        %v7884 = vadd.f32 %v7843, %v7883
        %v7885 = vpop.f32.mrb[0].mxu0
        %v7886 = vadd.f32 %v7845, %v7885
        %v7887 = vpop.f32.mrb[0].mxu0
        %v7888 = vpop.f32.mrb[0].mxu0
        %7889 = vdwg.mxu0
        %7890 = vmatprep.subr.bf16.mxu0 %v5511
        %7891 = vmatpush1.bf16.msra.mxu0 %v5510
        %7892 = vmatprep.subr.bf16.mxu0 %v5515
        %7893 = vmatpush1.bf16.msra.mxu0 %v5514
        %7894 = vmatprep.subr.bf16.mxu0 %v5519
        %7895 = vmatpush1.bf16.msra.mxu0 %v5518
        %7896 = vmatprep.subr.bf16.mxu0 %v5523
        %7897 = vmatpush1.bf16.msra.mxu0 %v5522
        %7898 = vmatprep.subr.bf16.mxu0 %v5527
        %7899 = vmatpush1.bf16.msra.mxu0 %v5526
        %7900 = vmatprep.subr.bf16.mxu0 %v5531
        %7901 = vmatpush1.bf16.msra.mxu0 %v5530
        %7902 = vmatprep.subr.bf16.mxu0 %v5535
        %7903 = vmatpush1.bf16.msra.mxu0 %v5534
        %7904 = vmatprep.subr.bf16.mxu0 %v5539
        %7905 = vmatpush1.bf16.msra.mxu0 %v5538
        %7906 = vmatprep.subr.bf16.mxu0 %v5543
        %7907 = vmatpush1.bf16.msra.mxu0 %v5542
        %7908 = vmatprep.subr.bf16.mxu0 %v5547
        %7909 = vmatpush1.bf16.msra.mxu0 %v5546
        %7910 = vmatprep.subr.bf16.mxu0 %v5551
        %7911 = vmatpush1.bf16.msra.mxu0 %v5550
        %7912 = vmatprep.subr.bf16.mxu0 %v5555
        %7913 = vmatpush1.bf16.msra.mxu0 %v5554
        %7914 = vmatprep.subr.bf16.mxu0 %v5559
        %7915 = vmatpush1.bf16.msra.mxu0 %v5558
        %7916 = vmatprep.subr.bf16.mxu0 %v5563
        %7917 = vmatpush1.bf16.msra.mxu0 %v5562
        %7918 = vmatprep.subr.bf16.mxu0 %v5567
        %7919 = vmatpush1.bf16.msra.mxu0 %v5566
        %7920 = vmatprep.subr.bf16.mxu0 %v5571
        %7921 = vmatpush1.bf16.msra.mxu0 %v5570
        %7922 = vmatprep.mubr.bf16.mxu0 %v1503
        %7923 = vmatmul.mubr.bf16.gmra.mrb[0].mxu0 %v1489
        %v7924 = vpop.f32.mrb[0].mxu0
        %v7925 = vadd.f32 %v7884, %v7924
        %v7926 = vpop.f32.mrb[0].mxu0
        %v7927 = vadd.f32 %v7886, %v7926
        %v7928 = vpop.f32.mrb[0].mxu0
        %v7929 = vpop.f32.mrb[0].mxu0
        %7930 = vdwg.mxu0
        %7931 = vmatprep.subr.bf16.mxu0 %v5575
        %7932 = vmatpush1.bf16.msra.mxu0 %v5574
        %7933 = vmatprep.subr.bf16.mxu0 %v5579
        %7934 = vmatpush1.bf16.msra.mxu0 %v5578
        %7935 = vmatprep.subr.bf16.mxu0 %v5583
        %7936 = vmatpush1.bf16.msra.mxu0 %v5582
        %7937 = vmatprep.subr.bf16.mxu0 %v5587
        %7938 = vmatpush1.bf16.msra.mxu0 %v5586
        %7939 = vmatprep.subr.bf16.mxu0 %v5591
        %7940 = vmatpush1.bf16.msra.mxu0 %v5590
        %7941 = vmatprep.subr.bf16.mxu0 %v5595
        %7942 = vmatpush1.bf16.msra.mxu0 %v5594
        %7943 = vmatprep.subr.bf16.mxu0 %v5599
        %7944 = vmatpush1.bf16.msra.mxu0 %v5598
        %7945 = vmatprep.subr.bf16.mxu0 %v5603
        %7946 = vmatpush1.bf16.msra.mxu0 %v5602
        %7947 = vmatprep.subr.bf16.mxu0 %v5607
        %7948 = vmatpush1.bf16.msra.mxu0 %v5606
        %7949 = vmatprep.subr.bf16.mxu0 %v5611
        %7950 = vmatpush1.bf16.msra.mxu0 %v5610
        %7951 = vmatprep.subr.bf16.mxu0 %v5615
        %7952 = vmatpush1.bf16.msra.mxu0 %v5614
        %7953 = vmatprep.subr.bf16.mxu0 %v5619
        %7954 = vmatpush1.bf16.msra.mxu0 %v5618
        %7955 = vmatprep.subr.bf16.mxu0 %v5623
        %7956 = vmatpush1.bf16.msra.mxu0 %v5622
        %7957 = vmatprep.subr.bf16.mxu0 %v5627
        %7958 = vmatpush1.bf16.msra.mxu0 %v5626
        %7959 = vmatprep.subr.bf16.mxu0 %v5631
        %7960 = vmatpush1.bf16.msra.mxu0 %v5630
        %7961 = vmatprep.subr.bf16.mxu0 %v5635
        %7962 = vmatpush1.bf16.msra.mxu0 %v5634
        %7963 = vmatprep.mubr.bf16.mxu0 %v1507
        %7964 = vmatmul.mubr.bf16.gmra.mrb[0].mxu0 %v1505
        %v7965 = vpop.f32.mrb[0].mxu0
        %v7966 = vadd.f32 %v7925, %v7965
        %v7967 = vpop.f32.mrb[0].mxu0
        %v7968 = vadd.f32 %v7927, %v7967
        %v7969 = vpop.f32.mrb[0].mxu0
        %v7970 = vpop.f32.mrb[0].mxu0
        %7971 = vdwg.mxu0
        %v7976 = vcombine.low %v7310, %v7312
        %v7977 = vcombine.low %v7966, %v7968
        %v7979 = vunpack.c.l.s4 1983009808
        %v7980 = vunpack.c.0.s8 %v7979
        %v7981 = vlaneseq
        %v7982 = vshrl.u32 %v7981, 7
        %v7983 = vsub.s32 %v7980, %v7982
        %v7984 = vrot.slane %v7976, %v7983
        %v7986 = vunpack.c.l.s4 1983009808
        %v7987 = vunpack.c.0.s8 %v7986
        %v7988 = vlaneseq
        %v7989 = vshrl.u32 %v7988, 7
        %v7990 = vsub.s32 %v7987, %v7989
        %v7991 = vrot.slane %v7977, %v7990
        %v7992 = vcombine.low %v7984, %v7991
        %v7994 = vadd.f32 %v276, %v7992
        %7995 = vst [vmem:[#allocation2] sm:$0xff] %v7994
        %p7996 = scmp.eq.s32.totalorder %s19, 1
        // Predicated region
        $region53: #{conv_classify_forward.5} parent=47 // pred_check
          %p7997 = pneg %p7996
        $region54: #{conv_classify_forward.5} parent=47 // pred_check_branch
          %7999 = sbr.rel (%p7997) target = $region56
        $region55: #{conv_classify_forward.5} parent=47 // pred_region
          %v8000 = vld [vmem:[#allocation2] sm:$0xff]
          %v8001 = vld [vmem:[%s2] sm:$0xf]
          %v8003 = vlaneseq
          %v8004 = vshrl.u32 %v8003, 7
          %v8005 = vsub.s32 0, %v8004
          %v8006 = vrot.slane %v8001, %v8005
          %v8007 = vlaneseq
          %v8008 = vshrl.u32 %v8007, 7
          %v8009 = vsub.s32 1, %v8008
          %v8010 = vrot.slane %v8001, %v8009
          %v8011 = vlaneseq
          %v8012 = vshrl.u32 %v8011, 7
          %v8013 = vsub.s32 2, %v8012
          %v8014 = vrot.slane %v8001, %v8013
          %v8015 = vlaneseq
          %v8016 = vshrl.u32 %v8015, 7
          %v8017 = vsub.s32 3, %v8016
          %v8018 = vrot.slane %v8001, %v8017
          %v8019 = vcombine.low %v8006, %v8010
          %v8020 = vcombine.low %v8014, %v8018
          %v8022 = vunpack.c.l.s4 1983009808
          %v8023 = vunpack.c.0.s8 %v8022
          %v8024 = vlaneseq
          %v8025 = vshrl.u32 %v8024, 7
          %v8026 = vsub.s32 %v8023, %v8025
          %v8027 = vrot.slane %v8019, %v8026
          %v8029 = vunpack.c.l.s4 1983009808
          %v8030 = vunpack.c.0.s8 %v8029
          %v8031 = vlaneseq
          %v8032 = vshrl.u32 %v8031, 7
          %v8033 = vsub.s32 %v8030, %v8032
          %v8034 = vrot.slane %v8020, %v8033
          %v8035 = vcombine.low %v8027, %v8034
          %v8037 = vadd.f32 %v8000, %v8035
          %v8039 = vcombine.high %v8037, %v8037
          %v8041 = vunpack.c.l.s4 1983009808
          %v8042 = vunpack.c.0.s8 %v8041
          %v8043 = vlaneseq
          %v8044 = vshrl.u32 %v8043, 7
          %v8045 = vsub.s32 %v8042, %v8044
          %v8046 = vrot.slane %v8037, %v8045
          %v8048 = vunpack.c.l.s4 1983009808
          %v8049 = vunpack.c.0.s8 %v8048
          %v8050 = vlaneseq
          %v8051 = vshrl.u32 %v8050, 7
          %v8052 = vsub.s32 %v8049, %v8051
          %v8053 = vrot.slane %v8039, %v8052
          %v8054 = vcombine.high %v8046, %v8046
          %v8055 = vcombine.high %v8053, %v8053
          %vm8060 = vcmask 1041408
          %v8061 = vsel %vm8060, %v8046, 0.0
          %v8062 = vrot.slane %v8061, 4
          %v8063 = vadd.f32 %v8061, %v8062
          %v8064 = vrot.slane %v8063, 2
          %v8065 = vadd.f32 %v8063, %v8064
          %v8066 = vrot.slane %v8065, 1
          %v8067 = vadd.f32 %v8065, %v8066
          %v8068 = vsel %vm8060, %v8054, 0.0
          %v8069 = vrot.slane %v8068, 4
          %v8070 = vadd.f32 %v8068, %v8069
          %v8071 = vrot.slane %v8070, 2
          %v8072 = vadd.f32 %v8070, %v8071
          %v8073 = vrot.slane %v8072, 1
          %v8074 = vadd.f32 %v8072, %v8073
          %v8075 = vsel %vm8060, %v8053, 0.0
          %v8076 = vrot.slane %v8075, 4
          %v8077 = vadd.f32 %v8075, %v8076
          %v8078 = vrot.slane %v8077, 2
          %v8079 = vadd.f32 %v8077, %v8078
          %v8080 = vrot.slane %v8079, 1
          %v8081 = vadd.f32 %v8079, %v8080
          %v8082 = vsel %vm8060, %v8055, 0.0
          %v8083 = vrot.slane %v8082, 4
          %v8084 = vadd.f32 %v8082, %v8083
          %v8085 = vrot.slane %v8084, 2
          %v8086 = vadd.f32 %v8084, %v8085
          %v8087 = vrot.slane %v8086, 1
          %v8088 = vadd.f32 %v8086, %v8087
          %v8089 = vmul.f32 %v8067, 0.5
          %v8090 = vmul.f32 %v8074, 0.5
          %v8091 = vmul.f32 %v8081, 0.5
          %v8092 = vmul.f32 %v8088, 0.5
          %v8093 = vmul.f32 %v8037, %v8037
          %v8095 = vcombine.high %v8093, %v8093
          %v8097 = vunpack.c.l.s4 1983009808
          %v8098 = vunpack.c.0.s8 %v8097
          %v8099 = vlaneseq
          %v8100 = vshrl.u32 %v8099, 7
          %v8101 = vsub.s32 %v8098, %v8100
          %v8102 = vrot.slane %v8093, %v8101
          %v8104 = vunpack.c.l.s4 1983009808
          %v8105 = vunpack.c.0.s8 %v8104
          %v8106 = vlaneseq
          %v8107 = vshrl.u32 %v8106, 7
          %v8108 = vsub.s32 %v8105, %v8107
          %v8109 = vrot.slane %v8095, %v8108
          %v8110 = vcombine.high %v8102, %v8102
          %v8111 = vcombine.high %v8109, %v8109
          %v8116 = vsel %vm8060, %v8102, 0.0
          %v8117 = vrot.slane %v8116, 4
          %v8118 = vadd.f32 %v8116, %v8117
          %v8119 = vrot.slane %v8118, 2
          %v8120 = vadd.f32 %v8118, %v8119
          %v8121 = vrot.slane %v8120, 1
          %v8122 = vadd.f32 %v8120, %v8121
          %v8123 = vsel %vm8060, %v8110, 0.0
          %v8124 = vrot.slane %v8123, 4
          %v8125 = vadd.f32 %v8123, %v8124
          %v8126 = vrot.slane %v8125, 2
          %v8127 = vadd.f32 %v8125, %v8126
          %v8128 = vrot.slane %v8127, 1
          %v8129 = vadd.f32 %v8127, %v8128
          %v8130 = vsel %vm8060, %v8109, 0.0
          %v8131 = vrot.slane %v8130, 4
          %v8132 = vadd.f32 %v8130, %v8131
          %v8133 = vrot.slane %v8132, 2
          %v8134 = vadd.f32 %v8132, %v8133
          %v8135 = vrot.slane %v8134, 1
          %v8136 = vadd.f32 %v8134, %v8135
          %v8137 = vsel %vm8060, %v8111, 0.0
          %v8138 = vrot.slane %v8137, 4
          %v8139 = vadd.f32 %v8137, %v8138
          %v8140 = vrot.slane %v8139, 2
          %v8141 = vadd.f32 %v8139, %v8140
          %v8142 = vrot.slane %v8141, 1
          %v8143 = vadd.f32 %v8141, %v8142
          %v8144 = vmul.f32 %v8122, 0.5
          %v8145 = vmul.f32 %v8129, 0.5
          %v8146 = vmul.f32 %v8136, 0.5
          %v8147 = vmul.f32 %v8143, 0.5
          %v8148 = vmul.f32 %v8089, %v8089
          %v8149 = vmul.f32 %v8090, %v8090
          %v8150 = vmul.f32 %v8091, %v8091
          %v8151 = vmul.f32 %v8092, %v8092
          %v8152 = vsub.f32 %v8144, %v8148
          %v8153 = vsub.f32 %v8145, %v8149
          %v8154 = vsub.f32 %v8146, %v8150
          %v8155 = vsub.f32 %v8147, %v8151
          %v8156 = vadd.f32 %v8152, 1e-05
          %v8157 = vadd.f32 %v8153, 1e-05
          %v8158 = vadd.f32 %v8154, 1e-05
          %v8159 = vadd.f32 %v8155, 1e-05
          %v8160 = vrsqrt.pop %v8156
          %v8161 = vrsqrt.pop %v8157
          %v8162 = vrsqrt.pop %v8158
          %v8163 = vrsqrt.pop %v8159
          %v8164 = vld [vmem:[%s3] sm:$0xf]
          %v8166 = vlaneseq
          %v8167 = vshrl.u32 %v8166, 7
          %v8168 = vsub.s32 0, %v8167
          %v8169 = vrot.slane %v8164, %v8168
          %v8170 = vlaneseq
          %v8171 = vshrl.u32 %v8170, 7
          %v8172 = vsub.s32 1, %v8171
          %v8173 = vrot.slane %v8164, %v8172
          %v8174 = vlaneseq
          %v8175 = vshrl.u32 %v8174, 7
          %v8176 = vsub.s32 2, %v8175
          %v8177 = vrot.slane %v8164, %v8176
          %v8178 = vlaneseq
          %v8179 = vshrl.u32 %v8178, 7
          %v8180 = vsub.s32 3, %v8179
          %v8181 = vrot.slane %v8164, %v8180
          %v8186 = vmul.f32 %v8160, %v8169
          %v8187 = vmul.f32 %v8161, %v8173
          %v8188 = vmul.f32 %v8162, %v8177
          %v8189 = vmul.f32 %v8163, %v8181
          %v8190 = vlaneseq
          %v8191 = vshrl.u32 %v8190, 7
          %v8192 = vsub.s32 0, %v8191
          %v8193 = vrot.slane %v8186, %v8192
          %v8194 = vlaneseq
          %v8195 = vshrl.u32 %v8194, 7
          %v8196 = vsub.s32 0, %v8195
          %v8197 = vrot.slane %v8187, %v8196
          %v8198 = vlaneseq
          %v8199 = vshrl.u32 %v8198, 7
          %v8200 = vsub.s32 0, %v8199
          %v8201 = vrot.slane %v8188, %v8200
          %v8202 = vlaneseq
          %v8203 = vshrl.u32 %v8202, 7
          %v8204 = vsub.s32 0, %v8203
          %v8205 = vrot.slane %v8189, %v8204
          %v8210 = vcombine.low %v8193, %v8197
          %v8211 = vcombine.low %v8201, %v8205
          %v8213 = vunpack.c.l.s4 1983009808
          %v8214 = vunpack.c.0.s8 %v8213
          %v8215 = vlaneseq
          %v8216 = vshrl.u32 %v8215, 7
          %v8217 = vsub.s32 %v8214, %v8216
          %v8218 = vrot.slane %v8210, %v8217
          %v8220 = vunpack.c.l.s4 1983009808
          %v8221 = vunpack.c.0.s8 %v8220
          %v8222 = vlaneseq
          %v8223 = vshrl.u32 %v8222, 7
          %v8224 = vsub.s32 %v8221, %v8223
          %v8225 = vrot.slane %v8211, %v8224
          %v8226 = vcombine.low %v8218, %v8225
          %v8228 = vmul.f32 %v8037, %v8226
          %v8229 = vld [vmem:[%s4] sm:$0xf]
          %v8230 = vmul.f32 %v8089, %v8186
          %v8231 = vmul.f32 %v8090, %v8187
          %v8232 = vmul.f32 %v8091, %v8188
          %v8233 = vmul.f32 %v8092, %v8189
          %v8238 = vcombine.low %v8230, %v8231
          %v8239 = vcombine.low %v8232, %v8233
          %v8241 = vunpack.c.l.s4 1966171168
          %v8242 = vunpack.c.0.s8 %v8241
          %v8243 = vlaneseq
          %v8244 = vshrl.u32 %v8243, 7
          %v8245 = vsub.s32 %v8242, %v8244
          %v8246 = vrot.slane %v8238, %v8245
          %v8248 = vunpack.c.l.s4 1966171168
          %v8249 = vunpack.c.0.s8 %v8248
          %v8250 = vlaneseq
          %v8251 = vshrl.u32 %v8250, 7
          %v8252 = vsub.s32 %v8249, %v8251
          %v8253 = vrot.slane %v8239, %v8252
          %v8254 = vcombine.low %v8246, %v8253
          %v8256 = vunpack.c.l.s4 1966171168
          %v8257 = vunpack.c.0.s8 %v8256
          %v8258 = vlaneseq
          %v8259 = vshrl.u32 %v8258, 7
          %v8260 = vsub.s32 %v8257, %v8259
          %v8261 = vrot.slane %v8254, %v8260
          %v8263 = vsub.f32 %v8229, %v8261
          %v8265 = vlaneseq
          %v8266 = vshrl.u32 %v8265, 7
          %v8267 = vsub.s32 0, %v8266
          %v8268 = vrot.slane %v8263, %v8267
          %v8269 = vlaneseq
          %v8270 = vshrl.u32 %v8269, 7
          %v8271 = vsub.s32 1, %v8270
          %v8272 = vrot.slane %v8263, %v8271
          %v8273 = vlaneseq
          %v8274 = vshrl.u32 %v8273, 7
          %v8275 = vsub.s32 2, %v8274
          %v8276 = vrot.slane %v8263, %v8275
          %v8277 = vlaneseq
          %v8278 = vshrl.u32 %v8277, 7
          %v8279 = vsub.s32 3, %v8278
          %v8280 = vrot.slane %v8263, %v8279
          %v8281 = vcombine.low %v8268, %v8272
          %v8282 = vcombine.low %v8276, %v8280
          %v8284 = vunpack.c.l.s4 1983009808
          %v8285 = vunpack.c.0.s8 %v8284
          %v8286 = vlaneseq
          %v8287 = vshrl.u32 %v8286, 7
          %v8288 = vsub.s32 %v8285, %v8287
          %v8289 = vrot.slane %v8281, %v8288
          %v8291 = vunpack.c.l.s4 1983009808
          %v8292 = vunpack.c.0.s8 %v8291
          %v8293 = vlaneseq
          %v8294 = vshrl.u32 %v8293, 7
          %v8295 = vsub.s32 %v8292, %v8294
          %v8296 = vrot.slane %v8282, %v8295
          %v8297 = vcombine.low %v8289, %v8296
          %v8299 = vadd.f32 %v8228, %v8297
          %v8300 = vmax.f32 %v8299, 0.0
          %v8301 = vld [vmem:[%s5] sm:$0xff]
          %v8302 = vld [vmem:[%s5 + $0x8] sm:$0xff]
          %v8303 = vld [vmem:[%s5 + $0x10] sm:$0xff]
          %v8304 = vld [vmem:[%s5 + $0x18] sm:$0xff]
          %v8305 = vld [vmem:[%s5 + $0x20] sm:$0xff]
          %v8306 = vld [vmem:[%s5 + $0x28] sm:$0xff]
          %v8307 = vld [vmem:[%s5 + $0x30] sm:$0xff]
          %v8308 = vld [vmem:[%s5 + $0x38] sm:$0xff]
          %v8309 = vld [vmem:[%s5 + $0x40] sm:$0xff]
          %v8310 = vld [vmem:[%s5 + $0x48] sm:$0xff]
          %v8311 = vld [vmem:[%s5 + $0x50] sm:$0xff]
          %v8312 = vld [vmem:[%s5 + $0x58] sm:$0xff]
          %v8313 = vld [vmem:[%s5 + $0x60] sm:$0xff]
          %v8314 = vld [vmem:[%s5 + $0x68] sm:$0xff]
          %v8315 = vld [vmem:[%s5 + $0x70] sm:$0xff]
          %v8316 = vld [vmem:[%s5 + $0x78] sm:$0xff]
          %v8317 = vld [vmem:[%s5 + $0x80] sm:$0xff]
          %v8318 = vld [vmem:[%s5 + $0x88] sm:$0xff]
          %v8319 = vld [vmem:[%s5 + $0x90] sm:$0xff]
          %v8320 = vld [vmem:[%s5 + $0x98] sm:$0xff]
          %v8321 = vld [vmem:[%s5 + $0xa0] sm:$0xff]
          %v8322 = vld [vmem:[%s5 + $0xa8] sm:$0xff]
          %v8323 = vld [vmem:[%s5 + $0xb0] sm:$0xff]
          %v8324 = vld [vmem:[%s5 + $0xb8] sm:$0xff]
          %v8325 = vld [vmem:[%s5 + $0xc0] sm:$0xff]
          %v8326 = vld [vmem:[%s5 + $0xc8] sm:$0xff]
          %v8327 = vld [vmem:[%s5 + $0xd0] sm:$0xff]
          %v8328 = vld [vmem:[%s5 + $0xd8] sm:$0xff]
          %v8329 = vld [vmem:[%s5 + $0xe0] sm:$0xff]
          %v8330 = vld [vmem:[%s5 + $0xe8] sm:$0xff]
          %v8331 = vld [vmem:[%s5 + $0xf0] sm:$0xff]
          %v8332 = vld [vmem:[%s5 + $0xf8] sm:$0xff]
          %v8333 = vld [vmem:[%s5 + $0x100] sm:$0xff]
          %v8334 = vld [vmem:[%s5 + $0x108] sm:$0xff]
          %v8335 = vld [vmem:[%s5 + $0x110] sm:$0xff]
          %v8336 = vld [vmem:[%s5 + $0x118] sm:$0xff]
          %v8337 = vld [vmem:[%s5 + $0x120] sm:$0xff]
          %v8338 = vld [vmem:[%s5 + $0x128] sm:$0xff]
          %v8339 = vld [vmem:[%s5 + $0x130] sm:$0xff]
          %v8340 = vld [vmem:[%s5 + $0x138] sm:$0xff]
          %v8341 = vld [vmem:[%s5 + $0x140] sm:$0xff]
          %v8342 = vld [vmem:[%s5 + $0x148] sm:$0xff]
          %v8343 = vld [vmem:[%s5 + $0x150] sm:$0xff]
          %v8344 = vld [vmem:[%s5 + $0x158] sm:$0xff]
          %v8345 = vld [vmem:[%s5 + $0x160] sm:$0xff]
          %v8346 = vld [vmem:[%s5 + $0x168] sm:$0xff]
          %v8347 = vld [vmem:[%s5 + $0x170] sm:$0xff]
          %v8348 = vld [vmem:[%s5 + $0x178] sm:$0xff]
          %v8349 = vld [vmem:[%s5 + $0x180] sm:$0xff]
          %v8350 = vld [vmem:[%s5 + $0x188] sm:$0xff]
          %v8351 = vld [vmem:[%s5 + $0x190] sm:$0xff]
          %v8352 = vld [vmem:[%s5 + $0x198] sm:$0xff]
          %v8353 = vld [vmem:[%s5 + $0x1a0] sm:$0xff]
          %v8354 = vld [vmem:[%s5 + $0x1a8] sm:$0xff]
          %v8355 = vld [vmem:[%s5 + $0x1b0] sm:$0xff]
          %v8356 = vld [vmem:[%s5 + $0x1b8] sm:$0xff]
          %v8357 = vld [vmem:[%s5 + $0x1c0] sm:$0xff]
          %v8358 = vld [vmem:[%s5 + $0x1c8] sm:$0xff]
          %v8359 = vld [vmem:[%s5 + $0x1d0] sm:$0xff]
          %v8360 = vld [vmem:[%s5 + $0x1d8] sm:$0xff]
          %v8361 = vld [vmem:[%s5 + $0x1e0] sm:$0xff]
          %v8362 = vld [vmem:[%s5 + $0x1e8] sm:$0xff]
          %v8363 = vld [vmem:[%s5 + $0x1f0] sm:$0xff]
          %v8364 = vld [vmem:[%s5 + $0x1f8] sm:$0xff]
          %v8365 = vld [vmem:[%s6] sm:$0x1]
          %v8367 = vlaneseq
          %v8368 = vshrl.u32 %v8367, 7
          %v8369 = vsub.s32 0, %v8368
          %v8370 = vrot.slane %v8365, %v8369
          %v8373 = vcombine.high %v8300, %v8300
          %v8375 = vunpack.c.l.s4 1983009808
          %v8376 = vunpack.c.0.s8 %v8375
          %v8377 = vlaneseq
          %v8378 = vshrl.u32 %v8377, 7
          %v8379 = vsub.s32 %v8376, %v8378
          %v8380 = vrot.slane %v8300, %v8379
          %v8382 = vunpack.c.l.s4 1983009808
          %v8383 = vunpack.c.0.s8 %v8382
          %v8384 = vlaneseq
          %v8385 = vshrl.u32 %v8384, 7
          %v8386 = vsub.s32 %v8383, %v8385
          %v8387 = vrot.slane %v8373, %v8386
          %v8388 = vcombine.high %v8380, %v8380
          %v8389 = vcombine.high %v8387, %v8387
          %8394 = vmatprep.subr.mxu0 0.0
          %8395 = vmatpush1.msra.mxu0 %v8301
          %8396 = vmatprep.subr.mxu0 0.0
          %8397 = vmatpush1.msra.mxu0 %v8302
          %8398 = vmatprep.subr.mxu0 0.0
          %8399 = vmatpush1.msra.mxu0 %v8303
          %8400 = vmatprep.subr.mxu0 0.0
          %8401 = vmatpush1.msra.mxu0 %v8304
          %8402 = vmatprep.subr.mxu0 0.0
          %8403 = vmatpush1.msra.mxu0 %v8305
          %8404 = vmatprep.subr.mxu0 0.0
          %8405 = vmatpush1.msra.mxu0 %v8306
          %8406 = vmatprep.subr.mxu0 0.0
          %8407 = vmatpush1.msra.mxu0 %v8307
          %8408 = vmatprep.subr.mxu0 0.0
          %8409 = vmatpush1.msra.mxu0 %v8308
          %8410 = vmatprep.subr.mxu0 0.0
          %8411 = vmatpush1.msra.mxu0 %v8309
          %8412 = vmatprep.subr.mxu0 0.0
          %8413 = vmatpush1.msra.mxu0 %v8310
          %8414 = vmatprep.subr.mxu0 0.0
          %8415 = vmatpush1.msra.mxu0 %v8311
          %8416 = vmatprep.subr.mxu0 0.0
          %8417 = vmatpush1.msra.mxu0 %v8312
          %8418 = vmatprep.subr.mxu0 0.0
          %8419 = vmatpush1.msra.mxu0 %v8313
          %8420 = vmatprep.subr.mxu0 0.0
          %8421 = vmatpush1.msra.mxu0 %v8314
          %8422 = vmatprep.subr.mxu0 0.0
          %8423 = vmatpush1.msra.mxu0 %v8315
          %8424 = vmatprep.subr.mxu0 0.0
          %8425 = vmatpush1.msra.mxu0 %v8316
          %8426 = vmatprep.subr.mxu0 0.0
          %8427 = vmatpush1.msra.mxu0 %v8317
          %8428 = vmatprep.subr.mxu0 0.0
          %8429 = vmatpush1.msra.mxu0 %v8318
          %8430 = vmatprep.subr.mxu0 0.0
          %8431 = vmatpush1.msra.mxu0 %v8319
          %8432 = vmatprep.subr.mxu0 0.0
          %8433 = vmatpush1.msra.mxu0 %v8320
          %8434 = vmatprep.subr.mxu0 0.0
          %8435 = vmatpush1.msra.mxu0 %v8321
          %8436 = vmatprep.subr.mxu0 0.0
          %8437 = vmatpush1.msra.mxu0 %v8322
          %8438 = vmatprep.subr.mxu0 0.0
          %8439 = vmatpush1.msra.mxu0 %v8323
          %8440 = vmatprep.subr.mxu0 0.0
          %8441 = vmatpush1.msra.mxu0 %v8324
          %8442 = vmatprep.subr.mxu0 0.0
          %8443 = vmatpush1.msra.mxu0 %v8325
          %8444 = vmatprep.subr.mxu0 0.0
          %8445 = vmatpush1.msra.mxu0 %v8326
          %8446 = vmatprep.subr.mxu0 0.0
          %8447 = vmatpush1.msra.mxu0 %v8327
          %8448 = vmatprep.subr.mxu0 0.0
          %8449 = vmatpush1.msra.mxu0 %v8328
          %8450 = vmatprep.subr.mxu0 0.0
          %8451 = vmatpush1.msra.mxu0 %v8329
          %8452 = vmatprep.subr.mxu0 0.0
          %8453 = vmatpush1.msra.mxu0 %v8330
          %8454 = vmatprep.subr.mxu0 0.0
          %8455 = vmatpush1.msra.mxu0 %v8331
          %8456 = vmatprep.subr.mxu0 0.0
          %8457 = vmatpush1.msra.mxu0 %v8332
          %8458 = vmatprep.mubr.f32.mxu0 %v8388
          %8459 = vmatmul.mubr.f32.gmra.mrb[0].mxu0 %v8380
          %v8460 = vpop.f32.mrb[0].mxu0
          %v8461 = vadd.f32 %v8370, %v8460
          %v8462 = vpop.f32.mrb[0].mxu0
          %8463 = vdwg.mxu0
          %8464 = vmatprep.subr.mxu0 0.0
          %8465 = vmatpush1.msra.mxu0 %v8333
          %8466 = vmatprep.subr.mxu0 0.0
          %8467 = vmatpush1.msra.mxu0 %v8334
          %8468 = vmatprep.subr.mxu0 0.0
          %8469 = vmatpush1.msra.mxu0 %v8335
          %8470 = vmatprep.subr.mxu0 0.0
          %8471 = vmatpush1.msra.mxu0 %v8336
          %8472 = vmatprep.subr.mxu0 0.0
          %8473 = vmatpush1.msra.mxu0 %v8337
          %8474 = vmatprep.subr.mxu0 0.0
          %8475 = vmatpush1.msra.mxu0 %v8338
          %8476 = vmatprep.subr.mxu0 0.0
          %8477 = vmatpush1.msra.mxu0 %v8339
          %8478 = vmatprep.subr.mxu0 0.0
          %8479 = vmatpush1.msra.mxu0 %v8340
          %8480 = vmatprep.subr.mxu0 0.0
          %8481 = vmatpush1.msra.mxu0 %v8341
          %8482 = vmatprep.subr.mxu0 0.0
          %8483 = vmatpush1.msra.mxu0 %v8342
          %8484 = vmatprep.subr.mxu0 0.0
          %8485 = vmatpush1.msra.mxu0 %v8343
          %8486 = vmatprep.subr.mxu0 0.0
          %8487 = vmatpush1.msra.mxu0 %v8344
          %8488 = vmatprep.subr.mxu0 0.0
          %8489 = vmatpush1.msra.mxu0 %v8345
          %8490 = vmatprep.subr.mxu0 0.0
          %8491 = vmatpush1.msra.mxu0 %v8346
          %8492 = vmatprep.subr.mxu0 0.0
          %8493 = vmatpush1.msra.mxu0 %v8347
          %8494 = vmatprep.subr.mxu0 0.0
          %8495 = vmatpush1.msra.mxu0 %v8348
          %8496 = vmatprep.subr.mxu0 0.0
          %8497 = vmatpush1.msra.mxu0 %v8349
          %8498 = vmatprep.subr.mxu0 0.0
          %8499 = vmatpush1.msra.mxu0 %v8350
          %8500 = vmatprep.subr.mxu0 0.0
          %8501 = vmatpush1.msra.mxu0 %v8351
          %8502 = vmatprep.subr.mxu0 0.0
          %8503 = vmatpush1.msra.mxu0 %v8352
          %8504 = vmatprep.subr.mxu0 0.0
          %8505 = vmatpush1.msra.mxu0 %v8353
          %8506 = vmatprep.subr.mxu0 0.0
          %8507 = vmatpush1.msra.mxu0 %v8354
          %8508 = vmatprep.subr.mxu0 0.0
          %8509 = vmatpush1.msra.mxu0 %v8355
          %8510 = vmatprep.subr.mxu0 0.0
          %8511 = vmatpush1.msra.mxu0 %v8356
          %8512 = vmatprep.subr.mxu0 0.0
          %8513 = vmatpush1.msra.mxu0 %v8357
          %8514 = vmatprep.subr.mxu0 0.0
          %8515 = vmatpush1.msra.mxu0 %v8358
          %8516 = vmatprep.subr.mxu0 0.0
          %8517 = vmatpush1.msra.mxu0 %v8359
          %8518 = vmatprep.subr.mxu0 0.0
          %8519 = vmatpush1.msra.mxu0 %v8360
          %8520 = vmatprep.subr.mxu0 0.0
          %8521 = vmatpush1.msra.mxu0 %v8361
          %8522 = vmatprep.subr.mxu0 0.0
          %8523 = vmatpush1.msra.mxu0 %v8362
          %8524 = vmatprep.subr.mxu0 0.0
          %8525 = vmatpush1.msra.mxu0 %v8363
          %8526 = vmatprep.subr.mxu0 0.0
          %8527 = vmatpush1.msra.mxu0 %v8364
          %8528 = vmatprep.mubr.f32.mxu0 %v8389
          %8529 = vmatmul.mubr.f32.gmra.mrb[0].mxu0 %v8387
          %v8530 = vpop.f32.mrb[0].mxu0
          %v8531 = vadd.f32 %v8461, %v8530
          %v8532 = vpop.f32.mrb[0].mxu0
          %8533 = vdwg.mxu0
          %vm8534 = vcmask 9216
          %v8535 = vsel %vm8534, %v8531, -inf
          %8536 = vmax.xlane.f32.xlu0 %v8535
          %v8537 = vpop.xlane.xlu0 %8536
          %v8538 = vsub.f32 %v8531, %v8537
          %v8539 = vmul.f32 %v8538, 1.442695
          %v8540 = vpow.pop %v8539
          %v8541 = vsel %vm8534, %v8540, 0.0
          %8542 = vadd.xlane.f32.xlu0 %v8541
          %v8543 = vpop.xlane.xlu0 %8542
          %v8544 = vrcp.pop %v8543
          %v8545 = vmul.f32 %v8540, %v8544
          %8546 = vst.msk [vmem:[#allocation3] sm:$0x3] %vm8534, %v8545
        $region56: #{conv_classify_forward.5} parent=47 // pred_fallthru
          _
        // Predicated region
        $region57: #{conv_classify_forward.5} parent=47 // pred_check
          %p8547 = pneg %p184
        $region58: #{conv_classify_forward.5} parent=47 // pred_check_branch
          %8549 = sbr.rel (%p8547) target = $region60
        $region59: #{conv_classify_forward.5} parent=47 // pred_region
          %s8551 = ssub.s32 32, 32
          %8552 = vsyncadd [#allocation4], %s8551
          %s8554 = sshll.u32 [#allocation3], 4
          %s8555 = int_to_ptr.vmem [resolvable:$true] %s8554
          %8557 = dma.vmem_to_hbm [thread:$0]  %s8555, 32, %s7, [#allocation4]
        $region60: #{conv_classify_forward.5} parent=47 // pred_fallthru
          _
        // Predicated region
        $region61: #{conv_classify_forward.5} parent=47 // pred_check
          %p8558 = pneg %p184
        $region62: #{conv_classify_forward.5} parent=47 // pred_check_branch
          %8560 = sbr.rel (%p8558) target = $region64
        $region63: #{conv_classify_forward.5} parent=47 // pred_region
          %8561 = dma.done [#allocation4], 32
        $region64: #{conv_classify_forward.5} parent=47 // pred_fallthru
          _
      $region48: #{conv_classify_forward.5} parent=5 // pred_fallthru
        _
      %p8562 = scmp.le.s32.totalorder 2, %s14
      // Predicated region
      $region65: #{conv_classify_forward.5} parent=5 // pred_check
        %p8563 = pneg %p8562
      $region66: #{conv_classify_forward.5} parent=5 // pred_check_branch
        %8565 = sbr.rel (%p8563) target = $region68
      $region67: #{conv_classify_forward.5} parent=5 // pred_region
        %s8566 = ssub.s32 %s14, 2
      $region68: #{conv_classify_forward.5} parent=5 // pred_fallthru
        _
    $region6: #{conv_classify_forward.5} parent=1 // loop_footer
      %s18 = sadd.s32 1, %s14
    $region7: #{conv_classify_forward.5} parent=1 // loop_footer_branch
      %13 = sbr.rel target = $region3
    $region8: #{conv_classify_forward.5} parent=1 // loop_exit
      _
    %8567 = vsyncpa [#allocation4], 1
    %s8568 = scalar_lea.sflag [#allocation4], 1
    %8569 = vsyncpa %s8568, 1

</llo_original>
